<compile_context>
chip_gen: v7x
topology: tpu7x:2x2x1
jax: 0.10.0
libtpu: 0.0.40
codegen_flags: <defaults>
</compile_context>

<pallas_src>
import math

import jax
import jax.numpy as jnp
from jax.experimental import pallas as pl
from jax.experimental.pallas import tpu as pltpu

N_HIDDEN = 100   # fixed by the module
N_LAYERS = 6     # fixed by the module
HP = 128         # lane-padded hidden size (and padded MLP width)


# ----------------------------- fused forward kernel --------------------------------
def fused_mv_lstm_kernel(x_ref, w_hbm, b_ref,
                         w1_ref, b1_ref, w2_ref, b2_ref, w3_ref, b3_ref,
                         out_ref, wbuf, wsem, hseq_scr, flat_scr):
    # x_ref:    (S*B, HP)  f32   time-major flattened, feature-padded input (row = t*B+b)
    # w_hbm:    (L, 2*HP, 4*HP) bf16 in HBM; rows 0:HP = W_ih, rows HP:2HP = W_hh,
    #                              gate column blocks in order (i, f, o, g)
    # b_ref:    (L, 1, 4*HP) f32  pre-summed (b_ih + b_hh), same gate order, padded
    # w*/b*:    padded MLP head (weights bf16, biases f32)
    # wbuf:     (2, 2*HP, 4*HP) bf16  double-buffered per-layer weight slab
    # wsem:     DMA semaphores (2,)
    # hseq_scr: (S*B, HP)  f32   current-layer output sequence (input to next layer)
    # flat_scr: (B, S*HP)  f32   lane-dense flattened last-layer output for the MLP
    B = flat_scr.shape[0]
    S = flat_scr.shape[1] // HP

    # Prime layer-0 weights; everything else (x, biases, MLP head) is tiny and auto-DMA'd.
    pltpu.make_async_copy(w_hbm.at[0], wbuf.at[0], wsem.at[0]).start()

    for layer in range(N_LAYERS):                       # static: fully unrolled
        slot = layer & 1
        # wait for this layer's weights, then prefetch the next layer's behind compute
        pltpu.make_async_copy(w_hbm.at[layer], wbuf.at[slot], wsem.at[slot]).wait()
        if layer + 1 < N_LAYERS:
            pltpu.make_async_copy(w_hbm.at[layer + 1], wbuf.at[1 - slot],
                                  wsem.at[1 - slot]).start()

        w_ih = wbuf[slot, 0:HP, :]                      # (HP, 4*HP) bf16
        w_hh = wbuf[slot, HP:2 * HP, :]                 # (HP, 4*HP) bf16

        # Hoisted input projection for ALL timesteps of this layer, bias folded in once.
        xin = x_ref[...] if layer == 0 else hseq_scr[...]          # (S*B, HP) f32
        xw = (jnp.dot(xin.astype(jnp.bfloat16), w_ih,
                      preferred_element_type=jnp.float32)
              + b_ref[layer])                                       # (S*B, 4*HP) f32

        h = jnp.zeros((B, HP), jnp.float32)
        c = jnp.zeros((B, HP), jnp.float32)
        last = layer == N_LAYERS - 1
        for t in range(S):                              # unrolled serial recurrence
            gates = xw[t * B:(t + 1) * B] + jnp.dot(
                h.astype(jnp.bfloat16), w_hh, preferred_element_type=jnp.float32)
            # packed gate order (i, f, o, g): one sigmoid over 3*HP lanes, one tanh
            ifo = jax.nn.sigmoid(gates[:, 0:3 * HP])
            i_g = ifo[:, 0:HP]
            f_g = ifo[:, HP:2 * HP]
            o_g = ifo[:, 2 * HP:3 * HP]
            g_g = jnp.tanh(gates[:, 3 * HP:4 * HP])
            c = f_g * c + i_g * g_g
            h = o_g * jnp.tanh(c)
            if last:
                # write straight into the lane-dense flat slab (128-aligned lane slice)
                flat_scr[:, t * HP:(t + 1) * HP] = h
            else:
                hseq_scr[t * B:(t + 1) * B, :] = h      # consumed by the next layer

    # MLP head on the padded lane-dense slab (== lstm_out.view(batch, -1) on padded H)
    flat = flat_scr[...]                                            # (B, S*HP) f32
    h1 = jnp.dot(flat.astype(jnp.bfloat16), w1_ref[...],
                 preferred_element_type=jnp.float32) + b1_ref[...]
    h2 = jnp.dot(h1.astype(jnp.bfloat16), w2_ref[...],
                 preferred_element_type=jnp.float32) + b2_ref[...]
    out_ref[...] = jnp.dot(h2.astype(jnp.bfloat16), w3_ref[...],
                           preferred_element_type=jnp.float32) + b3_ref[...]


def mv_lstm_forward(p, x):
    """x: (batch, seq_len, n_features) -> (batch, predict_day)."""
    B, S, F = x.shape
    # time-major, flattened to (S*B, F), zero-padded to 128 lanes for layer 0
    x_tm = jnp.transpose(x, (1, 0, 2)).astype(jnp.float32).reshape(S * B, F)
    x_pad = jnp.zeros((S * B, HP), jnp.float32).at[:, :F].set(x_tm)

    vmem = pl.BlockSpec(memory_space=pltpu.MemorySpace.VMEM)
    hbm = pl.BlockSpec(memory_space=pl.ANY)            # LSTM weights: manual per-layer DMA
    out_pad = pl.pallas_call(
        fused_mv_lstm_kernel,
        out_shape=jax.ShapeDtypeStruct((B, HP), jnp.float32),
        in_specs=[vmem, hbm, vmem, vmem, vmem, vmem, vmem, vmem, vmem],
        out_specs=vmem,
        scratch_shapes=[
            pltpu.VMEM((2, 2 * HP, 4 * HP), jnp.bfloat16),   # double-buffered layer weights
            pltpu.SemaphoreType.DMA((2,)),                   # one DMA sem per buffer slot
            pltpu.VMEM((S * B, HP), jnp.float32),            # per-layer sequence carry
            pltpu.VMEM((B, S * HP), jnp.float32),            # lane-dense flat LSTM output
        ],
        compiler_params=pltpu.CompilerParams(vmem_limit_bytes=32 * 1024 * 1024),
    )(x_pad, p["w_lstm"], p["b"],
      p["w1"], p["b1"], p["w2"], p["b2"], p["w3"], p["b3"])
    return out_pad[:, :p["predict_day"]]


# ----------------------------- parameters ------------------------------------------
def init_params(key, n_features, seq_len, predict_day):
    """PyTorch-equivalent init: per-gate (i,f,g,o) weights, uniform(+-1/sqrt(fan))."""
    params = {"lstm": [], "linear": []}
    keys = jax.random.split(key, 4 * N_LAYERS + 6)
    ki = 0
    k = 1.0 / math.sqrt(N_HIDDEN)
    for layer in range(N_LAYERS):
        in_dim = n_features if layer == 0 else N_HIDDEN
        w_ih = jax.random.uniform(keys[ki], (4, in_dim, N_HIDDEN), jnp.float32, -k, k); ki += 1
        w_hh = jax.random.uniform(keys[ki], (4, N_HIDDEN, N_HIDDEN), jnp.float32, -k, k); ki += 1
        b_ih = jax.random.uniform(keys[ki], (4, 1, N_HIDDEN), jnp.float32, -k, k); ki += 1
        b_hh = jax.random.uniform(keys[ki], (4, 1, N_HIDDEN), jnp.float32, -k, k); ki += 1
        params["lstm"].append((w_ih, w_hh, b_ih + b_hh))

    dims = [N_HIDDEN * seq_len, predict_day * 3, predict_day * 2, predict_day]
    for i in range(3):
        kin = 1.0 / math.sqrt(dims[i])
        w = jax.random.uniform(keys[ki], (dims[i], dims[i + 1]), jnp.float32, -kin, kin); ki += 1
        b = jax.random.uniform(keys[ki], (1, dims[i + 1]), jnp.float32, -kin, kin); ki += 1
        params["linear"].append((w, b))
    return params


def prepare_params(raw, n_features, seq_len, predict_day):
    """Fuse gates (order i,f,o,g), zero-pad to 128 lanes, cast matmul weights to bf16."""
    H = N_HIDDEN
    assert n_features <= HP, "layer-0 feature padding assumes n_features <= 128"
    # TODO(synk): support n_features > 128 (would need a wider layer-0 W_ih layout).
    GATE_DST = (0, 1, 3, 2)   # PyTorch gate order (i,f,g,o) -> packed (i,f,o,g)

    w_l, b_l = [], []
    for (w_ih, w_hh, b) in raw["lstm"]:
        in_dim = w_ih.shape[1]
        w_p = jnp.zeros((2 * HP, 4 * HP), jnp.float32)   # rows 0:HP=W_ih, HP:2HP=W_hh
        b_p = jnp.zeros((1, 4 * HP), jnp.float32)
        for g in range(4):
            d = GATE_DST[g]
            w_p = w_p.at[:in_dim, d * HP:d * HP + H].set(w_ih[g])
            w_p = w_p.at[HP:HP + H, d * HP:d * HP + H].set(w_hh[g])
            b_p = b_p.at[:, d * HP:d * HP + H].set(b[g])
        w_l.append(w_p.astype(jnp.bfloat16))             # padded cols stay exactly 0
        b_l.append(b_p)

    (w1, b1), (w2, b2), (w3, b3) = raw["linear"]
    d1, d2, d3 = w1.shape[1], w2.shape[1], w3.shape[1]
    w1_p = jnp.zeros((seq_len * HP, HP), jnp.float32)    # rows re-indexed for padded H
    for s in range(seq_len):
        w1_p = w1_p.at[s * HP:s * HP + H, :d1].set(w1[s * H:(s + 1) * H, :])
    b1_p = jnp.zeros((1, HP), jnp.float32).at[:, :d1].set(b1)
    w2_p = jnp.zeros((HP, HP), jnp.float32).at[:d1, :d2].set(w2)
    b2_p = jnp.zeros((1, HP), jnp.float32).at[:, :d2].set(b2)
    w3_p = jnp.zeros((HP, HP), jnp.float32).at[:d2, :d3].set(w3)
    b3_p = jnp.zeros((1, HP), jnp.float32).at[:, :d3].set(b3)

    return {
        "w_lstm": jnp.stack(w_l),                        # (L, 256, 512) bf16, HBM-resident
        "b": jnp.stack(b_l),                             # (L, 1, 512)  f32
        "w1": w1_p.astype(jnp.bfloat16), "b1": b1_p,
        "w2": w2_p.astype(jnp.bfloat16), "b2": b2_p,
        "w3": w3_p.astype(jnp.bfloat16), "b3": b3_p,
        "predict_day": d3,
    }


# ----------------------------- pure-JAX reference (for validation) ------------------
def mv_lstm_reference(raw, x):
    B, S, _ = x.shape
    hp = jax.lax.Precision.HIGHEST
    h_seq = jnp.transpose(x, (1, 0, 2)).astype(jnp.float32)     # (S, B, F)
    for (w_ih, w_hh, b) in raw["lstm"]:
        h = jnp.zeros((B, N_HIDDEN), jnp.float32)
        c = jnp.zeros((B, N_HIDDEN), jnp.float32)
        outs = []
        for t in range(S):
            x_t = h_seq[t]
            def gate(g):
                return (jnp.dot(x_t, w_ih[g], precision=hp)
                        + jnp.dot(h, w_hh[g], precision=hp) + b[g])
            i = jax.nn.sigmoid(gate(0)); f = jax.nn.sigmoid(gate(1))
            g_ = jnp.tanh(gate(2));      o = jax.nn.sigmoid(gate(3))
            c = f * c + i * g_
            h = o * jnp.tanh(c)
            outs.append(h)
        h_seq = jnp.stack(outs, axis=0)
    flat = jnp.transpose(h_seq, (1, 0, 2)).reshape(B, S * N_HIDDEN)
    for (w, bb) in raw["linear"]:
        flat = jnp.dot(flat, w, precision=hp) + bb
    return flat


# ----------------------------- main --------------------------------------------------
if __name__ == "__main__":
    batch, seq_len, n_features, predict_day = 2, 8, 8, 5
    key = jax.random.PRNGKey(0)
    pkey, xkey = jax.random.split(key)

    raw = init_params(pkey, n_features, seq_len, predict_day)
    params = prepare_params(raw, n_features, seq_len, predict_day)
    x = jax.random.normal(xkey, (batch, seq_len, n_features), jnp.float32)

    out = mv_lstm_forward(params, x)
    out = jax.block_until_ready(out)

    assert out.shape == (batch, predict_day), out.shape
    assert bool(jnp.all(jnp.isfinite(out)))

    ref = mv_lstm_reference(raw, x)
    max_diff = float(jnp.max(jnp.abs(out - ref)))
    # bf16-stored weights (perf guidance) vs. f32 HIGHEST reference: looser bound than
    # the all-f32 version's 5e-3, still tight relative to O(0.1-1) output magnitudes.
    assert max_diff < 3e-2, f"mismatch vs reference: {max_diff}"

    print("KERNEL_OK")
</pallas_src>

<mosaic_0001>
module attributes {stable_mosaic.version = 11 : i64} {
  func.func @fused_mv_lstm_kernel(%arg0: memref<16x128xf32, #tpu.memory_space<vmem>>, %arg1: memref<6x256x512xbf16, #tpu.memory_space<any>>, %arg2: memref<6x1x512xf32, #tpu.memory_space<vmem>>, %arg3: memref<1024x128xbf16, #tpu.memory_space<vmem>>, %arg4: memref<1x128xf32, #tpu.memory_space<vmem>>, %arg5: memref<128x128xbf16, #tpu.memory_space<vmem>>, %arg6: memref<1x128xf32, #tpu.memory_space<vmem>>, %arg7: memref<128x128xbf16, #tpu.memory_space<vmem>>, %arg8: memref<1x128xf32, #tpu.memory_space<vmem>>, %arg9: memref<2x128xf32, #tpu.memory_space<vmem>>, %arg10: memref<2x256x512xbf16, #tpu.memory_space<vmem>>, %arg11: memref<2x!tpu.dma_semaphore, #tpu.memory_space<semaphore_mem>>, %arg12: memref<16x128xf32, #tpu.memory_space<vmem>>, %arg13: memref<2x1024xf32, #tpu.memory_space<vmem>>) attributes {dimension_semantics = [], scalar_prefetch = 0 : i64, scratch_operands = 4 : i64, tpu.core_type = #tpu.core_type<tc>} {
    %c0_i32 = arith.constant 0 : i32
    %c0_i32_0 = arith.constant 0 : i32
    %c0_i32_1 = arith.constant 0 : i32
    %c0_i32_2 = arith.constant 0 : i32
    %c0_i32_3 = arith.constant 0 : i32
    %0 = tpu.memref_slice %arg1[%c0_i32, %c0_i32_2, %c0_i32_3] : memref<6x256x512xbf16, #tpu.memory_space<any>> -> memref<1x256x512xbf16, #tpu.memory_space<any>>
    %1 = tpu.memref_squeeze %0 : memref<1x256x512xbf16, #tpu.memory_space<any>> -> memref<256x512xbf16, #tpu.memory_space<any>>
    %c0_i32_4 = arith.constant 0 : i32
    %c0_i32_5 = arith.constant 0 : i32
    %2 = tpu.memref_slice %arg10[%c0_i32_0, %c0_i32_4, %c0_i32_5] : memref<2x256x512xbf16, #tpu.memory_space<vmem>> -> memref<1x256x512xbf16, #tpu.memory_space<vmem>>
    %3 = tpu.memref_squeeze %2 : memref<1x256x512xbf16, #tpu.memory_space<vmem>> -> memref<256x512xbf16, #tpu.memory_space<vmem>>
    %4 = tpu.memref_slice %arg11[%c0_i32_1] : memref<2x!tpu.dma_semaphore, #tpu.memory_space<semaphore_mem>> -> memref<1x!tpu.dma_semaphore, #tpu.memory_space<semaphore_mem>>
    %5 = tpu.memref_squeeze %4 : memref<1x!tpu.dma_semaphore, #tpu.memory_space<semaphore_mem>> -> memref<!tpu.dma_semaphore, #tpu.memory_space<semaphore_mem>>
    tpu.enqueue_dma source(%1 : memref<256x512xbf16, #tpu.memory_space<any>>) target(%3 : memref<256x512xbf16, #tpu.memory_space<vmem>>) target_semaphore(%5 : memref<!tpu.dma_semaphore, #tpu.memory_space<semaphore_mem>>)
    %c0_i32_6 = arith.constant 0 : i32
    %c0_i32_7 = arith.constant 0 : i32
    %c0_i32_8 = arith.constant 0 : i32
    %c0_i32_9 = arith.constant 0 : i32
    %c0_i32_10 = arith.constant 0 : i32
    %6 = tpu.memref_slice %arg1[%c0_i32_6, %c0_i32_9, %c0_i32_10] : memref<6x256x512xbf16, #tpu.memory_space<any>> -> memref<1x256x512xbf16, #tpu.memory_space<any>>
    %7 = tpu.memref_squeeze %6 : memref<1x256x512xbf16, #tpu.memory_space<any>> -> memref<256x512xbf16, #tpu.memory_space<any>>
    %c0_i32_11 = arith.constant 0 : i32
    %c0_i32_12 = arith.constant 0 : i32
    %8 = tpu.memref_slice %arg10[%c0_i32_7, %c0_i32_11, %c0_i32_12] : memref<2x256x512xbf16, #tpu.memory_space<vmem>> -> memref<1x256x512xbf16, #tpu.memory_space<vmem>>
    %9 = tpu.memref_squeeze %8 : memref<1x256x512xbf16, #tpu.memory_space<vmem>> -> memref<256x512xbf16, #tpu.memory_space<vmem>>
    %10 = tpu.memref_slice %arg11[%c0_i32_8] : memref<2x!tpu.dma_semaphore, #tpu.memory_space<semaphore_mem>> -> memref<1x!tpu.dma_semaphore, #tpu.memory_space<semaphore_mem>>
    %11 = tpu.memref_squeeze %10 : memref<1x!tpu.dma_semaphore, #tpu.memory_space<semaphore_mem>> -> memref<!tpu.dma_semaphore, #tpu.memory_space<semaphore_mem>>
    tpu.wait_dma2 semaphore(%11 : memref<!tpu.dma_semaphore, #tpu.memory_space<semaphore_mem>>) src(%7 : memref<256x512xbf16, #tpu.memory_space<any>>) dst(%9 : memref<256x512xbf16, #tpu.memory_space<vmem>>)
    %c1_i32 = arith.constant 1 : i32
    %c1_i32_13 = arith.constant 1 : i32
    %c1_i32_14 = arith.constant 1 : i32
    %c0_i32_15 = arith.constant 0 : i32
    %c0_i32_16 = arith.constant 0 : i32
    %12 = tpu.memref_slice %arg1[%c1_i32, %c0_i32_15, %c0_i32_16] : memref<6x256x512xbf16, #tpu.memory_space<any>> -> memref<1x256x512xbf16, #tpu.memory_space<any>>
    %13 = tpu.memref_squeeze %12 : memref<1x256x512xbf16, #tpu.memory_space<any>> -> memref<256x512xbf16, #tpu.memory_space<any>>
    %c0_i32_17 = arith.constant 0 : i32
    %c0_i32_18 = arith.constant 0 : i32
    %14 = tpu.memref_slice %arg10[%c1_i32_13, %c0_i32_17, %c0_i32_18] : memref<2x256x512xbf16, #tpu.memory_space<vmem>> -> memref<1x256x512xbf16, #tpu.memory_space<vmem>>
    %15 = tpu.memref_squeeze %14 : memref<1x256x512xbf16, #tpu.memory_space<vmem>> -> memref<256x512xbf16, #tpu.memory_space<vmem>>
    %16 = tpu.memref_slice %arg11[%c1_i32_14] : memref<2x!tpu.dma_semaphore, #tpu.memory_space<semaphore_mem>> -> memref<1x!tpu.dma_semaphore, #tpu.memory_space<semaphore_mem>>
    %17 = tpu.memref_squeeze %16 : memref<1x!tpu.dma_semaphore, #tpu.memory_space<semaphore_mem>> -> memref<!tpu.dma_semaphore, #tpu.memory_space<semaphore_mem>>
    tpu.enqueue_dma source(%13 : memref<256x512xbf16, #tpu.memory_space<any>>) target(%15 : memref<256x512xbf16, #tpu.memory_space<vmem>>) target_semaphore(%17 : memref<!tpu.dma_semaphore, #tpu.memory_space<semaphore_mem>>)
    %c0 = arith.constant 0 : index
    %c0_19 = arith.constant 0 : index
    %c0_20 = arith.constant 0 : index
    %18 = vector.load %arg10[%c0, %c0_19, %c0_20] : memref<2x256x512xbf16, #tpu.memory_space<vmem>>, vector<1x128x512xbf16>
    %19 = vector.shape_cast %18 : vector<1x128x512xbf16> to vector<128x512xbf16>
    %c0_21 = arith.constant 0 : index
    %c128 = arith.constant 128 : index
    %c0_22 = arith.constant 0 : index
    %20 = vector.load %arg10[%c0_21, %c128, %c0_22] : memref<2x256x512xbf16, #tpu.memory_space<vmem>>, vector<1x128x512xbf16>
    %21 = vector.shape_cast %20 : vector<1x128x512xbf16> to vector<128x512xbf16>
    %c0_23 = arith.constant 0 : index
    %c0_24 = arith.constant 0 : index
    %22 = vector.load %arg0[%c0_23, %c0_24] : memref<16x128xf32, #tpu.memory_space<vmem>>, vector<16x128xf32>
    %23 = arith.truncf %22 : vector<16x128xf32> to vector<16x128xbf16>
    %cst = arith.constant dense<0.000000e+00> : vector<16x512xf32>
    %24 = tpu.matmul %23, %19, %cst {dimension_numbers = #tpu.dot_dimension_numbers<[1], [0], [0], [1], [0, 0, 1, 1], [], []>} : vector<16x128xbf16>, vector<128x512xbf16>, vector<16x512xf32> -> vector<16x512xf32>
    %c0_25 = arith.constant 0 : index
    %c0_26 = arith.constant 0 : index
    %c0_27 = arith.constant 0 : index
    %25 = vector.load %arg2[%c0_25, %c0_26, %c0_27] : memref<6x1x512xf32, #tpu.memory_space<vmem>>, vector<1x1x512xf32>
    %26 = vector.shape_cast %25 : vector<1x1x512xf32> to vector<1x512xf32>
    %27 = vector.broadcast %26 : vector<1x512xf32> to vector<16x512xf32>
    %28 = arith.addf %24, %27 : vector<16x512xf32>
    %cst_28 = arith.constant 0.000000e+00 : f32
    %29 = vector.broadcast %cst_28 : f32 to vector<2x128xf32>
    %cst_29 = arith.constant 0.000000e+00 : f32
    %30 = vector.broadcast %cst_29 : f32 to vector<2x128xf32>
    %31 = vector.extract_strided_slice %28 {offsets = [0, 0], sizes = [2, 512], strides = [1, 1]} : vector<16x512xf32> to vector<2x512xf32>
    %32 = arith.truncf %29 : vector<2x128xf32> to vector<2x128xbf16>
    %cst_30 = arith.constant dense<0.000000e+00> : vector<2x512xf32>
    %33 = tpu.matmul %32, %21, %cst_30 {dimension_numbers = #tpu.dot_dimension_numbers<[1], [0], [0], [1], [0, 0, 1, 1], [], []>} : vector<2x128xbf16>, vector<128x512xbf16>, vector<2x512xf32> -> vector<2x512xf32>
    %34 = arith.addf %31, %33 : vector<2x512xf32>
    %35 = vector.extract_strided_slice %34 {offsets = [0, 0], sizes = [2, 384], strides = [1, 1]} : vector<2x512xf32> to vector<2x384xf32>
    %36 = arith.negf %35 : vector<2x384xf32>
    %37 = math.exp %36 : vector<2x384xf32>
    %cst_31 = arith.constant 1.000000e+00 : f32
    %38 = vector.broadcast %cst_31 : f32 to vector<2x384xf32>
    %39 = arith.addf %38, %37 : vector<2x384xf32>
    %40 = arith.divf %38, %39 : vector<2x384xf32>
    %41 = vector.extract_strided_slice %40 {offsets = [0, 0], sizes = [2, 128], strides = [1, 1]} : vector<2x384xf32> to vector<2x128xf32>
    %42 = vector.extract_strided_slice %40 {offsets = [0, 128], sizes = [2, 128], strides = [1, 1]} : vector<2x384xf32> to vector<2x128xf32>
    %43 = vector.extract_strided_slice %40 {offsets = [0, 256], sizes = [2, 128], strides = [1, 1]} : vector<2x384xf32> to vector<2x128xf32>
    %44 = vector.extract_strided_slice %34 {offsets = [0, 384], sizes = [2, 128], strides = [1, 1]} : vector<2x512xf32> to vector<2x128xf32>
    %45 = math.tanh %44 : vector<2x128xf32>
    %46 = arith.mulf %42, %30 : vector<2x128xf32>
    %47 = arith.mulf %41, %45 : vector<2x128xf32>
    %48 = arith.addf %46, %47 : vector<2x128xf32>
    %49 = math.tanh %48 : vector<2x128xf32>
    %50 = arith.mulf %43, %49 : vector<2x128xf32>
    %c0_32 = arith.constant 0 : index
    %c0_33 = arith.constant 0 : index
    %51 = vector.load %arg12[%c0_32, %c0_33] : memref<16x128xf32, #tpu.memory_space<vmem>>, vector<2x128xf32>
    tpu.vector_store %arg12[%c0_32, %c0_33], %50 {strides = array<i32>} : memref<16x128xf32, #tpu.memory_space<vmem>>, vector<2x128xf32>,
    %52 = vector.extract_strided_slice %28 {offsets = [2, 0], sizes = [2, 512], strides = [1, 1]} : vector<16x512xf32> to vector<2x512xf32>
    %53 = arith.truncf %50 : vector<2x128xf32> to vector<2x128xbf16>
    %cst_34 = arith.constant dense<0.000000e+00> : vector<2x512xf32>
    %54 = tpu.matmul %53, %21, %cst_34 {dimension_numbers = #tpu.dot_dimension_numbers<[1], [0], [0], [1], [0, 0, 1, 1], [], []>} : vector<2x128xbf16>, vector<128x512xbf16>, vector<2x512xf32> -> vector<2x512xf32>
    %55 = arith.addf %52, %54 : vector<2x512xf32>
    %56 = vector.extract_strided_slice %55 {offsets = [0, 0], sizes = [2, 384], strides = [1, 1]} : vector<2x512xf32> to vector<2x384xf32>
    %57 = arith.negf %56 : vector<2x384xf32>
    %58 = math.exp %57 : vector<2x384xf32>
    %cst_35 = arith.constant 1.000000e+00 : f32
    %59 = vector.broadcast %cst_35 : f32 to vector<2x384xf32>
    %60 = arith.addf %59, %58 : vector<2x384xf32>
    %61 = arith.divf %59, %60 : vector<2x384xf32>
    %62 = vector.extract_strided_slice %61 {offsets = [0, 0], sizes = [2, 128], strides = [1, 1]} : vector<2x384xf32> to vector<2x128xf32>
    %63 = vector.extract_strided_slice %61 {offsets = [0, 128], sizes = [2, 128], strides = [1, 1]} : vector<2x384xf32> to vector<2x128xf32>
    %64 = vector.extract_strided_slice %61 {offsets = [0, 256], sizes = [2, 128], strides = [1, 1]} : vector<2x384xf32> to vector<2x128xf32>
    %65 = vector.extract_strided_slice %55 {offsets = [0, 384], sizes = [2, 128], strides = [1, 1]} : vector<2x512xf32> to vector<2x128xf32>
    %66 = math.tanh %65 : vector<2x128xf32>
    %67 = arith.mulf %63, %48 : vector<2x128xf32>
    %68 = arith.mulf %62, %66 : vector<2x128xf32>
    %69 = arith.addf %67, %68 : vector<2x128xf32>
    %70 = math.tanh %69 : vector<2x128xf32>
    %71 = arith.mulf %64, %70 : vector<2x128xf32>
    %c2 = arith.constant 2 : index
    %c0_36 = arith.constant 0 : index
    %72 = vector.load %arg12[%c2, %c0_36] : memref<16x128xf32, #tpu.memory_space<vmem>>, vector<2x128xf32>
    tpu.vector_store %arg12[%c2, %c0_36], %71 {strides = array<i32>} : memref<16x128xf32, #tpu.memory_space<vmem>>, vector<2x128xf32>,
    %73 = vector.extract_strided_slice %28 {offsets = [4, 0], sizes = [2, 512], strides = [1, 1]} : vector<16x512xf32> to vector<2x512xf32>
    %74 = arith.truncf %71 : vector<2x128xf32> to vector<2x128xbf16>
    %cst_37 = arith.constant dense<0.000000e+00> : vector<2x512xf32>
    %75 = tpu.matmul %74, %21, %cst_37 {dimension_numbers = #tpu.dot_dimension_numbers<[1], [0], [0], [1], [0, 0, 1, 1], [], []>} : vector<2x128xbf16>, vector<128x512xbf16>, vector<2x512xf32> -> vector<2x512xf32>
    %76 = arith.addf %73, %75 : vector<2x512xf32>
    %77 = vector.extract_strided_slice %76 {offsets = [0, 0], sizes = [2, 384], strides = [1, 1]} : vector<2x512xf32> to vector<2x384xf32>
    %78 = arith.negf %77 : vector<2x384xf32>
    %79 = math.exp %78 : vector<2x384xf32>
    %cst_38 = arith.constant 1.000000e+00 : f32
    %80 = vector.broadcast %cst_38 : f32 to vector<2x384xf32>
    %81 = arith.addf %80, %79 : vector<2x384xf32>
    %82 = arith.divf %80, %81 : vector<2x384xf32>
    %83 = vector.extract_strided_slice %82 {offsets = [0, 0], sizes = [2, 128], strides = [1, 1]} : vector<2x384xf32> to vector<2x128xf32>
    %84 = vector.extract_strided_slice %82 {offsets = [0, 128], sizes = [2, 128], strides = [1, 1]} : vector<2x384xf32> to vector<2x128xf32>
    %85 = vector.extract_strided_slice %82 {offsets = [0, 256], sizes = [2, 128], strides = [1, 1]} : vector<2x384xf32> to vector<2x128xf32>
    %86 = vector.extract_strided_slice %76 {offsets = [0, 384], sizes = [2, 128], strides = [1, 1]} : vector<2x512xf32> to vector<2x128xf32>
    %87 = math.tanh %86 : vector<2x128xf32>
    %88 = arith.mulf %84, %69 : vector<2x128xf32>
    %89 = arith.mulf %83, %87 : vector<2x128xf32>
    %90 = arith.addf %88, %89 : vector<2x128xf32>
    %91 = math.tanh %90 : vector<2x128xf32>
    %92 = arith.mulf %85, %91 : vector<2x128xf32>
    %c4 = arith.constant 4 : index
    %c0_39 = arith.constant 0 : index
    %93 = vector.load %arg12[%c4, %c0_39] : memref<16x128xf32, #tpu.memory_space<vmem>>, vector<2x128xf32>
    tpu.vector_store %arg12[%c4, %c0_39], %92 {strides = array<i32>} : memref<16x128xf32, #tpu.memory_space<vmem>>, vector<2x128xf32>,
    %94 = vector.extract_strided_slice %28 {offsets = [6, 0], sizes = [2, 512], strides = [1, 1]} : vector<16x512xf32> to vector<2x512xf32>
    %95 = arith.truncf %92 : vector<2x128xf32> to vector<2x128xbf16>
    %cst_40 = arith.constant dense<0.000000e+00> : vector<2x512xf32>
    %96 = tpu.matmul %95, %21, %cst_40 {dimension_numbers = #tpu.dot_dimension_numbers<[1], [0], [0], [1], [0, 0, 1, 1], [], []>} : vector<2x128xbf16>, vector<128x512xbf16>, vector<2x512xf32> -> vector<2x512xf32>
    %97 = arith.addf %94, %96 : vector<2x512xf32>
    %98 = vector.extract_strided_slice %97 {offsets = [0, 0], sizes = [2, 384], strides = [1, 1]} : vector<2x512xf32> to vector<2x384xf32>
    %99 = arith.negf %98 : vector<2x384xf32>
    %100 = math.exp %99 : vector<2x384xf32>
    %cst_41 = arith.constant 1.000000e+00 : f32
    %101 = vector.broadcast %cst_41 : f32 to vector<2x384xf32>
    %102 = arith.addf %101, %100 : vector<2x384xf32>
    %103 = arith.divf %101, %102 : vector<2x384xf32>
    %104 = vector.extract_strided_slice %103 {offsets = [0, 0], sizes = [2, 128], strides = [1, 1]} : vector<2x384xf32> to vector<2x128xf32>
    %105 = vector.extract_strided_slice %103 {offsets = [0, 128], sizes = [2, 128], strides = [1, 1]} : vector<2x384xf32> to vector<2x128xf32>
    %106 = vector.extract_strided_slice %103 {offsets = [0, 256], sizes = [2, 128], strides = [1, 1]} : vector<2x384xf32> to vector<2x128xf32>
    %107 = vector.extract_strided_slice %97 {offsets = [0, 384], sizes = [2, 128], strides = [1, 1]} : vector<2x512xf32> to vector<2x128xf32>
    %108 = math.tanh %107 : vector<2x128xf32>
    %109 = arith.mulf %105, %90 : vector<2x128xf32>
    %110 = arith.mulf %104, %108 : vector<2x128xf32>
    %111 = arith.addf %109, %110 : vector<2x128xf32>
    %112 = math.tanh %111 : vector<2x128xf32>
    %113 = arith.mulf %106, %112 : vector<2x128xf32>
    %c6 = arith.constant 6 : index
    %c0_42 = arith.constant 0 : index
    %114 = vector.load %arg12[%c6, %c0_42] : memref<16x128xf32, #tpu.memory_space<vmem>>, vector<2x128xf32>
    tpu.vector_store %arg12[%c6, %c0_42], %113 {strides = array<i32>} : memref<16x128xf32, #tpu.memory_space<vmem>>, vector<2x128xf32>,
    %115 = vector.extract_strided_slice %28 {offsets = [8, 0], sizes = [2, 512], strides = [1, 1]} : vector<16x512xf32> to vector<2x512xf32>
    %116 = arith.truncf %113 : vector<2x128xf32> to vector<2x128xbf16>
    %cst_43 = arith.constant dense<0.000000e+00> : vector<2x512xf32>
    %117 = tpu.matmul %116, %21, %cst_43 {dimension_numbers = #tpu.dot_dimension_numbers<[1], [0], [0], [1], [0, 0, 1, 1], [], []>} : vector<2x128xbf16>, vector<128x512xbf16>, vector<2x512xf32> -> vector<2x512xf32>
    %118 = arith.addf %115, %117 : vector<2x512xf32>
    %119 = vector.extract_strided_slice %118 {offsets = [0, 0], sizes = [2, 384], strides = [1, 1]} : vector<2x512xf32> to vector<2x384xf32>
    %120 = arith.negf %119 : vector<2x384xf32>
    %121 = math.exp %120 : vector<2x384xf32>
    %cst_44 = arith.constant 1.000000e+00 : f32
    %122 = vector.broadcast %cst_44 : f32 to vector<2x384xf32>
    %123 = arith.addf %122, %121 : vector<2x384xf32>
    %124 = arith.divf %122, %123 : vector<2x384xf32>
    %125 = vector.extract_strided_slice %124 {offsets = [0, 0], sizes = [2, 128], strides = [1, 1]} : vector<2x384xf32> to vector<2x128xf32>
    %126 = vector.extract_strided_slice %124 {offsets = [0, 128], sizes = [2, 128], strides = [1, 1]} : vector<2x384xf32> to vector<2x128xf32>
    %127 = vector.extract_strided_slice %124 {offsets = [0, 256], sizes = [2, 128], strides = [1, 1]} : vector<2x384xf32> to vector<2x128xf32>
    %128 = vector.extract_strided_slice %118 {offsets = [0, 384], sizes = [2, 128], strides = [1, 1]} : vector<2x512xf32> to vector<2x128xf32>
    %129 = math.tanh %128 : vector<2x128xf32>
    %130 = arith.mulf %126, %111 : vector<2x128xf32>
    %131 = arith.mulf %125, %129 : vector<2x128xf32>
    %132 = arith.addf %130, %131 : vector<2x128xf32>
    %133 = math.tanh %132 : vector<2x128xf32>
    %134 = arith.mulf %127, %133 : vector<2x128xf32>
    %c8 = arith.constant 8 : index
    %c0_45 = arith.constant 0 : index
    %135 = vector.load %arg12[%c8, %c0_45] : memref<16x128xf32, #tpu.memory_space<vmem>>, vector<2x128xf32>
    tpu.vector_store %arg12[%c8, %c0_45], %134 {strides = array<i32>} : memref<16x128xf32, #tpu.memory_space<vmem>>, vector<2x128xf32>,
    %136 = vector.extract_strided_slice %28 {offsets = [10, 0], sizes = [2, 512], strides = [1, 1]} : vector<16x512xf32> to vector<2x512xf32>
    %137 = arith.truncf %134 : vector<2x128xf32> to vector<2x128xbf16>
    %cst_46 = arith.constant dense<0.000000e+00> : vector<2x512xf32>
    %138 = tpu.matmul %137, %21, %cst_46 {dimension_numbers = #tpu.dot_dimension_numbers<[1], [0], [0], [1], [0, 0, 1, 1], [], []>} : vector<2x128xbf16>, vector<128x512xbf16>, vector<2x512xf32> -> vector<2x512xf32>
    %139 = arith.addf %136, %138 : vector<2x512xf32>
    %140 = vector.extract_strided_slice %139 {offsets = [0, 0], sizes = [2, 384], strides = [1, 1]} : vector<2x512xf32> to vector<2x384xf32>
    %141 = arith.negf %140 : vector<2x384xf32>
    %142 = math.exp %141 : vector<2x384xf32>
    %cst_47 = arith.constant 1.000000e+00 : f32
    %143 = vector.broadcast %cst_47 : f32 to vector<2x384xf32>
    %144 = arith.addf %143, %142 : vector<2x384xf32>
    %145 = arith.divf %143, %144 : vector<2x384xf32>
    %146 = vector.extract_strided_slice %145 {offsets = [0, 0], sizes = [2, 128], strides = [1, 1]} : vector<2x384xf32> to vector<2x128xf32>
    %147 = vector.extract_strided_slice %145 {offsets = [0, 128], sizes = [2, 128], strides = [1, 1]} : vector<2x384xf32> to vector<2x128xf32>
    %148 = vector.extract_strided_slice %145 {offsets = [0, 256], sizes = [2, 128], strides = [1, 1]} : vector<2x384xf32> to vector<2x128xf32>
    %149 = vector.extract_strided_slice %139 {offsets = [0, 384], sizes = [2, 128], strides = [1, 1]} : vector<2x512xf32> to vector<2x128xf32>
    %150 = math.tanh %149 : vector<2x128xf32>
    %151 = arith.mulf %147, %132 : vector<2x128xf32>
    %152 = arith.mulf %146, %150 : vector<2x128xf32>
    %153 = arith.addf %151, %152 : vector<2x128xf32>
    %154 = math.tanh %153 : vector<2x128xf32>
    %155 = arith.mulf %148, %154 : vector<2x128xf32>
    %c10 = arith.constant 10 : index
    %c0_48 = arith.constant 0 : index
    %156 = vector.load %arg12[%c10, %c0_48] : memref<16x128xf32, #tpu.memory_space<vmem>>, vector<2x128xf32>
    tpu.vector_store %arg12[%c10, %c0_48], %155 {strides = array<i32>} : memref<16x128xf32, #tpu.memory_space<vmem>>, vector<2x128xf32>,
    %157 = vector.extract_strided_slice %28 {offsets = [12, 0], sizes = [2, 512], strides = [1, 1]} : vector<16x512xf32> to vector<2x512xf32>
    %158 = arith.truncf %155 : vector<2x128xf32> to vector<2x128xbf16>
    %cst_49 = arith.constant dense<0.000000e+00> : vector<2x512xf32>
    %159 = tpu.matmul %158, %21, %cst_49 {dimension_numbers = #tpu.dot_dimension_numbers<[1], [0], [0], [1], [0, 0, 1, 1], [], []>} : vector<2x128xbf16>, vector<128x512xbf16>, vector<2x512xf32> -> vector<2x512xf32>
    %160 = arith.addf %157, %159 : vector<2x512xf32>
    %161 = vector.extract_strided_slice %160 {offsets = [0, 0], sizes = [2, 384], strides = [1, 1]} : vector<2x512xf32> to vector<2x384xf32>
    %162 = arith.negf %161 : vector<2x384xf32>
    %163 = math.exp %162 : vector<2x384xf32>
    %cst_50 = arith.constant 1.000000e+00 : f32
    %164 = vector.broadcast %cst_50 : f32 to vector<2x384xf32>
    %165 = arith.addf %164, %163 : vector<2x384xf32>
    %166 = arith.divf %164, %165 : vector<2x384xf32>
    %167 = vector.extract_strided_slice %166 {offsets = [0, 0], sizes = [2, 128], strides = [1, 1]} : vector<2x384xf32> to vector<2x128xf32>
    %168 = vector.extract_strided_slice %166 {offsets = [0, 128], sizes = [2, 128], strides = [1, 1]} : vector<2x384xf32> to vector<2x128xf32>
    %169 = vector.extract_strided_slice %166 {offsets = [0, 256], sizes = [2, 128], strides = [1, 1]} : vector<2x384xf32> to vector<2x128xf32>
    %170 = vector.extract_strided_slice %160 {offsets = [0, 384], sizes = [2, 128], strides = [1, 1]} : vector<2x512xf32> to vector<2x128xf32>
    %171 = math.tanh %170 : vector<2x128xf32>
    %172 = arith.mulf %168, %153 : vector<2x128xf32>
    %173 = arith.mulf %167, %171 : vector<2x128xf32>
    %174 = arith.addf %172, %173 : vector<2x128xf32>
    %175 = math.tanh %174 : vector<2x128xf32>
    %176 = arith.mulf %169, %175 : vector<2x128xf32>
    %c12 = arith.constant 12 : index
    %c0_51 = arith.constant 0 : index
    %177 = vector.load %arg12[%c12, %c0_51] : memref<16x128xf32, #tpu.memory_space<vmem>>, vector<2x128xf32>
    tpu.vector_store %arg12[%c12, %c0_51], %176 {strides = array<i32>} : memref<16x128xf32, #tpu.memory_space<vmem>>, vector<2x128xf32>,
    %178 = vector.extract_strided_slice %28 {offsets = [14, 0], sizes = [2, 512], strides = [1, 1]} : vector<16x512xf32> to vector<2x512xf32>
    %179 = arith.truncf %176 : vector<2x128xf32> to vector<2x128xbf16>
    %cst_52 = arith.constant dense<0.000000e+00> : vector<2x512xf32>
    %180 = tpu.matmul %179, %21, %cst_52 {dimension_numbers = #tpu.dot_dimension_numbers<[1], [0], [0], [1], [0, 0, 1, 1], [], []>} : vector<2x128xbf16>, vector<128x512xbf16>, vector<2x512xf32> -> vector<2x512xf32>
    %181 = arith.addf %178, %180 : vector<2x512xf32>
    %182 = vector.extract_strided_slice %181 {offsets = [0, 0], sizes = [2, 384], strides = [1, 1]} : vector<2x512xf32> to vector<2x384xf32>
    %183 = arith.negf %182 : vector<2x384xf32>
    %184 = math.exp %183 : vector<2x384xf32>
    %cst_53 = arith.constant 1.000000e+00 : f32
    %185 = vector.broadcast %cst_53 : f32 to vector<2x384xf32>
    %186 = arith.addf %185, %184 : vector<2x384xf32>
    %187 = arith.divf %185, %186 : vector<2x384xf32>
    %188 = vector.extract_strided_slice %187 {offsets = [0, 0], sizes = [2, 128], strides = [1, 1]} : vector<2x384xf32> to vector<2x128xf32>
    %189 = vector.extract_strided_slice %187 {offsets = [0, 128], sizes = [2, 128], strides = [1, 1]} : vector<2x384xf32> to vector<2x128xf32>
    %190 = vector.extract_strided_slice %187 {offsets = [0, 256], sizes = [2, 128], strides = [1, 1]} : vector<2x384xf32> to vector<2x128xf32>
    %191 = vector.extract_strided_slice %181 {offsets = [0, 384], sizes = [2, 128], strides = [1, 1]} : vector<2x512xf32> to vector<2x128xf32>
    %192 = math.tanh %191 : vector<2x128xf32>
    %193 = arith.mulf %189, %174 : vector<2x128xf32>
    %194 = arith.mulf %188, %192 : vector<2x128xf32>
    %195 = arith.addf %193, %194 : vector<2x128xf32>
    %196 = math.tanh %195 : vector<2x128xf32>
    %197 = arith.mulf %190, %196 : vector<2x128xf32>
    %c14 = arith.constant 14 : index
    %c0_54 = arith.constant 0 : index
    %198 = vector.load %arg12[%c14, %c0_54] : memref<16x128xf32, #tpu.memory_space<vmem>>, vector<2x128xf32>
    tpu.vector_store %arg12[%c14, %c0_54], %197 {strides = array<i32>} : memref<16x128xf32, #tpu.memory_space<vmem>>, vector<2x128xf32>,
    %c1_i32_55 = arith.constant 1 : i32
    %c1_i32_56 = arith.constant 1 : i32
    %c1_i32_57 = arith.constant 1 : i32
    %c0_i32_58 = arith.constant 0 : i32
    %c0_i32_59 = arith.constant 0 : i32
    %199 = tpu.memref_slice %arg1[%c1_i32_55, %c0_i32_58, %c0_i32_59] : memref<6x256x512xbf16, #tpu.memory_space<any>> -> memref<1x256x512xbf16, #tpu.memory_space<any>>
    %200 = tpu.memref_squeeze %199 : memref<1x256x512xbf16, #tpu.memory_space<any>> -> memref<256x512xbf16, #tpu.memory_space<any>>
    %c0_i32_60 = arith.constant 0 : i32
    %c0_i32_61 = arith.constant 0 : i32
    %201 = tpu.memref_slice %arg10[%c1_i32_56, %c0_i32_60, %c0_i32_61] : memref<2x256x512xbf16, #tpu.memory_space<vmem>> -> memref<1x256x512xbf16, #tpu.memory_space<vmem>>
    %202 = tpu.memref_squeeze %201 : memref<1x256x512xbf16, #tpu.memory_space<vmem>> -> memref<256x512xbf16, #tpu.memory_space<vmem>>
    %203 = tpu.memref_slice %arg11[%c1_i32_57] : memref<2x!tpu.dma_semaphore, #tpu.memory_space<semaphore_mem>> -> memref<1x!tpu.dma_semaphore, #tpu.memory_space<semaphore_mem>>
    %204 = tpu.memref_squeeze %203 : memref<1x!tpu.dma_semaphore, #tpu.memory_space<semaphore_mem>> -> memref<!tpu.dma_semaphore, #tpu.memory_space<semaphore_mem>>
    tpu.wait_dma2 semaphore(%204 : memref<!tpu.dma_semaphore, #tpu.memory_space<semaphore_mem>>) src(%200 : memref<256x512xbf16, #tpu.memory_space<any>>) dst(%202 : memref<256x512xbf16, #tpu.memory_space<vmem>>)
    %c2_i32 = arith.constant 2 : i32
    %c0_i32_62 = arith.constant 0 : i32
    %c0_i32_63 = arith.constant 0 : i32
    %c0_i32_64 = arith.constant 0 : i32
    %c0_i32_65 = arith.constant 0 : i32
    %205 = tpu.memref_slice %arg1[%c2_i32, %c0_i32_64, %c0_i32_65] : memref<6x256x512xbf16, #tpu.memory_space<any>> -> memref<1x256x512xbf16, #tpu.memory_space<any>>
    %206 = tpu.memref_squeeze %205 : memref<1x256x512xbf16, #tpu.memory_space<any>> -> memref<256x512xbf16, #tpu.memory_space<any>>
    %c0_i32_66 = arith.constant 0 : i32
    %c0_i32_67 = arith.constant 0 : i32
    %207 = tpu.memref_slice %arg10[%c0_i32_62, %c0_i32_66, %c0_i32_67] : memref<2x256x512xbf16, #tpu.memory_space<vmem>> -> memref<1x256x512xbf16, #tpu.memory_space<vmem>>
    %208 = tpu.memref_squeeze %207 : memref<1x256x512xbf16, #tpu.memory_space<vmem>> -> memref<256x512xbf16, #tpu.memory_space<vmem>>
    %209 = tpu.memref_slice %arg11[%c0_i32_63] : memref<2x!tpu.dma_semaphore, #tpu.memory_space<semaphore_mem>> -> memref<1x!tpu.dma_semaphore, #tpu.memory_space<semaphore_mem>>
    %210 = tpu.memref_squeeze %209 : memref<1x!tpu.dma_semaphore, #tpu.memory_space<semaphore_mem>> -> memref<!tpu.dma_semaphore, #tpu.memory_space<semaphore_mem>>
    tpu.enqueue_dma source(%206 : memref<256x512xbf16, #tpu.memory_space<any>>) target(%208 : memref<256x512xbf16, #tpu.memory_space<vmem>>) target_semaphore(%210 : memref<!tpu.dma_semaphore, #tpu.memory_space<semaphore_mem>>)
    %c1 = arith.constant 1 : index
    %c0_68 = arith.constant 0 : index
    %c0_69 = arith.constant 0 : index
    %211 = vector.load %arg10[%c1, %c0_68, %c0_69] : memref<2x256x512xbf16, #tpu.memory_space<vmem>>, vector<1x128x512xbf16>
    %212 = vector.shape_cast %211 : vector<1x128x512xbf16> to vector<128x512xbf16>
    %c1_70 = arith.constant 1 : index
    %c128_71 = arith.constant 128 : index
    %c0_72 = arith.constant 0 : index
    %213 = vector.load %arg10[%c1_70, %c128_71, %c0_72] : memref<2x256x512xbf16, #tpu.memory_space<vmem>>, vector<1x128x512xbf16>
    %214 = vector.shape_cast %213 : vector<1x128x512xbf16> to vector<128x512xbf16>
    %c0_73 = arith.constant 0 : index
    %c0_74 = arith.constant 0 : index
    %215 = vector.load %arg12[%c0_73, %c0_74] : memref<16x128xf32, #tpu.memory_space<vmem>>, vector<16x128xf32>
    %216 = arith.truncf %215 : vector<16x128xf32> to vector<16x128xbf16>
    %cst_75 = arith.constant dense<0.000000e+00> : vector<16x512xf32>
    %217 = tpu.matmul %216, %212, %cst_75 {dimension_numbers = #tpu.dot_dimension_numbers<[1], [0], [0], [1], [0, 0, 1, 1], [], []>} : vector<16x128xbf16>, vector<128x512xbf16>, vector<16x512xf32> -> vector<16x512xf32>
    %c1_76 = arith.constant 1 : index
    %c0_77 = arith.constant 0 : index
    %c0_78 = arith.constant 0 : index
    %218 = vector.load %arg2[%c1_76, %c0_77, %c0_78] : memref<6x1x512xf32, #tpu.memory_space<vmem>>, vector<1x1x512xf32>
    %219 = vector.shape_cast %218 : vector<1x1x512xf32> to vector<1x512xf32>
    %220 = vector.broadcast %219 : vector<1x512xf32> to vector<16x512xf32>
    %221 = arith.addf %217, %220 : vector<16x512xf32>
    %cst_79 = arith.constant 0.000000e+00 : f32
    %222 = vector.broadcast %cst_79 : f32 to vector<2x128xf32>
    %cst_80 = arith.constant 0.000000e+00 : f32
    %223 = vector.broadcast %cst_80 : f32 to vector<2x128xf32>
    %224 = vector.extract_strided_slice %221 {offsets = [0, 0], sizes = [2, 512], strides = [1, 1]} : vector<16x512xf32> to vector<2x512xf32>
    %225 = arith.truncf %222 : vector<2x128xf32> to vector<2x128xbf16>
    %cst_81 = arith.constant dense<0.000000e+00> : vector<2x512xf32>
    %226 = tpu.matmul %225, %214, %cst_81 {dimension_numbers = #tpu.dot_dimension_numbers<[1], [0], [0], [1], [0, 0, 1, 1], [], []>} : vector<2x128xbf16>, vector<128x512xbf16>, vector<2x512xf32> -> vector<2x512xf32>
    %227 = arith.addf %224, %226 : vector<2x512xf32>
    %228 = vector.extract_strided_slice %227 {offsets = [0, 0], sizes = [2, 384], strides = [1, 1]} : vector<2x512xf32> to vector<2x384xf32>
    %229 = arith.negf %228 : vector<2x384xf32>
    %230 = math.exp %229 : vector<2x384xf32>
    %cst_82 = arith.constant 1.000000e+00 : f32
    %231 = vector.broadcast %cst_82 : f32 to vector<2x384xf32>
    %232 = arith.addf %231, %230 : vector<2x384xf32>
    %233 = arith.divf %231, %232 : vector<2x384xf32>
    %234 = vector.extract_strided_slice %233 {offsets = [0, 0], sizes = [2, 128], strides = [1, 1]} : vector<2x384xf32> to vector<2x128xf32>
    %235 = vector.extract_strided_slice %233 {offsets = [0, 128], sizes = [2, 128], strides = [1, 1]} : vector<2x384xf32> to vector<2x128xf32>
    %236 = vector.extract_strided_slice %233 {offsets = [0, 256], sizes = [2, 128], strides = [1, 1]} : vector<2x384xf32> to vector<2x128xf32>
    %237 = vector.extract_strided_slice %227 {offsets = [0, 384], sizes = [2, 128], strides = [1, 1]} : vector<2x512xf32> to vector<2x128xf32>
    %238 = math.tanh %237 : vector<2x128xf32>
    %239 = arith.mulf %235, %223 : vector<2x128xf32>
    %240 = arith.mulf %234, %238 : vector<2x128xf32>
    %241 = arith.addf %239, %240 : vector<2x128xf32>
    %242 = math.tanh %241 : vector<2x128xf32>
    %243 = arith.mulf %236, %242 : vector<2x128xf32>
    %c0_83 = arith.constant 0 : index
    %c0_84 = arith.constant 0 : index
    %244 = vector.load %arg12[%c0_83, %c0_84] : memref<16x128xf32, #tpu.memory_space<vmem>>, vector<2x128xf32>
    tpu.vector_store %arg12[%c0_83, %c0_84], %243 {strides = array<i32>} : memref<16x128xf32, #tpu.memory_space<vmem>>, vector<2x128xf32>,
    %245 = vector.extract_strided_slice %221 {offsets = [2, 0], sizes = [2, 512], strides = [1, 1]} : vector<16x512xf32> to vector<2x512xf32>
    %246 = arith.truncf %243 : vector<2x128xf32> to vector<2x128xbf16>
    %cst_85 = arith.constant dense<0.000000e+00> : vector<2x512xf32>
    %247 = tpu.matmul %246, %214, %cst_85 {dimension_numbers = #tpu.dot_dimension_numbers<[1], [0], [0], [1], [0, 0, 1, 1], [], []>} : vector<2x128xbf16>, vector<128x512xbf16>, vector<2x512xf32> -> vector<2x512xf32>
    %248 = arith.addf %245, %247 : vector<2x512xf32>
    %249 = vector.extract_strided_slice %248 {offsets = [0, 0], sizes = [2, 384], strides = [1, 1]} : vector<2x512xf32> to vector<2x384xf32>
    %250 = arith.negf %249 : vector<2x384xf32>
    %251 = math.exp %250 : vector<2x384xf32>
    %cst_86 = arith.constant 1.000000e+00 : f32
    %252 = vector.broadcast %cst_86 : f32 to vector<2x384xf32>
    %253 = arith.addf %252, %251 : vector<2x384xf32>
    %254 = arith.divf %252, %253 : vector<2x384xf32>
    %255 = vector.extract_strided_slice %254 {offsets = [0, 0], sizes = [2, 128], strides = [1, 1]} : vector<2x384xf32> to vector<2x128xf32>
    %256 = vector.extract_strided_slice %254 {offsets = [0, 128], sizes = [2, 128], strides = [1, 1]} : vector<2x384xf32> to vector<2x128xf32>
    %257 = vector.extract_strided_slice %254 {offsets = [0, 256], sizes = [2, 128], strides = [1, 1]} : vector<2x384xf32> to vector<2x128xf32>
    %258 = vector.extract_strided_slice %248 {offsets = [0, 384], sizes = [2, 128], strides = [1, 1]} : vector<2x512xf32> to vector<2x128xf32>
    %259 = math.tanh %258 : vector<2x128xf32>
    %260 = arith.mulf %256, %241 : vector<2x128xf32>
    %261 = arith.mulf %255, %259 : vector<2x128xf32>
    %262 = arith.addf %260, %261 : vector<2x128xf32>
    %263 = math.tanh %262 : vector<2x128xf32>
    %264 = arith.mulf %257, %263 : vector<2x128xf32>
    %c2_87 = arith.constant 2 : index
    %c0_88 = arith.constant 0 : index
    %265 = vector.load %arg12[%c2_87, %c0_88] : memref<16x128xf32, #tpu.memory_space<vmem>>, vector<2x128xf32>
    tpu.vector_store %arg12[%c2_87, %c0_88], %264 {strides = array<i32>} : memref<16x128xf32, #tpu.memory_space<vmem>>, vector<2x128xf32>,
    %266 = vector.extract_strided_slice %221 {offsets = [4, 0], sizes = [2, 512], strides = [1, 1]} : vector<16x512xf32> to vector<2x512xf32>
    %267 = arith.truncf %264 : vector<2x128xf32> to vector<2x128xbf16>
    %cst_89 = arith.constant dense<0.000000e+00> : vector<2x512xf32>
    %268 = tpu.matmul %267, %214, %cst_89 {dimension_numbers = #tpu.dot_dimension_numbers<[1], [0], [0], [1], [0, 0, 1, 1], [], []>} : vector<2x128xbf16>, vector<128x512xbf16>, vector<2x512xf32> -> vector<2x512xf32>
    %269 = arith.addf %266, %268 : vector<2x512xf32>
    %270 = vector.extract_strided_slice %269 {offsets = [0, 0], sizes = [2, 384], strides = [1, 1]} : vector<2x512xf32> to vector<2x384xf32>
    %271 = arith.negf %270 : vector<2x384xf32>
    %272 = math.exp %271 : vector<2x384xf32>
    %cst_90 = arith.constant 1.000000e+00 : f32
    %273 = vector.broadcast %cst_90 : f32 to vector<2x384xf32>
    %274 = arith.addf %273, %272 : vector<2x384xf32>
    %275 = arith.divf %273, %274 : vector<2x384xf32>
    %276 = vector.extract_strided_slice %275 {offsets = [0, 0], sizes = [2, 128], strides = [1, 1]} : vector<2x384xf32> to vector<2x128xf32>
    %277 = vector.extract_strided_slice %275 {offsets = [0, 128], sizes = [2, 128], strides = [1, 1]} : vector<2x384xf32> to vector<2x128xf32>
    %278 = vector.extract_strided_slice %275 {offsets = [0, 256], sizes = [2, 128], strides = [1, 1]} : vector<2x384xf32> to vector<2x128xf32>
    %279 = vector.extract_strided_slice %269 {offsets = [0, 384], sizes = [2, 128], strides = [1, 1]} : vector<2x512xf32> to vector<2x128xf32>
    %280 = math.tanh %279 : vector<2x128xf32>
    %281 = arith.mulf %277, %262 : vector<2x128xf32>
    %282 = arith.mulf %276, %280 : vector<2x128xf32>
    %283 = arith.addf %281, %282 : vector<2x128xf32>
    %284 = math.tanh %283 : vector<2x128xf32>
    %285 = arith.mulf %278, %284 : vector<2x128xf32>
    %c4_91 = arith.constant 4 : index
    %c0_92 = arith.constant 0 : index
    %286 = vector.load %arg12[%c4_91, %c0_92] : memref<16x128xf32, #tpu.memory_space<vmem>>, vector<2x128xf32>
    tpu.vector_store %arg12[%c4_91, %c0_92], %285 {strides = array<i32>} : memref<16x128xf32, #tpu.memory_space<vmem>>, vector<2x128xf32>,
    %287 = vector.extract_strided_slice %221 {offsets = [6, 0], sizes = [2, 512], strides = [1, 1]} : vector<16x512xf32> to vector<2x512xf32>
    %288 = arith.truncf %285 : vector<2x128xf32> to vector<2x128xbf16>
    %cst_93 = arith.constant dense<0.000000e+00> : vector<2x512xf32>
    %289 = tpu.matmul %288, %214, %cst_93 {dimension_numbers = #tpu.dot_dimension_numbers<[1], [0], [0], [1], [0, 0, 1, 1], [], []>} : vector<2x128xbf16>, vector<128x512xbf16>, vector<2x512xf32> -> vector<2x512xf32>
    %290 = arith.addf %287, %289 : vector<2x512xf32>
    %291 = vector.extract_strided_slice %290 {offsets = [0, 0], sizes = [2, 384], strides = [1, 1]} : vector<2x512xf32> to vector<2x384xf32>
    %292 = arith.negf %291 : vector<2x384xf32>
    %293 = math.exp %292 : vector<2x384xf32>
    %cst_94 = arith.constant 1.000000e+00 : f32
    %294 = vector.broadcast %cst_94 : f32 to vector<2x384xf32>
    %295 = arith.addf %294, %293 : vector<2x384xf32>
    %296 = arith.divf %294, %295 : vector<2x384xf32>
    %297 = vector.extract_strided_slice %296 {offsets = [0, 0], sizes = [2, 128], strides = [1, 1]} : vector<2x384xf32> to vector<2x128xf32>
    %298 = vector.extract_strided_slice %296 {offsets = [0, 128], sizes = [2, 128], strides = [1, 1]} : vector<2x384xf32> to vector<2x128xf32>
    %299 = vector.extract_strided_slice %296 {offsets = [0, 256], sizes = [2, 128], strides = [1, 1]} : vector<2x384xf32> to vector<2x128xf32>
    %300 = vector.extract_strided_slice %290 {offsets = [0, 384], sizes = [2, 128], strides = [1, 1]} : vector<2x512xf32> to vector<2x128xf32>
    %301 = math.tanh %300 : vector<2x128xf32>
    %302 = arith.mulf %298, %283 : vector<2x128xf32>
    %303 = arith.mulf %297, %301 : vector<2x128xf32>
    %304 = arith.addf %302, %303 : vector<2x128xf32>
    %305 = math.tanh %304 : vector<2x128xf32>
    %306 = arith.mulf %299, %305 : vector<2x128xf32>
    %c6_95 = arith.constant 6 : index
    %c0_96 = arith.constant 0 : index
    %307 = vector.load %arg12[%c6_95, %c0_96] : memref<16x128xf32, #tpu.memory_space<vmem>>, vector<2x128xf32>
    tpu.vector_store %arg12[%c6_95, %c0_96], %306 {strides = array<i32>} : memref<16x128xf32, #tpu.memory_space<vmem>>, vector<2x128xf32>,
    %308 = vector.extract_strided_slice %221 {offsets = [8, 0], sizes = [2, 512], strides = [1, 1]} : vector<16x512xf32> to vector<2x512xf32>
    %309 = arith.truncf %306 : vector<2x128xf32> to vector<2x128xbf16>
    %cst_97 = arith.constant dense<0.000000e+00> : vector<2x512xf32>
    %310 = tpu.matmul %309, %214, %cst_97 {dimension_numbers = #tpu.dot_dimension_numbers<[1], [0], [0], [1], [0, 0, 1, 1], [], []>} : vector<2x128xbf16>, vector<128x512xbf16>, vector<2x512xf32> -> vector<2x512xf32>
    %311 = arith.addf %308, %310 : vector<2x512xf32>
    %312 = vector.extract_strided_slice %311 {offsets = [0, 0], sizes = [2, 384], strides = [1, 1]} : vector<2x512xf32> to vector<2x384xf32>
    %313 = arith.negf %312 : vector<2x384xf32>
    %314 = math.exp %313 : vector<2x384xf32>
    %cst_98 = arith.constant 1.000000e+00 : f32
    %315 = vector.broadcast %cst_98 : f32 to vector<2x384xf32>
    %316 = arith.addf %315, %314 : vector<2x384xf32>
    %317 = arith.divf %315, %316 : vector<2x384xf32>
    %318 = vector.extract_strided_slice %317 {offsets = [0, 0], sizes = [2, 128], strides = [1, 1]} : vector<2x384xf32> to vector<2x128xf32>
    %319 = vector.extract_strided_slice %317 {offsets = [0, 128], sizes = [2, 128], strides = [1, 1]} : vector<2x384xf32> to vector<2x128xf32>
    %320 = vector.extract_strided_slice %317 {offsets = [0, 256], sizes = [2, 128], strides = [1, 1]} : vector<2x384xf32> to vector<2x128xf32>
    %321 = vector.extract_strided_slice %311 {offsets = [0, 384], sizes = [2, 128], strides = [1, 1]} : vector<2x512xf32> to vector<2x128xf32>
    %322 = math.tanh %321 : vector<2x128xf32>
    %323 = arith.mulf %319, %304 : vector<2x128xf32>
    %324 = arith.mulf %318, %322 : vector<2x128xf32>
    %325 = arith.addf %323, %324 : vector<2x128xf32>
    %326 = math.tanh %325 : vector<2x128xf32>
    %327 = arith.mulf %320, %326 : vector<2x128xf32>
    %c8_99 = arith.constant 8 : index
    %c0_100 = arith.constant 0 : index
    %328 = vector.load %arg12[%c8_99, %c0_100] : memref<16x128xf32, #tpu.memory_space<vmem>>, vector<2x128xf32>
    tpu.vector_store %arg12[%c8_99, %c0_100], %327 {strides = array<i32>} : memref<16x128xf32, #tpu.memory_space<vmem>>, vector<2x128xf32>,
    %329 = vector.extract_strided_slice %221 {offsets = [10, 0], sizes = [2, 512], strides = [1, 1]} : vector<16x512xf32> to vector<2x512xf32>
    %330 = arith.truncf %327 : vector<2x128xf32> to vector<2x128xbf16>
    %cst_101 = arith.constant dense<0.000000e+00> : vector<2x512xf32>
    %331 = tpu.matmul %330, %214, %cst_101 {dimension_numbers = #tpu.dot_dimension_numbers<[1], [0], [0], [1], [0, 0, 1, 1], [], []>} : vector<2x128xbf16>, vector<128x512xbf16>, vector<2x512xf32> -> vector<2x512xf32>
    %332 = arith.addf %329, %331 : vector<2x512xf32>
    %333 = vector.extract_strided_slice %332 {offsets = [0, 0], sizes = [2, 384], strides = [1, 1]} : vector<2x512xf32> to vector<2x384xf32>
    %334 = arith.negf %333 : vector<2x384xf32>
    %335 = math.exp %334 : vector<2x384xf32>
    %cst_102 = arith.constant 1.000000e+00 : f32
    %336 = vector.broadcast %cst_102 : f32 to vector<2x384xf32>
    %337 = arith.addf %336, %335 : vector<2x384xf32>
    %338 = arith.divf %336, %337 : vector<2x384xf32>
    %339 = vector.extract_strided_slice %338 {offsets = [0, 0], sizes = [2, 128], strides = [1, 1]} : vector<2x384xf32> to vector<2x128xf32>
    %340 = vector.extract_strided_slice %338 {offsets = [0, 128], sizes = [2, 128], strides = [1, 1]} : vector<2x384xf32> to vector<2x128xf32>
    %341 = vector.extract_strided_slice %338 {offsets = [0, 256], sizes = [2, 128], strides = [1, 1]} : vector<2x384xf32> to vector<2x128xf32>
    %342 = vector.extract_strided_slice %332 {offsets = [0, 384], sizes = [2, 128], strides = [1, 1]} : vector<2x512xf32> to vector<2x128xf32>
    %343 = math.tanh %342 : vector<2x128xf32>
    %344 = arith.mulf %340, %325 : vector<2x128xf32>
    %345 = arith.mulf %339, %343 : vector<2x128xf32>
    %346 = arith.addf %344, %345 : vector<2x128xf32>
    %347 = math.tanh %346 : vector<2x128xf32>
    %348 = arith.mulf %341, %347 : vector<2x128xf32>
    %c10_103 = arith.constant 10 : index
    %c0_104 = arith.constant 0 : index
    %349 = vector.load %arg12[%c10_103, %c0_104] : memref<16x128xf32, #tpu.memory_space<vmem>>, vector<2x128xf32>
    tpu.vector_store %arg12[%c10_103, %c0_104], %348 {strides = array<i32>} : memref<16x128xf32, #tpu.memory_space<vmem>>, vector<2x128xf32>,
    %350 = vector.extract_strided_slice %221 {offsets = [12, 0], sizes = [2, 512], strides = [1, 1]} : vector<16x512xf32> to vector<2x512xf32>
    %351 = arith.truncf %348 : vector<2x128xf32> to vector<2x128xbf16>
    %cst_105 = arith.constant dense<0.000000e+00> : vector<2x512xf32>
    %352 = tpu.matmul %351, %214, %cst_105 {dimension_numbers = #tpu.dot_dimension_numbers<[1], [0], [0], [1], [0, 0, 1, 1], [], []>} : vector<2x128xbf16>, vector<128x512xbf16>, vector<2x512xf32> -> vector<2x512xf32>
    %353 = arith.addf %350, %352 : vector<2x512xf32>
    %354 = vector.extract_strided_slice %353 {offsets = [0, 0], sizes = [2, 384], strides = [1, 1]} : vector<2x512xf32> to vector<2x384xf32>
    %355 = arith.negf %354 : vector<2x384xf32>
    %356 = math.exp %355 : vector<2x384xf32>
    %cst_106 = arith.constant 1.000000e+00 : f32
    %357 = vector.broadcast %cst_106 : f32 to vector<2x384xf32>
    %358 = arith.addf %357, %356 : vector<2x384xf32>
    %359 = arith.divf %357, %358 : vector<2x384xf32>
    %360 = vector.extract_strided_slice %359 {offsets = [0, 0], sizes = [2, 128], strides = [1, 1]} : vector<2x384xf32> to vector<2x128xf32>
    %361 = vector.extract_strided_slice %359 {offsets = [0, 128], sizes = [2, 128], strides = [1, 1]} : vector<2x384xf32> to vector<2x128xf32>
    %362 = vector.extract_strided_slice %359 {offsets = [0, 256], sizes = [2, 128], strides = [1, 1]} : vector<2x384xf32> to vector<2x128xf32>
    %363 = vector.extract_strided_slice %353 {offsets = [0, 384], sizes = [2, 128], strides = [1, 1]} : vector<2x512xf32> to vector<2x128xf32>
    %364 = math.tanh %363 : vector<2x128xf32>
    %365 = arith.mulf %361, %346 : vector<2x128xf32>
    %366 = arith.mulf %360, %364 : vector<2x128xf32>
    %367 = arith.addf %365, %366 : vector<2x128xf32>
    %368 = math.tanh %367 : vector<2x128xf32>
    %369 = arith.mulf %362, %368 : vector<2x128xf32>
    %c12_107 = arith.constant 12 : index
    %c0_108 = arith.constant 0 : index
    %370 = vector.load %arg12[%c12_107, %c0_108] : memref<16x128xf32, #tpu.memory_space<vmem>>, vector<2x128xf32>
    tpu.vector_store %arg12[%c12_107, %c0_108], %369 {strides = array<i32>} : memref<16x128xf32, #tpu.memory_space<vmem>>, vector<2x128xf32>,
    %371 = vector.extract_strided_slice %221 {offsets = [14, 0], sizes = [2, 512], strides = [1, 1]} : vector<16x512xf32> to vector<2x512xf32>
    %372 = arith.truncf %369 : vector<2x128xf32> to vector<2x128xbf16>
    %cst_109 = arith.constant dense<0.000000e+00> : vector<2x512xf32>
    %373 = tpu.matmul %372, %214, %cst_109 {dimension_numbers = #tpu.dot_dimension_numbers<[1], [0], [0], [1], [0, 0, 1, 1], [], []>} : vector<2x128xbf16>, vector<128x512xbf16>, vector<2x512xf32> -> vector<2x512xf32>
    %374 = arith.addf %371, %373 : vector<2x512xf32>
    %375 = vector.extract_strided_slice %374 {offsets = [0, 0], sizes = [2, 384], strides = [1, 1]} : vector<2x512xf32> to vector<2x384xf32>
    %376 = arith.negf %375 : vector<2x384xf32>
    %377 = math.exp %376 : vector<2x384xf32>
    %cst_110 = arith.constant 1.000000e+00 : f32
    %378 = vector.broadcast %cst_110 : f32 to vector<2x384xf32>
    %379 = arith.addf %378, %377 : vector<2x384xf32>
    %380 = arith.divf %378, %379 : vector<2x384xf32>
    %381 = vector.extract_strided_slice %380 {offsets = [0, 0], sizes = [2, 128], strides = [1, 1]} : vector<2x384xf32> to vector<2x128xf32>
    %382 = vector.extract_strided_slice %380 {offsets = [0, 128], sizes = [2, 128], strides = [1, 1]} : vector<2x384xf32> to vector<2x128xf32>
    %383 = vector.extract_strided_slice %380 {offsets = [0, 256], sizes = [2, 128], strides = [1, 1]} : vector<2x384xf32> to vector<2x128xf32>
    %384 = vector.extract_strided_slice %374 {offsets = [0, 384], sizes = [2, 128], strides = [1, 1]} : vector<2x512xf32> to vector<2x128xf32>
    %385 = math.tanh %384 : vector<2x128xf32>
    %386 = arith.mulf %382, %367 : vector<2x128xf32>
    %387 = arith.mulf %381, %385 : vector<2x128xf32>
    %388 = arith.addf %386, %387 : vector<2x128xf32>
    %389 = math.tanh %388 : vector<2x128xf32>
    %390 = arith.mulf %383, %389 : vector<2x128xf32>
    %c14_111 = arith.constant 14 : index
    %c0_112 = arith.constant 0 : index
    %391 = vector.load %arg12[%c14_111, %c0_112] : memref<16x128xf32, #tpu.memory_space<vmem>>, vector<2x128xf32>
    tpu.vector_store %arg12[%c14_111, %c0_112], %390 {strides = array<i32>} : memref<16x128xf32, #tpu.memory_space<vmem>>, vector<2x128xf32>,
    %c2_i32_113 = arith.constant 2 : i32
    %c0_i32_114 = arith.constant 0 : i32
    %c0_i32_115 = arith.constant 0 : i32
    %c0_i32_116 = arith.constant 0 : i32
    %c0_i32_117 = arith.constant 0 : i32
    %392 = tpu.memref_slice %arg1[%c2_i32_113, %c0_i32_116, %c0_i32_117] : memref<6x256x512xbf16, #tpu.memory_space<any>> -> memref<1x256x512xbf16, #tpu.memory_space<any>>
    %393 = tpu.memref_squeeze %392 : memref<1x256x512xbf16, #tpu.memory_space<any>> -> memref<256x512xbf16, #tpu.memory_space<any>>
    %c0_i32_118 = arith.constant 0 : i32
    %c0_i32_119 = arith.constant 0 : i32
    %394 = tpu.memref_slice %arg10[%c0_i32_114, %c0_i32_118, %c0_i32_119] : memref<2x256x512xbf16, #tpu.memory_space<vmem>> -> memref<1x256x512xbf16, #tpu.memory_space<vmem>>
    %395 = tpu.memref_squeeze %394 : memref<1x256x512xbf16, #tpu.memory_space<vmem>> -> memref<256x512xbf16, #tpu.memory_space<vmem>>
    %396 = tpu.memref_slice %arg11[%c0_i32_115] : memref<2x!tpu.dma_semaphore, #tpu.memory_space<semaphore_mem>> -> memref<1x!tpu.dma_semaphore, #tpu.memory_space<semaphore_mem>>
    %397 = tpu.memref_squeeze %396 : memref<1x!tpu.dma_semaphore, #tpu.memory_space<semaphore_mem>> -> memref<!tpu.dma_semaphore, #tpu.memory_space<semaphore_mem>>
    tpu.wait_dma2 semaphore(%397 : memref<!tpu.dma_semaphore, #tpu.memory_space<semaphore_mem>>) src(%393 : memref<256x512xbf16, #tpu.memory_space<any>>) dst(%395 : memref<256x512xbf16, #tpu.memory_space<vmem>>)
    %c3_i32 = arith.constant 3 : i32
    %c1_i32_120 = arith.constant 1 : i32
    %c1_i32_121 = arith.constant 1 : i32
    %c0_i32_122 = arith.constant 0 : i32
    %c0_i32_123 = arith.constant 0 : i32
    %398 = tpu.memref_slice %arg1[%c3_i32, %c0_i32_122, %c0_i32_123] : memref<6x256x512xbf16, #tpu.memory_space<any>> -> memref<1x256x512xbf16, #tpu.memory_space<any>>
    %399 = tpu.memref_squeeze %398 : memref<1x256x512xbf16, #tpu.memory_space<any>> -> memref<256x512xbf16, #tpu.memory_space<any>>
    %c0_i32_124 = arith.constant 0 : i32
    %c0_i32_125 = arith.constant 0 : i32
    %400 = tpu.memref_slice %arg10[%c1_i32_120, %c0_i32_124, %c0_i32_125] : memref<2x256x512xbf16, #tpu.memory_space<vmem>> -> memref<1x256x512xbf16, #tpu.memory_space<vmem>>
    %401 = tpu.memref_squeeze %400 : memref<1x256x512xbf16, #tpu.memory_space<vmem>> -> memref<256x512xbf16, #tpu.memory_space<vmem>>
    %402 = tpu.memref_slice %arg11[%c1_i32_121] : memref<2x!tpu.dma_semaphore, #tpu.memory_space<semaphore_mem>> -> memref<1x!tpu.dma_semaphore, #tpu.memory_space<semaphore_mem>>
    %403 = tpu.memref_squeeze %402 : memref<1x!tpu.dma_semaphore, #tpu.memory_space<semaphore_mem>> -> memref<!tpu.dma_semaphore, #tpu.memory_space<semaphore_mem>>
    tpu.enqueue_dma source(%399 : memref<256x512xbf16, #tpu.memory_space<any>>) target(%401 : memref<256x512xbf16, #tpu.memory_space<vmem>>) target_semaphore(%403 : memref<!tpu.dma_semaphore, #tpu.memory_space<semaphore_mem>>)
    %c0_126 = arith.constant 0 : index
    %c0_127 = arith.constant 0 : index
    %c0_128 = arith.constant 0 : index
    %404 = vector.load %arg10[%c0_126, %c0_127, %c0_128] : memref<2x256x512xbf16, #tpu.memory_space<vmem>>, vector<1x128x512xbf16>
    %405 = vector.shape_cast %404 : vector<1x128x512xbf16> to vector<128x512xbf16>
    %c0_129 = arith.constant 0 : index
    %c128_130 = arith.constant 128 : index
    %c0_131 = arith.constant 0 : index
    %406 = vector.load %arg10[%c0_129, %c128_130, %c0_131] : memref<2x256x512xbf16, #tpu.memory_space<vmem>>, vector<1x128x512xbf16>
    %407 = vector.shape_cast %406 : vector<1x128x512xbf16> to vector<128x512xbf16>
    %c0_132 = arith.constant 0 : index
    %c0_133 = arith.constant 0 : index
    %408 = vector.load %arg12[%c0_132, %c0_133] : memref<16x128xf32, #tpu.memory_space<vmem>>, vector<16x128xf32>
    %409 = arith.truncf %408 : vector<16x128xf32> to vector<16x128xbf16>
    %cst_134 = arith.constant dense<0.000000e+00> : vector<16x512xf32>
    %410 = tpu.matmul %409, %405, %cst_134 {dimension_numbers = #tpu.dot_dimension_numbers<[1], [0], [0], [1], [0, 0, 1, 1], [], []>} : vector<16x128xbf16>, vector<128x512xbf16>, vector<16x512xf32> -> vector<16x512xf32>
    %c2_135 = arith.constant 2 : index
    %c0_136 = arith.constant 0 : index
    %c0_137 = arith.constant 0 : index
    %411 = vector.load %arg2[%c2_135, %c0_136, %c0_137] : memref<6x1x512xf32, #tpu.memory_space<vmem>>, vector<1x1x512xf32>
    %412 = vector.shape_cast %411 : vector<1x1x512xf32> to vector<1x512xf32>
    %413 = vector.broadcast %412 : vector<1x512xf32> to vector<16x512xf32>
    %414 = arith.addf %410, %413 : vector<16x512xf32>
    %cst_138 = arith.constant 0.000000e+00 : f32
    %415 = vector.broadcast %cst_138 : f32 to vector<2x128xf32>
    %cst_139 = arith.constant 0.000000e+00 : f32
    %416 = vector.broadcast %cst_139 : f32 to vector<2x128xf32>
    %417 = vector.extract_strided_slice %414 {offsets = [0, 0], sizes = [2, 512], strides = [1, 1]} : vector<16x512xf32> to vector<2x512xf32>
    %418 = arith.truncf %415 : vector<2x128xf32> to vector<2x128xbf16>
    %cst_140 = arith.constant dense<0.000000e+00> : vector<2x512xf32>
    %419 = tpu.matmul %418, %407, %cst_140 {dimension_numbers = #tpu.dot_dimension_numbers<[1], [0], [0], [1], [0, 0, 1, 1], [], []>} : vector<2x128xbf16>, vector<128x512xbf16>, vector<2x512xf32> -> vector<2x512xf32>
    %420 = arith.addf %417, %419 : vector<2x512xf32>
    %421 = vector.extract_strided_slice %420 {offsets = [0, 0], sizes = [2, 384], strides = [1, 1]} : vector<2x512xf32> to vector<2x384xf32>
    %422 = arith.negf %421 : vector<2x384xf32>
    %423 = math.exp %422 : vector<2x384xf32>
    %cst_141 = arith.constant 1.000000e+00 : f32
    %424 = vector.broadcast %cst_141 : f32 to vector<2x384xf32>
    %425 = arith.addf %424, %423 : vector<2x384xf32>
    %426 = arith.divf %424, %425 : vector<2x384xf32>
    %427 = vector.extract_strided_slice %426 {offsets = [0, 0], sizes = [2, 128], strides = [1, 1]} : vector<2x384xf32> to vector<2x128xf32>
    %428 = vector.extract_strided_slice %426 {offsets = [0, 128], sizes = [2, 128], strides = [1, 1]} : vector<2x384xf32> to vector<2x128xf32>
    %429 = vector.extract_strided_slice %426 {offsets = [0, 256], sizes = [2, 128], strides = [1, 1]} : vector<2x384xf32> to vector<2x128xf32>
    %430 = vector.extract_strided_slice %420 {offsets = [0, 384], sizes = [2, 128], strides = [1, 1]} : vector<2x512xf32> to vector<2x128xf32>
    %431 = math.tanh %430 : vector<2x128xf32>
    %432 = arith.mulf %428, %416 : vector<2x128xf32>
    %433 = arith.mulf %427, %431 : vector<2x128xf32>
    %434 = arith.addf %432, %433 : vector<2x128xf32>
    %435 = math.tanh %434 : vector<2x128xf32>
    %436 = arith.mulf %429, %435 : vector<2x128xf32>
    %c0_142 = arith.constant 0 : index
    %c0_143 = arith.constant 0 : index
    %437 = vector.load %arg12[%c0_142, %c0_143] : memref<16x128xf32, #tpu.memory_space<vmem>>, vector<2x128xf32>
    tpu.vector_store %arg12[%c0_142, %c0_143], %436 {strides = array<i32>} : memref<16x128xf32, #tpu.memory_space<vmem>>, vector<2x128xf32>,
    %438 = vector.extract_strided_slice %414 {offsets = [2, 0], sizes = [2, 512], strides = [1, 1]} : vector<16x512xf32> to vector<2x512xf32>
    %439 = arith.truncf %436 : vector<2x128xf32> to vector<2x128xbf16>
    %cst_144 = arith.constant dense<0.000000e+00> : vector<2x512xf32>
    %440 = tpu.matmul %439, %407, %cst_144 {dimension_numbers = #tpu.dot_dimension_numbers<[1], [0], [0], [1], [0, 0, 1, 1], [], []>} : vector<2x128xbf16>, vector<128x512xbf16>, vector<2x512xf32> -> vector<2x512xf32>
    %441 = arith.addf %438, %440 : vector<2x512xf32>
    %442 = vector.extract_strided_slice %441 {offsets = [0, 0], sizes = [2, 384], strides = [1, 1]} : vector<2x512xf32> to vector<2x384xf32>
    %443 = arith.negf %442 : vector<2x384xf32>
    %444 = math.exp %443 : vector<2x384xf32>
    %cst_145 = arith.constant 1.000000e+00 : f32
    %445 = vector.broadcast %cst_145 : f32 to vector<2x384xf32>
    %446 = arith.addf %445, %444 : vector<2x384xf32>
    %447 = arith.divf %445, %446 : vector<2x384xf32>
    %448 = vector.extract_strided_slice %447 {offsets = [0, 0], sizes = [2, 128], strides = [1, 1]} : vector<2x384xf32> to vector<2x128xf32>
    %449 = vector.extract_strided_slice %447 {offsets = [0, 128], sizes = [2, 128], strides = [1, 1]} : vector<2x384xf32> to vector<2x128xf32>
    %450 = vector.extract_strided_slice %447 {offsets = [0, 256], sizes = [2, 128], strides = [1, 1]} : vector<2x384xf32> to vector<2x128xf32>
    %451 = vector.extract_strided_slice %441 {offsets = [0, 384], sizes = [2, 128], strides = [1, 1]} : vector<2x512xf32> to vector<2x128xf32>
    %452 = math.tanh %451 : vector<2x128xf32>
    %453 = arith.mulf %449, %434 : vector<2x128xf32>
    %454 = arith.mulf %448, %452 : vector<2x128xf32>
    %455 = arith.addf %453, %454 : vector<2x128xf32>
    %456 = math.tanh %455 : vector<2x128xf32>
    %457 = arith.mulf %450, %456 : vector<2x128xf32>
    %c2_146 = arith.constant 2 : index
    %c0_147 = arith.constant 0 : index
    %458 = vector.load %arg12[%c2_146, %c0_147] : memref<16x128xf32, #tpu.memory_space<vmem>>, vector<2x128xf32>
    tpu.vector_store %arg12[%c2_146, %c0_147], %457 {strides = array<i32>} : memref<16x128xf32, #tpu.memory_space<vmem>>, vector<2x128xf32>,
    %459 = vector.extract_strided_slice %414 {offsets = [4, 0], sizes = [2, 512], strides = [1, 1]} : vector<16x512xf32> to vector<2x512xf32>
    %460 = arith.truncf %457 : vector<2x128xf32> to vector<2x128xbf16>
    %cst_148 = arith.constant dense<0.000000e+00> : vector<2x512xf32>
    %461 = tpu.matmul %460, %407, %cst_148 {dimension_numbers = #tpu.dot_dimension_numbers<[1], [0], [0], [1], [0, 0, 1, 1], [], []>} : vector<2x128xbf16>, vector<128x512xbf16>, vector<2x512xf32> -> vector<2x512xf32>
    %462 = arith.addf %459, %461 : vector<2x512xf32>
    %463 = vector.extract_strided_slice %462 {offsets = [0, 0], sizes = [2, 384], strides = [1, 1]} : vector<2x512xf32> to vector<2x384xf32>
    %464 = arith.negf %463 : vector<2x384xf32>
    %465 = math.exp %464 : vector<2x384xf32>
    %cst_149 = arith.constant 1.000000e+00 : f32
    %466 = vector.broadcast %cst_149 : f32 to vector<2x384xf32>
    %467 = arith.addf %466, %465 : vector<2x384xf32>
    %468 = arith.divf %466, %467 : vector<2x384xf32>
    %469 = vector.extract_strided_slice %468 {offsets = [0, 0], sizes = [2, 128], strides = [1, 1]} : vector<2x384xf32> to vector<2x128xf32>
    %470 = vector.extract_strided_slice %468 {offsets = [0, 128], sizes = [2, 128], strides = [1, 1]} : vector<2x384xf32> to vector<2x128xf32>
    %471 = vector.extract_strided_slice %468 {offsets = [0, 256], sizes = [2, 128], strides = [1, 1]} : vector<2x384xf32> to vector<2x128xf32>
    %472 = vector.extract_strided_slice %462 {offsets = [0, 384], sizes = [2, 128], strides = [1, 1]} : vector<2x512xf32> to vector<2x128xf32>
    %473 = math.tanh %472 : vector<2x128xf32>
    %474 = arith.mulf %470, %455 : vector<2x128xf32>
    %475 = arith.mulf %469, %473 : vector<2x128xf32>
    %476 = arith.addf %474, %475 : vector<2x128xf32>
    %477 = math.tanh %476 : vector<2x128xf32>
    %478 = arith.mulf %471, %477 : vector<2x128xf32>
    %c4_150 = arith.constant 4 : index
    %c0_151 = arith.constant 0 : index
    %479 = vector.load %arg12[%c4_150, %c0_151] : memref<16x128xf32, #tpu.memory_space<vmem>>, vector<2x128xf32>
    tpu.vector_store %arg12[%c4_150, %c0_151], %478 {strides = array<i32>} : memref<16x128xf32, #tpu.memory_space<vmem>>, vector<2x128xf32>,
    %480 = vector.extract_strided_slice %414 {offsets = [6, 0], sizes = [2, 512], strides = [1, 1]} : vector<16x512xf32> to vector<2x512xf32>
    %481 = arith.truncf %478 : vector<2x128xf32> to vector<2x128xbf16>
    %cst_152 = arith.constant dense<0.000000e+00> : vector<2x512xf32>
    %482 = tpu.matmul %481, %407, %cst_152 {dimension_numbers = #tpu.dot_dimension_numbers<[1], [0], [0], [1], [0, 0, 1, 1], [], []>} : vector<2x128xbf16>, vector<128x512xbf16>, vector<2x512xf32> -> vector<2x512xf32>
    %483 = arith.addf %480, %482 : vector<2x512xf32>
    %484 = vector.extract_strided_slice %483 {offsets = [0, 0], sizes = [2, 384], strides = [1, 1]} : vector<2x512xf32> to vector<2x384xf32>
    %485 = arith.negf %484 : vector<2x384xf32>
    %486 = math.exp %485 : vector<2x384xf32>
    %cst_153 = arith.constant 1.000000e+00 : f32
    %487 = vector.broadcast %cst_153 : f32 to vector<2x384xf32>
    %488 = arith.addf %487, %486 : vector<2x384xf32>
    %489 = arith.divf %487, %488 : vector<2x384xf32>
    %490 = vector.extract_strided_slice %489 {offsets = [0, 0], sizes = [2, 128], strides = [1, 1]} : vector<2x384xf32> to vector<2x128xf32>
    %491 = vector.extract_strided_slice %489 {offsets = [0, 128], sizes = [2, 128], strides = [1, 1]} : vector<2x384xf32> to vector<2x128xf32>
    %492 = vector.extract_strided_slice %489 {offsets = [0, 256], sizes = [2, 128], strides = [1, 1]} : vector<2x384xf32> to vector<2x128xf32>
    %493 = vector.extract_strided_slice %483 {offsets = [0, 384], sizes = [2, 128], strides = [1, 1]} : vector<2x512xf32> to vector<2x128xf32>
    %494 = math.tanh %493 : vector<2x128xf32>
    %495 = arith.mulf %491, %476 : vector<2x128xf32>
    %496 = arith.mulf %490, %494 : vector<2x128xf32>
    %497 = arith.addf %495, %496 : vector<2x128xf32>
    %498 = math.tanh %497 : vector<2x128xf32>
    %499 = arith.mulf %492, %498 : vector<2x128xf32>
    %c6_154 = arith.constant 6 : index
    %c0_155 = arith.constant 0 : index
    %500 = vector.load %arg12[%c6_154, %c0_155] : memref<16x128xf32, #tpu.memory_space<vmem>>, vector<2x128xf32>
    tpu.vector_store %arg12[%c6_154, %c0_155], %499 {strides = array<i32>} : memref<16x128xf32, #tpu.memory_space<vmem>>, vector<2x128xf32>,
    %501 = vector.extract_strided_slice %414 {offsets = [8, 0], sizes = [2, 512], strides = [1, 1]} : vector<16x512xf32> to vector<2x512xf32>
    %502 = arith.truncf %499 : vector<2x128xf32> to vector<2x128xbf16>
    %cst_156 = arith.constant dense<0.000000e+00> : vector<2x512xf32>
    %503 = tpu.matmul %502, %407, %cst_156 {dimension_numbers = #tpu.dot_dimension_numbers<[1], [0], [0], [1], [0, 0, 1, 1], [], []>} : vector<2x128xbf16>, vector<128x512xbf16>, vector<2x512xf32> -> vector<2x512xf32>
    %504 = arith.addf %501, %503 : vector<2x512xf32>
    %505 = vector.extract_strided_slice %504 {offsets = [0, 0], sizes = [2, 384], strides = [1, 1]} : vector<2x512xf32> to vector<2x384xf32>
    %506 = arith.negf %505 : vector<2x384xf32>
    %507 = math.exp %506 : vector<2x384xf32>
    %cst_157 = arith.constant 1.000000e+00 : f32
    %508 = vector.broadcast %cst_157 : f32 to vector<2x384xf32>
    %509 = arith.addf %508, %507 : vector<2x384xf32>
    %510 = arith.divf %508, %509 : vector<2x384xf32>
    %511 = vector.extract_strided_slice %510 {offsets = [0, 0], sizes = [2, 128], strides = [1, 1]} : vector<2x384xf32> to vector<2x128xf32>
    %512 = vector.extract_strided_slice %510 {offsets = [0, 128], sizes = [2, 128], strides = [1, 1]} : vector<2x384xf32> to vector<2x128xf32>
    %513 = vector.extract_strided_slice %510 {offsets = [0, 256], sizes = [2, 128], strides = [1, 1]} : vector<2x384xf32> to vector<2x128xf32>
    %514 = vector.extract_strided_slice %504 {offsets = [0, 384], sizes = [2, 128], strides = [1, 1]} : vector<2x512xf32> to vector<2x128xf32>
    %515 = math.tanh %514 : vector<2x128xf32>
    %516 = arith.mulf %512, %497 : vector<2x128xf32>
    %517 = arith.mulf %511, %515 : vector<2x128xf32>
    %518 = arith.addf %516, %517 : vector<2x128xf32>
    %519 = math.tanh %518 : vector<2x128xf32>
    %520 = arith.mulf %513, %519 : vector<2x128xf32>
    %c8_158 = arith.constant 8 : index
    %c0_159 = arith.constant 0 : index
    %521 = vector.load %arg12[%c8_158, %c0_159] : memref<16x128xf32, #tpu.memory_space<vmem>>, vector<2x128xf32>
    tpu.vector_store %arg12[%c8_158, %c0_159], %520 {strides = array<i32>} : memref<16x128xf32, #tpu.memory_space<vmem>>, vector<2x128xf32>,
    %522 = vector.extract_strided_slice %414 {offsets = [10, 0], sizes = [2, 512], strides = [1, 1]} : vector<16x512xf32> to vector<2x512xf32>
    %523 = arith.truncf %520 : vector<2x128xf32> to vector<2x128xbf16>
    %cst_160 = arith.constant dense<0.000000e+00> : vector<2x512xf32>
    %524 = tpu.matmul %523, %407, %cst_160 {dimension_numbers = #tpu.dot_dimension_numbers<[1], [0], [0], [1], [0, 0, 1, 1], [], []>} : vector<2x128xbf16>, vector<128x512xbf16>, vector<2x512xf32> -> vector<2x512xf32>
    %525 = arith.addf %522, %524 : vector<2x512xf32>
    %526 = vector.extract_strided_slice %525 {offsets = [0, 0], sizes = [2, 384], strides = [1, 1]} : vector<2x512xf32> to vector<2x384xf32>
    %527 = arith.negf %526 : vector<2x384xf32>
    %528 = math.exp %527 : vector<2x384xf32>
    %cst_161 = arith.constant 1.000000e+00 : f32
    %529 = vector.broadcast %cst_161 : f32 to vector<2x384xf32>
    %530 = arith.addf %529, %528 : vector<2x384xf32>
    %531 = arith.divf %529, %530 : vector<2x384xf32>
    %532 = vector.extract_strided_slice %531 {offsets = [0, 0], sizes = [2, 128], strides = [1, 1]} : vector<2x384xf32> to vector<2x128xf32>
    %533 = vector.extract_strided_slice %531 {offsets = [0, 128], sizes = [2, 128], strides = [1, 1]} : vector<2x384xf32> to vector<2x128xf32>
    %534 = vector.extract_strided_slice %531 {offsets = [0, 256], sizes = [2, 128], strides = [1, 1]} : vector<2x384xf32> to vector<2x128xf32>
    %535 = vector.extract_strided_slice %525 {offsets = [0, 384], sizes = [2, 128], strides = [1, 1]} : vector<2x512xf32> to vector<2x128xf32>
    %536 = math.tanh %535 : vector<2x128xf32>
    %537 = arith.mulf %533, %518 : vector<2x128xf32>
    %538 = arith.mulf %532, %536 : vector<2x128xf32>
    %539 = arith.addf %537, %538 : vector<2x128xf32>
    %540 = math.tanh %539 : vector<2x128xf32>
    %541 = arith.mulf %534, %540 : vector<2x128xf32>
    %c10_162 = arith.constant 10 : index
    %c0_163 = arith.constant 0 : index
    %542 = vector.load %arg12[%c10_162, %c0_163] : memref<16x128xf32, #tpu.memory_space<vmem>>, vector<2x128xf32>
    tpu.vector_store %arg12[%c10_162, %c0_163], %541 {strides = array<i32>} : memref<16x128xf32, #tpu.memory_space<vmem>>, vector<2x128xf32>,
    %543 = vector.extract_strided_slice %414 {offsets = [12, 0], sizes = [2, 512], strides = [1, 1]} : vector<16x512xf32> to vector<2x512xf32>
    %544 = arith.truncf %541 : vector<2x128xf32> to vector<2x128xbf16>
    %cst_164 = arith.constant dense<0.000000e+00> : vector<2x512xf32>
    %545 = tpu.matmul %544, %407, %cst_164 {dimension_numbers = #tpu.dot_dimension_numbers<[1], [0], [0], [1], [0, 0, 1, 1], [], []>} : vector<2x128xbf16>, vector<128x512xbf16>, vector<2x512xf32> -> vector<2x512xf32>
    %546 = arith.addf %543, %545 : vector<2x512xf32>
    %547 = vector.extract_strided_slice %546 {offsets = [0, 0], sizes = [2, 384], strides = [1, 1]} : vector<2x512xf32> to vector<2x384xf32>
    %548 = arith.negf %547 : vector<2x384xf32>
    %549 = math.exp %548 : vector<2x384xf32>
    %cst_165 = arith.constant 1.000000e+00 : f32
    %550 = vector.broadcast %cst_165 : f32 to vector<2x384xf32>
    %551 = arith.addf %550, %549 : vector<2x384xf32>
    %552 = arith.divf %550, %551 : vector<2x384xf32>
    %553 = vector.extract_strided_slice %552 {offsets = [0, 0], sizes = [2, 128], strides = [1, 1]} : vector<2x384xf32> to vector<2x128xf32>
    %554 = vector.extract_strided_slice %552 {offsets = [0, 128], sizes = [2, 128], strides = [1, 1]} : vector<2x384xf32> to vector<2x128xf32>
    %555 = vector.extract_strided_slice %552 {offsets = [0, 256], sizes = [2, 128], strides = [1, 1]} : vector<2x384xf32> to vector<2x128xf32>
    %556 = vector.extract_strided_slice %546 {offsets = [0, 384], sizes = [2, 128], strides = [1, 1]} : vector<2x512xf32> to vector<2x128xf32>
    %557 = math.tanh %556 : vector<2x128xf32>
    %558 = arith.mulf %554, %539 : vector<2x128xf32>
    %559 = arith.mulf %553, %557 : vector<2x128xf32>
    %560 = arith.addf %558, %559 : vector<2x128xf32>
    %561 = math.tanh %560 : vector<2x128xf32>
    %562 = arith.mulf %555, %561 : vector<2x128xf32>
    %c12_166 = arith.constant 12 : index
    %c0_167 = arith.constant 0 : index
    %563 = vector.load %arg12[%c12_166, %c0_167] : memref<16x128xf32, #tpu.memory_space<vmem>>, vector<2x128xf32>
    tpu.vector_store %arg12[%c12_166, %c0_167], %562 {strides = array<i32>} : memref<16x128xf32, #tpu.memory_space<vmem>>, vector<2x128xf32>,
    %564 = vector.extract_strided_slice %414 {offsets = [14, 0], sizes = [2, 512], strides = [1, 1]} : vector<16x512xf32> to vector<2x512xf32>
    %565 = arith.truncf %562 : vector<2x128xf32> to vector<2x128xbf16>
    %cst_168 = arith.constant dense<0.000000e+00> : vector<2x512xf32>
    %566 = tpu.matmul %565, %407, %cst_168 {dimension_numbers = #tpu.dot_dimension_numbers<[1], [0], [0], [1], [0, 0, 1, 1], [], []>} : vector<2x128xbf16>, vector<128x512xbf16>, vector<2x512xf32> -> vector<2x512xf32>
    %567 = arith.addf %564, %566 : vector<2x512xf32>
    %568 = vector.extract_strided_slice %567 {offsets = [0, 0], sizes = [2, 384], strides = [1, 1]} : vector<2x512xf32> to vector<2x384xf32>
    %569 = arith.negf %568 : vector<2x384xf32>
    %570 = math.exp %569 : vector<2x384xf32>
    %cst_169 = arith.constant 1.000000e+00 : f32
    %571 = vector.broadcast %cst_169 : f32 to vector<2x384xf32>
    %572 = arith.addf %571, %570 : vector<2x384xf32>
    %573 = arith.divf %571, %572 : vector<2x384xf32>
    %574 = vector.extract_strided_slice %573 {offsets = [0, 0], sizes = [2, 128], strides = [1, 1]} : vector<2x384xf32> to vector<2x128xf32>
    %575 = vector.extract_strided_slice %573 {offsets = [0, 128], sizes = [2, 128], strides = [1, 1]} : vector<2x384xf32> to vector<2x128xf32>
    %576 = vector.extract_strided_slice %573 {offsets = [0, 256], sizes = [2, 128], strides = [1, 1]} : vector<2x384xf32> to vector<2x128xf32>
    %577 = vector.extract_strided_slice %567 {offsets = [0, 384], sizes = [2, 128], strides = [1, 1]} : vector<2x512xf32> to vector<2x128xf32>
    %578 = math.tanh %577 : vector<2x128xf32>
    %579 = arith.mulf %575, %560 : vector<2x128xf32>
    %580 = arith.mulf %574, %578 : vector<2x128xf32>
    %581 = arith.addf %579, %580 : vector<2x128xf32>
    %582 = math.tanh %581 : vector<2x128xf32>
    %583 = arith.mulf %576, %582 : vector<2x128xf32>
    %c14_170 = arith.constant 14 : index
    %c0_171 = arith.constant 0 : index
    %584 = vector.load %arg12[%c14_170, %c0_171] : memref<16x128xf32, #tpu.memory_space<vmem>>, vector<2x128xf32>
    tpu.vector_store %arg12[%c14_170, %c0_171], %583 {strides = array<i32>} : memref<16x128xf32, #tpu.memory_space<vmem>>, vector<2x128xf32>,
    %c3_i32_172 = arith.constant 3 : i32
    %c1_i32_173 = arith.constant 1 : i32
    %c1_i32_174 = arith.constant 1 : i32
    %c0_i32_175 = arith.constant 0 : i32
    %c0_i32_176 = arith.constant 0 : i32
    %585 = tpu.memref_slice %arg1[%c3_i32_172, %c0_i32_175, %c0_i32_176] : memref<6x256x512xbf16, #tpu.memory_space<any>> -> memref<1x256x512xbf16, #tpu.memory_space<any>>
    %586 = tpu.memref_squeeze %585 : memref<1x256x512xbf16, #tpu.memory_space<any>> -> memref<256x512xbf16, #tpu.memory_space<any>>
    %c0_i32_177 = arith.constant 0 : i32
    %c0_i32_178 = arith.constant 0 : i32
    %587 = tpu.memref_slice %arg10[%c1_i32_173, %c0_i32_177, %c0_i32_178] : memref<2x256x512xbf16, #tpu.memory_space<vmem>> -> memref<1x256x512xbf16, #tpu.memory_space<vmem>>
    %588 = tpu.memref_squeeze %587 : memref<1x256x512xbf16, #tpu.memory_space<vmem>> -> memref<256x512xbf16, #tpu.memory_space<vmem>>
    %589 = tpu.memref_slice %arg11[%c1_i32_174] : memref<2x!tpu.dma_semaphore, #tpu.memory_space<semaphore_mem>> -> memref<1x!tpu.dma_semaphore, #tpu.memory_space<semaphore_mem>>
    %590 = tpu.memref_squeeze %589 : memref<1x!tpu.dma_semaphore, #tpu.memory_space<semaphore_mem>> -> memref<!tpu.dma_semaphore, #tpu.memory_space<semaphore_mem>>
    tpu.wait_dma2 semaphore(%590 : memref<!tpu.dma_semaphore, #tpu.memory_space<semaphore_mem>>) src(%586 : memref<256x512xbf16, #tpu.memory_space<any>>) dst(%588 : memref<256x512xbf16, #tpu.memory_space<vmem>>)
    %c4_i32 = arith.constant 4 : i32
    %c0_i32_179 = arith.constant 0 : i32
    %c0_i32_180 = arith.constant 0 : i32
    %c0_i32_181 = arith.constant 0 : i32
    %c0_i32_182 = arith.constant 0 : i32
    %591 = tpu.memref_slice %arg1[%c4_i32, %c0_i32_181, %c0_i32_182] : memref<6x256x512xbf16, #tpu.memory_space<any>> -> memref<1x256x512xbf16, #tpu.memory_space<any>>
    %592 = tpu.memref_squeeze %591 : memref<1x256x512xbf16, #tpu.memory_space<any>> -> memref<256x512xbf16, #tpu.memory_space<any>>
    %c0_i32_183 = arith.constant 0 : i32
    %c0_i32_184 = arith.constant 0 : i32
    %593 = tpu.memref_slice %arg10[%c0_i32_179, %c0_i32_183, %c0_i32_184] : memref<2x256x512xbf16, #tpu.memory_space<vmem>> -> memref<1x256x512xbf16, #tpu.memory_space<vmem>>
    %594 = tpu.memref_squeeze %593 : memref<1x256x512xbf16, #tpu.memory_space<vmem>> -> memref<256x512xbf16, #tpu.memory_space<vmem>>
    %595 = tpu.memref_slice %arg11[%c0_i32_180] : memref<2x!tpu.dma_semaphore, #tpu.memory_space<semaphore_mem>> -> memref<1x!tpu.dma_semaphore, #tpu.memory_space<semaphore_mem>>
    %596 = tpu.memref_squeeze %595 : memref<1x!tpu.dma_semaphore, #tpu.memory_space<semaphore_mem>> -> memref<!tpu.dma_semaphore, #tpu.memory_space<semaphore_mem>>
    tpu.enqueue_dma source(%592 : memref<256x512xbf16, #tpu.memory_space<any>>) target(%594 : memref<256x512xbf16, #tpu.memory_space<vmem>>) target_semaphore(%596 : memref<!tpu.dma_semaphore, #tpu.memory_space<semaphore_mem>>)
    %c1_185 = arith.constant 1 : index
    %c0_186 = arith.constant 0 : index
    %c0_187 = arith.constant 0 : index
    %597 = vector.load %arg10[%c1_185, %c0_186, %c0_187] : memref<2x256x512xbf16, #tpu.memory_space<vmem>>, vector<1x128x512xbf16>
    %598 = vector.shape_cast %597 : vector<1x128x512xbf16> to vector<128x512xbf16>
    %c1_188 = arith.constant 1 : index
    %c128_189 = arith.constant 128 : index
    %c0_190 = arith.constant 0 : index
    %599 = vector.load %arg10[%c1_188, %c128_189, %c0_190] : memref<2x256x512xbf16, #tpu.memory_space<vmem>>, vector<1x128x512xbf16>
    %600 = vector.shape_cast %599 : vector<1x128x512xbf16> to vector<128x512xbf16>
    %c0_191 = arith.constant 0 : index
    %c0_192 = arith.constant 0 : index
    %601 = vector.load %arg12[%c0_191, %c0_192] : memref<16x128xf32, #tpu.memory_space<vmem>>, vector<16x128xf32>
    %602 = arith.truncf %601 : vector<16x128xf32> to vector<16x128xbf16>
    %cst_193 = arith.constant dense<0.000000e+00> : vector<16x512xf32>
    %603 = tpu.matmul %602, %598, %cst_193 {dimension_numbers = #tpu.dot_dimension_numbers<[1], [0], [0], [1], [0, 0, 1, 1], [], []>} : vector<16x128xbf16>, vector<128x512xbf16>, vector<16x512xf32> -> vector<16x512xf32>
    %c3 = arith.constant 3 : index
    %c0_194 = arith.constant 0 : index
    %c0_195 = arith.constant 0 : index
    %604 = vector.load %arg2[%c3, %c0_194, %c0_195] : memref<6x1x512xf32, #tpu.memory_space<vmem>>, vector<1x1x512xf32>
    %605 = vector.shape_cast %604 : vector<1x1x512xf32> to vector<1x512xf32>
    %606 = vector.broadcast %605 : vector<1x512xf32> to vector<16x512xf32>
    %607 = arith.addf %603, %606 : vector<16x512xf32>
    %cst_196 = arith.constant 0.000000e+00 : f32
    %608 = vector.broadcast %cst_196 : f32 to vector<2x128xf32>
    %cst_197 = arith.constant 0.000000e+00 : f32
    %609 = vector.broadcast %cst_197 : f32 to vector<2x128xf32>
    %610 = vector.extract_strided_slice %607 {offsets = [0, 0], sizes = [2, 512], strides = [1, 1]} : vector<16x512xf32> to vector<2x512xf32>
    %611 = arith.truncf %608 : vector<2x128xf32> to vector<2x128xbf16>
    %cst_198 = arith.constant dense<0.000000e+00> : vector<2x512xf32>
    %612 = tpu.matmul %611, %600, %cst_198 {dimension_numbers = #tpu.dot_dimension_numbers<[1], [0], [0], [1], [0, 0, 1, 1], [], []>} : vector<2x128xbf16>, vector<128x512xbf16>, vector<2x512xf32> -> vector<2x512xf32>
    %613 = arith.addf %610, %612 : vector<2x512xf32>
    %614 = vector.extract_strided_slice %613 {offsets = [0, 0], sizes = [2, 384], strides = [1, 1]} : vector<2x512xf32> to vector<2x384xf32>
    %615 = arith.negf %614 : vector<2x384xf32>
    %616 = math.exp %615 : vector<2x384xf32>
    %cst_199 = arith.constant 1.000000e+00 : f32
    %617 = vector.broadcast %cst_199 : f32 to vector<2x384xf32>
    %618 = arith.addf %617, %616 : vector<2x384xf32>
    %619 = arith.divf %617, %618 : vector<2x384xf32>
    %620 = vector.extract_strided_slice %619 {offsets = [0, 0], sizes = [2, 128], strides = [1, 1]} : vector<2x384xf32> to vector<2x128xf32>
    %621 = vector.extract_strided_slice %619 {offsets = [0, 128], sizes = [2, 128], strides = [1, 1]} : vector<2x384xf32> to vector<2x128xf32>
    %622 = vector.extract_strided_slice %619 {offsets = [0, 256], sizes = [2, 128], strides = [1, 1]} : vector<2x384xf32> to vector<2x128xf32>
    %623 = vector.extract_strided_slice %613 {offsets = [0, 384], sizes = [2, 128], strides = [1, 1]} : vector<2x512xf32> to vector<2x128xf32>
    %624 = math.tanh %623 : vector<2x128xf32>
    %625 = arith.mulf %621, %609 : vector<2x128xf32>
    %626 = arith.mulf %620, %624 : vector<2x128xf32>
    %627 = arith.addf %625, %626 : vector<2x128xf32>
    %628 = math.tanh %627 : vector<2x128xf32>
    %629 = arith.mulf %622, %628 : vector<2x128xf32>
    %c0_200 = arith.constant 0 : index
    %c0_201 = arith.constant 0 : index
    %630 = vector.load %arg12[%c0_200, %c0_201] : memref<16x128xf32, #tpu.memory_space<vmem>>, vector<2x128xf32>
    tpu.vector_store %arg12[%c0_200, %c0_201], %629 {strides = array<i32>} : memref<16x128xf32, #tpu.memory_space<vmem>>, vector<2x128xf32>,
    %631 = vector.extract_strided_slice %607 {offsets = [2, 0], sizes = [2, 512], strides = [1, 1]} : vector<16x512xf32> to vector<2x512xf32>
    %632 = arith.truncf %629 : vector<2x128xf32> to vector<2x128xbf16>
    %cst_202 = arith.constant dense<0.000000e+00> : vector<2x512xf32>
    %633 = tpu.matmul %632, %600, %cst_202 {dimension_numbers = #tpu.dot_dimension_numbers<[1], [0], [0], [1], [0, 0, 1, 1], [], []>} : vector<2x128xbf16>, vector<128x512xbf16>, vector<2x512xf32> -> vector<2x512xf32>
    %634 = arith.addf %631, %633 : vector<2x512xf32>
    %635 = vector.extract_strided_slice %634 {offsets = [0, 0], sizes = [2, 384], strides = [1, 1]} : vector<2x512xf32> to vector<2x384xf32>
    %636 = arith.negf %635 : vector<2x384xf32>
    %637 = math.exp %636 : vector<2x384xf32>
    %cst_203 = arith.constant 1.000000e+00 : f32
    %638 = vector.broadcast %cst_203 : f32 to vector<2x384xf32>
    %639 = arith.addf %638, %637 : vector<2x384xf32>
    %640 = arith.divf %638, %639 : vector<2x384xf32>
    %641 = vector.extract_strided_slice %640 {offsets = [0, 0], sizes = [2, 128], strides = [1, 1]} : vector<2x384xf32> to vector<2x128xf32>
    %642 = vector.extract_strided_slice %640 {offsets = [0, 128], sizes = [2, 128], strides = [1, 1]} : vector<2x384xf32> to vector<2x128xf32>
    %643 = vector.extract_strided_slice %640 {offsets = [0, 256], sizes = [2, 128], strides = [1, 1]} : vector<2x384xf32> to vector<2x128xf32>
    %644 = vector.extract_strided_slice %634 {offsets = [0, 384], sizes = [2, 128], strides = [1, 1]} : vector<2x512xf32> to vector<2x128xf32>
    %645 = math.tanh %644 : vector<2x128xf32>
    %646 = arith.mulf %642, %627 : vector<2x128xf32>
    %647 = arith.mulf %641, %645 : vector<2x128xf32>
    %648 = arith.addf %646, %647 : vector<2x128xf32>
    %649 = math.tanh %648 : vector<2x128xf32>
    %650 = arith.mulf %643, %649 : vector<2x128xf32>
    %c2_204 = arith.constant 2 : index
    %c0_205 = arith.constant 0 : index
    %651 = vector.load %arg12[%c2_204, %c0_205] : memref<16x128xf32, #tpu.memory_space<vmem>>, vector<2x128xf32>
    tpu.vector_store %arg12[%c2_204, %c0_205], %650 {strides = array<i32>} : memref<16x128xf32, #tpu.memory_space<vmem>>, vector<2x128xf32>,
    %652 = vector.extract_strided_slice %607 {offsets = [4, 0], sizes = [2, 512], strides = [1, 1]} : vector<16x512xf32> to vector<2x512xf32>
    %653 = arith.truncf %650 : vector<2x128xf32> to vector<2x128xbf16>
    %cst_206 = arith.constant dense<0.000000e+00> : vector<2x512xf32>
    %654 = tpu.matmul %653, %600, %cst_206 {dimension_numbers = #tpu.dot_dimension_numbers<[1], [0], [0], [1], [0, 0, 1, 1], [], []>} : vector<2x128xbf16>, vector<128x512xbf16>, vector<2x512xf32> -> vector<2x512xf32>
    %655 = arith.addf %652, %654 : vector<2x512xf32>
    %656 = vector.extract_strided_slice %655 {offsets = [0, 0], sizes = [2, 384], strides = [1, 1]} : vector<2x512xf32> to vector<2x384xf32>
    %657 = arith.negf %656 : vector<2x384xf32>
    %658 = math.exp %657 : vector<2x384xf32>
    %cst_207 = arith.constant 1.000000e+00 : f32
    %659 = vector.broadcast %cst_207 : f32 to vector<2x384xf32>
    %660 = arith.addf %659, %658 : vector<2x384xf32>
    %661 = arith.divf %659, %660 : vector<2x384xf32>
    %662 = vector.extract_strided_slice %661 {offsets = [0, 0], sizes = [2, 128], strides = [1, 1]} : vector<2x384xf32> to vector<2x128xf32>
    %663 = vector.extract_strided_slice %661 {offsets = [0, 128], sizes = [2, 128], strides = [1, 1]} : vector<2x384xf32> to vector<2x128xf32>
    %664 = vector.extract_strided_slice %661 {offsets = [0, 256], sizes = [2, 128], strides = [1, 1]} : vector<2x384xf32> to vector<2x128xf32>
    %665 = vector.extract_strided_slice %655 {offsets = [0, 384], sizes = [2, 128], strides = [1, 1]} : vector<2x512xf32> to vector<2x128xf32>
    %666 = math.tanh %665 : vector<2x128xf32>
    %667 = arith.mulf %663, %648 : vector<2x128xf32>
    %668 = arith.mulf %662, %666 : vector<2x128xf32>
    %669 = arith.addf %667, %668 : vector<2x128xf32>
    %670 = math.tanh %669 : vector<2x128xf32>
    %671 = arith.mulf %664, %670 : vector<2x128xf32>
    %c4_208 = arith.constant 4 : index
    %c0_209 = arith.constant 0 : index
    %672 = vector.load %arg12[%c4_208, %c0_209] : memref<16x128xf32, #tpu.memory_space<vmem>>, vector<2x128xf32>
    tpu.vector_store %arg12[%c4_208, %c0_209], %671 {strides = array<i32>} : memref<16x128xf32, #tpu.memory_space<vmem>>, vector<2x128xf32>,
    %673 = vector.extract_strided_slice %607 {offsets = [6, 0], sizes = [2, 512], strides = [1, 1]} : vector<16x512xf32> to vector<2x512xf32>
    %674 = arith.truncf %671 : vector<2x128xf32> to vector<2x128xbf16>
    %cst_210 = arith.constant dense<0.000000e+00> : vector<2x512xf32>
    %675 = tpu.matmul %674, %600, %cst_210 {dimension_numbers = #tpu.dot_dimension_numbers<[1], [0], [0], [1], [0, 0, 1, 1], [], []>} : vector<2x128xbf16>, vector<128x512xbf16>, vector<2x512xf32> -> vector<2x512xf32>
    %676 = arith.addf %673, %675 : vector<2x512xf32>
    %677 = vector.extract_strided_slice %676 {offsets = [0, 0], sizes = [2, 384], strides = [1, 1]} : vector<2x512xf32> to vector<2x384xf32>
    %678 = arith.negf %677 : vector<2x384xf32>
    %679 = math.exp %678 : vector<2x384xf32>
    %cst_211 = arith.constant 1.000000e+00 : f32
    %680 = vector.broadcast %cst_211 : f32 to vector<2x384xf32>
    %681 = arith.addf %680, %679 : vector<2x384xf32>
    %682 = arith.divf %680, %681 : vector<2x384xf32>
    %683 = vector.extract_strided_slice %682 {offsets = [0, 0], sizes = [2, 128], strides = [1, 1]} : vector<2x384xf32> to vector<2x128xf32>
    %684 = vector.extract_strided_slice %682 {offsets = [0, 128], sizes = [2, 128], strides = [1, 1]} : vector<2x384xf32> to vector<2x128xf32>
    %685 = vector.extract_strided_slice %682 {offsets = [0, 256], sizes = [2, 128], strides = [1, 1]} : vector<2x384xf32> to vector<2x128xf32>
    %686 = vector.extract_strided_slice %676 {offsets = [0, 384], sizes = [2, 128], strides = [1, 1]} : vector<2x512xf32> to vector<2x128xf32>
    %687 = math.tanh %686 : vector<2x128xf32>
    %688 = arith.mulf %684, %669 : vector<2x128xf32>
    %689 = arith.mulf %683, %687 : vector<2x128xf32>
    %690 = arith.addf %688, %689 : vector<2x128xf32>
    %691 = math.tanh %690 : vector<2x128xf32>
    %692 = arith.mulf %685, %691 : vector<2x128xf32>
    %c6_212 = arith.constant 6 : index
    %c0_213 = arith.constant 0 : index
    %693 = vector.load %arg12[%c6_212, %c0_213] : memref<16x128xf32, #tpu.memory_space<vmem>>, vector<2x128xf32>
    tpu.vector_store %arg12[%c6_212, %c0_213], %692 {strides = array<i32>} : memref<16x128xf32, #tpu.memory_space<vmem>>, vector<2x128xf32>,
    %694 = vector.extract_strided_slice %607 {offsets = [8, 0], sizes = [2, 512], strides = [1, 1]} : vector<16x512xf32> to vector<2x512xf32>
    %695 = arith.truncf %692 : vector<2x128xf32> to vector<2x128xbf16>
    %cst_214 = arith.constant dense<0.000000e+00> : vector<2x512xf32>
    %696 = tpu.matmul %695, %600, %cst_214 {dimension_numbers = #tpu.dot_dimension_numbers<[1], [0], [0], [1], [0, 0, 1, 1], [], []>} : vector<2x128xbf16>, vector<128x512xbf16>, vector<2x512xf32> -> vector<2x512xf32>
    %697 = arith.addf %694, %696 : vector<2x512xf32>
    %698 = vector.extract_strided_slice %697 {offsets = [0, 0], sizes = [2, 384], strides = [1, 1]} : vector<2x512xf32> to vector<2x384xf32>
    %699 = arith.negf %698 : vector<2x384xf32>
    %700 = math.exp %699 : vector<2x384xf32>
    %cst_215 = arith.constant 1.000000e+00 : f32
    %701 = vector.broadcast %cst_215 : f32 to vector<2x384xf32>
    %702 = arith.addf %701, %700 : vector<2x384xf32>
    %703 = arith.divf %701, %702 : vector<2x384xf32>
    %704 = vector.extract_strided_slice %703 {offsets = [0, 0], sizes = [2, 128], strides = [1, 1]} : vector<2x384xf32> to vector<2x128xf32>
    %705 = vector.extract_strided_slice %703 {offsets = [0, 128], sizes = [2, 128], strides = [1, 1]} : vector<2x384xf32> to vector<2x128xf32>
    %706 = vector.extract_strided_slice %703 {offsets = [0, 256], sizes = [2, 128], strides = [1, 1]} : vector<2x384xf32> to vector<2x128xf32>
    %707 = vector.extract_strided_slice %697 {offsets = [0, 384], sizes = [2, 128], strides = [1, 1]} : vector<2x512xf32> to vector<2x128xf32>
    %708 = math.tanh %707 : vector<2x128xf32>
    %709 = arith.mulf %705, %690 : vector<2x128xf32>
    %710 = arith.mulf %704, %708 : vector<2x128xf32>
    %711 = arith.addf %709, %710 : vector<2x128xf32>
    %712 = math.tanh %711 : vector<2x128xf32>
    %713 = arith.mulf %706, %712 : vector<2x128xf32>
    %c8_216 = arith.constant 8 : index
    %c0_217 = arith.constant 0 : index
    %714 = vector.load %arg12[%c8_216, %c0_217] : memref<16x128xf32, #tpu.memory_space<vmem>>, vector<2x128xf32>
    tpu.vector_store %arg12[%c8_216, %c0_217], %713 {strides = array<i32>} : memref<16x128xf32, #tpu.memory_space<vmem>>, vector<2x128xf32>,
    %715 = vector.extract_strided_slice %607 {offsets = [10, 0], sizes = [2, 512], strides = [1, 1]} : vector<16x512xf32> to vector<2x512xf32>
    %716 = arith.truncf %713 : vector<2x128xf32> to vector<2x128xbf16>
    %cst_218 = arith.constant dense<0.000000e+00> : vector<2x512xf32>
    %717 = tpu.matmul %716, %600, %cst_218 {dimension_numbers = #tpu.dot_dimension_numbers<[1], [0], [0], [1], [0, 0, 1, 1], [], []>} : vector<2x128xbf16>, vector<128x512xbf16>, vector<2x512xf32> -> vector<2x512xf32>
    %718 = arith.addf %715, %717 : vector<2x512xf32>
    %719 = vector.extract_strided_slice %718 {offsets = [0, 0], sizes = [2, 384], strides = [1, 1]} : vector<2x512xf32> to vector<2x384xf32>
    %720 = arith.negf %719 : vector<2x384xf32>
    %721 = math.exp %720 : vector<2x384xf32>
    %cst_219 = arith.constant 1.000000e+00 : f32
    %722 = vector.broadcast %cst_219 : f32 to vector<2x384xf32>
    %723 = arith.addf %722, %721 : vector<2x384xf32>
    %724 = arith.divf %722, %723 : vector<2x384xf32>
    %725 = vector.extract_strided_slice %724 {offsets = [0, 0], sizes = [2, 128], strides = [1, 1]} : vector<2x384xf32> to vector<2x128xf32>
    %726 = vector.extract_strided_slice %724 {offsets = [0, 128], sizes = [2, 128], strides = [1, 1]} : vector<2x384xf32> to vector<2x128xf32>
    %727 = vector.extract_strided_slice %724 {offsets = [0, 256], sizes = [2, 128], strides = [1, 1]} : vector<2x384xf32> to vector<2x128xf32>
    %728 = vector.extract_strided_slice %718 {offsets = [0, 384], sizes = [2, 128], strides = [1, 1]} : vector<2x512xf32> to vector<2x128xf32>
    %729 = math.tanh %728 : vector<2x128xf32>
    %730 = arith.mulf %726, %711 : vector<2x128xf32>
    %731 = arith.mulf %725, %729 : vector<2x128xf32>
    %732 = arith.addf %730, %731 : vector<2x128xf32>
    %733 = math.tanh %732 : vector<2x128xf32>
    %734 = arith.mulf %727, %733 : vector<2x128xf32>
    %c10_220 = arith.constant 10 : index
    %c0_221 = arith.constant 0 : index
    %735 = vector.load %arg12[%c10_220, %c0_221] : memref<16x128xf32, #tpu.memory_space<vmem>>, vector<2x128xf32>
    tpu.vector_store %arg12[%c10_220, %c0_221], %734 {strides = array<i32>} : memref<16x128xf32, #tpu.memory_space<vmem>>, vector<2x128xf32>,
    %736 = vector.extract_strided_slice %607 {offsets = [12, 0], sizes = [2, 512], strides = [1, 1]} : vector<16x512xf32> to vector<2x512xf32>
    %737 = arith.truncf %734 : vector<2x128xf32> to vector<2x128xbf16>
    %cst_222 = arith.constant dense<0.000000e+00> : vector<2x512xf32>
    %738 = tpu.matmul %737, %600, %cst_222 {dimension_numbers = #tpu.dot_dimension_numbers<[1], [0], [0], [1], [0, 0, 1, 1], [], []>} : vector<2x128xbf16>, vector<128x512xbf16>, vector<2x512xf32> -> vector<2x512xf32>
    %739 = arith.addf %736, %738 : vector<2x512xf32>
    %740 = vector.extract_strided_slice %739 {offsets = [0, 0], sizes = [2, 384], strides = [1, 1]} : vector<2x512xf32> to vector<2x384xf32>
    %741 = arith.negf %740 : vector<2x384xf32>
    %742 = math.exp %741 : vector<2x384xf32>
    %cst_223 = arith.constant 1.000000e+00 : f32
    %743 = vector.broadcast %cst_223 : f32 to vector<2x384xf32>
    %744 = arith.addf %743, %742 : vector<2x384xf32>
    %745 = arith.divf %743, %744 : vector<2x384xf32>
    %746 = vector.extract_strided_slice %745 {offsets = [0, 0], sizes = [2, 128], strides = [1, 1]} : vector<2x384xf32> to vector<2x128xf32>
    %747 = vector.extract_strided_slice %745 {offsets = [0, 128], sizes = [2, 128], strides = [1, 1]} : vector<2x384xf32> to vector<2x128xf32>
    %748 = vector.extract_strided_slice %745 {offsets = [0, 256], sizes = [2, 128], strides = [1, 1]} : vector<2x384xf32> to vector<2x128xf32>
    %749 = vector.extract_strided_slice %739 {offsets = [0, 384], sizes = [2, 128], strides = [1, 1]} : vector<2x512xf32> to vector<2x128xf32>
    %750 = math.tanh %749 : vector<2x128xf32>
    %751 = arith.mulf %747, %732 : vector<2x128xf32>
    %752 = arith.mulf %746, %750 : vector<2x128xf32>
    %753 = arith.addf %751, %752 : vector<2x128xf32>
    %754 = math.tanh %753 : vector<2x128xf32>
    %755 = arith.mulf %748, %754 : vector<2x128xf32>
    %c12_224 = arith.constant 12 : index
    %c0_225 = arith.constant 0 : index
    %756 = vector.load %arg12[%c12_224, %c0_225] : memref<16x128xf32, #tpu.memory_space<vmem>>, vector<2x128xf32>
    tpu.vector_store %arg12[%c12_224, %c0_225], %755 {strides = array<i32>} : memref<16x128xf32, #tpu.memory_space<vmem>>, vector<2x128xf32>,
    %757 = vector.extract_strided_slice %607 {offsets = [14, 0], sizes = [2, 512], strides = [1, 1]} : vector<16x512xf32> to vector<2x512xf32>
    %758 = arith.truncf %755 : vector<2x128xf32> to vector<2x128xbf16>
    %cst_226 = arith.constant dense<0.000000e+00> : vector<2x512xf32>
    %759 = tpu.matmul %758, %600, %cst_226 {dimension_numbers = #tpu.dot_dimension_numbers<[1], [0], [0], [1], [0, 0, 1, 1], [], []>} : vector<2x128xbf16>, vector<128x512xbf16>, vector<2x512xf32> -> vector<2x512xf32>
    %760 = arith.addf %757, %759 : vector<2x512xf32>
    %761 = vector.extract_strided_slice %760 {offsets = [0, 0], sizes = [2, 384], strides = [1, 1]} : vector<2x512xf32> to vector<2x384xf32>
    %762 = arith.negf %761 : vector<2x384xf32>
    %763 = math.exp %762 : vector<2x384xf32>
    %cst_227 = arith.constant 1.000000e+00 : f32
    %764 = vector.broadcast %cst_227 : f32 to vector<2x384xf32>
    %765 = arith.addf %764, %763 : vector<2x384xf32>
    %766 = arith.divf %764, %765 : vector<2x384xf32>
    %767 = vector.extract_strided_slice %766 {offsets = [0, 0], sizes = [2, 128], strides = [1, 1]} : vector<2x384xf32> to vector<2x128xf32>
    %768 = vector.extract_strided_slice %766 {offsets = [0, 128], sizes = [2, 128], strides = [1, 1]} : vector<2x384xf32> to vector<2x128xf32>
    %769 = vector.extract_strided_slice %766 {offsets = [0, 256], sizes = [2, 128], strides = [1, 1]} : vector<2x384xf32> to vector<2x128xf32>
    %770 = vector.extract_strided_slice %760 {offsets = [0, 384], sizes = [2, 128], strides = [1, 1]} : vector<2x512xf32> to vector<2x128xf32>
    %771 = math.tanh %770 : vector<2x128xf32>
    %772 = arith.mulf %768, %753 : vector<2x128xf32>
    %773 = arith.mulf %767, %771 : vector<2x128xf32>
    %774 = arith.addf %772, %773 : vector<2x128xf32>
    %775 = math.tanh %774 : vector<2x128xf32>
    %776 = arith.mulf %769, %775 : vector<2x128xf32>
    %c14_228 = arith.constant 14 : index
    %c0_229 = arith.constant 0 : index
    %777 = vector.load %arg12[%c14_228, %c0_229] : memref<16x128xf32, #tpu.memory_space<vmem>>, vector<2x128xf32>
    tpu.vector_store %arg12[%c14_228, %c0_229], %776 {strides = array<i32>} : memref<16x128xf32, #tpu.memory_space<vmem>>, vector<2x128xf32>,
    %c4_i32_230 = arith.constant 4 : i32
    %c0_i32_231 = arith.constant 0 : i32
    %c0_i32_232 = arith.constant 0 : i32
    %c0_i32_233 = arith.constant 0 : i32
    %c0_i32_234 = arith.constant 0 : i32
    %778 = tpu.memref_slice %arg1[%c4_i32_230, %c0_i32_233, %c0_i32_234] : memref<6x256x512xbf16, #tpu.memory_space<any>> -> memref<1x256x512xbf16, #tpu.memory_space<any>>
    %779 = tpu.memref_squeeze %778 : memref<1x256x512xbf16, #tpu.memory_space<any>> -> memref<256x512xbf16, #tpu.memory_space<any>>
    %c0_i32_235 = arith.constant 0 : i32
    %c0_i32_236 = arith.constant 0 : i32
    %780 = tpu.memref_slice %arg10[%c0_i32_231, %c0_i32_235, %c0_i32_236] : memref<2x256x512xbf16, #tpu.memory_space<vmem>> -> memref<1x256x512xbf16, #tpu.memory_space<vmem>>
    %781 = tpu.memref_squeeze %780 : memref<1x256x512xbf16, #tpu.memory_space<vmem>> -> memref<256x512xbf16, #tpu.memory_space<vmem>>
    %782 = tpu.memref_slice %arg11[%c0_i32_232] : memref<2x!tpu.dma_semaphore, #tpu.memory_space<semaphore_mem>> -> memref<1x!tpu.dma_semaphore, #tpu.memory_space<semaphore_mem>>
    %783 = tpu.memref_squeeze %782 : memref<1x!tpu.dma_semaphore, #tpu.memory_space<semaphore_mem>> -> memref<!tpu.dma_semaphore, #tpu.memory_space<semaphore_mem>>
    tpu.wait_dma2 semaphore(%783 : memref<!tpu.dma_semaphore, #tpu.memory_space<semaphore_mem>>) src(%779 : memref<256x512xbf16, #tpu.memory_space<any>>) dst(%781 : memref<256x512xbf16, #tpu.memory_space<vmem>>)
    %c5_i32 = arith.constant 5 : i32
    %c1_i32_237 = arith.constant 1 : i32
    %c1_i32_238 = arith.constant 1 : i32
    %c0_i32_239 = arith.constant 0 : i32
    %c0_i32_240 = arith.constant 0 : i32
    %784 = tpu.memref_slice %arg1[%c5_i32, %c0_i32_239, %c0_i32_240] : memref<6x256x512xbf16, #tpu.memory_space<any>> -> memref<1x256x512xbf16, #tpu.memory_space<any>>
    %785 = tpu.memref_squeeze %784 : memref<1x256x512xbf16, #tpu.memory_space<any>> -> memref<256x512xbf16, #tpu.memory_space<any>>
    %c0_i32_241 = arith.constant 0 : i32
    %c0_i32_242 = arith.constant 0 : i32
    %786 = tpu.memref_slice %arg10[%c1_i32_237, %c0_i32_241, %c0_i32_242] : memref<2x256x512xbf16, #tpu.memory_space<vmem>> -> memref<1x256x512xbf16, #tpu.memory_space<vmem>>
    %787 = tpu.memref_squeeze %786 : memref<1x256x512xbf16, #tpu.memory_space<vmem>> -> memref<256x512xbf16, #tpu.memory_space<vmem>>
    %788 = tpu.memref_slice %arg11[%c1_i32_238] : memref<2x!tpu.dma_semaphore, #tpu.memory_space<semaphore_mem>> -> memref<1x!tpu.dma_semaphore, #tpu.memory_space<semaphore_mem>>
    %789 = tpu.memref_squeeze %788 : memref<1x!tpu.dma_semaphore, #tpu.memory_space<semaphore_mem>> -> memref<!tpu.dma_semaphore, #tpu.memory_space<semaphore_mem>>
    tpu.enqueue_dma source(%785 : memref<256x512xbf16, #tpu.memory_space<any>>) target(%787 : memref<256x512xbf16, #tpu.memory_space<vmem>>) target_semaphore(%789 : memref<!tpu.dma_semaphore, #tpu.memory_space<semaphore_mem>>)
    %c0_243 = arith.constant 0 : index
    %c0_244 = arith.constant 0 : index
    %c0_245 = arith.constant 0 : index
    %790 = vector.load %arg10[%c0_243, %c0_244, %c0_245] : memref<2x256x512xbf16, #tpu.memory_space<vmem>>, vector<1x128x512xbf16>
    %791 = vector.shape_cast %790 : vector<1x128x512xbf16> to vector<128x512xbf16>
    %c0_246 = arith.constant 0 : index
    %c128_247 = arith.constant 128 : index
    %c0_248 = arith.constant 0 : index
    %792 = vector.load %arg10[%c0_246, %c128_247, %c0_248] : memref<2x256x512xbf16, #tpu.memory_space<vmem>>, vector<1x128x512xbf16>
    %793 = vector.shape_cast %792 : vector<1x128x512xbf16> to vector<128x512xbf16>
    %c0_249 = arith.constant 0 : index
    %c0_250 = arith.constant 0 : index
    %794 = vector.load %arg12[%c0_249, %c0_250] : memref<16x128xf32, #tpu.memory_space<vmem>>, vector<16x128xf32>
    %795 = arith.truncf %794 : vector<16x128xf32> to vector<16x128xbf16>
    %cst_251 = arith.constant dense<0.000000e+00> : vector<16x512xf32>
    %796 = tpu.matmul %795, %791, %cst_251 {dimension_numbers = #tpu.dot_dimension_numbers<[1], [0], [0], [1], [0, 0, 1, 1], [], []>} : vector<16x128xbf16>, vector<128x512xbf16>, vector<16x512xf32> -> vector<16x512xf32>
    %c4_252 = arith.constant 4 : index
    %c0_253 = arith.constant 0 : index
    %c0_254 = arith.constant 0 : index
    %797 = vector.load %arg2[%c4_252, %c0_253, %c0_254] : memref<6x1x512xf32, #tpu.memory_space<vmem>>, vector<1x1x512xf32>
    %798 = vector.shape_cast %797 : vector<1x1x512xf32> to vector<1x512xf32>
    %799 = vector.broadcast %798 : vector<1x512xf32> to vector<16x512xf32>
    %800 = arith.addf %796, %799 : vector<16x512xf32>
    %cst_255 = arith.constant 0.000000e+00 : f32
    %801 = vector.broadcast %cst_255 : f32 to vector<2x128xf32>
    %cst_256 = arith.constant 0.000000e+00 : f32
    %802 = vector.broadcast %cst_256 : f32 to vector<2x128xf32>
    %803 = vector.extract_strided_slice %800 {offsets = [0, 0], sizes = [2, 512], strides = [1, 1]} : vector<16x512xf32> to vector<2x512xf32>
    %804 = arith.truncf %801 : vector<2x128xf32> to vector<2x128xbf16>
    %cst_257 = arith.constant dense<0.000000e+00> : vector<2x512xf32>
    %805 = tpu.matmul %804, %793, %cst_257 {dimension_numbers = #tpu.dot_dimension_numbers<[1], [0], [0], [1], [0, 0, 1, 1], [], []>} : vector<2x128xbf16>, vector<128x512xbf16>, vector<2x512xf32> -> vector<2x512xf32>
    %806 = arith.addf %803, %805 : vector<2x512xf32>
    %807 = vector.extract_strided_slice %806 {offsets = [0, 0], sizes = [2, 384], strides = [1, 1]} : vector<2x512xf32> to vector<2x384xf32>
    %808 = arith.negf %807 : vector<2x384xf32>
    %809 = math.exp %808 : vector<2x384xf32>
    %cst_258 = arith.constant 1.000000e+00 : f32
    %810 = vector.broadcast %cst_258 : f32 to vector<2x384xf32>
    %811 = arith.addf %810, %809 : vector<2x384xf32>
    %812 = arith.divf %810, %811 : vector<2x384xf32>
    %813 = vector.extract_strided_slice %812 {offsets = [0, 0], sizes = [2, 128], strides = [1, 1]} : vector<2x384xf32> to vector<2x128xf32>
    %814 = vector.extract_strided_slice %812 {offsets = [0, 128], sizes = [2, 128], strides = [1, 1]} : vector<2x384xf32> to vector<2x128xf32>
    %815 = vector.extract_strided_slice %812 {offsets = [0, 256], sizes = [2, 128], strides = [1, 1]} : vector<2x384xf32> to vector<2x128xf32>
    %816 = vector.extract_strided_slice %806 {offsets = [0, 384], sizes = [2, 128], strides = [1, 1]} : vector<2x512xf32> to vector<2x128xf32>
    %817 = math.tanh %816 : vector<2x128xf32>
    %818 = arith.mulf %814, %802 : vector<2x128xf32>
    %819 = arith.mulf %813, %817 : vector<2x128xf32>
    %820 = arith.addf %818, %819 : vector<2x128xf32>
    %821 = math.tanh %820 : vector<2x128xf32>
    %822 = arith.mulf %815, %821 : vector<2x128xf32>
    %c0_259 = arith.constant 0 : index
    %c0_260 = arith.constant 0 : index
    %823 = vector.load %arg12[%c0_259, %c0_260] : memref<16x128xf32, #tpu.memory_space<vmem>>, vector<2x128xf32>
    tpu.vector_store %arg12[%c0_259, %c0_260], %822 {strides = array<i32>} : memref<16x128xf32, #tpu.memory_space<vmem>>, vector<2x128xf32>,
    %824 = vector.extract_strided_slice %800 {offsets = [2, 0], sizes = [2, 512], strides = [1, 1]} : vector<16x512xf32> to vector<2x512xf32>
    %825 = arith.truncf %822 : vector<2x128xf32> to vector<2x128xbf16>
    %cst_261 = arith.constant dense<0.000000e+00> : vector<2x512xf32>
    %826 = tpu.matmul %825, %793, %cst_261 {dimension_numbers = #tpu.dot_dimension_numbers<[1], [0], [0], [1], [0, 0, 1, 1], [], []>} : vector<2x128xbf16>, vector<128x512xbf16>, vector<2x512xf32> -> vector<2x512xf32>
    %827 = arith.addf %824, %826 : vector<2x512xf32>
    %828 = vector.extract_strided_slice %827 {offsets = [0, 0], sizes = [2, 384], strides = [1, 1]} : vector<2x512xf32> to vector<2x384xf32>
    %829 = arith.negf %828 : vector<2x384xf32>
    %830 = math.exp %829 : vector<2x384xf32>
    %cst_262 = arith.constant 1.000000e+00 : f32
    %831 = vector.broadcast %cst_262 : f32 to vector<2x384xf32>
    %832 = arith.addf %831, %830 : vector<2x384xf32>
    %833 = arith.divf %831, %832 : vector<2x384xf32>
    %834 = vector.extract_strided_slice %833 {offsets = [0, 0], sizes = [2, 128], strides = [1, 1]} : vector<2x384xf32> to vector<2x128xf32>
    %835 = vector.extract_strided_slice %833 {offsets = [0, 128], sizes = [2, 128], strides = [1, 1]} : vector<2x384xf32> to vector<2x128xf32>
    %836 = vector.extract_strided_slice %833 {offsets = [0, 256], sizes = [2, 128], strides = [1, 1]} : vector<2x384xf32> to vector<2x128xf32>
    %837 = vector.extract_strided_slice %827 {offsets = [0, 384], sizes = [2, 128], strides = [1, 1]} : vector<2x512xf32> to vector<2x128xf32>
    %838 = math.tanh %837 : vector<2x128xf32>
    %839 = arith.mulf %835, %820 : vector<2x128xf32>
    %840 = arith.mulf %834, %838 : vector<2x128xf32>
    %841 = arith.addf %839, %840 : vector<2x128xf32>
    %842 = math.tanh %841 : vector<2x128xf32>
    %843 = arith.mulf %836, %842 : vector<2x128xf32>
    %c2_263 = arith.constant 2 : index
    %c0_264 = arith.constant 0 : index
    %844 = vector.load %arg12[%c2_263, %c0_264] : memref<16x128xf32, #tpu.memory_space<vmem>>, vector<2x128xf32>
    tpu.vector_store %arg12[%c2_263, %c0_264], %843 {strides = array<i32>} : memref<16x128xf32, #tpu.memory_space<vmem>>, vector<2x128xf32>,
    %845 = vector.extract_strided_slice %800 {offsets = [4, 0], sizes = [2, 512], strides = [1, 1]} : vector<16x512xf32> to vector<2x512xf32>
    %846 = arith.truncf %843 : vector<2x128xf32> to vector<2x128xbf16>
    %cst_265 = arith.constant dense<0.000000e+00> : vector<2x512xf32>
    %847 = tpu.matmul %846, %793, %cst_265 {dimension_numbers = #tpu.dot_dimension_numbers<[1], [0], [0], [1], [0, 0, 1, 1], [], []>} : vector<2x128xbf16>, vector<128x512xbf16>, vector<2x512xf32> -> vector<2x512xf32>
    %848 = arith.addf %845, %847 : vector<2x512xf32>
    %849 = vector.extract_strided_slice %848 {offsets = [0, 0], sizes = [2, 384], strides = [1, 1]} : vector<2x512xf32> to vector<2x384xf32>
    %850 = arith.negf %849 : vector<2x384xf32>
    %851 = math.exp %850 : vector<2x384xf32>
    %cst_266 = arith.constant 1.000000e+00 : f32
    %852 = vector.broadcast %cst_266 : f32 to vector<2x384xf32>
    %853 = arith.addf %852, %851 : vector<2x384xf32>
    %854 = arith.divf %852, %853 : vector<2x384xf32>
    %855 = vector.extract_strided_slice %854 {offsets = [0, 0], sizes = [2, 128], strides = [1, 1]} : vector<2x384xf32> to vector<2x128xf32>
    %856 = vector.extract_strided_slice %854 {offsets = [0, 128], sizes = [2, 128], strides = [1, 1]} : vector<2x384xf32> to vector<2x128xf32>
    %857 = vector.extract_strided_slice %854 {offsets = [0, 256], sizes = [2, 128], strides = [1, 1]} : vector<2x384xf32> to vector<2x128xf32>
    %858 = vector.extract_strided_slice %848 {offsets = [0, 384], sizes = [2, 128], strides = [1, 1]} : vector<2x512xf32> to vector<2x128xf32>
    %859 = math.tanh %858 : vector<2x128xf32>
    %860 = arith.mulf %856, %841 : vector<2x128xf32>
    %861 = arith.mulf %855, %859 : vector<2x128xf32>
    %862 = arith.addf %860, %861 : vector<2x128xf32>
    %863 = math.tanh %862 : vector<2x128xf32>
    %864 = arith.mulf %857, %863 : vector<2x128xf32>
    %c4_267 = arith.constant 4 : index
    %c0_268 = arith.constant 0 : index
    %865 = vector.load %arg12[%c4_267, %c0_268] : memref<16x128xf32, #tpu.memory_space<vmem>>, vector<2x128xf32>
    tpu.vector_store %arg12[%c4_267, %c0_268], %864 {strides = array<i32>} : memref<16x128xf32, #tpu.memory_space<vmem>>, vector<2x128xf32>,
    %866 = vector.extract_strided_slice %800 {offsets = [6, 0], sizes = [2, 512], strides = [1, 1]} : vector<16x512xf32> to vector<2x512xf32>
    %867 = arith.truncf %864 : vector<2x128xf32> to vector<2x128xbf16>
    %cst_269 = arith.constant dense<0.000000e+00> : vector<2x512xf32>
    %868 = tpu.matmul %867, %793, %cst_269 {dimension_numbers = #tpu.dot_dimension_numbers<[1], [0], [0], [1], [0, 0, 1, 1], [], []>} : vector<2x128xbf16>, vector<128x512xbf16>, vector<2x512xf32> -> vector<2x512xf32>
    %869 = arith.addf %866, %868 : vector<2x512xf32>
    %870 = vector.extract_strided_slice %869 {offsets = [0, 0], sizes = [2, 384], strides = [1, 1]} : vector<2x512xf32> to vector<2x384xf32>
    %871 = arith.negf %870 : vector<2x384xf32>
    %872 = math.exp %871 : vector<2x384xf32>
    %cst_270 = arith.constant 1.000000e+00 : f32
    %873 = vector.broadcast %cst_270 : f32 to vector<2x384xf32>
    %874 = arith.addf %873, %872 : vector<2x384xf32>
    %875 = arith.divf %873, %874 : vector<2x384xf32>
    %876 = vector.extract_strided_slice %875 {offsets = [0, 0], sizes = [2, 128], strides = [1, 1]} : vector<2x384xf32> to vector<2x128xf32>
    %877 = vector.extract_strided_slice %875 {offsets = [0, 128], sizes = [2, 128], strides = [1, 1]} : vector<2x384xf32> to vector<2x128xf32>
    %878 = vector.extract_strided_slice %875 {offsets = [0, 256], sizes = [2, 128], strides = [1, 1]} : vector<2x384xf32> to vector<2x128xf32>
    %879 = vector.extract_strided_slice %869 {offsets = [0, 384], sizes = [2, 128], strides = [1, 1]} : vector<2x512xf32> to vector<2x128xf32>
    %880 = math.tanh %879 : vector<2x128xf32>
    %881 = arith.mulf %877, %862 : vector<2x128xf32>
    %882 = arith.mulf %876, %880 : vector<2x128xf32>
    %883 = arith.addf %881, %882 : vector<2x128xf32>
    %884 = math.tanh %883 : vector<2x128xf32>
    %885 = arith.mulf %878, %884 : vector<2x128xf32>
    %c6_271 = arith.constant 6 : index
    %c0_272 = arith.constant 0 : index
    %886 = vector.load %arg12[%c6_271, %c0_272] : memref<16x128xf32, #tpu.memory_space<vmem>>, vector<2x128xf32>
    tpu.vector_store %arg12[%c6_271, %c0_272], %885 {strides = array<i32>} : memref<16x128xf32, #tpu.memory_space<vmem>>, vector<2x128xf32>,
    %887 = vector.extract_strided_slice %800 {offsets = [8, 0], sizes = [2, 512], strides = [1, 1]} : vector<16x512xf32> to vector<2x512xf32>
    %888 = arith.truncf %885 : vector<2x128xf32> to vector<2x128xbf16>
    %cst_273 = arith.constant dense<0.000000e+00> : vector<2x512xf32>
    %889 = tpu.matmul %888, %793, %cst_273 {dimension_numbers = #tpu.dot_dimension_numbers<[1], [0], [0], [1], [0, 0, 1, 1], [], []>} : vector<2x128xbf16>, vector<128x512xbf16>, vector<2x512xf32> -> vector<2x512xf32>
    %890 = arith.addf %887, %889 : vector<2x512xf32>
    %891 = vector.extract_strided_slice %890 {offsets = [0, 0], sizes = [2, 384], strides = [1, 1]} : vector<2x512xf32> to vector<2x384xf32>
    %892 = arith.negf %891 : vector<2x384xf32>
    %893 = math.exp %892 : vector<2x384xf32>
    %cst_274 = arith.constant 1.000000e+00 : f32
    %894 = vector.broadcast %cst_274 : f32 to vector<2x384xf32>
    %895 = arith.addf %894, %893 : vector<2x384xf32>
    %896 = arith.divf %894, %895 : vector<2x384xf32>
    %897 = vector.extract_strided_slice %896 {offsets = [0, 0], sizes = [2, 128], strides = [1, 1]} : vector<2x384xf32> to vector<2x128xf32>
    %898 = vector.extract_strided_slice %896 {offsets = [0, 128], sizes = [2, 128], strides = [1, 1]} : vector<2x384xf32> to vector<2x128xf32>
    %899 = vector.extract_strided_slice %896 {offsets = [0, 256], sizes = [2, 128], strides = [1, 1]} : vector<2x384xf32> to vector<2x128xf32>
    %900 = vector.extract_strided_slice %890 {offsets = [0, 384], sizes = [2, 128], strides = [1, 1]} : vector<2x512xf32> to vector<2x128xf32>
    %901 = math.tanh %900 : vector<2x128xf32>
    %902 = arith.mulf %898, %883 : vector<2x128xf32>
    %903 = arith.mulf %897, %901 : vector<2x128xf32>
    %904 = arith.addf %902, %903 : vector<2x128xf32>
    %905 = math.tanh %904 : vector<2x128xf32>
    %906 = arith.mulf %899, %905 : vector<2x128xf32>
    %c8_275 = arith.constant 8 : index
    %c0_276 = arith.constant 0 : index
    %907 = vector.load %arg12[%c8_275, %c0_276] : memref<16x128xf32, #tpu.memory_space<vmem>>, vector<2x128xf32>
    tpu.vector_store %arg12[%c8_275, %c0_276], %906 {strides = array<i32>} : memref<16x128xf32, #tpu.memory_space<vmem>>, vector<2x128xf32>,
    %908 = vector.extract_strided_slice %800 {offsets = [10, 0], sizes = [2, 512], strides = [1, 1]} : vector<16x512xf32> to vector<2x512xf32>
    %909 = arith.truncf %906 : vector<2x128xf32> to vector<2x128xbf16>
    %cst_277 = arith.constant dense<0.000000e+00> : vector<2x512xf32>
    %910 = tpu.matmul %909, %793, %cst_277 {dimension_numbers = #tpu.dot_dimension_numbers<[1], [0], [0], [1], [0, 0, 1, 1], [], []>} : vector<2x128xbf16>, vector<128x512xbf16>, vector<2x512xf32> -> vector<2x512xf32>
    %911 = arith.addf %908, %910 : vector<2x512xf32>
    %912 = vector.extract_strided_slice %911 {offsets = [0, 0], sizes = [2, 384], strides = [1, 1]} : vector<2x512xf32> to vector<2x384xf32>
    %913 = arith.negf %912 : vector<2x384xf32>
    %914 = math.exp %913 : vector<2x384xf32>
    %cst_278 = arith.constant 1.000000e+00 : f32
    %915 = vector.broadcast %cst_278 : f32 to vector<2x384xf32>
    %916 = arith.addf %915, %914 : vector<2x384xf32>
    %917 = arith.divf %915, %916 : vector<2x384xf32>
    %918 = vector.extract_strided_slice %917 {offsets = [0, 0], sizes = [2, 128], strides = [1, 1]} : vector<2x384xf32> to vector<2x128xf32>
    %919 = vector.extract_strided_slice %917 {offsets = [0, 128], sizes = [2, 128], strides = [1, 1]} : vector<2x384xf32> to vector<2x128xf32>
    %920 = vector.extract_strided_slice %917 {offsets = [0, 256], sizes = [2, 128], strides = [1, 1]} : vector<2x384xf32> to vector<2x128xf32>
    %921 = vector.extract_strided_slice %911 {offsets = [0, 384], sizes = [2, 128], strides = [1, 1]} : vector<2x512xf32> to vector<2x128xf32>
    %922 = math.tanh %921 : vector<2x128xf32>
    %923 = arith.mulf %919, %904 : vector<2x128xf32>
    %924 = arith.mulf %918, %922 : vector<2x128xf32>
    %925 = arith.addf %923, %924 : vector<2x128xf32>
    %926 = math.tanh %925 : vector<2x128xf32>
    %927 = arith.mulf %920, %926 : vector<2x128xf32>
    %c10_279 = arith.constant 10 : index
    %c0_280 = arith.constant 0 : index
    %928 = vector.load %arg12[%c10_279, %c0_280] : memref<16x128xf32, #tpu.memory_space<vmem>>, vector<2x128xf32>
    tpu.vector_store %arg12[%c10_279, %c0_280], %927 {strides = array<i32>} : memref<16x128xf32, #tpu.memory_space<vmem>>, vector<2x128xf32>,
    %929 = vector.extract_strided_slice %800 {offsets = [12, 0], sizes = [2, 512], strides = [1, 1]} : vector<16x512xf32> to vector<2x512xf32>
    %930 = arith.truncf %927 : vector<2x128xf32> to vector<2x128xbf16>
    %cst_281 = arith.constant dense<0.000000e+00> : vector<2x512xf32>
    %931 = tpu.matmul %930, %793, %cst_281 {dimension_numbers = #tpu.dot_dimension_numbers<[1], [0], [0], [1], [0, 0, 1, 1], [], []>} : vector<2x128xbf16>, vector<128x512xbf16>, vector<2x512xf32> -> vector<2x512xf32>
    %932 = arith.addf %929, %931 : vector<2x512xf32>
    %933 = vector.extract_strided_slice %932 {offsets = [0, 0], sizes = [2, 384], strides = [1, 1]} : vector<2x512xf32> to vector<2x384xf32>
    %934 = arith.negf %933 : vector<2x384xf32>
    %935 = math.exp %934 : vector<2x384xf32>
    %cst_282 = arith.constant 1.000000e+00 : f32
    %936 = vector.broadcast %cst_282 : f32 to vector<2x384xf32>
    %937 = arith.addf %936, %935 : vector<2x384xf32>
    %938 = arith.divf %936, %937 : vector<2x384xf32>
    %939 = vector.extract_strided_slice %938 {offsets = [0, 0], sizes = [2, 128], strides = [1, 1]} : vector<2x384xf32> to vector<2x128xf32>
    %940 = vector.extract_strided_slice %938 {offsets = [0, 128], sizes = [2, 128], strides = [1, 1]} : vector<2x384xf32> to vector<2x128xf32>
    %941 = vector.extract_strided_slice %938 {offsets = [0, 256], sizes = [2, 128], strides = [1, 1]} : vector<2x384xf32> to vector<2x128xf32>
    %942 = vector.extract_strided_slice %932 {offsets = [0, 384], sizes = [2, 128], strides = [1, 1]} : vector<2x512xf32> to vector<2x128xf32>
    %943 = math.tanh %942 : vector<2x128xf32>
    %944 = arith.mulf %940, %925 : vector<2x128xf32>
    %945 = arith.mulf %939, %943 : vector<2x128xf32>
    %946 = arith.addf %944, %945 : vector<2x128xf32>
    %947 = math.tanh %946 : vector<2x128xf32>
    %948 = arith.mulf %941, %947 : vector<2x128xf32>
    %c12_283 = arith.constant 12 : index
    %c0_284 = arith.constant 0 : index
    %949 = vector.load %arg12[%c12_283, %c0_284] : memref<16x128xf32, #tpu.memory_space<vmem>>, vector<2x128xf32>
    tpu.vector_store %arg12[%c12_283, %c0_284], %948 {strides = array<i32>} : memref<16x128xf32, #tpu.memory_space<vmem>>, vector<2x128xf32>,
    %950 = vector.extract_strided_slice %800 {offsets = [14, 0], sizes = [2, 512], strides = [1, 1]} : vector<16x512xf32> to vector<2x512xf32>
    %951 = arith.truncf %948 : vector<2x128xf32> to vector<2x128xbf16>
    %cst_285 = arith.constant dense<0.000000e+00> : vector<2x512xf32>
    %952 = tpu.matmul %951, %793, %cst_285 {dimension_numbers = #tpu.dot_dimension_numbers<[1], [0], [0], [1], [0, 0, 1, 1], [], []>} : vector<2x128xbf16>, vector<128x512xbf16>, vector<2x512xf32> -> vector<2x512xf32>
    %953 = arith.addf %950, %952 : vector<2x512xf32>
    %954 = vector.extract_strided_slice %953 {offsets = [0, 0], sizes = [2, 384], strides = [1, 1]} : vector<2x512xf32> to vector<2x384xf32>
    %955 = arith.negf %954 : vector<2x384xf32>
    %956 = math.exp %955 : vector<2x384xf32>
    %cst_286 = arith.constant 1.000000e+00 : f32
    %957 = vector.broadcast %cst_286 : f32 to vector<2x384xf32>
    %958 = arith.addf %957, %956 : vector<2x384xf32>
    %959 = arith.divf %957, %958 : vector<2x384xf32>
    %960 = vector.extract_strided_slice %959 {offsets = [0, 0], sizes = [2, 128], strides = [1, 1]} : vector<2x384xf32> to vector<2x128xf32>
    %961 = vector.extract_strided_slice %959 {offsets = [0, 128], sizes = [2, 128], strides = [1, 1]} : vector<2x384xf32> to vector<2x128xf32>
    %962 = vector.extract_strided_slice %959 {offsets = [0, 256], sizes = [2, 128], strides = [1, 1]} : vector<2x384xf32> to vector<2x128xf32>
    %963 = vector.extract_strided_slice %953 {offsets = [0, 384], sizes = [2, 128], strides = [1, 1]} : vector<2x512xf32> to vector<2x128xf32>
    %964 = math.tanh %963 : vector<2x128xf32>
    %965 = arith.mulf %961, %946 : vector<2x128xf32>
    %966 = arith.mulf %960, %964 : vector<2x128xf32>
    %967 = arith.addf %965, %966 : vector<2x128xf32>
    %968 = math.tanh %967 : vector<2x128xf32>
    %969 = arith.mulf %962, %968 : vector<2x128xf32>
    %c14_287 = arith.constant 14 : index
    %c0_288 = arith.constant 0 : index
    %970 = vector.load %arg12[%c14_287, %c0_288] : memref<16x128xf32, #tpu.memory_space<vmem>>, vector<2x128xf32>
    tpu.vector_store %arg12[%c14_287, %c0_288], %969 {strides = array<i32>} : memref<16x128xf32, #tpu.memory_space<vmem>>, vector<2x128xf32>,
    %c5_i32_289 = arith.constant 5 : i32
    %c1_i32_290 = arith.constant 1 : i32
    %c1_i32_291 = arith.constant 1 : i32
    %c0_i32_292 = arith.constant 0 : i32
    %c0_i32_293 = arith.constant 0 : i32
    %971 = tpu.memref_slice %arg1[%c5_i32_289, %c0_i32_292, %c0_i32_293] : memref<6x256x512xbf16, #tpu.memory_space<any>> -> memref<1x256x512xbf16, #tpu.memory_space<any>>
    %972 = tpu.memref_squeeze %971 : memref<1x256x512xbf16, #tpu.memory_space<any>> -> memref<256x512xbf16, #tpu.memory_space<any>>
    %c0_i32_294 = arith.constant 0 : i32
    %c0_i32_295 = arith.constant 0 : i32
    %973 = tpu.memref_slice %arg10[%c1_i32_290, %c0_i32_294, %c0_i32_295] : memref<2x256x512xbf16, #tpu.memory_space<vmem>> -> memref<1x256x512xbf16, #tpu.memory_space<vmem>>
    %974 = tpu.memref_squeeze %973 : memref<1x256x512xbf16, #tpu.memory_space<vmem>> -> memref<256x512xbf16, #tpu.memory_space<vmem>>
    %975 = tpu.memref_slice %arg11[%c1_i32_291] : memref<2x!tpu.dma_semaphore, #tpu.memory_space<semaphore_mem>> -> memref<1x!tpu.dma_semaphore, #tpu.memory_space<semaphore_mem>>
    %976 = tpu.memref_squeeze %975 : memref<1x!tpu.dma_semaphore, #tpu.memory_space<semaphore_mem>> -> memref<!tpu.dma_semaphore, #tpu.memory_space<semaphore_mem>>
    tpu.wait_dma2 semaphore(%976 : memref<!tpu.dma_semaphore, #tpu.memory_space<semaphore_mem>>) src(%972 : memref<256x512xbf16, #tpu.memory_space<any>>) dst(%974 : memref<256x512xbf16, #tpu.memory_space<vmem>>)
    %c1_296 = arith.constant 1 : index
    %c0_297 = arith.constant 0 : index
    %c0_298 = arith.constant 0 : index
    %977 = vector.load %arg10[%c1_296, %c0_297, %c0_298] : memref<2x256x512xbf16, #tpu.memory_space<vmem>>, vector<1x128x512xbf16>
    %978 = vector.shape_cast %977 : vector<1x128x512xbf16> to vector<128x512xbf16>
    %c1_299 = arith.constant 1 : index
    %c128_300 = arith.constant 128 : index
    %c0_301 = arith.constant 0 : index
    %979 = vector.load %arg10[%c1_299, %c128_300, %c0_301] : memref<2x256x512xbf16, #tpu.memory_space<vmem>>, vector<1x128x512xbf16>
    %980 = vector.shape_cast %979 : vector<1x128x512xbf16> to vector<128x512xbf16>
    %c0_302 = arith.constant 0 : index
    %c0_303 = arith.constant 0 : index
    %981 = vector.load %arg12[%c0_302, %c0_303] : memref<16x128xf32, #tpu.memory_space<vmem>>, vector<16x128xf32>
    %982 = arith.truncf %981 : vector<16x128xf32> to vector<16x128xbf16>
    %cst_304 = arith.constant dense<0.000000e+00> : vector<16x512xf32>
    %983 = tpu.matmul %982, %978, %cst_304 {dimension_numbers = #tpu.dot_dimension_numbers<[1], [0], [0], [1], [0, 0, 1, 1], [], []>} : vector<16x128xbf16>, vector<128x512xbf16>, vector<16x512xf32> -> vector<16x512xf32>
    %c5 = arith.constant 5 : index
    %c0_305 = arith.constant 0 : index
    %c0_306 = arith.constant 0 : index
    %984 = vector.load %arg2[%c5, %c0_305, %c0_306] : memref<6x1x512xf32, #tpu.memory_space<vmem>>, vector<1x1x512xf32>
    %985 = vector.shape_cast %984 : vector<1x1x512xf32> to vector<1x512xf32>
    %986 = vector.broadcast %985 : vector<1x512xf32> to vector<16x512xf32>
    %987 = arith.addf %983, %986 : vector<16x512xf32>
    %cst_307 = arith.constant 0.000000e+00 : f32
    %988 = vector.broadcast %cst_307 : f32 to vector<2x128xf32>
    %cst_308 = arith.constant 0.000000e+00 : f32
    %989 = vector.broadcast %cst_308 : f32 to vector<2x128xf32>
    %990 = vector.extract_strided_slice %987 {offsets = [0, 0], sizes = [2, 512], strides = [1, 1]} : vector<16x512xf32> to vector<2x512xf32>
    %991 = arith.truncf %988 : vector<2x128xf32> to vector<2x128xbf16>
    %cst_309 = arith.constant dense<0.000000e+00> : vector<2x512xf32>
    %992 = tpu.matmul %991, %980, %cst_309 {dimension_numbers = #tpu.dot_dimension_numbers<[1], [0], [0], [1], [0, 0, 1, 1], [], []>} : vector<2x128xbf16>, vector<128x512xbf16>, vector<2x512xf32> -> vector<2x512xf32>
    %993 = arith.addf %990, %992 : vector<2x512xf32>
    %994 = vector.extract_strided_slice %993 {offsets = [0, 0], sizes = [2, 384], strides = [1, 1]} : vector<2x512xf32> to vector<2x384xf32>
    %995 = arith.negf %994 : vector<2x384xf32>
    %996 = math.exp %995 : vector<2x384xf32>
    %cst_310 = arith.constant 1.000000e+00 : f32
    %997 = vector.broadcast %cst_310 : f32 to vector<2x384xf32>
    %998 = arith.addf %997, %996 : vector<2x384xf32>
    %999 = arith.divf %997, %998 : vector<2x384xf32>
    %1000 = vector.extract_strided_slice %999 {offsets = [0, 0], sizes = [2, 128], strides = [1, 1]} : vector<2x384xf32> to vector<2x128xf32>
    %1001 = vector.extract_strided_slice %999 {offsets = [0, 128], sizes = [2, 128], strides = [1, 1]} : vector<2x384xf32> to vector<2x128xf32>
    %1002 = vector.extract_strided_slice %999 {offsets = [0, 256], sizes = [2, 128], strides = [1, 1]} : vector<2x384xf32> to vector<2x128xf32>
    %1003 = vector.extract_strided_slice %993 {offsets = [0, 384], sizes = [2, 128], strides = [1, 1]} : vector<2x512xf32> to vector<2x128xf32>
    %1004 = math.tanh %1003 : vector<2x128xf32>
    %1005 = arith.mulf %1001, %989 : vector<2x128xf32>
    %1006 = arith.mulf %1000, %1004 : vector<2x128xf32>
    %1007 = arith.addf %1005, %1006 : vector<2x128xf32>
    %1008 = math.tanh %1007 : vector<2x128xf32>
    %1009 = arith.mulf %1002, %1008 : vector<2x128xf32>
    %c0_311 = arith.constant 0 : index
    %c0_312 = arith.constant 0 : index
    %1010 = vector.load %arg13[%c0_311, %c0_312] : memref<2x1024xf32, #tpu.memory_space<vmem>>, vector<2x128xf32>
    tpu.vector_store %arg13[%c0_311, %c0_312], %1009 {strides = array<i32>} : memref<2x1024xf32, #tpu.memory_space<vmem>>, vector<2x128xf32>,
    %1011 = vector.extract_strided_slice %987 {offsets = [2, 0], sizes = [2, 512], strides = [1, 1]} : vector<16x512xf32> to vector<2x512xf32>
    %1012 = arith.truncf %1009 : vector<2x128xf32> to vector<2x128xbf16>
    %cst_313 = arith.constant dense<0.000000e+00> : vector<2x512xf32>
    %1013 = tpu.matmul %1012, %980, %cst_313 {dimension_numbers = #tpu.dot_dimension_numbers<[1], [0], [0], [1], [0, 0, 1, 1], [], []>} : vector<2x128xbf16>, vector<128x512xbf16>, vector<2x512xf32> -> vector<2x512xf32>
    %1014 = arith.addf %1011, %1013 : vector<2x512xf32>
    %1015 = vector.extract_strided_slice %1014 {offsets = [0, 0], sizes = [2, 384], strides = [1, 1]} : vector<2x512xf32> to vector<2x384xf32>
    %1016 = arith.negf %1015 : vector<2x384xf32>
    %1017 = math.exp %1016 : vector<2x384xf32>
    %cst_314 = arith.constant 1.000000e+00 : f32
    %1018 = vector.broadcast %cst_314 : f32 to vector<2x384xf32>
    %1019 = arith.addf %1018, %1017 : vector<2x384xf32>
    %1020 = arith.divf %1018, %1019 : vector<2x384xf32>
    %1021 = vector.extract_strided_slice %1020 {offsets = [0, 0], sizes = [2, 128], strides = [1, 1]} : vector<2x384xf32> to vector<2x128xf32>
    %1022 = vector.extract_strided_slice %1020 {offsets = [0, 128], sizes = [2, 128], strides = [1, 1]} : vector<2x384xf32> to vector<2x128xf32>
    %1023 = vector.extract_strided_slice %1020 {offsets = [0, 256], sizes = [2, 128], strides = [1, 1]} : vector<2x384xf32> to vector<2x128xf32>
    %1024 = vector.extract_strided_slice %1014 {offsets = [0, 384], sizes = [2, 128], strides = [1, 1]} : vector<2x512xf32> to vector<2x128xf32>
    %1025 = math.tanh %1024 : vector<2x128xf32>
    %1026 = arith.mulf %1022, %1007 : vector<2x128xf32>
    %1027 = arith.mulf %1021, %1025 : vector<2x128xf32>
    %1028 = arith.addf %1026, %1027 : vector<2x128xf32>
    %1029 = math.tanh %1028 : vector<2x128xf32>
    %1030 = arith.mulf %1023, %1029 : vector<2x128xf32>
    %c0_315 = arith.constant 0 : index
    %c128_316 = arith.constant 128 : index
    %1031 = vector.load %arg13[%c0_315, %c128_316] : memref<2x1024xf32, #tpu.memory_space<vmem>>, vector<2x128xf32>
    tpu.vector_store %arg13[%c0_315, %c128_316], %1030 {strides = array<i32>} : memref<2x1024xf32, #tpu.memory_space<vmem>>, vector<2x128xf32>,
    %1032 = vector.extract_strided_slice %987 {offsets = [4, 0], sizes = [2, 512], strides = [1, 1]} : vector<16x512xf32> to vector<2x512xf32>
    %1033 = arith.truncf %1030 : vector<2x128xf32> to vector<2x128xbf16>
    %cst_317 = arith.constant dense<0.000000e+00> : vector<2x512xf32>
    %1034 = tpu.matmul %1033, %980, %cst_317 {dimension_numbers = #tpu.dot_dimension_numbers<[1], [0], [0], [1], [0, 0, 1, 1], [], []>} : vector<2x128xbf16>, vector<128x512xbf16>, vector<2x512xf32> -> vector<2x512xf32>
    %1035 = arith.addf %1032, %1034 : vector<2x512xf32>
    %1036 = vector.extract_strided_slice %1035 {offsets = [0, 0], sizes = [2, 384], strides = [1, 1]} : vector<2x512xf32> to vector<2x384xf32>
    %1037 = arith.negf %1036 : vector<2x384xf32>
    %1038 = math.exp %1037 : vector<2x384xf32>
    %cst_318 = arith.constant 1.000000e+00 : f32
    %1039 = vector.broadcast %cst_318 : f32 to vector<2x384xf32>
    %1040 = arith.addf %1039, %1038 : vector<2x384xf32>
    %1041 = arith.divf %1039, %1040 : vector<2x384xf32>
    %1042 = vector.extract_strided_slice %1041 {offsets = [0, 0], sizes = [2, 128], strides = [1, 1]} : vector<2x384xf32> to vector<2x128xf32>
    %1043 = vector.extract_strided_slice %1041 {offsets = [0, 128], sizes = [2, 128], strides = [1, 1]} : vector<2x384xf32> to vector<2x128xf32>
    %1044 = vector.extract_strided_slice %1041 {offsets = [0, 256], sizes = [2, 128], strides = [1, 1]} : vector<2x384xf32> to vector<2x128xf32>
    %1045 = vector.extract_strided_slice %1035 {offsets = [0, 384], sizes = [2, 128], strides = [1, 1]} : vector<2x512xf32> to vector<2x128xf32>
    %1046 = math.tanh %1045 : vector<2x128xf32>
    %1047 = arith.mulf %1043, %1028 : vector<2x128xf32>
    %1048 = arith.mulf %1042, %1046 : vector<2x128xf32>
    %1049 = arith.addf %1047, %1048 : vector<2x128xf32>
    %1050 = math.tanh %1049 : vector<2x128xf32>
    %1051 = arith.mulf %1044, %1050 : vector<2x128xf32>
    %c0_319 = arith.constant 0 : index
    %c256 = arith.constant 256 : index
    %1052 = vector.load %arg13[%c0_319, %c256] : memref<2x1024xf32, #tpu.memory_space<vmem>>, vector<2x128xf32>
    tpu.vector_store %arg13[%c0_319, %c256], %1051 {strides = array<i32>} : memref<2x1024xf32, #tpu.memory_space<vmem>>, vector<2x128xf32>,
    %1053 = vector.extract_strided_slice %987 {offsets = [6, 0], sizes = [2, 512], strides = [1, 1]} : vector<16x512xf32> to vector<2x512xf32>
    %1054 = arith.truncf %1051 : vector<2x128xf32> to vector<2x128xbf16>
    %cst_320 = arith.constant dense<0.000000e+00> : vector<2x512xf32>
    %1055 = tpu.matmul %1054, %980, %cst_320 {dimension_numbers = #tpu.dot_dimension_numbers<[1], [0], [0], [1], [0, 0, 1, 1], [], []>} : vector<2x128xbf16>, vector<128x512xbf16>, vector<2x512xf32> -> vector<2x512xf32>
    %1056 = arith.addf %1053, %1055 : vector<2x512xf32>
    %1057 = vector.extract_strided_slice %1056 {offsets = [0, 0], sizes = [2, 384], strides = [1, 1]} : vector<2x512xf32> to vector<2x384xf32>
    %1058 = arith.negf %1057 : vector<2x384xf32>
    %1059 = math.exp %1058 : vector<2x384xf32>
    %cst_321 = arith.constant 1.000000e+00 : f32
    %1060 = vector.broadcast %cst_321 : f32 to vector<2x384xf32>
    %1061 = arith.addf %1060, %1059 : vector<2x384xf32>
    %1062 = arith.divf %1060, %1061 : vector<2x384xf32>
    %1063 = vector.extract_strided_slice %1062 {offsets = [0, 0], sizes = [2, 128], strides = [1, 1]} : vector<2x384xf32> to vector<2x128xf32>
    %1064 = vector.extract_strided_slice %1062 {offsets = [0, 128], sizes = [2, 128], strides = [1, 1]} : vector<2x384xf32> to vector<2x128xf32>
    %1065 = vector.extract_strided_slice %1062 {offsets = [0, 256], sizes = [2, 128], strides = [1, 1]} : vector<2x384xf32> to vector<2x128xf32>
    %1066 = vector.extract_strided_slice %1056 {offsets = [0, 384], sizes = [2, 128], strides = [1, 1]} : vector<2x512xf32> to vector<2x128xf32>
    %1067 = math.tanh %1066 : vector<2x128xf32>
    %1068 = arith.mulf %1064, %1049 : vector<2x128xf32>
    %1069 = arith.mulf %1063, %1067 : vector<2x128xf32>
    %1070 = arith.addf %1068, %1069 : vector<2x128xf32>
    %1071 = math.tanh %1070 : vector<2x128xf32>
    %1072 = arith.mulf %1065, %1071 : vector<2x128xf32>
    %c0_322 = arith.constant 0 : index
    %c384 = arith.constant 384 : index
    %1073 = vector.load %arg13[%c0_322, %c384] : memref<2x1024xf32, #tpu.memory_space<vmem>>, vector<2x128xf32>
    tpu.vector_store %arg13[%c0_322, %c384], %1072 {strides = array<i32>} : memref<2x1024xf32, #tpu.memory_space<vmem>>, vector<2x128xf32>,
    %1074 = vector.extract_strided_slice %987 {offsets = [8, 0], sizes = [2, 512], strides = [1, 1]} : vector<16x512xf32> to vector<2x512xf32>
    %1075 = arith.truncf %1072 : vector<2x128xf32> to vector<2x128xbf16>
    %cst_323 = arith.constant dense<0.000000e+00> : vector<2x512xf32>
    %1076 = tpu.matmul %1075, %980, %cst_323 {dimension_numbers = #tpu.dot_dimension_numbers<[1], [0], [0], [1], [0, 0, 1, 1], [], []>} : vector<2x128xbf16>, vector<128x512xbf16>, vector<2x512xf32> -> vector<2x512xf32>
    %1077 = arith.addf %1074, %1076 : vector<2x512xf32>
    %1078 = vector.extract_strided_slice %1077 {offsets = [0, 0], sizes = [2, 384], strides = [1, 1]} : vector<2x512xf32> to vector<2x384xf32>
    %1079 = arith.negf %1078 : vector<2x384xf32>
    %1080 = math.exp %1079 : vector<2x384xf32>
    %cst_324 = arith.constant 1.000000e+00 : f32
    %1081 = vector.broadcast %cst_324 : f32 to vector<2x384xf32>
    %1082 = arith.addf %1081, %1080 : vector<2x384xf32>
    %1083 = arith.divf %1081, %1082 : vector<2x384xf32>
    %1084 = vector.extract_strided_slice %1083 {offsets = [0, 0], sizes = [2, 128], strides = [1, 1]} : vector<2x384xf32> to vector<2x128xf32>
    %1085 = vector.extract_strided_slice %1083 {offsets = [0, 128], sizes = [2, 128], strides = [1, 1]} : vector<2x384xf32> to vector<2x128xf32>
    %1086 = vector.extract_strided_slice %1083 {offsets = [0, 256], sizes = [2, 128], strides = [1, 1]} : vector<2x384xf32> to vector<2x128xf32>
    %1087 = vector.extract_strided_slice %1077 {offsets = [0, 384], sizes = [2, 128], strides = [1, 1]} : vector<2x512xf32> to vector<2x128xf32>
    %1088 = math.tanh %1087 : vector<2x128xf32>
    %1089 = arith.mulf %1085, %1070 : vector<2x128xf32>
    %1090 = arith.mulf %1084, %1088 : vector<2x128xf32>
    %1091 = arith.addf %1089, %1090 : vector<2x128xf32>
    %1092 = math.tanh %1091 : vector<2x128xf32>
    %1093 = arith.mulf %1086, %1092 : vector<2x128xf32>
    %c0_325 = arith.constant 0 : index
    %c512 = arith.constant 512 : index
    %1094 = vector.load %arg13[%c0_325, %c512] : memref<2x1024xf32, #tpu.memory_space<vmem>>, vector<2x128xf32>
    tpu.vector_store %arg13[%c0_325, %c512], %1093 {strides = array<i32>} : memref<2x1024xf32, #tpu.memory_space<vmem>>, vector<2x128xf32>,
    %1095 = vector.extract_strided_slice %987 {offsets = [10, 0], sizes = [2, 512], strides = [1, 1]} : vector<16x512xf32> to vector<2x512xf32>
    %1096 = arith.truncf %1093 : vector<2x128xf32> to vector<2x128xbf16>
    %cst_326 = arith.constant dense<0.000000e+00> : vector<2x512xf32>
    %1097 = tpu.matmul %1096, %980, %cst_326 {dimension_numbers = #tpu.dot_dimension_numbers<[1], [0], [0], [1], [0, 0, 1, 1], [], []>} : vector<2x128xbf16>, vector<128x512xbf16>, vector<2x512xf32> -> vector<2x512xf32>
    %1098 = arith.addf %1095, %1097 : vector<2x512xf32>
    %1099 = vector.extract_strided_slice %1098 {offsets = [0, 0], sizes = [2, 384], strides = [1, 1]} : vector<2x512xf32> to vector<2x384xf32>
    %1100 = arith.negf %1099 : vector<2x384xf32>
    %1101 = math.exp %1100 : vector<2x384xf32>
    %cst_327 = arith.constant 1.000000e+00 : f32
    %1102 = vector.broadcast %cst_327 : f32 to vector<2x384xf32>
    %1103 = arith.addf %1102, %1101 : vector<2x384xf32>
    %1104 = arith.divf %1102, %1103 : vector<2x384xf32>
    %1105 = vector.extract_strided_slice %1104 {offsets = [0, 0], sizes = [2, 128], strides = [1, 1]} : vector<2x384xf32> to vector<2x128xf32>
    %1106 = vector.extract_strided_slice %1104 {offsets = [0, 128], sizes = [2, 128], strides = [1, 1]} : vector<2x384xf32> to vector<2x128xf32>
    %1107 = vector.extract_strided_slice %1104 {offsets = [0, 256], sizes = [2, 128], strides = [1, 1]} : vector<2x384xf32> to vector<2x128xf32>
    %1108 = vector.extract_strided_slice %1098 {offsets = [0, 384], sizes = [2, 128], strides = [1, 1]} : vector<2x512xf32> to vector<2x128xf32>
    %1109 = math.tanh %1108 : vector<2x128xf32>
    %1110 = arith.mulf %1106, %1091 : vector<2x128xf32>
    %1111 = arith.mulf %1105, %1109 : vector<2x128xf32>
    %1112 = arith.addf %1110, %1111 : vector<2x128xf32>
    %1113 = math.tanh %1112 : vector<2x128xf32>
    %1114 = arith.mulf %1107, %1113 : vector<2x128xf32>
    %c0_328 = arith.constant 0 : index
    %c640 = arith.constant 640 : index
    %1115 = vector.load %arg13[%c0_328, %c640] : memref<2x1024xf32, #tpu.memory_space<vmem>>, vector<2x128xf32>
    tpu.vector_store %arg13[%c0_328, %c640], %1114 {strides = array<i32>} : memref<2x1024xf32, #tpu.memory_space<vmem>>, vector<2x128xf32>,
    %1116 = vector.extract_strided_slice %987 {offsets = [12, 0], sizes = [2, 512], strides = [1, 1]} : vector<16x512xf32> to vector<2x512xf32>
    %1117 = arith.truncf %1114 : vector<2x128xf32> to vector<2x128xbf16>
    %cst_329 = arith.constant dense<0.000000e+00> : vector<2x512xf32>
    %1118 = tpu.matmul %1117, %980, %cst_329 {dimension_numbers = #tpu.dot_dimension_numbers<[1], [0], [0], [1], [0, 0, 1, 1], [], []>} : vector<2x128xbf16>, vector<128x512xbf16>, vector<2x512xf32> -> vector<2x512xf32>
    %1119 = arith.addf %1116, %1118 : vector<2x512xf32>
    %1120 = vector.extract_strided_slice %1119 {offsets = [0, 0], sizes = [2, 384], strides = [1, 1]} : vector<2x512xf32> to vector<2x384xf32>
    %1121 = arith.negf %1120 : vector<2x384xf32>
    %1122 = math.exp %1121 : vector<2x384xf32>
    %cst_330 = arith.constant 1.000000e+00 : f32
    %1123 = vector.broadcast %cst_330 : f32 to vector<2x384xf32>
    %1124 = arith.addf %1123, %1122 : vector<2x384xf32>
    %1125 = arith.divf %1123, %1124 : vector<2x384xf32>
    %1126 = vector.extract_strided_slice %1125 {offsets = [0, 0], sizes = [2, 128], strides = [1, 1]} : vector<2x384xf32> to vector<2x128xf32>
    %1127 = vector.extract_strided_slice %1125 {offsets = [0, 128], sizes = [2, 128], strides = [1, 1]} : vector<2x384xf32> to vector<2x128xf32>
    %1128 = vector.extract_strided_slice %1125 {offsets = [0, 256], sizes = [2, 128], strides = [1, 1]} : vector<2x384xf32> to vector<2x128xf32>
    %1129 = vector.extract_strided_slice %1119 {offsets = [0, 384], sizes = [2, 128], strides = [1, 1]} : vector<2x512xf32> to vector<2x128xf32>
    %1130 = math.tanh %1129 : vector<2x128xf32>
    %1131 = arith.mulf %1127, %1112 : vector<2x128xf32>
    %1132 = arith.mulf %1126, %1130 : vector<2x128xf32>
    %1133 = arith.addf %1131, %1132 : vector<2x128xf32>
    %1134 = math.tanh %1133 : vector<2x128xf32>
    %1135 = arith.mulf %1128, %1134 : vector<2x128xf32>
    %c0_331 = arith.constant 0 : index
    %c768 = arith.constant 768 : index
    %1136 = vector.load %arg13[%c0_331, %c768] : memref<2x1024xf32, #tpu.memory_space<vmem>>, vector<2x128xf32>
    tpu.vector_store %arg13[%c0_331, %c768], %1135 {strides = array<i32>} : memref<2x1024xf32, #tpu.memory_space<vmem>>, vector<2x128xf32>,
    %1137 = vector.extract_strided_slice %987 {offsets = [14, 0], sizes = [2, 512], strides = [1, 1]} : vector<16x512xf32> to vector<2x512xf32>
    %1138 = arith.truncf %1135 : vector<2x128xf32> to vector<2x128xbf16>
    %cst_332 = arith.constant dense<0.000000e+00> : vector<2x512xf32>
    %1139 = tpu.matmul %1138, %980, %cst_332 {dimension_numbers = #tpu.dot_dimension_numbers<[1], [0], [0], [1], [0, 0, 1, 1], [], []>} : vector<2x128xbf16>, vector<128x512xbf16>, vector<2x512xf32> -> vector<2x512xf32>
    %1140 = arith.addf %1137, %1139 : vector<2x512xf32>
    %1141 = vector.extract_strided_slice %1140 {offsets = [0, 0], sizes = [2, 384], strides = [1, 1]} : vector<2x512xf32> to vector<2x384xf32>
    %1142 = arith.negf %1141 : vector<2x384xf32>
    %1143 = math.exp %1142 : vector<2x384xf32>
    %cst_333 = arith.constant 1.000000e+00 : f32
    %1144 = vector.broadcast %cst_333 : f32 to vector<2x384xf32>
    %1145 = arith.addf %1144, %1143 : vector<2x384xf32>
    %1146 = arith.divf %1144, %1145 : vector<2x384xf32>
    %1147 = vector.extract_strided_slice %1146 {offsets = [0, 0], sizes = [2, 128], strides = [1, 1]} : vector<2x384xf32> to vector<2x128xf32>
    %1148 = vector.extract_strided_slice %1146 {offsets = [0, 128], sizes = [2, 128], strides = [1, 1]} : vector<2x384xf32> to vector<2x128xf32>
    %1149 = vector.extract_strided_slice %1146 {offsets = [0, 256], sizes = [2, 128], strides = [1, 1]} : vector<2x384xf32> to vector<2x128xf32>
    %1150 = vector.extract_strided_slice %1140 {offsets = [0, 384], sizes = [2, 128], strides = [1, 1]} : vector<2x512xf32> to vector<2x128xf32>
    %1151 = math.tanh %1150 : vector<2x128xf32>
    %1152 = arith.mulf %1148, %1133 : vector<2x128xf32>
    %1153 = arith.mulf %1147, %1151 : vector<2x128xf32>
    %1154 = arith.addf %1152, %1153 : vector<2x128xf32>
    %1155 = math.tanh %1154 : vector<2x128xf32>
    %1156 = arith.mulf %1149, %1155 : vector<2x128xf32>
    %c0_334 = arith.constant 0 : index
    %c896 = arith.constant 896 : index
    %1157 = vector.load %arg13[%c0_334, %c896] : memref<2x1024xf32, #tpu.memory_space<vmem>>, vector<2x128xf32>
    tpu.vector_store %arg13[%c0_334, %c896], %1156 {strides = array<i32>} : memref<2x1024xf32, #tpu.memory_space<vmem>>, vector<2x128xf32>,
    %c0_335 = arith.constant 0 : index
    %c0_336 = arith.constant 0 : index
    %1158 = vector.load %arg13[%c0_335, %c0_336] : memref<2x1024xf32, #tpu.memory_space<vmem>>, vector<2x1024xf32>
    %1159 = arith.truncf %1158 : vector<2x1024xf32> to vector<2x1024xbf16>
    %c0_337 = arith.constant 0 : index
    %c0_338 = arith.constant 0 : index
    %1160 = vector.load %arg3[%c0_337, %c0_338] : memref<1024x128xbf16, #tpu.memory_space<vmem>>, vector<1024x128xbf16>
    %cst_339 = arith.constant dense<0.000000e+00> : vector<2x128xf32>
    %1161 = tpu.matmul %1159, %1160, %cst_339 {dimension_numbers = #tpu.dot_dimension_numbers<[1], [0], [0], [1], [0, 0, 1, 1], [], []>} : vector<2x1024xbf16>, vector<1024x128xbf16>, vector<2x128xf32> -> vector<2x128xf32>
    %c0_340 = arith.constant 0 : index
    %c0_341 = arith.constant 0 : index
    %1162 = vector.load %arg4[%c0_340, %c0_341] : memref<1x128xf32, #tpu.memory_space<vmem>>, vector<1x128xf32>
    %1163 = vector.broadcast %1162 : vector<1x128xf32> to vector<2x128xf32>
    %1164 = arith.addf %1161, %1163 : vector<2x128xf32>
    %1165 = arith.truncf %1164 : vector<2x128xf32> to vector<2x128xbf16>
    %c0_342 = arith.constant 0 : index
    %c0_343 = arith.constant 0 : index
    %1166 = vector.load %arg5[%c0_342, %c0_343] : memref<128x128xbf16, #tpu.memory_space<vmem>>, vector<128x128xbf16>
    %cst_344 = arith.constant dense<0.000000e+00> : vector<2x128xf32>
    %1167 = tpu.matmul %1165, %1166, %cst_344 {dimension_numbers = #tpu.dot_dimension_numbers<[1], [0], [0], [1], [0, 0, 1, 1], [], []>} : vector<2x128xbf16>, vector<128x128xbf16>, vector<2x128xf32> -> vector<2x128xf32>
    %c0_345 = arith.constant 0 : index
    %c0_346 = arith.constant 0 : index
    %1168 = vector.load %arg6[%c0_345, %c0_346] : memref<1x128xf32, #tpu.memory_space<vmem>>, vector<1x128xf32>
    %1169 = vector.broadcast %1168 : vector<1x128xf32> to vector<2x128xf32>
    %1170 = arith.addf %1167, %1169 : vector<2x128xf32>
    %1171 = arith.truncf %1170 : vector<2x128xf32> to vector<2x128xbf16>
    %c0_347 = arith.constant 0 : index
    %c0_348 = arith.constant 0 : index
    %1172 = vector.load %arg7[%c0_347, %c0_348] : memref<128x128xbf16, #tpu.memory_space<vmem>>, vector<128x128xbf16>
    %cst_349 = arith.constant dense<0.000000e+00> : vector<2x128xf32>
    %1173 = tpu.matmul %1171, %1172, %cst_349 {dimension_numbers = #tpu.dot_dimension_numbers<[1], [0], [0], [1], [0, 0, 1, 1], [], []>} : vector<2x128xbf16>, vector<128x128xbf16>, vector<2x128xf32> -> vector<2x128xf32>
    %c0_350 = arith.constant 0 : index
    %c0_351 = arith.constant 0 : index
    %1174 = vector.load %arg8[%c0_350, %c0_351] : memref<1x128xf32, #tpu.memory_space<vmem>>, vector<1x128xf32>
    %1175 = vector.broadcast %1174 : vector<1x128xf32> to vector<2x128xf32>
    %1176 = arith.addf %1173, %1175 : vector<2x128xf32>
    %c0_352 = arith.constant 0 : index
    %c0_353 = arith.constant 0 : index
    %1177 = vector.load %arg9[%c0_352, %c0_353] : memref<2x128xf32, #tpu.memory_space<vmem>>, vector<2x128xf32>
    tpu.vector_store %arg9[%c0_352, %c0_353], %1176 {strides = array<i32>} : memref<2x128xf32, #tpu.memory_space<vmem>>, vector<2x128xf32>,
    return
  }
}

</mosaic_0001>

<llo_original>
// kernel: tpu_custom_call.1
$region0: #{tpu_custom_call.1}
  #allocation0 [shape = 'u32[]', space=smem, size = 0x4, offset = 0x4, fixed_abs, tag = 'smem constant byte address 0x4 - core index']
  #allocation1 [shape = 'u32[144,128]{1,0:T(1,128)}', space=vmem, size = 0x12000, scoped, tag = 'internal scratch']
  #allocation2 [shape = 'bf16[2,256,512]{2,1,0:T(16,128)(2,1)}', space=vmem, size = 0x80000, scoped, tag = 'scratch operand']
  #allocation3 [shape = 's32[2]{0}', space=sflag, size = 0x8, scoped, tag = 'scratch operand']
  #allocation4 [shape = 'f32[16,128]{1,0:T(8,128)}', space=vmem, size = 0x2000, scoped, tag = 'scratch operand']
  #allocation5 [shape = 'f32[2,1024]{1,0:T(2,128)}', space=vmem, size = 0x2000, scoped, tag = 'scratch operand']
  #allocation21 [shape = 's32[]', space=sflag, size = 0x4, offset = 0, fixed_abs, tag = 'sflag constant byte address 0x0 - dummy sync flag']
  #allocation23 [shape = 's32[]', space=sflag, size = 0x4, offset = 0, fixed_abs, tag = 'sflag constant byte address 0x0 - dummy sync flag']
  #allocation25 [shape = 's32[]', space=sflag, size = 0x4, offset = 0, fixed_abs, tag = 'sflag constant byte address 0x0 - dummy sync flag']
  #allocation27 [shape = 's32[]', space=sflag, size = 0x4, offset = 0, fixed_abs, tag = 'sflag constant byte address 0x0 - dummy sync flag']
  #allocation29 [shape = 's32[]', space=sflag, size = 0x4, offset = 0, fixed_abs, tag = 'sflag constant byte address 0x0 - dummy sync flag']
  #allocation31 [shape = 's32[]', space=sflag, size = 0x4, offset = 0, fixed_abs, tag = 'sflag constant byte address 0x0 - dummy sync flag']
  %s0 = inlined_call_operand.hbm [shape: f32[16,128], index: 0, kind: input, shape index: {}]
  %s1 = inlined_call_operand.hbm [shape: bf16[6,256,512], index: 1, kind: input, shape index: {}]
  %s2 = inlined_call_operand.hbm [shape: f32[6,1,512], index: 2, kind: input, shape index: {}]
  %s3 = inlined_call_operand.hbm [shape: bf16[1024,128], index: 3, kind: input, shape index: {}]
  %s4 = inlined_call_operand.hbm [shape: f32[1,128], index: 4, kind: input, shape index: {}]
  %s5 = inlined_call_operand.hbm [shape: bf16[128,128], index: 5, kind: input, shape index: {}]
  %s6 = inlined_call_operand.hbm [shape: f32[1,128], index: 6, kind: input, shape index: {}]
  %s7 = inlined_call_operand.hbm [shape: bf16[128,128], index: 7, kind: input, shape index: {}]
  %s8 = inlined_call_operand.hbm [shape: f32[1,128], index: 8, kind: input, shape index: {}]
  %s9 = inlined_call_operand.hbm [shape: f32[2,128], index: 9, kind: output, shape index: {}]
  %s10 = sld [smem:[#allocation0]]
  $region74: #{tpu_custom_call.1} parent=0
    _
  %s12 = ssub.s32 1, %s10
  %s13 = scalar_select 0, %s12, %s10
  $region1: #{tpu_custom_call.1} parent=0
    #allocation6 [shape = 'u8[8192]{0}', space=vmem, size = 0x2000, scoped, tag = 'input window, operand 0, single buffered']
    #allocation7 [shape = 's32[1]{0}', space=sflag, size = 0x4, scoped, tag = 'scoped memory for tpu_custom_call.1']
    #allocation8 [shape = 's32[1]{0}', space=sflag, size = 0x4, scoped, tag = 'scoped memory for tpu_custom_call.1']
    #allocation9 [shape = 'u8[12288]{0}', space=vmem, size = 0x3000, scoped, tag = 'input window, operand 2, single buffered']
    #allocation10 [shape = 's32[1]{0}', space=sflag, size = 0x4, scoped, tag = 'scoped memory for tpu_custom_call.1']
    #allocation11 [shape = 'u8[262144]{0}', space=vmem, size = 0x40000, scoped, tag = 'input window, operand 3, single buffered']
    #allocation12 [shape = 'u8[512]{0}', space=vmem, size = 0x400, scoped, tag = 'input window, operand 4, single buffered']
    #allocation13 [shape = 's32[1]{0}', space=sflag, size = 0x4, scoped, tag = 'scoped memory for tpu_custom_call.1']
    #allocation14 [shape = 'u8[32768]{0}', space=vmem, size = 0x8000, scoped, tag = 'input window, operand 5, single buffered']
    #allocation15 [shape = 'u8[512]{0}', space=vmem, size = 0x400, scoped, tag = 'input window, operand 6, single buffered']
    #allocation16 [shape = 's32[1]{0}', space=sflag, size = 0x4, scoped, tag = 'scoped memory for tpu_custom_call.1']
    #allocation17 [shape = 'u8[32768]{0}', space=vmem, size = 0x8000, scoped, tag = 'input window, operand 7, single buffered']
    #allocation18 [shape = 'u8[512]{0}', space=vmem, size = 0x400, scoped, tag = 'input window, operand 8, single buffered']
    #allocation19 [shape = 's32[1]{0}', space=sflag, size = 0x4, scoped, tag = 'scoped memory for tpu_custom_call.1']
    #allocation20 [shape = 'u8[1024]{0}', space=vmem, size = 0x400, scoped, tag = 'output window, operand 0, single buffered']
    #allocation22 [shape = 'u32[9]{0}', space=smem, size = 0x24, scoped, tag = 'DMA stride descriptor']
    #allocation24 [shape = 'u32[9]{0}', space=smem, size = 0x24, scoped, tag = 'DMA stride descriptor']
    #allocation26 [shape = 'u32[9]{0}', space=smem, size = 0x24, scoped, tag = 'DMA stride descriptor']
    #allocation28 [shape = 'u32[9]{0}', space=smem, size = 0x24, scoped, tag = 'DMA stride descriptor']
    #allocation30 [shape = 'u32[9]{0}', space=smem, size = 0x24, scoped, tag = 'DMA stride descriptor']
    #allocation32 [shape = 'u32[9]{0}', space=smem, size = 0x24, scoped, tag = 'DMA stride descriptor']
    %14 = vsyncpa [#allocation7], 0
    %15 = vsyncpa [#allocation10], 0
    %16 = vsyncpa [#allocation13], 0
    %17 = vsyncpa [#allocation16], 0
    %18 = vsyncpa [#allocation19], 0
    %19 = vsyncpa [#allocation8], 0
    // Predicated region
    $region2: #{tpu_custom_call.1} parent=1 // pred_check
      _
    $region3: #{tpu_custom_call.1} parent=1 // pred_check_branch
      %21 = sbr.rel (0) target = $region5
    $region4: #{tpu_custom_call.1} parent=1 // pred_region
      %s23 = ssub.s32 256, 256
      %24 = vsyncadd [#allocation7], %s23
      %s25 = sshll.u32 [#allocation6], 4
      %s26 = int_to_ptr.vmem [resolvable:$true] %s25
      %31 = dma.hbm_to_vmem [thread:$0]  %s0, 256, %s26, [#allocation7], 128, 128, 8
    $region5: #{tpu_custom_call.1} parent=1 // pred_fallthru
      _
    // Predicated region
    $region6: #{tpu_custom_call.1} parent=1 // pred_check
      _
    $region7: #{tpu_custom_call.1} parent=1 // pred_check_branch
      %33 = sbr.rel (0) target = $region9
    $region8: #{tpu_custom_call.1} parent=1 // pred_region
      %s35 = ssub.s32 384, 384
      %36 = vsyncadd [#allocation10], %s35
      %s37 = sshll.u32 [#allocation9], 4
      %s38 = int_to_ptr.vmem [resolvable:$true] %s37
      %43 = dma.hbm_to_vmem [thread:$0]  %s2, 384, %s38, [#allocation10], 64, 64, 4
    $region9: #{tpu_custom_call.1} parent=1 // pred_fallthru
      _
    // Predicated region
    $region10: #{tpu_custom_call.1} parent=1 // pred_check
      _
    $region11: #{tpu_custom_call.1} parent=1 // pred_check_branch
      %45 = sbr.rel (0) target = $region13
    $region12: #{tpu_custom_call.1} parent=1 // pred_region
      %s47 = ssub.s32 8192, 8192
      %48 = vsyncadd [#allocation10], %s47
      %s49 = sshll.u32 [#allocation11], 4
      %s50 = int_to_ptr.vmem [resolvable:$true] %s49
      %55 = dma.hbm_to_vmem [thread:$0]  %s3, 8192, %s50, [#allocation10], 64, 64, 4
    $region13: #{tpu_custom_call.1} parent=1 // pred_fallthru
      _
    // Predicated region
    $region14: #{tpu_custom_call.1} parent=1 // pred_check
      _
    $region15: #{tpu_custom_call.1} parent=1 // pred_check_branch
      %57 = sbr.rel (0) target = $region17
    $region16: #{tpu_custom_call.1} parent=1 // pred_region
      %s59 = ssub.s32 16, 16
      %60 = vsyncadd [#allocation13], %s59
      %s62 = sshll.u32 [#allocation12], 4
      %s63 = int_to_ptr.vmem [resolvable:$true] %s62
      %65 = dma.hbm_to_vmem [thread:$0]  %s4, 16, %s63, [#allocation13]
    $region17: #{tpu_custom_call.1} parent=1 // pred_fallthru
      _
    // Predicated region
    $region18: #{tpu_custom_call.1} parent=1 // pred_check
      _
    $region19: #{tpu_custom_call.1} parent=1 // pred_check_branch
      %67 = sbr.rel (0) target = $region21
    $region20: #{tpu_custom_call.1} parent=1 // pred_region
      %s69 = ssub.s32 1024, 1024
      %70 = vsyncadd [#allocation13], %s69
      %s71 = sshll.u32 [#allocation14], 4
      %s72 = int_to_ptr.vmem [resolvable:$true] %s71
      %77 = dma.hbm_to_vmem [thread:$0]  %s5, 1024, %s72, [#allocation13], 64, 64, 4
    $region21: #{tpu_custom_call.1} parent=1 // pred_fallthru
      _
    // Predicated region
    $region22: #{tpu_custom_call.1} parent=1 // pred_check
      _
    $region23: #{tpu_custom_call.1} parent=1 // pred_check_branch
      %79 = sbr.rel (0) target = $region25
    $region24: #{tpu_custom_call.1} parent=1 // pred_region
      %s81 = ssub.s32 16, 16
      %82 = vsyncadd [#allocation16], %s81
      %s84 = sshll.u32 [#allocation15], 4
      %s85 = int_to_ptr.vmem [resolvable:$true] %s84
      %87 = dma.hbm_to_vmem [thread:$0]  %s6, 16, %s85, [#allocation16]
    $region25: #{tpu_custom_call.1} parent=1 // pred_fallthru
      _
    // Predicated region
    $region26: #{tpu_custom_call.1} parent=1 // pred_check
      _
    $region27: #{tpu_custom_call.1} parent=1 // pred_check_branch
      %89 = sbr.rel (0) target = $region29
    $region28: #{tpu_custom_call.1} parent=1 // pred_region
      %s91 = ssub.s32 1024, 1024
      %92 = vsyncadd [#allocation16], %s91
      %s93 = sshll.u32 [#allocation17], 4
      %s94 = int_to_ptr.vmem [resolvable:$true] %s93
      %99 = dma.hbm_to_vmem [thread:$0]  %s7, 1024, %s94, [#allocation16], 64, 64, 4
    $region29: #{tpu_custom_call.1} parent=1 // pred_fallthru
      _
    // Predicated region
    $region30: #{tpu_custom_call.1} parent=1 // pred_check
      _
    $region31: #{tpu_custom_call.1} parent=1 // pred_check_branch
      %101 = sbr.rel (0) target = $region33
    $region32: #{tpu_custom_call.1} parent=1 // pred_region
      %s103 = ssub.s32 16, 16
      %104 = vsyncadd [#allocation19], %s103
      %s106 = sshll.u32 [#allocation18], 4
      %s107 = int_to_ptr.vmem [resolvable:$true] %s106
      %109 = dma.hbm_to_vmem [thread:$0]  %s8, 16, %s107, [#allocation19]
    $region33: #{tpu_custom_call.1} parent=1 // pred_fallthru
      _
    // Predicated region
    $region34: #{tpu_custom_call.1} parent=1 // pred_check
      _
    $region35: #{tpu_custom_call.1} parent=1 // pred_check_branch
      %111 = sbr.rel (0) target = $region37
    $region36: #{tpu_custom_call.1} parent=1 // pred_region
      %112 = dma.done [#allocation7], 256
    $region37: #{tpu_custom_call.1} parent=1 // pred_fallthru
      _
    // Predicated region
    $region38: #{tpu_custom_call.1} parent=1 // pred_check
      _
    $region39: #{tpu_custom_call.1} parent=1 // pred_check_branch
      %114 = sbr.rel (0) target = $region41
    $region40: #{tpu_custom_call.1} parent=1 // pred_region
      %115 = dma.done [#allocation10], 384
    $region41: #{tpu_custom_call.1} parent=1 // pred_fallthru
      _
    // Predicated region
    $region42: #{tpu_custom_call.1} parent=1 // pred_check
      _
    $region43: #{tpu_custom_call.1} parent=1 // pred_check_branch
      %117 = sbr.rel (0) target = $region45
    $region44: #{tpu_custom_call.1} parent=1 // pred_region
      %118 = dma.done [#allocation10], 8192
    $region45: #{tpu_custom_call.1} parent=1 // pred_fallthru
      _
    // Predicated region
    $region46: #{tpu_custom_call.1} parent=1 // pred_check
      _
    $region47: #{tpu_custom_call.1} parent=1 // pred_check_branch
      %120 = sbr.rel (0) target = $region49
    $region48: #{tpu_custom_call.1} parent=1 // pred_region
      %121 = dma.done [#allocation13], 16
    $region49: #{tpu_custom_call.1} parent=1 // pred_fallthru
      _
    // Predicated region
    $region50: #{tpu_custom_call.1} parent=1 // pred_check
      _
    $region51: #{tpu_custom_call.1} parent=1 // pred_check_branch
      %123 = sbr.rel (0) target = $region53
    $region52: #{tpu_custom_call.1} parent=1 // pred_region
      %124 = dma.done [#allocation13], 1024
    $region53: #{tpu_custom_call.1} parent=1 // pred_fallthru
      _
    // Predicated region
    $region54: #{tpu_custom_call.1} parent=1 // pred_check
      _
    $region55: #{tpu_custom_call.1} parent=1 // pred_check_branch
      %126 = sbr.rel (0) target = $region57
    $region56: #{tpu_custom_call.1} parent=1 // pred_region
      %127 = dma.done [#allocation16], 16
    $region57: #{tpu_custom_call.1} parent=1 // pred_fallthru
      _
    // Predicated region
    $region58: #{tpu_custom_call.1} parent=1 // pred_check
      _
    $region59: #{tpu_custom_call.1} parent=1 // pred_check_branch
      %129 = sbr.rel (0) target = $region61
    $region60: #{tpu_custom_call.1} parent=1 // pred_region
      %130 = dma.done [#allocation16], 1024
    $region61: #{tpu_custom_call.1} parent=1 // pred_fallthru
      _
    // Predicated region
    $region62: #{tpu_custom_call.1} parent=1 // pred_check
      _
    $region63: #{tpu_custom_call.1} parent=1 // pred_check_branch
      %132 = sbr.rel (0) target = $region65
    $region64: #{tpu_custom_call.1} parent=1 // pred_region
      %133 = dma.done [#allocation19], 16
    $region65: #{tpu_custom_call.1} parent=1 // pred_fallthru
      _
    %s136 = sshll.u32 1, 14
    %s137 = sxor.u32 4294967295, %s136
    %s139 = sld [smem:[#allocation0]]
    %s140 = sadd.s32 2, %s139
    %s142 = sshll.u32 7, 26
    %s143 = sxor.u32 4294967295, %s142
    %s144 = sand.u32 0, %s143
    %s145 = sshll.u32 %s140, 26
    %s146 = sor.u32 %s144, %s145
    %s147 = sshll.u32 [#allocation2], 4
    %s148 = int_to_ptr.vmem [resolvable:$true] %s147
    %151 = sst [smem:[#allocation22]] 512
    %s152 = scalar_lea.smem [#allocation22], 1
    %153 = sst [smem:[%s152]] 512
    %s154 = scalar_lea.smem [#allocation22], 2
    %155 = sst [smem:[%s154]] 4
    %s156 = scalar_lea.smem [#allocation22], 3
    %157 = sst [smem:[%s156]] 64
    %s158 = scalar_lea.smem [#allocation22], 4
    %159 = sst [smem:[%s158]] 128
    %s160 = scalar_lea.smem [#allocation22], 5
    %161 = sst [smem:[%s160]] 2
    %s162 = scalar_lea.smem [#allocation22], 6
    %163 = sst [smem:[%s162]] 256
    %s164 = scalar_lea.smem [#allocation22], 7
    %165 = sst [smem:[%s164]] 64
    %s166 = scalar_lea.smem [#allocation22], 8
    %167 = sst [smem:[%s166]] 4
    %169 = dma.general %s1, 8192, %s148, [#allocation3], [#allocation21], [#allocation22], %s146, 0
    %s170 = smul.u32 4, 32
    %s171 = smul.u32 %s170, 4
    %s172 = sshll.u32 %s171, 4
    %173 = dma.done [#allocation3], %s172
    %s174 = scalar_lea.hbm %s1, 8192
    %s175 = scalar_lea.vmem [#allocation2], 512
    %s176 = scalar_lea.sflag [#allocation3], 1
    %s178 = sshll.u32 1, 14
    %s179 = sxor.u32 4294967295, %s178
    %s181 = sadd.s32 2, %s139
    %s183 = sshll.u32 7, 26
    %s184 = sxor.u32 4294967295, %s183
    %s185 = sand.u32 0, %s184
    %s186 = sshll.u32 %s181, 26
    %s187 = sor.u32 %s185, %s186
    %s188 = sshll.u32 %s175, 4
    %s189 = int_to_ptr.vmem [resolvable:$true] %s188
    %192 = sst [smem:[#allocation24]] 512
    %s193 = scalar_lea.smem [#allocation24], 1
    %194 = sst [smem:[%s193]] 512
    %s195 = scalar_lea.smem [#allocation24], 2
    %196 = sst [smem:[%s195]] 4
    %s197 = scalar_lea.smem [#allocation24], 3
    %198 = sst [smem:[%s197]] 64
    %s199 = scalar_lea.smem [#allocation24], 4
    %200 = sst [smem:[%s199]] 128
    %s201 = scalar_lea.smem [#allocation24], 5
    %202 = sst [smem:[%s201]] 2
    %s203 = scalar_lea.smem [#allocation24], 6
    %204 = sst [smem:[%s203]] 256
    %s205 = scalar_lea.smem [#allocation24], 7
    %206 = sst [smem:[%s205]] 64
    %s207 = scalar_lea.smem [#allocation24], 8
    %208 = sst [smem:[%s207]] 4
    %210 = dma.general %s174, 8192, %s189, %s176, [#allocation23], [#allocation24], %s187, 0
    %v211 = vld [vmem:[#allocation2] sm:$0xff]
    %v212 = vld [vmem:[#allocation2 + $0x8] sm:$0xff]
    %v213 = vld [vmem:[#allocation2 + $0x10] sm:$0xff]
    %v214 = vld [vmem:[#allocation2 + $0x18] sm:$0xff]
    %v215 = vld [vmem:[#allocation2 + $0x20] sm:$0xff]
    %v216 = vld [vmem:[#allocation2 + $0x28] sm:$0xff]
    %v217 = vld [vmem:[#allocation2 + $0x30] sm:$0xff]
    %v218 = vld [vmem:[#allocation2 + $0x38] sm:$0xff]
    %v219 = vld [vmem:[#allocation2 + $0x40] sm:$0xff]
    %v220 = vld [vmem:[#allocation2 + $0x48] sm:$0xff]
    %v221 = vld [vmem:[#allocation2 + $0x50] sm:$0xff]
    %v222 = vld [vmem:[#allocation2 + $0x58] sm:$0xff]
    %v223 = vld [vmem:[#allocation2 + $0x60] sm:$0xff]
    %v224 = vld [vmem:[#allocation2 + $0x68] sm:$0xff]
    %v225 = vld [vmem:[#allocation2 + $0x70] sm:$0xff]
    %v226 = vld [vmem:[#allocation2 + $0x78] sm:$0xff]
    %v227 = vld [vmem:[#allocation2 + $0x80] sm:$0xff]
    %v228 = vld [vmem:[#allocation2 + $0x88] sm:$0xff]
    %v229 = vld [vmem:[#allocation2 + $0x90] sm:$0xff]
    %v230 = vld [vmem:[#allocation2 + $0x98] sm:$0xff]
    %v231 = vld [vmem:[#allocation2 + $0xa0] sm:$0xff]
    %v232 = vld [vmem:[#allocation2 + $0xa8] sm:$0xff]
    %v233 = vld [vmem:[#allocation2 + $0xb0] sm:$0xff]
    %v234 = vld [vmem:[#allocation2 + $0xb8] sm:$0xff]
    %v235 = vld [vmem:[#allocation2 + $0xc0] sm:$0xff]
    %v236 = vld [vmem:[#allocation2 + $0xc8] sm:$0xff]
    %v237 = vld [vmem:[#allocation2 + $0xd0] sm:$0xff]
    %v238 = vld [vmem:[#allocation2 + $0xd8] sm:$0xff]
    %v239 = vld [vmem:[#allocation2 + $0xe0] sm:$0xff]
    %v240 = vld [vmem:[#allocation2 + $0xe8] sm:$0xff]
    %v241 = vld [vmem:[#allocation2 + $0xf0] sm:$0xff]
    %v242 = vld [vmem:[#allocation2 + $0xf8] sm:$0xff]
    %v243 = vld [vmem:[#allocation2 + $0x100] sm:$0xff]
    %v244 = vld [vmem:[#allocation2 + $0x108] sm:$0xff]
    %v245 = vld [vmem:[#allocation2 + $0x110] sm:$0xff]
    %v246 = vld [vmem:[#allocation2 + $0x118] sm:$0xff]
    %v247 = vld [vmem:[#allocation2 + $0x120] sm:$0xff]
    %v248 = vld [vmem:[#allocation2 + $0x128] sm:$0xff]
    %v249 = vld [vmem:[#allocation2 + $0x130] sm:$0xff]
    %v250 = vld [vmem:[#allocation2 + $0x138] sm:$0xff]
    %v251 = vld [vmem:[#allocation2 + $0x140] sm:$0xff]
    %v252 = vld [vmem:[#allocation2 + $0x148] sm:$0xff]
    %v253 = vld [vmem:[#allocation2 + $0x150] sm:$0xff]
    %v254 = vld [vmem:[#allocation2 + $0x158] sm:$0xff]
    %v255 = vld [vmem:[#allocation2 + $0x160] sm:$0xff]
    %v256 = vld [vmem:[#allocation2 + $0x168] sm:$0xff]
    %v257 = vld [vmem:[#allocation2 + $0x170] sm:$0xff]
    %v258 = vld [vmem:[#allocation2 + $0x178] sm:$0xff]
    %v259 = vld [vmem:[#allocation2 + $0x180] sm:$0xff]
    %v260 = vld [vmem:[#allocation2 + $0x188] sm:$0xff]
    %v261 = vld [vmem:[#allocation2 + $0x190] sm:$0xff]
    %v262 = vld [vmem:[#allocation2 + $0x198] sm:$0xff]
    %v263 = vld [vmem:[#allocation2 + $0x1a0] sm:$0xff]
    %v264 = vld [vmem:[#allocation2 + $0x1a8] sm:$0xff]
    %v265 = vld [vmem:[#allocation2 + $0x1b0] sm:$0xff]
    %v266 = vld [vmem:[#allocation2 + $0x1b8] sm:$0xff]
    %v267 = vld [vmem:[#allocation2 + $0x1c0] sm:$0xff]
    %v268 = vld [vmem:[#allocation2 + $0x1c8] sm:$0xff]
    %v269 = vld [vmem:[#allocation2 + $0x1d0] sm:$0xff]
    %v270 = vld [vmem:[#allocation2 + $0x1d8] sm:$0xff]
    %v271 = vld [vmem:[#allocation2 + $0x1e0] sm:$0xff]
    %v272 = vld [vmem:[#allocation2 + $0x1e8] sm:$0xff]
    %v273 = vld [vmem:[#allocation2 + $0x1f0] sm:$0xff]
    %v274 = vld [vmem:[#allocation2 + $0x1f8] sm:$0xff]
    %v275 = vld [vmem:[#allocation6] sm:$0xff]
    %v276 = vld [vmem:[#allocation6 + $0x8] sm:$0xff]
    %v277 = vpack.c.bf16 %v276, %v275
    %v278 = vld [vmem:[#allocation9] sm:$0xf]
    %v280 = vlaneseq
    %v281 = vshrl.u32 %v280, 7
    %v282 = vsub.s32 0, %v281
    %v283 = vrot.slane %v278, %v282
    %v284 = vlaneseq
    %v285 = vshrl.u32 %v284, 7
    %v286 = vsub.s32 1, %v285
    %v287 = vrot.slane %v278, %v286
    %v288 = vlaneseq
    %v289 = vshrl.u32 %v288, 7
    %v290 = vsub.s32 2, %v289
    %v291 = vrot.slane %v278, %v290
    %v292 = vlaneseq
    %v293 = vshrl.u32 %v292, 7
    %v294 = vsub.s32 3, %v293
    %v295 = vrot.slane %v278, %v294
    %300 = vmatprep.subr.bf16.mxu0 %v212
    %301 = vmatpush1.bf16.msra.mxu0 %v211
    %302 = vmatprep.subr.bf16.mxu0 %v216
    %303 = vmatpush1.bf16.msra.mxu0 %v215
    %304 = vmatprep.subr.bf16.mxu0 %v220
    %305 = vmatpush1.bf16.msra.mxu0 %v219
    %306 = vmatprep.subr.bf16.mxu0 %v224
    %307 = vmatpush1.bf16.msra.mxu0 %v223
    %308 = vmatprep.subr.bf16.mxu0 %v228
    %309 = vmatpush1.bf16.msra.mxu0 %v227
    %310 = vmatprep.subr.bf16.mxu0 %v232
    %311 = vmatpush1.bf16.msra.mxu0 %v231
    %312 = vmatprep.subr.bf16.mxu0 %v236
    %313 = vmatpush1.bf16.msra.mxu0 %v235
    %314 = vmatprep.subr.bf16.mxu0 %v240
    %315 = vmatpush1.bf16.msra.mxu0 %v239
    %316 = vmatprep.subr.bf16.mxu0 0
    %317 = vmatpush1.bf16.msra.mxu0 0
    %318 = vmatprep.subr.bf16.mxu0 0
    %319 = vmatpush1.bf16.msra.mxu0 0
    %320 = vmatprep.subr.bf16.mxu0 0
    %321 = vmatpush1.bf16.msra.mxu0 0
    %322 = vmatprep.subr.bf16.mxu0 0
    %323 = vmatpush1.bf16.msra.mxu0 0
    %324 = vmatprep.subr.bf16.mxu0 0
    %325 = vmatpush1.bf16.msra.mxu0 0
    %326 = vmatprep.subr.bf16.mxu0 0
    %327 = vmatpush1.bf16.msra.mxu0 0
    %328 = vmatprep.subr.bf16.mxu0 0
    %329 = vmatpush1.bf16.msra.mxu0 0
    %330 = vmatprep.subr.bf16.mxu0 0
    %331 = vmatpush1.bf16.msra.mxu0 0
    %332 = vmatprep.mubr.bf16.mxu0 0
    %333 = vmatmul.mubr.bf16.gmra.mrb[0].mxu0 %v277
    %v334 = vpop.f32.mrb[0].mxu0
    %v335 = vadd.f32 %v283, %v334
    %v336 = vpop.f32.mrb[0].mxu0
    %v337 = vadd.f32 %v287, %v336
    %v338 = vpop.f32.mrb[0].mxu0
    %v339 = vadd.f32 %v283, %v338
    %v340 = vpop.f32.mrb[0].mxu0
    %v341 = vadd.f32 %v287, %v340
    %342 = vdwg.mxu0
    %343 = vmatprep.subr.bf16.mxu0 %v214
    %344 = vmatpush1.bf16.msra.mxu0 %v213
    %345 = vmatprep.subr.bf16.mxu0 %v218
    %346 = vmatpush1.bf16.msra.mxu0 %v217
    %347 = vmatprep.subr.bf16.mxu0 %v222
    %348 = vmatpush1.bf16.msra.mxu0 %v221
    %349 = vmatprep.subr.bf16.mxu0 %v226
    %350 = vmatpush1.bf16.msra.mxu0 %v225
    %351 = vmatprep.subr.bf16.mxu0 %v230
    %352 = vmatpush1.bf16.msra.mxu0 %v229
    %353 = vmatprep.subr.bf16.mxu0 %v234
    %354 = vmatpush1.bf16.msra.mxu0 %v233
    %355 = vmatprep.subr.bf16.mxu0 %v238
    %356 = vmatpush1.bf16.msra.mxu0 %v237
    %357 = vmatprep.subr.bf16.mxu0 %v242
    %358 = vmatpush1.bf16.msra.mxu0 %v241
    %359 = vmatprep.subr.bf16.mxu0 0
    %360 = vmatpush1.bf16.msra.mxu0 0
    %361 = vmatprep.subr.bf16.mxu0 0
    %362 = vmatpush1.bf16.msra.mxu0 0
    %363 = vmatprep.subr.bf16.mxu0 0
    %364 = vmatpush1.bf16.msra.mxu0 0
    %365 = vmatprep.subr.bf16.mxu0 0
    %366 = vmatpush1.bf16.msra.mxu0 0
    %367 = vmatprep.subr.bf16.mxu0 0
    %368 = vmatpush1.bf16.msra.mxu0 0
    %369 = vmatprep.subr.bf16.mxu0 0
    %370 = vmatpush1.bf16.msra.mxu0 0
    %371 = vmatprep.subr.bf16.mxu0 0
    %372 = vmatpush1.bf16.msra.mxu0 0
    %373 = vmatprep.subr.bf16.mxu0 0
    %374 = vmatpush1.bf16.msra.mxu0 0
    %375 = vmatprep.mubr.bf16.mxu0 0
    %376 = vmatmul.mubr.bf16.gmra.mrb[0].mxu0 %v277
    %v377 = vpop.f32.mrb[0].mxu0
    %v378 = vadd.f32 %v291, %v377
    %v379 = vpop.f32.mrb[0].mxu0
    %v380 = vadd.f32 %v295, %v379
    %v381 = vpop.f32.mrb[0].mxu0
    %v382 = vadd.f32 %v291, %v381
    %v383 = vpop.f32.mrb[0].mxu0
    %v384 = vadd.f32 %v295, %v383
    %385 = vdwg.mxu0
    %386 = vmatprep.subr.bf16.mxu0 %v244
    %387 = vmatpush1.bf16.msra.mxu0 %v243
    %388 = vmatprep.subr.bf16.mxu0 %v248
    %389 = vmatpush1.bf16.msra.mxu0 %v247
    %390 = vmatprep.subr.bf16.mxu0 %v252
    %391 = vmatpush1.bf16.msra.mxu0 %v251
    %392 = vmatprep.subr.bf16.mxu0 %v256
    %393 = vmatpush1.bf16.msra.mxu0 %v255
    %394 = vmatprep.subr.bf16.mxu0 %v260
    %395 = vmatpush1.bf16.msra.mxu0 %v259
    %396 = vmatprep.subr.bf16.mxu0 %v264
    %397 = vmatpush1.bf16.msra.mxu0 %v263
    %398 = vmatprep.subr.bf16.mxu0 %v268
    %399 = vmatpush1.bf16.msra.mxu0 %v267
    %400 = vmatprep.subr.bf16.mxu0 %v272
    %401 = vmatpush1.bf16.msra.mxu0 %v271
    %402 = vmatprep.subr.bf16.mxu0 0
    %403 = vmatpush1.bf16.msra.mxu0 0
    %404 = vmatprep.subr.bf16.mxu0 0
    %405 = vmatpush1.bf16.msra.mxu0 0
    %406 = vmatprep.subr.bf16.mxu0 0
    %407 = vmatpush1.bf16.msra.mxu0 0
    %408 = vmatprep.subr.bf16.mxu0 0
    %409 = vmatpush1.bf16.msra.mxu0 0
    %410 = vmatprep.subr.bf16.mxu0 0
    %411 = vmatpush1.bf16.msra.mxu0 0
    %412 = vmatprep.subr.bf16.mxu0 0
    %413 = vmatpush1.bf16.msra.mxu0 0
    %414 = vmatprep.subr.bf16.mxu0 0
    %415 = vmatpush1.bf16.msra.mxu0 0
    %416 = vmatprep.subr.bf16.mxu0 0
    %417 = vmatpush1.bf16.msra.mxu0 0
    %418 = vmatprep.mubr.bf16.mxu0 0
    %419 = vmatmul.mubr.bf16.gmra.mrb[0].mxu0 0
    %v420 = vpop.f32.mrb[0].mxu0
    %v421 = vadd.f32 0.0, %v420
    %v422 = vpop.f32.mrb[0].mxu0
    %v423 = vadd.f32 0.0, %v422
    %v424 = vpop.f32.mrb[0].mxu0
    %v425 = vpop.f32.mrb[0].mxu0
    %426 = vdwg.mxu0
    %427 = vmatprep.subr.bf16.mxu0 %v246
    %428 = vmatpush1.bf16.msra.mxu0 %v245
    %429 = vmatprep.subr.bf16.mxu0 %v250
    %430 = vmatpush1.bf16.msra.mxu0 %v249
    %431 = vmatprep.subr.bf16.mxu0 %v254
    %432 = vmatpush1.bf16.msra.mxu0 %v253
    %433 = vmatprep.subr.bf16.mxu0 %v258
    %434 = vmatpush1.bf16.msra.mxu0 %v257
    %435 = vmatprep.subr.bf16.mxu0 %v262
    %436 = vmatpush1.bf16.msra.mxu0 %v261
    %437 = vmatprep.subr.bf16.mxu0 %v266
    %438 = vmatpush1.bf16.msra.mxu0 %v265
    %439 = vmatprep.subr.bf16.mxu0 %v270
    %440 = vmatpush1.bf16.msra.mxu0 %v269
    %441 = vmatprep.subr.bf16.mxu0 %v274
    %442 = vmatpush1.bf16.msra.mxu0 %v273
    %443 = vmatprep.subr.bf16.mxu0 0
    %444 = vmatpush1.bf16.msra.mxu0 0
    %445 = vmatprep.subr.bf16.mxu0 0
    %446 = vmatpush1.bf16.msra.mxu0 0
    %447 = vmatprep.subr.bf16.mxu0 0
    %448 = vmatpush1.bf16.msra.mxu0 0
    %449 = vmatprep.subr.bf16.mxu0 0
    %450 = vmatpush1.bf16.msra.mxu0 0
    %451 = vmatprep.subr.bf16.mxu0 0
    %452 = vmatpush1.bf16.msra.mxu0 0
    %453 = vmatprep.subr.bf16.mxu0 0
    %454 = vmatpush1.bf16.msra.mxu0 0
    %455 = vmatprep.subr.bf16.mxu0 0
    %456 = vmatpush1.bf16.msra.mxu0 0
    %457 = vmatprep.subr.bf16.mxu0 0
    %458 = vmatpush1.bf16.msra.mxu0 0
    %459 = vmatprep.mubr.bf16.mxu0 0
    %460 = vmatmul.mubr.bf16.gmra.mrb[0].mxu0 0
    %v461 = vpop.f32.mrb[0].mxu0
    %v462 = vadd.f32 0.0, %v461
    %v463 = vpop.f32.mrb[0].mxu0
    %v464 = vadd.f32 0.0, %v463
    %v465 = vpop.f32.mrb[0].mxu0
    %v466 = vpop.f32.mrb[0].mxu0
    %467 = vdwg.mxu0
    %v468 = vadd.f32 %v335, %v421
    %v469 = vadd.f32 %v337, %v423
    %v470 = vadd.f32 %v378, %v462
    %v471 = vadd.f32 %v380, %v464
    %v472 = vxor.u32 %v468, 2147483648
    %v473 = vxor.u32 %v469, 2147483648
    %v474 = vxor.u32 %v470, 2147483648
    %v475 = vmul.f32 %v472, 1.442695
    %v476 = vpow.pop %v475
    %v477 = vmul.f32 %v473, 1.442695
    %v478 = vpow.pop %v477
    %v479 = vmul.f32 %v474, 1.442695
    %v480 = vpow.pop %v479
    %v481 = vadd.f32 %v476, 1.0
    %v482 = vadd.f32 %v478, 1.0
    %v483 = vadd.f32 %v480, 1.0
    %v484 = vrcp.pop %v481
    %v485 = vmul.f32 1.0, %v484
    %v486 = vrcp.pop %v482
    %v487 = vmul.f32 1.0, %v486
    %v488 = vrcp.pop %v483
    %v489 = vmul.f32 1.0, %v488
    %v490 = vtanh.pop %v471
    %v491 = vmul.f32 %v487, 0.0
    %v492 = vmul.f32 %v485, %v490
    %v493 = vadd.f32 %v491, %v492
    %v494 = vtanh.pop %v493
    %v495 = vmul.f32 %v489, %v494
    %496 = vst [vmem:[#allocation4] sm:$0x3] %v495
    %v497 = vpack.c.bf16 %v495, %v495
    %498 = vmatprep.subr.bf16.mxu0 %v244
    %499 = vmatpush1.bf16.msra.mxu0 %v243
    %500 = vmatprep.subr.bf16.mxu0 %v248
    %501 = vmatpush1.bf16.msra.mxu0 %v247
    %502 = vmatprep.subr.bf16.mxu0 %v252
    %503 = vmatpush1.bf16.msra.mxu0 %v251
    %504 = vmatprep.subr.bf16.mxu0 %v256
    %505 = vmatpush1.bf16.msra.mxu0 %v255
    %506 = vmatprep.subr.bf16.mxu0 %v260
    %507 = vmatpush1.bf16.msra.mxu0 %v259
    %508 = vmatprep.subr.bf16.mxu0 %v264
    %509 = vmatpush1.bf16.msra.mxu0 %v263
    %510 = vmatprep.subr.bf16.mxu0 %v268
    %511 = vmatpush1.bf16.msra.mxu0 %v267
    %512 = vmatprep.subr.bf16.mxu0 %v272
    %513 = vmatpush1.bf16.msra.mxu0 %v271
    %514 = vmatprep.subr.bf16.mxu0 0
    %515 = vmatpush1.bf16.msra.mxu0 0
    %516 = vmatprep.subr.bf16.mxu0 0
    %517 = vmatpush1.bf16.msra.mxu0 0
    %518 = vmatprep.subr.bf16.mxu0 0
    %519 = vmatpush1.bf16.msra.mxu0 0
    %520 = vmatprep.subr.bf16.mxu0 0
    %521 = vmatpush1.bf16.msra.mxu0 0
    %522 = vmatprep.subr.bf16.mxu0 0
    %523 = vmatpush1.bf16.msra.mxu0 0
    %524 = vmatprep.subr.bf16.mxu0 0
    %525 = vmatpush1.bf16.msra.mxu0 0
    %526 = vmatprep.subr.bf16.mxu0 0
    %527 = vmatpush1.bf16.msra.mxu0 0
    %528 = vmatprep.subr.bf16.mxu0 0
    %529 = vmatpush1.bf16.msra.mxu0 0
    %530 = vmatprep.mubr.bf16.mxu0 0
    %531 = vmatmul.mubr.bf16.gmra.mrb[0].mxu0 %v497
    %v532 = vpop.f32.mrb[0].mxu0
    %v533 = vadd.f32 0.0, %v532
    %v534 = vpop.f32.mrb[0].mxu0
    %v535 = vadd.f32 0.0, %v534
    %v536 = vpop.f32.mrb[0].mxu0
    %v537 = vpop.f32.mrb[0].mxu0
    %538 = vdwg.mxu0
    %539 = vmatprep.subr.bf16.mxu0 %v246
    %540 = vmatpush1.bf16.msra.mxu0 %v245
    %541 = vmatprep.subr.bf16.mxu0 %v250
    %542 = vmatpush1.bf16.msra.mxu0 %v249
    %543 = vmatprep.subr.bf16.mxu0 %v254
    %544 = vmatpush1.bf16.msra.mxu0 %v253
    %545 = vmatprep.subr.bf16.mxu0 %v258
    %546 = vmatpush1.bf16.msra.mxu0 %v257
    %547 = vmatprep.subr.bf16.mxu0 %v262
    %548 = vmatpush1.bf16.msra.mxu0 %v261
    %549 = vmatprep.subr.bf16.mxu0 %v266
    %550 = vmatpush1.bf16.msra.mxu0 %v265
    %551 = vmatprep.subr.bf16.mxu0 %v270
    %552 = vmatpush1.bf16.msra.mxu0 %v269
    %553 = vmatprep.subr.bf16.mxu0 %v274
    %554 = vmatpush1.bf16.msra.mxu0 %v273
    %555 = vmatprep.subr.bf16.mxu0 0
    %556 = vmatpush1.bf16.msra.mxu0 0
    %557 = vmatprep.subr.bf16.mxu0 0
    %558 = vmatpush1.bf16.msra.mxu0 0
    %559 = vmatprep.subr.bf16.mxu0 0
    %560 = vmatpush1.bf16.msra.mxu0 0
    %561 = vmatprep.subr.bf16.mxu0 0
    %562 = vmatpush1.bf16.msra.mxu0 0
    %563 = vmatprep.subr.bf16.mxu0 0
    %564 = vmatpush1.bf16.msra.mxu0 0
    %565 = vmatprep.subr.bf16.mxu0 0
    %566 = vmatpush1.bf16.msra.mxu0 0
    %567 = vmatprep.subr.bf16.mxu0 0
    %568 = vmatpush1.bf16.msra.mxu0 0
    %569 = vmatprep.subr.bf16.mxu0 0
    %570 = vmatpush1.bf16.msra.mxu0 0
    %571 = vmatprep.mubr.bf16.mxu0 0
    %572 = vmatmul.mubr.bf16.gmra.mrb[0].mxu0 %v497
    %v573 = vpop.f32.mrb[0].mxu0
    %v574 = vadd.f32 0.0, %v573
    %v575 = vpop.f32.mrb[0].mxu0
    %v576 = vadd.f32 0.0, %v575
    %v577 = vpop.f32.mrb[0].mxu0
    %v578 = vpop.f32.mrb[0].mxu0
    %579 = vdwg.mxu0
    %v584 = vrot.slane %v533, 6
    %v585 = vrot.slane %v535, 6
    %v586 = vrot.slane %v574, 6
    %v587 = vrot.slane %v576, 6
    %v592 = vadd.f32 %v335, %v584
    %v593 = vadd.f32 %v337, %v585
    %v594 = vadd.f32 %v378, %v586
    %v595 = vadd.f32 %v380, %v587
    %v596 = vxor.u32 %v592, 2147483648
    %v597 = vxor.u32 %v593, 2147483648
    %v598 = vxor.u32 %v594, 2147483648
    %v599 = vmul.f32 %v596, 1.442695
    %v600 = vpow.pop %v599
    %v601 = vmul.f32 %v597, 1.442695
    %v602 = vpow.pop %v601
    %v603 = vmul.f32 %v598, 1.442695
    %v604 = vpow.pop %v603
    %v605 = vadd.f32 %v600, 1.0
    %v606 = vadd.f32 %v602, 1.0
    %v607 = vadd.f32 %v604, 1.0
    %v608 = vrcp.pop %v605
    %v609 = vmul.f32 1.0, %v608
    %v610 = vrcp.pop %v606
    %v611 = vmul.f32 1.0, %v610
    %v612 = vrcp.pop %v607
    %v613 = vmul.f32 1.0, %v612
    %v614 = vtanh.pop %v595
    %v616 = vrot.slane %v493, 6
    %v618 = vmul.f32 %v611, %v616
    %v619 = vmul.f32 %v609, %v614
    %v620 = vadd.f32 %v618, %v619
    %v621 = vtanh.pop %v620
    %v622 = vmul.f32 %v613, %v621
    %623 = vst [vmem:[#allocation4] sm:$0xc] %v622
    %v624 = vpack.c.bf16 %v622, %v622
    %v626 = vrot.slane %v624, 1
    %628 = vmatprep.subr.bf16.mxu0 %v244
    %629 = vmatpush1.bf16.msra.mxu0 %v243
    %630 = vmatprep.subr.bf16.mxu0 %v248
    %631 = vmatpush1.bf16.msra.mxu0 %v247
    %632 = vmatprep.subr.bf16.mxu0 %v252
    %633 = vmatpush1.bf16.msra.mxu0 %v251
    %634 = vmatprep.subr.bf16.mxu0 %v256
    %635 = vmatpush1.bf16.msra.mxu0 %v255
    %636 = vmatprep.subr.bf16.mxu0 %v260
    %637 = vmatpush1.bf16.msra.mxu0 %v259
    %638 = vmatprep.subr.bf16.mxu0 %v264
    %639 = vmatpush1.bf16.msra.mxu0 %v263
    %640 = vmatprep.subr.bf16.mxu0 %v268
    %641 = vmatpush1.bf16.msra.mxu0 %v267
    %642 = vmatprep.subr.bf16.mxu0 %v272
    %643 = vmatpush1.bf16.msra.mxu0 %v271
    %644 = vmatprep.subr.bf16.mxu0 0
    %645 = vmatpush1.bf16.msra.mxu0 0
    %646 = vmatprep.subr.bf16.mxu0 0
    %647 = vmatpush1.bf16.msra.mxu0 0
    %648 = vmatprep.subr.bf16.mxu0 0
    %649 = vmatpush1.bf16.msra.mxu0 0
    %650 = vmatprep.subr.bf16.mxu0 0
    %651 = vmatpush1.bf16.msra.mxu0 0
    %652 = vmatprep.subr.bf16.mxu0 0
    %653 = vmatpush1.bf16.msra.mxu0 0
    %654 = vmatprep.subr.bf16.mxu0 0
    %655 = vmatpush1.bf16.msra.mxu0 0
    %656 = vmatprep.subr.bf16.mxu0 0
    %657 = vmatpush1.bf16.msra.mxu0 0
    %658 = vmatprep.subr.bf16.mxu0 0
    %659 = vmatpush1.bf16.msra.mxu0 0
    %660 = vmatprep.mubr.bf16.mxu0 0
    %661 = vmatmul.mubr.bf16.gmra.mrb[0].mxu0 %v626
    %v662 = vpop.f32.mrb[0].mxu0
    %v663 = vadd.f32 0.0, %v662
    %v664 = vpop.f32.mrb[0].mxu0
    %v665 = vadd.f32 0.0, %v664
    %v666 = vpop.f32.mrb[0].mxu0
    %v667 = vpop.f32.mrb[0].mxu0
    %668 = vdwg.mxu0
    %669 = vmatprep.subr.bf16.mxu0 %v246
    %670 = vmatpush1.bf16.msra.mxu0 %v245
    %671 = vmatprep.subr.bf16.mxu0 %v250
    %672 = vmatpush1.bf16.msra.mxu0 %v249
    %673 = vmatprep.subr.bf16.mxu0 %v254
    %674 = vmatpush1.bf16.msra.mxu0 %v253
    %675 = vmatprep.subr.bf16.mxu0 %v258
    %676 = vmatpush1.bf16.msra.mxu0 %v257
    %677 = vmatprep.subr.bf16.mxu0 %v262
    %678 = vmatpush1.bf16.msra.mxu0 %v261
    %679 = vmatprep.subr.bf16.mxu0 %v266
    %680 = vmatpush1.bf16.msra.mxu0 %v265
    %681 = vmatprep.subr.bf16.mxu0 %v270
    %682 = vmatpush1.bf16.msra.mxu0 %v269
    %683 = vmatprep.subr.bf16.mxu0 %v274
    %684 = vmatpush1.bf16.msra.mxu0 %v273
    %685 = vmatprep.subr.bf16.mxu0 0
    %686 = vmatpush1.bf16.msra.mxu0 0
    %687 = vmatprep.subr.bf16.mxu0 0
    %688 = vmatpush1.bf16.msra.mxu0 0
    %689 = vmatprep.subr.bf16.mxu0 0
    %690 = vmatpush1.bf16.msra.mxu0 0
    %691 = vmatprep.subr.bf16.mxu0 0
    %692 = vmatpush1.bf16.msra.mxu0 0
    %693 = vmatprep.subr.bf16.mxu0 0
    %694 = vmatpush1.bf16.msra.mxu0 0
    %695 = vmatprep.subr.bf16.mxu0 0
    %696 = vmatpush1.bf16.msra.mxu0 0
    %697 = vmatprep.subr.bf16.mxu0 0
    %698 = vmatpush1.bf16.msra.mxu0 0
    %699 = vmatprep.subr.bf16.mxu0 0
    %700 = vmatpush1.bf16.msra.mxu0 0
    %701 = vmatprep.mubr.bf16.mxu0 0
    %702 = vmatmul.mubr.bf16.gmra.mrb[0].mxu0 %v626
    %v703 = vpop.f32.mrb[0].mxu0
    %v704 = vadd.f32 0.0, %v703
    %v705 = vpop.f32.mrb[0].mxu0
    %v706 = vadd.f32 0.0, %v705
    %v707 = vpop.f32.mrb[0].mxu0
    %v708 = vpop.f32.mrb[0].mxu0
    %709 = vdwg.mxu0
    %v714 = vrot.slane %v663, 4
    %v715 = vrot.slane %v665, 4
    %v716 = vrot.slane %v704, 4
    %v717 = vrot.slane %v706, 4
    %v722 = vadd.f32 %v335, %v714
    %v723 = vadd.f32 %v337, %v715
    %v724 = vadd.f32 %v378, %v716
    %v725 = vadd.f32 %v380, %v717
    %v726 = vxor.u32 %v722, 2147483648
    %v727 = vxor.u32 %v723, 2147483648
    %v728 = vxor.u32 %v724, 2147483648
    %v729 = vmul.f32 %v726, 1.442695
    %v730 = vpow.pop %v729
    %v731 = vmul.f32 %v727, 1.442695
    %v732 = vpow.pop %v731
    %v733 = vmul.f32 %v728, 1.442695
    %v734 = vpow.pop %v733
    %v735 = vadd.f32 %v730, 1.0
    %v736 = vadd.f32 %v732, 1.0
    %v737 = vadd.f32 %v734, 1.0
    %v738 = vrcp.pop %v735
    %v739 = vmul.f32 1.0, %v738
    %v740 = vrcp.pop %v736
    %v741 = vmul.f32 1.0, %v740
    %v742 = vrcp.pop %v737
    %v743 = vmul.f32 1.0, %v742
    %v744 = vtanh.pop %v725
    %v746 = vrot.slane %v620, 6
    %v748 = vmul.f32 %v741, %v746
    %v749 = vmul.f32 %v739, %v744
    %v750 = vadd.f32 %v748, %v749
    %v751 = vtanh.pop %v750
    %v752 = vmul.f32 %v743, %v751
    %753 = vst [vmem:[#allocation4] sm:$0x30] %v752
    %v754 = vpack.c.bf16 %v752, %v752
    %v756 = vrot.slane %v754, 2
    %758 = vmatprep.subr.bf16.mxu0 %v244
    %759 = vmatpush1.bf16.msra.mxu0 %v243
    %760 = vmatprep.subr.bf16.mxu0 %v248
    %761 = vmatpush1.bf16.msra.mxu0 %v247
    %762 = vmatprep.subr.bf16.mxu0 %v252
    %763 = vmatpush1.bf16.msra.mxu0 %v251
    %764 = vmatprep.subr.bf16.mxu0 %v256
    %765 = vmatpush1.bf16.msra.mxu0 %v255
    %766 = vmatprep.subr.bf16.mxu0 %v260
    %767 = vmatpush1.bf16.msra.mxu0 %v259
    %768 = vmatprep.subr.bf16.mxu0 %v264
    %769 = vmatpush1.bf16.msra.mxu0 %v263
    %770 = vmatprep.subr.bf16.mxu0 %v268
    %771 = vmatpush1.bf16.msra.mxu0 %v267
    %772 = vmatprep.subr.bf16.mxu0 %v272
    %773 = vmatpush1.bf16.msra.mxu0 %v271
    %774 = vmatprep.subr.bf16.mxu0 0
    %775 = vmatpush1.bf16.msra.mxu0 0
    %776 = vmatprep.subr.bf16.mxu0 0
    %777 = vmatpush1.bf16.msra.mxu0 0
    %778 = vmatprep.subr.bf16.mxu0 0
    %779 = vmatpush1.bf16.msra.mxu0 0
    %780 = vmatprep.subr.bf16.mxu0 0
    %781 = vmatpush1.bf16.msra.mxu0 0
    %782 = vmatprep.subr.bf16.mxu0 0
    %783 = vmatpush1.bf16.msra.mxu0 0
    %784 = vmatprep.subr.bf16.mxu0 0
    %785 = vmatpush1.bf16.msra.mxu0 0
    %786 = vmatprep.subr.bf16.mxu0 0
    %787 = vmatpush1.bf16.msra.mxu0 0
    %788 = vmatprep.subr.bf16.mxu0 0
    %789 = vmatpush1.bf16.msra.mxu0 0
    %790 = vmatprep.mubr.bf16.mxu0 0
    %791 = vmatmul.mubr.bf16.gmra.mrb[0].mxu0 %v756
    %v792 = vpop.f32.mrb[0].mxu0
    %v793 = vadd.f32 0.0, %v792
    %v794 = vpop.f32.mrb[0].mxu0
    %v795 = vadd.f32 0.0, %v794
    %v796 = vpop.f32.mrb[0].mxu0
    %v797 = vpop.f32.mrb[0].mxu0
    %798 = vdwg.mxu0
    %799 = vmatprep.subr.bf16.mxu0 %v246
    %800 = vmatpush1.bf16.msra.mxu0 %v245
    %801 = vmatprep.subr.bf16.mxu0 %v250
    %802 = vmatpush1.bf16.msra.mxu0 %v249
    %803 = vmatprep.subr.bf16.mxu0 %v254
    %804 = vmatpush1.bf16.msra.mxu0 %v253
    %805 = vmatprep.subr.bf16.mxu0 %v258
    %806 = vmatpush1.bf16.msra.mxu0 %v257
    %807 = vmatprep.subr.bf16.mxu0 %v262
    %808 = vmatpush1.bf16.msra.mxu0 %v261
    %809 = vmatprep.subr.bf16.mxu0 %v266
    %810 = vmatpush1.bf16.msra.mxu0 %v265
    %811 = vmatprep.subr.bf16.mxu0 %v270
    %812 = vmatpush1.bf16.msra.mxu0 %v269
    %813 = vmatprep.subr.bf16.mxu0 %v274
    %814 = vmatpush1.bf16.msra.mxu0 %v273
    %815 = vmatprep.subr.bf16.mxu0 0
    %816 = vmatpush1.bf16.msra.mxu0 0
    %817 = vmatprep.subr.bf16.mxu0 0
    %818 = vmatpush1.bf16.msra.mxu0 0
    %819 = vmatprep.subr.bf16.mxu0 0
    %820 = vmatpush1.bf16.msra.mxu0 0
    %821 = vmatprep.subr.bf16.mxu0 0
    %822 = vmatpush1.bf16.msra.mxu0 0
    %823 = vmatprep.subr.bf16.mxu0 0
    %824 = vmatpush1.bf16.msra.mxu0 0
    %825 = vmatprep.subr.bf16.mxu0 0
    %826 = vmatpush1.bf16.msra.mxu0 0
    %827 = vmatprep.subr.bf16.mxu0 0
    %828 = vmatpush1.bf16.msra.mxu0 0
    %829 = vmatprep.subr.bf16.mxu0 0
    %830 = vmatpush1.bf16.msra.mxu0 0
    %831 = vmatprep.mubr.bf16.mxu0 0
    %832 = vmatmul.mubr.bf16.gmra.mrb[0].mxu0 %v756
    %v833 = vpop.f32.mrb[0].mxu0
    %v834 = vadd.f32 0.0, %v833
    %v835 = vpop.f32.mrb[0].mxu0
    %v836 = vadd.f32 0.0, %v835
    %v837 = vpop.f32.mrb[0].mxu0
    %v838 = vpop.f32.mrb[0].mxu0
    %839 = vdwg.mxu0
    %v844 = vrot.slane %v793, 2
    %v845 = vrot.slane %v795, 2
    %v846 = vrot.slane %v834, 2
    %v847 = vrot.slane %v836, 2
    %v852 = vadd.f32 %v335, %v844
    %v853 = vadd.f32 %v337, %v845
    %v854 = vadd.f32 %v378, %v846
    %v855 = vadd.f32 %v380, %v847
    %v856 = vxor.u32 %v852, 2147483648
    %v857 = vxor.u32 %v853, 2147483648
    %v858 = vxor.u32 %v854, 2147483648
    %v859 = vmul.f32 %v856, 1.442695
    %v860 = vpow.pop %v859
    %v861 = vmul.f32 %v857, 1.442695
    %v862 = vpow.pop %v861
    %v863 = vmul.f32 %v858, 1.442695
    %v864 = vpow.pop %v863
    %v865 = vadd.f32 %v860, 1.0
    %v866 = vadd.f32 %v862, 1.0
    %v867 = vadd.f32 %v864, 1.0
    %v868 = vrcp.pop %v865
    %v869 = vmul.f32 1.0, %v868
    %v870 = vrcp.pop %v866
    %v871 = vmul.f32 1.0, %v870
    %v872 = vrcp.pop %v867
    %v873 = vmul.f32 1.0, %v872
    %v874 = vtanh.pop %v855
    %v876 = vrot.slane %v750, 6
    %v878 = vmul.f32 %v871, %v876
    %v879 = vmul.f32 %v869, %v874
    %v880 = vadd.f32 %v878, %v879
    %v881 = vtanh.pop %v880
    %v882 = vmul.f32 %v873, %v881
    %883 = vst [vmem:[#allocation4] sm:$0xc0] %v882
    %v884 = vpack.c.bf16 %v882, %v882
    %v886 = vrot.slane %v884, 3
    %888 = vmatprep.subr.bf16.mxu0 %v244
    %889 = vmatpush1.bf16.msra.mxu0 %v243
    %890 = vmatprep.subr.bf16.mxu0 %v248
    %891 = vmatpush1.bf16.msra.mxu0 %v247
    %892 = vmatprep.subr.bf16.mxu0 %v252
    %893 = vmatpush1.bf16.msra.mxu0 %v251
    %894 = vmatprep.subr.bf16.mxu0 %v256
    %895 = vmatpush1.bf16.msra.mxu0 %v255
    %896 = vmatprep.subr.bf16.mxu0 %v260
    %897 = vmatpush1.bf16.msra.mxu0 %v259
    %898 = vmatprep.subr.bf16.mxu0 %v264
    %899 = vmatpush1.bf16.msra.mxu0 %v263
    %900 = vmatprep.subr.bf16.mxu0 %v268
    %901 = vmatpush1.bf16.msra.mxu0 %v267
    %902 = vmatprep.subr.bf16.mxu0 %v272
    %903 = vmatpush1.bf16.msra.mxu0 %v271
    %904 = vmatprep.subr.bf16.mxu0 0
    %905 = vmatpush1.bf16.msra.mxu0 0
    %906 = vmatprep.subr.bf16.mxu0 0
    %907 = vmatpush1.bf16.msra.mxu0 0
    %908 = vmatprep.subr.bf16.mxu0 0
    %909 = vmatpush1.bf16.msra.mxu0 0
    %910 = vmatprep.subr.bf16.mxu0 0
    %911 = vmatpush1.bf16.msra.mxu0 0
    %912 = vmatprep.subr.bf16.mxu0 0
    %913 = vmatpush1.bf16.msra.mxu0 0
    %914 = vmatprep.subr.bf16.mxu0 0
    %915 = vmatpush1.bf16.msra.mxu0 0
    %916 = vmatprep.subr.bf16.mxu0 0
    %917 = vmatpush1.bf16.msra.mxu0 0
    %918 = vmatprep.subr.bf16.mxu0 0
    %919 = vmatpush1.bf16.msra.mxu0 0
    %920 = vmatprep.mubr.bf16.mxu0 0
    %921 = vmatmul.mubr.bf16.gmra.mrb[0].mxu0 %v886
    %v922 = vpop.f32.mrb[0].mxu0
    %v923 = vadd.f32 0.0, %v922
    %v924 = vpop.f32.mrb[0].mxu0
    %v925 = vadd.f32 0.0, %v924
    %v926 = vpop.f32.mrb[0].mxu0
    %v927 = vpop.f32.mrb[0].mxu0
    %928 = vdwg.mxu0
    %929 = vmatprep.subr.bf16.mxu0 %v246
    %930 = vmatpush1.bf16.msra.mxu0 %v245
    %931 = vmatprep.subr.bf16.mxu0 %v250
    %932 = vmatpush1.bf16.msra.mxu0 %v249
    %933 = vmatprep.subr.bf16.mxu0 %v254
    %934 = vmatpush1.bf16.msra.mxu0 %v253
    %935 = vmatprep.subr.bf16.mxu0 %v258
    %936 = vmatpush1.bf16.msra.mxu0 %v257
    %937 = vmatprep.subr.bf16.mxu0 %v262
    %938 = vmatpush1.bf16.msra.mxu0 %v261
    %939 = vmatprep.subr.bf16.mxu0 %v266
    %940 = vmatpush1.bf16.msra.mxu0 %v265
    %941 = vmatprep.subr.bf16.mxu0 %v270
    %942 = vmatpush1.bf16.msra.mxu0 %v269
    %943 = vmatprep.subr.bf16.mxu0 %v274
    %944 = vmatpush1.bf16.msra.mxu0 %v273
    %945 = vmatprep.subr.bf16.mxu0 0
    %946 = vmatpush1.bf16.msra.mxu0 0
    %947 = vmatprep.subr.bf16.mxu0 0
    %948 = vmatpush1.bf16.msra.mxu0 0
    %949 = vmatprep.subr.bf16.mxu0 0
    %950 = vmatpush1.bf16.msra.mxu0 0
    %951 = vmatprep.subr.bf16.mxu0 0
    %952 = vmatpush1.bf16.msra.mxu0 0
    %953 = vmatprep.subr.bf16.mxu0 0
    %954 = vmatpush1.bf16.msra.mxu0 0
    %955 = vmatprep.subr.bf16.mxu0 0
    %956 = vmatpush1.bf16.msra.mxu0 0
    %957 = vmatprep.subr.bf16.mxu0 0
    %958 = vmatpush1.bf16.msra.mxu0 0
    %959 = vmatprep.subr.bf16.mxu0 0
    %960 = vmatpush1.bf16.msra.mxu0 0
    %961 = vmatprep.mubr.bf16.mxu0 0
    %962 = vmatmul.mubr.bf16.gmra.mrb[0].mxu0 %v886
    %v963 = vpop.f32.mrb[0].mxu0
    %v964 = vadd.f32 0.0, %v963
    %v965 = vpop.f32.mrb[0].mxu0
    %v966 = vadd.f32 0.0, %v965
    %v967 = vpop.f32.mrb[0].mxu0
    %v968 = vpop.f32.mrb[0].mxu0
    %969 = vdwg.mxu0
    %v970 = vadd.f32 %v339, %v923
    %v971 = vadd.f32 %v341, %v925
    %v972 = vadd.f32 %v382, %v964
    %v973 = vadd.f32 %v384, %v966
    %v974 = vxor.u32 %v970, 2147483648
    %v975 = vxor.u32 %v971, 2147483648
    %v976 = vxor.u32 %v972, 2147483648
    %v977 = vmul.f32 %v974, 1.442695
    %v978 = vpow.pop %v977
    %v979 = vmul.f32 %v975, 1.442695
    %v980 = vpow.pop %v979
    %v981 = vmul.f32 %v976, 1.442695
    %v982 = vpow.pop %v981
    %v983 = vadd.f32 %v978, 1.0
    %v984 = vadd.f32 %v980, 1.0
    %v985 = vadd.f32 %v982, 1.0
    %v986 = vrcp.pop %v983
    %v987 = vmul.f32 1.0, %v986
    %v988 = vrcp.pop %v984
    %v989 = vmul.f32 1.0, %v988
    %v990 = vrcp.pop %v985
    %v991 = vmul.f32 1.0, %v990
    %v992 = vtanh.pop %v973
    %v994 = vrot.slane %v880, 6
    %v996 = vmul.f32 %v989, %v994
    %v997 = vmul.f32 %v987, %v992
    %v998 = vadd.f32 %v996, %v997
    %v999 = vtanh.pop %v998
    %v1000 = vmul.f32 %v991, %v999
    %1001 = vst [vmem:[#allocation4 + $0x8] sm:$0x3] %v1000
    %v1002 = vpack.c.bf16 %v1000, %v1000
    %1003 = vmatprep.subr.bf16.mxu0 %v244
    %1004 = vmatpush1.bf16.msra.mxu0 %v243
    %1005 = vmatprep.subr.bf16.mxu0 %v248
    %1006 = vmatpush1.bf16.msra.mxu0 %v247
    %1007 = vmatprep.subr.bf16.mxu0 %v252
    %1008 = vmatpush1.bf16.msra.mxu0 %v251
    %1009 = vmatprep.subr.bf16.mxu0 %v256
    %1010 = vmatpush1.bf16.msra.mxu0 %v255
    %1011 = vmatprep.subr.bf16.mxu0 %v260
    %1012 = vmatpush1.bf16.msra.mxu0 %v259
    %1013 = vmatprep.subr.bf16.mxu0 %v264
    %1014 = vmatpush1.bf16.msra.mxu0 %v263
    %1015 = vmatprep.subr.bf16.mxu0 %v268
    %1016 = vmatpush1.bf16.msra.mxu0 %v267
    %1017 = vmatprep.subr.bf16.mxu0 %v272
    %1018 = vmatpush1.bf16.msra.mxu0 %v271
    %1019 = vmatprep.subr.bf16.mxu0 0
    %1020 = vmatpush1.bf16.msra.mxu0 0
    %1021 = vmatprep.subr.bf16.mxu0 0
    %1022 = vmatpush1.bf16.msra.mxu0 0
    %1023 = vmatprep.subr.bf16.mxu0 0
    %1024 = vmatpush1.bf16.msra.mxu0 0
    %1025 = vmatprep.subr.bf16.mxu0 0
    %1026 = vmatpush1.bf16.msra.mxu0 0
    %1027 = vmatprep.subr.bf16.mxu0 0
    %1028 = vmatpush1.bf16.msra.mxu0 0
    %1029 = vmatprep.subr.bf16.mxu0 0
    %1030 = vmatpush1.bf16.msra.mxu0 0
    %1031 = vmatprep.subr.bf16.mxu0 0
    %1032 = vmatpush1.bf16.msra.mxu0 0
    %1033 = vmatprep.subr.bf16.mxu0 0
    %1034 = vmatpush1.bf16.msra.mxu0 0
    %1035 = vmatprep.mubr.bf16.mxu0 0
    %1036 = vmatmul.mubr.bf16.gmra.mrb[0].mxu0 %v1002
    %v1037 = vpop.f32.mrb[0].mxu0
    %v1038 = vadd.f32 0.0, %v1037
    %v1039 = vpop.f32.mrb[0].mxu0
    %v1040 = vadd.f32 0.0, %v1039
    %v1041 = vpop.f32.mrb[0].mxu0
    %v1042 = vpop.f32.mrb[0].mxu0
    %1043 = vdwg.mxu0
    %1044 = vmatprep.subr.bf16.mxu0 %v246
    %1045 = vmatpush1.bf16.msra.mxu0 %v245
    %1046 = vmatprep.subr.bf16.mxu0 %v250
    %1047 = vmatpush1.bf16.msra.mxu0 %v249
    %1048 = vmatprep.subr.bf16.mxu0 %v254
    %1049 = vmatpush1.bf16.msra.mxu0 %v253
    %1050 = vmatprep.subr.bf16.mxu0 %v258
    %1051 = vmatpush1.bf16.msra.mxu0 %v257
    %1052 = vmatprep.subr.bf16.mxu0 %v262
    %1053 = vmatpush1.bf16.msra.mxu0 %v261
    %1054 = vmatprep.subr.bf16.mxu0 %v266
    %1055 = vmatpush1.bf16.msra.mxu0 %v265
    %1056 = vmatprep.subr.bf16.mxu0 %v270
    %1057 = vmatpush1.bf16.msra.mxu0 %v269
    %1058 = vmatprep.subr.bf16.mxu0 %v274
    %1059 = vmatpush1.bf16.msra.mxu0 %v273
    %1060 = vmatprep.subr.bf16.mxu0 0
    %1061 = vmatpush1.bf16.msra.mxu0 0
    %1062 = vmatprep.subr.bf16.mxu0 0
    %1063 = vmatpush1.bf16.msra.mxu0 0
    %1064 = vmatprep.subr.bf16.mxu0 0
    %1065 = vmatpush1.bf16.msra.mxu0 0
    %1066 = vmatprep.subr.bf16.mxu0 0
    %1067 = vmatpush1.bf16.msra.mxu0 0
    %1068 = vmatprep.subr.bf16.mxu0 0
    %1069 = vmatpush1.bf16.msra.mxu0 0
    %1070 = vmatprep.subr.bf16.mxu0 0
    %1071 = vmatpush1.bf16.msra.mxu0 0
    %1072 = vmatprep.subr.bf16.mxu0 0
    %1073 = vmatpush1.bf16.msra.mxu0 0
    %1074 = vmatprep.subr.bf16.mxu0 0
    %1075 = vmatpush1.bf16.msra.mxu0 0
    %1076 = vmatprep.mubr.bf16.mxu0 0
    %1077 = vmatmul.mubr.bf16.gmra.mrb[0].mxu0 %v1002
    %v1078 = vpop.f32.mrb[0].mxu0
    %v1079 = vadd.f32 0.0, %v1078
    %v1080 = vpop.f32.mrb[0].mxu0
    %v1081 = vadd.f32 0.0, %v1080
    %v1082 = vpop.f32.mrb[0].mxu0
    %v1083 = vpop.f32.mrb[0].mxu0
    %1084 = vdwg.mxu0
    %v1089 = vrot.slane %v1038, 6
    %v1090 = vrot.slane %v1040, 6
    %v1091 = vrot.slane %v1079, 6
    %v1092 = vrot.slane %v1081, 6
    %v1097 = vadd.f32 %v339, %v1089
    %v1098 = vadd.f32 %v341, %v1090
    %v1099 = vadd.f32 %v382, %v1091
    %v1100 = vadd.f32 %v384, %v1092
    %v1101 = vxor.u32 %v1097, 2147483648
    %v1102 = vxor.u32 %v1098, 2147483648
    %v1103 = vxor.u32 %v1099, 2147483648
    %v1104 = vmul.f32 %v1101, 1.442695
    %v1105 = vpow.pop %v1104
    %v1106 = vmul.f32 %v1102, 1.442695
    %v1107 = vpow.pop %v1106
    %v1108 = vmul.f32 %v1103, 1.442695
    %v1109 = vpow.pop %v1108
    %v1110 = vadd.f32 %v1105, 1.0
    %v1111 = vadd.f32 %v1107, 1.0
    %v1112 = vadd.f32 %v1109, 1.0
    %v1113 = vrcp.pop %v1110
    %v1114 = vmul.f32 1.0, %v1113
    %v1115 = vrcp.pop %v1111
    %v1116 = vmul.f32 1.0, %v1115
    %v1117 = vrcp.pop %v1112
    %v1118 = vmul.f32 1.0, %v1117
    %v1119 = vtanh.pop %v1100
    %v1121 = vrot.slane %v998, 6
    %v1123 = vmul.f32 %v1116, %v1121
    %v1124 = vmul.f32 %v1114, %v1119
    %v1125 = vadd.f32 %v1123, %v1124
    %v1126 = vtanh.pop %v1125
    %v1127 = vmul.f32 %v1118, %v1126
    %1128 = vst [vmem:[#allocation4 + $0x8] sm:$0xc] %v1127
    %v1129 = vpack.c.bf16 %v1127, %v1127
    %v1131 = vrot.slane %v1129, 1
    %1133 = vmatprep.subr.bf16.mxu0 %v244
    %1134 = vmatpush1.bf16.msra.mxu0 %v243
    %1135 = vmatprep.subr.bf16.mxu0 %v248
    %1136 = vmatpush1.bf16.msra.mxu0 %v247
    %1137 = vmatprep.subr.bf16.mxu0 %v252
    %1138 = vmatpush1.bf16.msra.mxu0 %v251
    %1139 = vmatprep.subr.bf16.mxu0 %v256
    %1140 = vmatpush1.bf16.msra.mxu0 %v255
    %1141 = vmatprep.subr.bf16.mxu0 %v260
    %1142 = vmatpush1.bf16.msra.mxu0 %v259
    %1143 = vmatprep.subr.bf16.mxu0 %v264
    %1144 = vmatpush1.bf16.msra.mxu0 %v263
    %1145 = vmatprep.subr.bf16.mxu0 %v268
    %1146 = vmatpush1.bf16.msra.mxu0 %v267
    %1147 = vmatprep.subr.bf16.mxu0 %v272
    %1148 = vmatpush1.bf16.msra.mxu0 %v271
    %1149 = vmatprep.subr.bf16.mxu0 0
    %1150 = vmatpush1.bf16.msra.mxu0 0
    %1151 = vmatprep.subr.bf16.mxu0 0
    %1152 = vmatpush1.bf16.msra.mxu0 0
    %1153 = vmatprep.subr.bf16.mxu0 0
    %1154 = vmatpush1.bf16.msra.mxu0 0
    %1155 = vmatprep.subr.bf16.mxu0 0
    %1156 = vmatpush1.bf16.msra.mxu0 0
    %1157 = vmatprep.subr.bf16.mxu0 0
    %1158 = vmatpush1.bf16.msra.mxu0 0
    %1159 = vmatprep.subr.bf16.mxu0 0
    %1160 = vmatpush1.bf16.msra.mxu0 0
    %1161 = vmatprep.subr.bf16.mxu0 0
    %1162 = vmatpush1.bf16.msra.mxu0 0
    %1163 = vmatprep.subr.bf16.mxu0 0
    %1164 = vmatpush1.bf16.msra.mxu0 0
    %1165 = vmatprep.mubr.bf16.mxu0 0
    %1166 = vmatmul.mubr.bf16.gmra.mrb[0].mxu0 %v1131
    %v1167 = vpop.f32.mrb[0].mxu0
    %v1168 = vadd.f32 0.0, %v1167
    %v1169 = vpop.f32.mrb[0].mxu0
    %v1170 = vadd.f32 0.0, %v1169
    %v1171 = vpop.f32.mrb[0].mxu0
    %v1172 = vpop.f32.mrb[0].mxu0
    %1173 = vdwg.mxu0
    %1174 = vmatprep.subr.bf16.mxu0 %v246
    %1175 = vmatpush1.bf16.msra.mxu0 %v245
    %1176 = vmatprep.subr.bf16.mxu0 %v250
    %1177 = vmatpush1.bf16.msra.mxu0 %v249
    %1178 = vmatprep.subr.bf16.mxu0 %v254
    %1179 = vmatpush1.bf16.msra.mxu0 %v253
    %1180 = vmatprep.subr.bf16.mxu0 %v258
    %1181 = vmatpush1.bf16.msra.mxu0 %v257
    %1182 = vmatprep.subr.bf16.mxu0 %v262
    %1183 = vmatpush1.bf16.msra.mxu0 %v261
    %1184 = vmatprep.subr.bf16.mxu0 %v266
    %1185 = vmatpush1.bf16.msra.mxu0 %v265
    %1186 = vmatprep.subr.bf16.mxu0 %v270
    %1187 = vmatpush1.bf16.msra.mxu0 %v269
    %1188 = vmatprep.subr.bf16.mxu0 %v274
    %1189 = vmatpush1.bf16.msra.mxu0 %v273
    %1190 = vmatprep.subr.bf16.mxu0 0
    %1191 = vmatpush1.bf16.msra.mxu0 0
    %1192 = vmatprep.subr.bf16.mxu0 0
    %1193 = vmatpush1.bf16.msra.mxu0 0
    %1194 = vmatprep.subr.bf16.mxu0 0
    %1195 = vmatpush1.bf16.msra.mxu0 0
    %1196 = vmatprep.subr.bf16.mxu0 0
    %1197 = vmatpush1.bf16.msra.mxu0 0
    %1198 = vmatprep.subr.bf16.mxu0 0
    %1199 = vmatpush1.bf16.msra.mxu0 0
    %1200 = vmatprep.subr.bf16.mxu0 0
    %1201 = vmatpush1.bf16.msra.mxu0 0
    %1202 = vmatprep.subr.bf16.mxu0 0
    %1203 = vmatpush1.bf16.msra.mxu0 0
    %1204 = vmatprep.subr.bf16.mxu0 0
    %1205 = vmatpush1.bf16.msra.mxu0 0
    %1206 = vmatprep.mubr.bf16.mxu0 0
    %1207 = vmatmul.mubr.bf16.gmra.mrb[0].mxu0 %v1131
    %v1208 = vpop.f32.mrb[0].mxu0
    %v1209 = vadd.f32 0.0, %v1208
    %v1210 = vpop.f32.mrb[0].mxu0
    %v1211 = vadd.f32 0.0, %v1210
    %v1212 = vpop.f32.mrb[0].mxu0
    %v1213 = vpop.f32.mrb[0].mxu0
    %1214 = vdwg.mxu0
    %v1219 = vrot.slane %v1168, 4
    %v1220 = vrot.slane %v1170, 4
    %v1221 = vrot.slane %v1209, 4
    %v1222 = vrot.slane %v1211, 4
    %v1227 = vadd.f32 %v339, %v1219
    %v1228 = vadd.f32 %v341, %v1220
    %v1229 = vadd.f32 %v382, %v1221
    %v1230 = vadd.f32 %v384, %v1222
    %v1231 = vxor.u32 %v1227, 2147483648
    %v1232 = vxor.u32 %v1228, 2147483648
    %v1233 = vxor.u32 %v1229, 2147483648
    %v1234 = vmul.f32 %v1231, 1.442695
    %v1235 = vpow.pop %v1234
    %v1236 = vmul.f32 %v1232, 1.442695
    %v1237 = vpow.pop %v1236
    %v1238 = vmul.f32 %v1233, 1.442695
    %v1239 = vpow.pop %v1238
    %v1240 = vadd.f32 %v1235, 1.0
    %v1241 = vadd.f32 %v1237, 1.0
    %v1242 = vadd.f32 %v1239, 1.0
    %v1243 = vrcp.pop %v1240
    %v1244 = vmul.f32 1.0, %v1243
    %v1245 = vrcp.pop %v1241
    %v1246 = vmul.f32 1.0, %v1245
    %v1247 = vrcp.pop %v1242
    %v1248 = vmul.f32 1.0, %v1247
    %v1249 = vtanh.pop %v1230
    %v1251 = vrot.slane %v1125, 6
    %v1253 = vmul.f32 %v1246, %v1251
    %v1254 = vmul.f32 %v1244, %v1249
    %v1255 = vadd.f32 %v1253, %v1254
    %v1256 = vtanh.pop %v1255
    %v1257 = vmul.f32 %v1248, %v1256
    %1258 = vst [vmem:[#allocation4 + $0x8] sm:$0x30] %v1257
    %v1259 = vpack.c.bf16 %v1257, %v1257
    %v1261 = vrot.slane %v1259, 2
    %1263 = vmatprep.subr.bf16.mxu0 %v244
    %1264 = vmatpush1.bf16.msra.mxu0 %v243
    %1265 = vmatprep.subr.bf16.mxu0 %v248
    %1266 = vmatpush1.bf16.msra.mxu0 %v247
    %1267 = vmatprep.subr.bf16.mxu0 %v252
    %1268 = vmatpush1.bf16.msra.mxu0 %v251
    %1269 = vmatprep.subr.bf16.mxu0 %v256
    %1270 = vmatpush1.bf16.msra.mxu0 %v255
    %1271 = vmatprep.subr.bf16.mxu0 %v260
    %1272 = vmatpush1.bf16.msra.mxu0 %v259
    %1273 = vmatprep.subr.bf16.mxu0 %v264
    %1274 = vmatpush1.bf16.msra.mxu0 %v263
    %1275 = vmatprep.subr.bf16.mxu0 %v268
    %1276 = vmatpush1.bf16.msra.mxu0 %v267
    %1277 = vmatprep.subr.bf16.mxu0 %v272
    %1278 = vmatpush1.bf16.msra.mxu0 %v271
    %1279 = vmatprep.subr.bf16.mxu0 0
    %1280 = vmatpush1.bf16.msra.mxu0 0
    %1281 = vmatprep.subr.bf16.mxu0 0
    %1282 = vmatpush1.bf16.msra.mxu0 0
    %1283 = vmatprep.subr.bf16.mxu0 0
    %1284 = vmatpush1.bf16.msra.mxu0 0
    %1285 = vmatprep.subr.bf16.mxu0 0
    %1286 = vmatpush1.bf16.msra.mxu0 0
    %1287 = vmatprep.subr.bf16.mxu0 0
    %1288 = vmatpush1.bf16.msra.mxu0 0
    %1289 = vmatprep.subr.bf16.mxu0 0
    %1290 = vmatpush1.bf16.msra.mxu0 0
    %1291 = vmatprep.subr.bf16.mxu0 0
    %1292 = vmatpush1.bf16.msra.mxu0 0
    %1293 = vmatprep.subr.bf16.mxu0 0
    %1294 = vmatpush1.bf16.msra.mxu0 0
    %1295 = vmatprep.mubr.bf16.mxu0 0
    %1296 = vmatmul.mubr.bf16.gmra.mrb[0].mxu0 %v1261
    %v1297 = vpop.f32.mrb[0].mxu0
    %v1298 = vadd.f32 0.0, %v1297
    %v1299 = vpop.f32.mrb[0].mxu0
    %v1300 = vadd.f32 0.0, %v1299
    %v1301 = vpop.f32.mrb[0].mxu0
    %v1302 = vpop.f32.mrb[0].mxu0
    %1303 = vdwg.mxu0
    %1304 = vmatprep.subr.bf16.mxu0 %v246
    %1305 = vmatpush1.bf16.msra.mxu0 %v245
    %1306 = vmatprep.subr.bf16.mxu0 %v250
    %1307 = vmatpush1.bf16.msra.mxu0 %v249
    %1308 = vmatprep.subr.bf16.mxu0 %v254
    %1309 = vmatpush1.bf16.msra.mxu0 %v253
    %1310 = vmatprep.subr.bf16.mxu0 %v258
    %1311 = vmatpush1.bf16.msra.mxu0 %v257
    %1312 = vmatprep.subr.bf16.mxu0 %v262
    %1313 = vmatpush1.bf16.msra.mxu0 %v261
    %1314 = vmatprep.subr.bf16.mxu0 %v266
    %1315 = vmatpush1.bf16.msra.mxu0 %v265
    %1316 = vmatprep.subr.bf16.mxu0 %v270
    %1317 = vmatpush1.bf16.msra.mxu0 %v269
    %1318 = vmatprep.subr.bf16.mxu0 %v274
    %1319 = vmatpush1.bf16.msra.mxu0 %v273
    %1320 = vmatprep.subr.bf16.mxu0 0
    %1321 = vmatpush1.bf16.msra.mxu0 0
    %1322 = vmatprep.subr.bf16.mxu0 0
    %1323 = vmatpush1.bf16.msra.mxu0 0
    %1324 = vmatprep.subr.bf16.mxu0 0
    %1325 = vmatpush1.bf16.msra.mxu0 0
    %1326 = vmatprep.subr.bf16.mxu0 0
    %1327 = vmatpush1.bf16.msra.mxu0 0
    %1328 = vmatprep.subr.bf16.mxu0 0
    %1329 = vmatpush1.bf16.msra.mxu0 0
    %1330 = vmatprep.subr.bf16.mxu0 0
    %1331 = vmatpush1.bf16.msra.mxu0 0
    %1332 = vmatprep.subr.bf16.mxu0 0
    %1333 = vmatpush1.bf16.msra.mxu0 0
    %1334 = vmatprep.subr.bf16.mxu0 0
    %1335 = vmatpush1.bf16.msra.mxu0 0
    %1336 = vmatprep.mubr.bf16.mxu0 0
    %1337 = vmatmul.mubr.bf16.gmra.mrb[0].mxu0 %v1261
    %v1338 = vpop.f32.mrb[0].mxu0
    %v1339 = vadd.f32 0.0, %v1338
    %v1340 = vpop.f32.mrb[0].mxu0
    %v1341 = vadd.f32 0.0, %v1340
    %v1342 = vpop.f32.mrb[0].mxu0
    %v1343 = vpop.f32.mrb[0].mxu0
    %1344 = vdwg.mxu0
    %v1349 = vrot.slane %v1298, 2
    %v1350 = vrot.slane %v1300, 2
    %v1351 = vrot.slane %v1339, 2
    %v1352 = vrot.slane %v1341, 2
    %v1357 = vadd.f32 %v339, %v1349
    %v1358 = vadd.f32 %v341, %v1350
    %v1359 = vadd.f32 %v382, %v1351
    %v1360 = vadd.f32 %v384, %v1352
    %v1361 = vxor.u32 %v1357, 2147483648
    %v1362 = vxor.u32 %v1358, 2147483648
    %v1363 = vxor.u32 %v1359, 2147483648
    %v1364 = vmul.f32 %v1361, 1.442695
    %v1365 = vpow.pop %v1364
    %v1366 = vmul.f32 %v1362, 1.442695
    %v1367 = vpow.pop %v1366
    %v1368 = vmul.f32 %v1363, 1.442695
    %v1369 = vpow.pop %v1368
    %v1370 = vadd.f32 %v1365, 1.0
    %v1371 = vadd.f32 %v1367, 1.0
    %v1372 = vadd.f32 %v1369, 1.0
    %v1373 = vrcp.pop %v1370
    %v1374 = vmul.f32 1.0, %v1373
    %v1375 = vrcp.pop %v1371
    %v1376 = vmul.f32 1.0, %v1375
    %v1377 = vrcp.pop %v1372
    %v1378 = vmul.f32 1.0, %v1377
    %v1379 = vtanh.pop %v1360
    %v1381 = vrot.slane %v1255, 6
    %v1383 = vmul.f32 %v1376, %v1381
    %v1384 = vmul.f32 %v1374, %v1379
    %v1385 = vadd.f32 %v1383, %v1384
    %v1386 = vtanh.pop %v1385
    %v1387 = vmul.f32 %v1378, %v1386
    %1388 = vst [vmem:[#allocation4 + $0x8] sm:$0xc0] %v1387
    %s1389 = sshll.u32 %s171, 4
    %1390 = dma.done %s176, %s1389
    %s1391 = scalar_lea.hbm %s1, 16384
    %s1393 = sshll.u32 1, 14
    %s1394 = sxor.u32 4294967295, %s1393
    %s1396 = sadd.s32 2, %s139
    %s1398 = sshll.u32 7, 26
    %s1399 = sxor.u32 4294967295, %s1398
    %s1400 = sand.u32 0, %s1399
    %s1401 = sshll.u32 %s1396, 26
    %s1402 = sor.u32 %s1400, %s1401
    %s1403 = sshll.u32 [#allocation2], 4
    %s1404 = int_to_ptr.vmem [resolvable:$true] %s1403
    %1407 = sst [smem:[#allocation26]] 512
    %s1408 = scalar_lea.smem [#allocation26], 1
    %1409 = sst [smem:[%s1408]] 512
    %s1410 = scalar_lea.smem [#allocation26], 2
    %1411 = sst [smem:[%s1410]] 4
    %s1412 = scalar_lea.smem [#allocation26], 3
    %1413 = sst [smem:[%s1412]] 64
    %s1414 = scalar_lea.smem [#allocation26], 4
    %1415 = sst [smem:[%s1414]] 128
    %s1416 = scalar_lea.smem [#allocation26], 5
    %1417 = sst [smem:[%s1416]] 2
    %s1418 = scalar_lea.smem [#allocation26], 6
    %1419 = sst [smem:[%s1418]] 256
    %s1420 = scalar_lea.smem [#allocation26], 7
    %1421 = sst [smem:[%s1420]] 64
    %s1422 = scalar_lea.smem [#allocation26], 8
    %1423 = sst [smem:[%s1422]] 4
    %1425 = dma.general %s1391, 8192, %s1404, [#allocation3], [#allocation25], [#allocation26], %s1402, 0
    %v1426 = vld [vmem:[%s175] sm:$0xff]
    %v1427 = vld [vmem:[%s175 + $0x8] sm:$0xff]
    %v1428 = vld [vmem:[%s175 + $0x10] sm:$0xff]
    %v1429 = vld [vmem:[%s175 + $0x18] sm:$0xff]
    %v1430 = vld [vmem:[%s175 + $0x20] sm:$0xff]
    %v1431 = vld [vmem:[%s175 + $0x28] sm:$0xff]
    %v1432 = vld [vmem:[%s175 + $0x30] sm:$0xff]
    %v1433 = vld [vmem:[%s175 + $0x38] sm:$0xff]
    %v1434 = vld [vmem:[%s175 + $0x40] sm:$0xff]
    %v1435 = vld [vmem:[%s175 + $0x48] sm:$0xff]
    %v1436 = vld [vmem:[%s175 + $0x50] sm:$0xff]
    %v1437 = vld [vmem:[%s175 + $0x58] sm:$0xff]
    %v1438 = vld [vmem:[%s175 + $0x60] sm:$0xff]
    %v1439 = vld [vmem:[%s175 + $0x68] sm:$0xff]
    %v1440 = vld [vmem:[%s175 + $0x70] sm:$0xff]
    %v1441 = vld [vmem:[%s175 + $0x78] sm:$0xff]
    %v1442 = vld [vmem:[%s175 + $0x80] sm:$0xff]
    %v1443 = vld [vmem:[%s175 + $0x88] sm:$0xff]
    %v1444 = vld [vmem:[%s175 + $0x90] sm:$0xff]
    %v1445 = vld [vmem:[%s175 + $0x98] sm:$0xff]
    %v1446 = vld [vmem:[%s175 + $0xa0] sm:$0xff]
    %v1447 = vld [vmem:[%s175 + $0xa8] sm:$0xff]
    %v1448 = vld [vmem:[%s175 + $0xb0] sm:$0xff]
    %v1449 = vld [vmem:[%s175 + $0xb8] sm:$0xff]
    %v1450 = vld [vmem:[%s175 + $0xc0] sm:$0xff]
    %v1451 = vld [vmem:[%s175 + $0xc8] sm:$0xff]
    %v1452 = vld [vmem:[%s175 + $0xd0] sm:$0xff]
    %v1453 = vld [vmem:[%s175 + $0xd8] sm:$0xff]
    %v1454 = vld [vmem:[%s175 + $0xe0] sm:$0xff]
    %v1455 = vld [vmem:[%s175 + $0xe8] sm:$0xff]
    %v1456 = vld [vmem:[%s175 + $0xf0] sm:$0xff]
    %v1457 = vld [vmem:[%s175 + $0xf8] sm:$0xff]
    %v1458 = vld [vmem:[%s175 + $0x100] sm:$0xff]
    %v1459 = vld [vmem:[%s175 + $0x108] sm:$0xff]
    %v1460 = vld [vmem:[%s175 + $0x110] sm:$0xff]
    %v1461 = vld [vmem:[%s175 + $0x118] sm:$0xff]
    %v1462 = vld [vmem:[%s175 + $0x120] sm:$0xff]
    %v1463 = vld [vmem:[%s175 + $0x128] sm:$0xff]
    %v1464 = vld [vmem:[%s175 + $0x130] sm:$0xff]
    %v1465 = vld [vmem:[%s175 + $0x138] sm:$0xff]
    %v1466 = vld [vmem:[%s175 + $0x140] sm:$0xff]
    %v1467 = vld [vmem:[%s175 + $0x148] sm:$0xff]
    %v1468 = vld [vmem:[%s175 + $0x150] sm:$0xff]
    %v1469 = vld [vmem:[%s175 + $0x158] sm:$0xff]
    %v1470 = vld [vmem:[%s175 + $0x160] sm:$0xff]
    %v1471 = vld [vmem:[%s175 + $0x168] sm:$0xff]
    %v1472 = vld [vmem:[%s175 + $0x170] sm:$0xff]
    %v1473 = vld [vmem:[%s175 + $0x178] sm:$0xff]
    %v1474 = vld [vmem:[%s175 + $0x180] sm:$0xff]
    %v1475 = vld [vmem:[%s175 + $0x188] sm:$0xff]
    %v1476 = vld [vmem:[%s175 + $0x190] sm:$0xff]
    %v1477 = vld [vmem:[%s175 + $0x198] sm:$0xff]
    %v1478 = vld [vmem:[%s175 + $0x1a0] sm:$0xff]
    %v1479 = vld [vmem:[%s175 + $0x1a8] sm:$0xff]
    %v1480 = vld [vmem:[%s175 + $0x1b0] sm:$0xff]
    %v1481 = vld [vmem:[%s175 + $0x1b8] sm:$0xff]
    %v1482 = vld [vmem:[%s175 + $0x1c0] sm:$0xff]
    %v1483 = vld [vmem:[%s175 + $0x1c8] sm:$0xff]
    %v1484 = vld [vmem:[%s175 + $0x1d0] sm:$0xff]
    %v1485 = vld [vmem:[%s175 + $0x1d8] sm:$0xff]
    %v1486 = vld [vmem:[%s175 + $0x1e0] sm:$0xff]
    %v1487 = vld [vmem:[%s175 + $0x1e8] sm:$0xff]
    %v1488 = vld [vmem:[%s175 + $0x1f0] sm:$0xff]
    %v1489 = vld [vmem:[%s175 + $0x1f8] sm:$0xff]
    %v1490 = vld [vmem:[#allocation4] sm:$0xff]
    %v1491 = vld [vmem:[#allocation4 + $0x8] sm:$0xff]
    %v1492 = vpack.c.bf16 %v1491, %v1490
    %s1493 = scalar_lea.vmem [#allocation9], 4
    %v1494 = vld [vmem:[%s1493] sm:$0xf]
    %v1496 = vlaneseq
    %v1497 = vshrl.u32 %v1496, 7
    %v1498 = vsub.s32 0, %v1497
    %v1499 = vrot.slane %v1494, %v1498
    %v1500 = vlaneseq
    %v1501 = vshrl.u32 %v1500, 7
    %v1502 = vsub.s32 1, %v1501
    %v1503 = vrot.slane %v1494, %v1502
    %v1504 = vlaneseq
    %v1505 = vshrl.u32 %v1504, 7
    %v1506 = vsub.s32 2, %v1505
    %v1507 = vrot.slane %v1494, %v1506
    %v1508 = vlaneseq
    %v1509 = vshrl.u32 %v1508, 7
    %v1510 = vsub.s32 3, %v1509
    %v1511 = vrot.slane %v1494, %v1510
    %1516 = vmatprep.subr.bf16.mxu0 %v1427
    %1517 = vmatpush1.bf16.msra.mxu0 %v1426
    %1518 = vmatprep.subr.bf16.mxu0 %v1431
    %1519 = vmatpush1.bf16.msra.mxu0 %v1430
    %1520 = vmatprep.subr.bf16.mxu0 %v1435
    %1521 = vmatpush1.bf16.msra.mxu0 %v1434
    %1522 = vmatprep.subr.bf16.mxu0 %v1439
    %1523 = vmatpush1.bf16.msra.mxu0 %v1438
    %1524 = vmatprep.subr.bf16.mxu0 %v1443
    %1525 = vmatpush1.bf16.msra.mxu0 %v1442
    %1526 = vmatprep.subr.bf16.mxu0 %v1447
    %1527 = vmatpush1.bf16.msra.mxu0 %v1446
    %1528 = vmatprep.subr.bf16.mxu0 %v1451
    %1529 = vmatpush1.bf16.msra.mxu0 %v1450
    %1530 = vmatprep.subr.bf16.mxu0 %v1455
    %1531 = vmatpush1.bf16.msra.mxu0 %v1454
    %1532 = vmatprep.subr.bf16.mxu0 0
    %1533 = vmatpush1.bf16.msra.mxu0 0
    %1534 = vmatprep.subr.bf16.mxu0 0
    %1535 = vmatpush1.bf16.msra.mxu0 0
    %1536 = vmatprep.subr.bf16.mxu0 0
    %1537 = vmatpush1.bf16.msra.mxu0 0
    %1538 = vmatprep.subr.bf16.mxu0 0
    %1539 = vmatpush1.bf16.msra.mxu0 0
    %1540 = vmatprep.subr.bf16.mxu0 0
    %1541 = vmatpush1.bf16.msra.mxu0 0
    %1542 = vmatprep.subr.bf16.mxu0 0
    %1543 = vmatpush1.bf16.msra.mxu0 0
    %1544 = vmatprep.subr.bf16.mxu0 0
    %1545 = vmatpush1.bf16.msra.mxu0 0
    %1546 = vmatprep.subr.bf16.mxu0 0
    %1547 = vmatpush1.bf16.msra.mxu0 0
    %1548 = vmatprep.mubr.bf16.mxu0 0
    %1549 = vmatmul.mubr.bf16.gmra.mrb[0].mxu0 %v1492
    %v1550 = vpop.f32.mrb[0].mxu0
    %v1551 = vadd.f32 %v1499, %v1550
    %v1552 = vpop.f32.mrb[0].mxu0
    %v1553 = vadd.f32 %v1503, %v1552
    %v1554 = vpop.f32.mrb[0].mxu0
    %v1555 = vadd.f32 %v1499, %v1554
    %v1556 = vpop.f32.mrb[0].mxu0
    %v1557 = vadd.f32 %v1503, %v1556
    %1558 = vdwg.mxu0
    %1559 = vmatprep.subr.bf16.mxu0 %v1429
    %1560 = vmatpush1.bf16.msra.mxu0 %v1428
    %1561 = vmatprep.subr.bf16.mxu0 %v1433
    %1562 = vmatpush1.bf16.msra.mxu0 %v1432
    %1563 = vmatprep.subr.bf16.mxu0 %v1437
    %1564 = vmatpush1.bf16.msra.mxu0 %v1436
    %1565 = vmatprep.subr.bf16.mxu0 %v1441
    %1566 = vmatpush1.bf16.msra.mxu0 %v1440
    %1567 = vmatprep.subr.bf16.mxu0 %v1445
    %1568 = vmatpush1.bf16.msra.mxu0 %v1444
    %1569 = vmatprep.subr.bf16.mxu0 %v1449
    %1570 = vmatpush1.bf16.msra.mxu0 %v1448
    %1571 = vmatprep.subr.bf16.mxu0 %v1453
    %1572 = vmatpush1.bf16.msra.mxu0 %v1452
    %1573 = vmatprep.subr.bf16.mxu0 %v1457
    %1574 = vmatpush1.bf16.msra.mxu0 %v1456
    %1575 = vmatprep.subr.bf16.mxu0 0
    %1576 = vmatpush1.bf16.msra.mxu0 0
    %1577 = vmatprep.subr.bf16.mxu0 0
    %1578 = vmatpush1.bf16.msra.mxu0 0
    %1579 = vmatprep.subr.bf16.mxu0 0
    %1580 = vmatpush1.bf16.msra.mxu0 0
    %1581 = vmatprep.subr.bf16.mxu0 0
    %1582 = vmatpush1.bf16.msra.mxu0 0
    %1583 = vmatprep.subr.bf16.mxu0 0
    %1584 = vmatpush1.bf16.msra.mxu0 0
    %1585 = vmatprep.subr.bf16.mxu0 0
    %1586 = vmatpush1.bf16.msra.mxu0 0
    %1587 = vmatprep.subr.bf16.mxu0 0
    %1588 = vmatpush1.bf16.msra.mxu0 0
    %1589 = vmatprep.subr.bf16.mxu0 0
    %1590 = vmatpush1.bf16.msra.mxu0 0
    %1591 = vmatprep.mubr.bf16.mxu0 0
    %1592 = vmatmul.mubr.bf16.gmra.mrb[0].mxu0 %v1492
    %v1593 = vpop.f32.mrb[0].mxu0
    %v1594 = vadd.f32 %v1507, %v1593
    %v1595 = vpop.f32.mrb[0].mxu0
    %v1596 = vadd.f32 %v1511, %v1595
    %v1597 = vpop.f32.mrb[0].mxu0
    %v1598 = vadd.f32 %v1507, %v1597
    %v1599 = vpop.f32.mrb[0].mxu0
    %v1600 = vadd.f32 %v1511, %v1599
    %1601 = vdwg.mxu0
    %1602 = vmatprep.subr.bf16.mxu0 %v1459
    %1603 = vmatpush1.bf16.msra.mxu0 %v1458
    %1604 = vmatprep.subr.bf16.mxu0 %v1463
    %1605 = vmatpush1.bf16.msra.mxu0 %v1462
    %1606 = vmatprep.subr.bf16.mxu0 %v1467
    %1607 = vmatpush1.bf16.msra.mxu0 %v1466
    %1608 = vmatprep.subr.bf16.mxu0 %v1471
    %1609 = vmatpush1.bf16.msra.mxu0 %v1470
    %1610 = vmatprep.subr.bf16.mxu0 %v1475
    %1611 = vmatpush1.bf16.msra.mxu0 %v1474
    %1612 = vmatprep.subr.bf16.mxu0 %v1479
    %1613 = vmatpush1.bf16.msra.mxu0 %v1478
    %1614 = vmatprep.subr.bf16.mxu0 %v1483
    %1615 = vmatpush1.bf16.msra.mxu0 %v1482
    %1616 = vmatprep.subr.bf16.mxu0 %v1487
    %1617 = vmatpush1.bf16.msra.mxu0 %v1486
    %1618 = vmatprep.subr.bf16.mxu0 0
    %1619 = vmatpush1.bf16.msra.mxu0 0
    %1620 = vmatprep.subr.bf16.mxu0 0
    %1621 = vmatpush1.bf16.msra.mxu0 0
    %1622 = vmatprep.subr.bf16.mxu0 0
    %1623 = vmatpush1.bf16.msra.mxu0 0
    %1624 = vmatprep.subr.bf16.mxu0 0
    %1625 = vmatpush1.bf16.msra.mxu0 0
    %1626 = vmatprep.subr.bf16.mxu0 0
    %1627 = vmatpush1.bf16.msra.mxu0 0
    %1628 = vmatprep.subr.bf16.mxu0 0
    %1629 = vmatpush1.bf16.msra.mxu0 0
    %1630 = vmatprep.subr.bf16.mxu0 0
    %1631 = vmatpush1.bf16.msra.mxu0 0
    %1632 = vmatprep.subr.bf16.mxu0 0
    %1633 = vmatpush1.bf16.msra.mxu0 0
    %1634 = vmatprep.mubr.bf16.mxu0 0
    %1635 = vmatmul.mubr.bf16.gmra.mrb[0].mxu0 0
    %v1636 = vpop.f32.mrb[0].mxu0
    %v1637 = vadd.f32 0.0, %v1636
    %v1638 = vpop.f32.mrb[0].mxu0
    %v1639 = vadd.f32 0.0, %v1638
    %v1640 = vpop.f32.mrb[0].mxu0
    %v1641 = vpop.f32.mrb[0].mxu0
    %1642 = vdwg.mxu0
    %1643 = vmatprep.subr.bf16.mxu0 %v1461
    %1644 = vmatpush1.bf16.msra.mxu0 %v1460
    %1645 = vmatprep.subr.bf16.mxu0 %v1465
    %1646 = vmatpush1.bf16.msra.mxu0 %v1464
    %1647 = vmatprep.subr.bf16.mxu0 %v1469
    %1648 = vmatpush1.bf16.msra.mxu0 %v1468
    %1649 = vmatprep.subr.bf16.mxu0 %v1473
    %1650 = vmatpush1.bf16.msra.mxu0 %v1472
    %1651 = vmatprep.subr.bf16.mxu0 %v1477
    %1652 = vmatpush1.bf16.msra.mxu0 %v1476
    %1653 = vmatprep.subr.bf16.mxu0 %v1481
    %1654 = vmatpush1.bf16.msra.mxu0 %v1480
    %1655 = vmatprep.subr.bf16.mxu0 %v1485
    %1656 = vmatpush1.bf16.msra.mxu0 %v1484
    %1657 = vmatprep.subr.bf16.mxu0 %v1489
    %1658 = vmatpush1.bf16.msra.mxu0 %v1488
    %1659 = vmatprep.subr.bf16.mxu0 0
    %1660 = vmatpush1.bf16.msra.mxu0 0
    %1661 = vmatprep.subr.bf16.mxu0 0
    %1662 = vmatpush1.bf16.msra.mxu0 0
    %1663 = vmatprep.subr.bf16.mxu0 0
    %1664 = vmatpush1.bf16.msra.mxu0 0
    %1665 = vmatprep.subr.bf16.mxu0 0
    %1666 = vmatpush1.bf16.msra.mxu0 0
    %1667 = vmatprep.subr.bf16.mxu0 0
    %1668 = vmatpush1.bf16.msra.mxu0 0
    %1669 = vmatprep.subr.bf16.mxu0 0
    %1670 = vmatpush1.bf16.msra.mxu0 0
    %1671 = vmatprep.subr.bf16.mxu0 0
    %1672 = vmatpush1.bf16.msra.mxu0 0
    %1673 = vmatprep.subr.bf16.mxu0 0
    %1674 = vmatpush1.bf16.msra.mxu0 0
    %1675 = vmatprep.mubr.bf16.mxu0 0
    %1676 = vmatmul.mubr.bf16.gmra.mrb[0].mxu0 0
    %v1677 = vpop.f32.mrb[0].mxu0
    %v1678 = vadd.f32 0.0, %v1677
    %v1679 = vpop.f32.mrb[0].mxu0
    %v1680 = vadd.f32 0.0, %v1679
    %v1681 = vpop.f32.mrb[0].mxu0
    %v1682 = vpop.f32.mrb[0].mxu0
    %1683 = vdwg.mxu0
    %v1684 = vadd.f32 %v1551, %v1637
    %v1685 = vadd.f32 %v1553, %v1639
    %v1686 = vadd.f32 %v1594, %v1678
    %v1687 = vadd.f32 %v1596, %v1680
    %v1688 = vxor.u32 %v1684, 2147483648
    %v1689 = vxor.u32 %v1685, 2147483648
    %v1690 = vxor.u32 %v1686, 2147483648
    %v1691 = vmul.f32 %v1688, 1.442695
    %v1692 = vpow.pop %v1691
    %v1693 = vmul.f32 %v1689, 1.442695
    %v1694 = vpow.pop %v1693
    %v1695 = vmul.f32 %v1690, 1.442695
    %v1696 = vpow.pop %v1695
    %v1697 = vadd.f32 %v1692, 1.0
    %v1698 = vadd.f32 %v1694, 1.0
    %v1699 = vadd.f32 %v1696, 1.0
    %v1700 = vrcp.pop %v1697
    %v1701 = vmul.f32 1.0, %v1700
    %v1702 = vrcp.pop %v1698
    %v1703 = vmul.f32 1.0, %v1702
    %v1704 = vrcp.pop %v1699
    %v1705 = vmul.f32 1.0, %v1704
    %v1706 = vtanh.pop %v1687
    %v1707 = vmul.f32 %v1703, 0.0
    %v1708 = vmul.f32 %v1701, %v1706
    %v1709 = vadd.f32 %v1707, %v1708
    %v1710 = vtanh.pop %v1709
    %v1711 = vmul.f32 %v1705, %v1710
    %1712 = vst [vmem:[#allocation4] sm:$0x3] %v1711
    %v1713 = vpack.c.bf16 %v1711, %v1711
    %1714 = vmatprep.subr.bf16.mxu0 %v1459
    %1715 = vmatpush1.bf16.msra.mxu0 %v1458
    %1716 = vmatprep.subr.bf16.mxu0 %v1463
    %1717 = vmatpush1.bf16.msra.mxu0 %v1462
    %1718 = vmatprep.subr.bf16.mxu0 %v1467
    %1719 = vmatpush1.bf16.msra.mxu0 %v1466
    %1720 = vmatprep.subr.bf16.mxu0 %v1471
    %1721 = vmatpush1.bf16.msra.mxu0 %v1470
    %1722 = vmatprep.subr.bf16.mxu0 %v1475
    %1723 = vmatpush1.bf16.msra.mxu0 %v1474
    %1724 = vmatprep.subr.bf16.mxu0 %v1479
    %1725 = vmatpush1.bf16.msra.mxu0 %v1478
    %1726 = vmatprep.subr.bf16.mxu0 %v1483
    %1727 = vmatpush1.bf16.msra.mxu0 %v1482
    %1728 = vmatprep.subr.bf16.mxu0 %v1487
    %1729 = vmatpush1.bf16.msra.mxu0 %v1486
    %1730 = vmatprep.subr.bf16.mxu0 0
    %1731 = vmatpush1.bf16.msra.mxu0 0
    %1732 = vmatprep.subr.bf16.mxu0 0
    %1733 = vmatpush1.bf16.msra.mxu0 0
    %1734 = vmatprep.subr.bf16.mxu0 0
    %1735 = vmatpush1.bf16.msra.mxu0 0
    %1736 = vmatprep.subr.bf16.mxu0 0
    %1737 = vmatpush1.bf16.msra.mxu0 0
    %1738 = vmatprep.subr.bf16.mxu0 0
    %1739 = vmatpush1.bf16.msra.mxu0 0
    %1740 = vmatprep.subr.bf16.mxu0 0
    %1741 = vmatpush1.bf16.msra.mxu0 0
    %1742 = vmatprep.subr.bf16.mxu0 0
    %1743 = vmatpush1.bf16.msra.mxu0 0
    %1744 = vmatprep.subr.bf16.mxu0 0
    %1745 = vmatpush1.bf16.msra.mxu0 0
    %1746 = vmatprep.mubr.bf16.mxu0 0
    %1747 = vmatmul.mubr.bf16.gmra.mrb[0].mxu0 %v1713
    %v1748 = vpop.f32.mrb[0].mxu0
    %v1749 = vadd.f32 0.0, %v1748
    %v1750 = vpop.f32.mrb[0].mxu0
    %v1751 = vadd.f32 0.0, %v1750
    %v1752 = vpop.f32.mrb[0].mxu0
    %v1753 = vpop.f32.mrb[0].mxu0
    %1754 = vdwg.mxu0
    %1755 = vmatprep.subr.bf16.mxu0 %v1461
    %1756 = vmatpush1.bf16.msra.mxu0 %v1460
    %1757 = vmatprep.subr.bf16.mxu0 %v1465
    %1758 = vmatpush1.bf16.msra.mxu0 %v1464
    %1759 = vmatprep.subr.bf16.mxu0 %v1469
    %1760 = vmatpush1.bf16.msra.mxu0 %v1468
    %1761 = vmatprep.subr.bf16.mxu0 %v1473
    %1762 = vmatpush1.bf16.msra.mxu0 %v1472
    %1763 = vmatprep.subr.bf16.mxu0 %v1477
    %1764 = vmatpush1.bf16.msra.mxu0 %v1476
    %1765 = vmatprep.subr.bf16.mxu0 %v1481
    %1766 = vmatpush1.bf16.msra.mxu0 %v1480
    %1767 = vmatprep.subr.bf16.mxu0 %v1485
    %1768 = vmatpush1.bf16.msra.mxu0 %v1484
    %1769 = vmatprep.subr.bf16.mxu0 %v1489
    %1770 = vmatpush1.bf16.msra.mxu0 %v1488
    %1771 = vmatprep.subr.bf16.mxu0 0
    %1772 = vmatpush1.bf16.msra.mxu0 0
    %1773 = vmatprep.subr.bf16.mxu0 0
    %1774 = vmatpush1.bf16.msra.mxu0 0
    %1775 = vmatprep.subr.bf16.mxu0 0
    %1776 = vmatpush1.bf16.msra.mxu0 0
    %1777 = vmatprep.subr.bf16.mxu0 0
    %1778 = vmatpush1.bf16.msra.mxu0 0
    %1779 = vmatprep.subr.bf16.mxu0 0
    %1780 = vmatpush1.bf16.msra.mxu0 0
    %1781 = vmatprep.subr.bf16.mxu0 0
    %1782 = vmatpush1.bf16.msra.mxu0 0
    %1783 = vmatprep.subr.bf16.mxu0 0
    %1784 = vmatpush1.bf16.msra.mxu0 0
    %1785 = vmatprep.subr.bf16.mxu0 0
    %1786 = vmatpush1.bf16.msra.mxu0 0
    %1787 = vmatprep.mubr.bf16.mxu0 0
    %1788 = vmatmul.mubr.bf16.gmra.mrb[0].mxu0 %v1713
    %v1789 = vpop.f32.mrb[0].mxu0
    %v1790 = vadd.f32 0.0, %v1789
    %v1791 = vpop.f32.mrb[0].mxu0
    %v1792 = vadd.f32 0.0, %v1791
    %v1793 = vpop.f32.mrb[0].mxu0
    %v1794 = vpop.f32.mrb[0].mxu0
    %1795 = vdwg.mxu0
    %v1800 = vrot.slane %v1749, 6
    %v1801 = vrot.slane %v1751, 6
    %v1802 = vrot.slane %v1790, 6
    %v1803 = vrot.slane %v1792, 6
    %v1808 = vadd.f32 %v1551, %v1800
    %v1809 = vadd.f32 %v1553, %v1801
    %v1810 = vadd.f32 %v1594, %v1802
    %v1811 = vadd.f32 %v1596, %v1803
    %v1812 = vxor.u32 %v1808, 2147483648
    %v1813 = vxor.u32 %v1809, 2147483648
    %v1814 = vxor.u32 %v1810, 2147483648
    %v1815 = vmul.f32 %v1812, 1.442695
    %v1816 = vpow.pop %v1815
    %v1817 = vmul.f32 %v1813, 1.442695
    %v1818 = vpow.pop %v1817
    %v1819 = vmul.f32 %v1814, 1.442695
    %v1820 = vpow.pop %v1819
    %v1821 = vadd.f32 %v1816, 1.0
    %v1822 = vadd.f32 %v1818, 1.0
    %v1823 = vadd.f32 %v1820, 1.0
    %v1824 = vrcp.pop %v1821
    %v1825 = vmul.f32 1.0, %v1824
    %v1826 = vrcp.pop %v1822
    %v1827 = vmul.f32 1.0, %v1826
    %v1828 = vrcp.pop %v1823
    %v1829 = vmul.f32 1.0, %v1828
    %v1830 = vtanh.pop %v1811
    %v1832 = vrot.slane %v1709, 6
    %v1834 = vmul.f32 %v1827, %v1832
    %v1835 = vmul.f32 %v1825, %v1830
    %v1836 = vadd.f32 %v1834, %v1835
    %v1837 = vtanh.pop %v1836
    %v1838 = vmul.f32 %v1829, %v1837
    %1839 = vst [vmem:[#allocation4] sm:$0xc] %v1838
    %v1840 = vpack.c.bf16 %v1838, %v1838
    %v1842 = vrot.slane %v1840, 1
    %1844 = vmatprep.subr.bf16.mxu0 %v1459
    %1845 = vmatpush1.bf16.msra.mxu0 %v1458
    %1846 = vmatprep.subr.bf16.mxu0 %v1463
    %1847 = vmatpush1.bf16.msra.mxu0 %v1462
    %1848 = vmatprep.subr.bf16.mxu0 %v1467
    %1849 = vmatpush1.bf16.msra.mxu0 %v1466
    %1850 = vmatprep.subr.bf16.mxu0 %v1471
    %1851 = vmatpush1.bf16.msra.mxu0 %v1470
    %1852 = vmatprep.subr.bf16.mxu0 %v1475
    %1853 = vmatpush1.bf16.msra.mxu0 %v1474
    %1854 = vmatprep.subr.bf16.mxu0 %v1479
    %1855 = vmatpush1.bf16.msra.mxu0 %v1478
    %1856 = vmatprep.subr.bf16.mxu0 %v1483
    %1857 = vmatpush1.bf16.msra.mxu0 %v1482
    %1858 = vmatprep.subr.bf16.mxu0 %v1487
    %1859 = vmatpush1.bf16.msra.mxu0 %v1486
    %1860 = vmatprep.subr.bf16.mxu0 0
    %1861 = vmatpush1.bf16.msra.mxu0 0
    %1862 = vmatprep.subr.bf16.mxu0 0
    %1863 = vmatpush1.bf16.msra.mxu0 0
    %1864 = vmatprep.subr.bf16.mxu0 0
    %1865 = vmatpush1.bf16.msra.mxu0 0
    %1866 = vmatprep.subr.bf16.mxu0 0
    %1867 = vmatpush1.bf16.msra.mxu0 0
    %1868 = vmatprep.subr.bf16.mxu0 0
    %1869 = vmatpush1.bf16.msra.mxu0 0
    %1870 = vmatprep.subr.bf16.mxu0 0
    %1871 = vmatpush1.bf16.msra.mxu0 0
    %1872 = vmatprep.subr.bf16.mxu0 0
    %1873 = vmatpush1.bf16.msra.mxu0 0
    %1874 = vmatprep.subr.bf16.mxu0 0
    %1875 = vmatpush1.bf16.msra.mxu0 0
    %1876 = vmatprep.mubr.bf16.mxu0 0
    %1877 = vmatmul.mubr.bf16.gmra.mrb[0].mxu0 %v1842
    %v1878 = vpop.f32.mrb[0].mxu0
    %v1879 = vadd.f32 0.0, %v1878
    %v1880 = vpop.f32.mrb[0].mxu0
    %v1881 = vadd.f32 0.0, %v1880
    %v1882 = vpop.f32.mrb[0].mxu0
    %v1883 = vpop.f32.mrb[0].mxu0
    %1884 = vdwg.mxu0
    %1885 = vmatprep.subr.bf16.mxu0 %v1461
    %1886 = vmatpush1.bf16.msra.mxu0 %v1460
    %1887 = vmatprep.subr.bf16.mxu0 %v1465
    %1888 = vmatpush1.bf16.msra.mxu0 %v1464
    %1889 = vmatprep.subr.bf16.mxu0 %v1469
    %1890 = vmatpush1.bf16.msra.mxu0 %v1468
    %1891 = vmatprep.subr.bf16.mxu0 %v1473
    %1892 = vmatpush1.bf16.msra.mxu0 %v1472
    %1893 = vmatprep.subr.bf16.mxu0 %v1477
    %1894 = vmatpush1.bf16.msra.mxu0 %v1476
    %1895 = vmatprep.subr.bf16.mxu0 %v1481
    %1896 = vmatpush1.bf16.msra.mxu0 %v1480
    %1897 = vmatprep.subr.bf16.mxu0 %v1485
    %1898 = vmatpush1.bf16.msra.mxu0 %v1484
    %1899 = vmatprep.subr.bf16.mxu0 %v1489
    %1900 = vmatpush1.bf16.msra.mxu0 %v1488
    %1901 = vmatprep.subr.bf16.mxu0 0
    %1902 = vmatpush1.bf16.msra.mxu0 0
    %1903 = vmatprep.subr.bf16.mxu0 0
    %1904 = vmatpush1.bf16.msra.mxu0 0
    %1905 = vmatprep.subr.bf16.mxu0 0
    %1906 = vmatpush1.bf16.msra.mxu0 0
    %1907 = vmatprep.subr.bf16.mxu0 0
    %1908 = vmatpush1.bf16.msra.mxu0 0
    %1909 = vmatprep.subr.bf16.mxu0 0
    %1910 = vmatpush1.bf16.msra.mxu0 0
    %1911 = vmatprep.subr.bf16.mxu0 0
    %1912 = vmatpush1.bf16.msra.mxu0 0
    %1913 = vmatprep.subr.bf16.mxu0 0
    %1914 = vmatpush1.bf16.msra.mxu0 0
    %1915 = vmatprep.subr.bf16.mxu0 0
    %1916 = vmatpush1.bf16.msra.mxu0 0
    %1917 = vmatprep.mubr.bf16.mxu0 0
    %1918 = vmatmul.mubr.bf16.gmra.mrb[0].mxu0 %v1842
    %v1919 = vpop.f32.mrb[0].mxu0
    %v1920 = vadd.f32 0.0, %v1919
    %v1921 = vpop.f32.mrb[0].mxu0
    %v1922 = vadd.f32 0.0, %v1921
    %v1923 = vpop.f32.mrb[0].mxu0
    %v1924 = vpop.f32.mrb[0].mxu0
    %1925 = vdwg.mxu0
    %v1930 = vrot.slane %v1879, 4
    %v1931 = vrot.slane %v1881, 4
    %v1932 = vrot.slane %v1920, 4
    %v1933 = vrot.slane %v1922, 4
    %v1938 = vadd.f32 %v1551, %v1930
    %v1939 = vadd.f32 %v1553, %v1931
    %v1940 = vadd.f32 %v1594, %v1932
    %v1941 = vadd.f32 %v1596, %v1933
    %v1942 = vxor.u32 %v1938, 2147483648
    %v1943 = vxor.u32 %v1939, 2147483648
    %v1944 = vxor.u32 %v1940, 2147483648
    %v1945 = vmul.f32 %v1942, 1.442695
    %v1946 = vpow.pop %v1945
    %v1947 = vmul.f32 %v1943, 1.442695
    %v1948 = vpow.pop %v1947
    %v1949 = vmul.f32 %v1944, 1.442695
    %v1950 = vpow.pop %v1949
    %v1951 = vadd.f32 %v1946, 1.0
    %v1952 = vadd.f32 %v1948, 1.0
    %v1953 = vadd.f32 %v1950, 1.0
    %v1954 = vrcp.pop %v1951
    %v1955 = vmul.f32 1.0, %v1954
    %v1956 = vrcp.pop %v1952
    %v1957 = vmul.f32 1.0, %v1956
    %v1958 = vrcp.pop %v1953
    %v1959 = vmul.f32 1.0, %v1958
    %v1960 = vtanh.pop %v1941
    %v1962 = vrot.slane %v1836, 6
    %v1964 = vmul.f32 %v1957, %v1962
    %v1965 = vmul.f32 %v1955, %v1960
    %v1966 = vadd.f32 %v1964, %v1965
    %v1967 = vtanh.pop %v1966
    %v1968 = vmul.f32 %v1959, %v1967
    %1969 = vst [vmem:[#allocation4] sm:$0x30] %v1968
    %v1970 = vpack.c.bf16 %v1968, %v1968
    %v1972 = vrot.slane %v1970, 2
    %1974 = vmatprep.subr.bf16.mxu0 %v1459
    %1975 = vmatpush1.bf16.msra.mxu0 %v1458
    %1976 = vmatprep.subr.bf16.mxu0 %v1463
    %1977 = vmatpush1.bf16.msra.mxu0 %v1462
    %1978 = vmatprep.subr.bf16.mxu0 %v1467
    %1979 = vmatpush1.bf16.msra.mxu0 %v1466
    %1980 = vmatprep.subr.bf16.mxu0 %v1471
    %1981 = vmatpush1.bf16.msra.mxu0 %v1470
    %1982 = vmatprep.subr.bf16.mxu0 %v1475
    %1983 = vmatpush1.bf16.msra.mxu0 %v1474
    %1984 = vmatprep.subr.bf16.mxu0 %v1479
    %1985 = vmatpush1.bf16.msra.mxu0 %v1478
    %1986 = vmatprep.subr.bf16.mxu0 %v1483
    %1987 = vmatpush1.bf16.msra.mxu0 %v1482
    %1988 = vmatprep.subr.bf16.mxu0 %v1487
    %1989 = vmatpush1.bf16.msra.mxu0 %v1486
    %1990 = vmatprep.subr.bf16.mxu0 0
    %1991 = vmatpush1.bf16.msra.mxu0 0
    %1992 = vmatprep.subr.bf16.mxu0 0
    %1993 = vmatpush1.bf16.msra.mxu0 0
    %1994 = vmatprep.subr.bf16.mxu0 0
    %1995 = vmatpush1.bf16.msra.mxu0 0
    %1996 = vmatprep.subr.bf16.mxu0 0
    %1997 = vmatpush1.bf16.msra.mxu0 0
    %1998 = vmatprep.subr.bf16.mxu0 0
    %1999 = vmatpush1.bf16.msra.mxu0 0
    %2000 = vmatprep.subr.bf16.mxu0 0
    %2001 = vmatpush1.bf16.msra.mxu0 0
    %2002 = vmatprep.subr.bf16.mxu0 0
    %2003 = vmatpush1.bf16.msra.mxu0 0
    %2004 = vmatprep.subr.bf16.mxu0 0
    %2005 = vmatpush1.bf16.msra.mxu0 0
    %2006 = vmatprep.mubr.bf16.mxu0 0
    %2007 = vmatmul.mubr.bf16.gmra.mrb[0].mxu0 %v1972
    %v2008 = vpop.f32.mrb[0].mxu0
    %v2009 = vadd.f32 0.0, %v2008
    %v2010 = vpop.f32.mrb[0].mxu0
    %v2011 = vadd.f32 0.0, %v2010
    %v2012 = vpop.f32.mrb[0].mxu0
    %v2013 = vpop.f32.mrb[0].mxu0
    %2014 = vdwg.mxu0
    %2015 = vmatprep.subr.bf16.mxu0 %v1461
    %2016 = vmatpush1.bf16.msra.mxu0 %v1460
    %2017 = vmatprep.subr.bf16.mxu0 %v1465
    %2018 = vmatpush1.bf16.msra.mxu0 %v1464
    %2019 = vmatprep.subr.bf16.mxu0 %v1469
    %2020 = vmatpush1.bf16.msra.mxu0 %v1468
    %2021 = vmatprep.subr.bf16.mxu0 %v1473
    %2022 = vmatpush1.bf16.msra.mxu0 %v1472
    %2023 = vmatprep.subr.bf16.mxu0 %v1477
    %2024 = vmatpush1.bf16.msra.mxu0 %v1476
    %2025 = vmatprep.subr.bf16.mxu0 %v1481
    %2026 = vmatpush1.bf16.msra.mxu0 %v1480
    %2027 = vmatprep.subr.bf16.mxu0 %v1485
    %2028 = vmatpush1.bf16.msra.mxu0 %v1484
    %2029 = vmatprep.subr.bf16.mxu0 %v1489
    %2030 = vmatpush1.bf16.msra.mxu0 %v1488
    %2031 = vmatprep.subr.bf16.mxu0 0
    %2032 = vmatpush1.bf16.msra.mxu0 0
    %2033 = vmatprep.subr.bf16.mxu0 0
    %2034 = vmatpush1.bf16.msra.mxu0 0
    %2035 = vmatprep.subr.bf16.mxu0 0
    %2036 = vmatpush1.bf16.msra.mxu0 0
    %2037 = vmatprep.subr.bf16.mxu0 0
    %2038 = vmatpush1.bf16.msra.mxu0 0
    %2039 = vmatprep.subr.bf16.mxu0 0
    %2040 = vmatpush1.bf16.msra.mxu0 0
    %2041 = vmatprep.subr.bf16.mxu0 0
    %2042 = vmatpush1.bf16.msra.mxu0 0
    %2043 = vmatprep.subr.bf16.mxu0 0
    %2044 = vmatpush1.bf16.msra.mxu0 0
    %2045 = vmatprep.subr.bf16.mxu0 0
    %2046 = vmatpush1.bf16.msra.mxu0 0
    %2047 = vmatprep.mubr.bf16.mxu0 0
    %2048 = vmatmul.mubr.bf16.gmra.mrb[0].mxu0 %v1972
    %v2049 = vpop.f32.mrb[0].mxu0
    %v2050 = vadd.f32 0.0, %v2049
    %v2051 = vpop.f32.mrb[0].mxu0
    %v2052 = vadd.f32 0.0, %v2051
    %v2053 = vpop.f32.mrb[0].mxu0
    %v2054 = vpop.f32.mrb[0].mxu0
    %2055 = vdwg.mxu0
    %v2060 = vrot.slane %v2009, 2
    %v2061 = vrot.slane %v2011, 2
    %v2062 = vrot.slane %v2050, 2
    %v2063 = vrot.slane %v2052, 2
    %v2068 = vadd.f32 %v1551, %v2060
    %v2069 = vadd.f32 %v1553, %v2061
    %v2070 = vadd.f32 %v1594, %v2062
    %v2071 = vadd.f32 %v1596, %v2063
    %v2072 = vxor.u32 %v2068, 2147483648
    %v2073 = vxor.u32 %v2069, 2147483648
    %v2074 = vxor.u32 %v2070, 2147483648
    %v2075 = vmul.f32 %v2072, 1.442695
    %v2076 = vpow.pop %v2075
    %v2077 = vmul.f32 %v2073, 1.442695
    %v2078 = vpow.pop %v2077
    %v2079 = vmul.f32 %v2074, 1.442695
    %v2080 = vpow.pop %v2079
    %v2081 = vadd.f32 %v2076, 1.0
    %v2082 = vadd.f32 %v2078, 1.0
    %v2083 = vadd.f32 %v2080, 1.0
    %v2084 = vrcp.pop %v2081
    %v2085 = vmul.f32 1.0, %v2084
    %v2086 = vrcp.pop %v2082
    %v2087 = vmul.f32 1.0, %v2086
    %v2088 = vrcp.pop %v2083
    %v2089 = vmul.f32 1.0, %v2088
    %v2090 = vtanh.pop %v2071
    %v2092 = vrot.slane %v1966, 6
    %v2094 = vmul.f32 %v2087, %v2092
    %v2095 = vmul.f32 %v2085, %v2090
    %v2096 = vadd.f32 %v2094, %v2095
    %v2097 = vtanh.pop %v2096
    %v2098 = vmul.f32 %v2089, %v2097
    %2099 = vst [vmem:[#allocation4] sm:$0xc0] %v2098
    %v2100 = vpack.c.bf16 %v2098, %v2098
    %v2102 = vrot.slane %v2100, 3
    %2104 = vmatprep.subr.bf16.mxu0 %v1459
    %2105 = vmatpush1.bf16.msra.mxu0 %v1458
    %2106 = vmatprep.subr.bf16.mxu0 %v1463
    %2107 = vmatpush1.bf16.msra.mxu0 %v1462
    %2108 = vmatprep.subr.bf16.mxu0 %v1467
    %2109 = vmatpush1.bf16.msra.mxu0 %v1466
    %2110 = vmatprep.subr.bf16.mxu0 %v1471
    %2111 = vmatpush1.bf16.msra.mxu0 %v1470
    %2112 = vmatprep.subr.bf16.mxu0 %v1475
    %2113 = vmatpush1.bf16.msra.mxu0 %v1474
    %2114 = vmatprep.subr.bf16.mxu0 %v1479
    %2115 = vmatpush1.bf16.msra.mxu0 %v1478
    %2116 = vmatprep.subr.bf16.mxu0 %v1483
    %2117 = vmatpush1.bf16.msra.mxu0 %v1482
    %2118 = vmatprep.subr.bf16.mxu0 %v1487
    %2119 = vmatpush1.bf16.msra.mxu0 %v1486
    %2120 = vmatprep.subr.bf16.mxu0 0
    %2121 = vmatpush1.bf16.msra.mxu0 0
    %2122 = vmatprep.subr.bf16.mxu0 0
    %2123 = vmatpush1.bf16.msra.mxu0 0
    %2124 = vmatprep.subr.bf16.mxu0 0
    %2125 = vmatpush1.bf16.msra.mxu0 0
    %2126 = vmatprep.subr.bf16.mxu0 0
    %2127 = vmatpush1.bf16.msra.mxu0 0
    %2128 = vmatprep.subr.bf16.mxu0 0
    %2129 = vmatpush1.bf16.msra.mxu0 0
    %2130 = vmatprep.subr.bf16.mxu0 0
    %2131 = vmatpush1.bf16.msra.mxu0 0
    %2132 = vmatprep.subr.bf16.mxu0 0
    %2133 = vmatpush1.bf16.msra.mxu0 0
    %2134 = vmatprep.subr.bf16.mxu0 0
    %2135 = vmatpush1.bf16.msra.mxu0 0
    %2136 = vmatprep.mubr.bf16.mxu0 0
    %2137 = vmatmul.mubr.bf16.gmra.mrb[0].mxu0 %v2102
    %v2138 = vpop.f32.mrb[0].mxu0
    %v2139 = vadd.f32 0.0, %v2138
    %v2140 = vpop.f32.mrb[0].mxu0
    %v2141 = vadd.f32 0.0, %v2140
    %v2142 = vpop.f32.mrb[0].mxu0
    %v2143 = vpop.f32.mrb[0].mxu0
    %2144 = vdwg.mxu0
    %2145 = vmatprep.subr.bf16.mxu0 %v1461
    %2146 = vmatpush1.bf16.msra.mxu0 %v1460
    %2147 = vmatprep.subr.bf16.mxu0 %v1465
    %2148 = vmatpush1.bf16.msra.mxu0 %v1464
    %2149 = vmatprep.subr.bf16.mxu0 %v1469
    %2150 = vmatpush1.bf16.msra.mxu0 %v1468
    %2151 = vmatprep.subr.bf16.mxu0 %v1473
    %2152 = vmatpush1.bf16.msra.mxu0 %v1472
    %2153 = vmatprep.subr.bf16.mxu0 %v1477
    %2154 = vmatpush1.bf16.msra.mxu0 %v1476
    %2155 = vmatprep.subr.bf16.mxu0 %v1481
    %2156 = vmatpush1.bf16.msra.mxu0 %v1480
    %2157 = vmatprep.subr.bf16.mxu0 %v1485
    %2158 = vmatpush1.bf16.msra.mxu0 %v1484
    %2159 = vmatprep.subr.bf16.mxu0 %v1489
    %2160 = vmatpush1.bf16.msra.mxu0 %v1488
    %2161 = vmatprep.subr.bf16.mxu0 0
    %2162 = vmatpush1.bf16.msra.mxu0 0
    %2163 = vmatprep.subr.bf16.mxu0 0
    %2164 = vmatpush1.bf16.msra.mxu0 0
    %2165 = vmatprep.subr.bf16.mxu0 0
    %2166 = vmatpush1.bf16.msra.mxu0 0
    %2167 = vmatprep.subr.bf16.mxu0 0
    %2168 = vmatpush1.bf16.msra.mxu0 0
    %2169 = vmatprep.subr.bf16.mxu0 0
    %2170 = vmatpush1.bf16.msra.mxu0 0
    %2171 = vmatprep.subr.bf16.mxu0 0
    %2172 = vmatpush1.bf16.msra.mxu0 0
    %2173 = vmatprep.subr.bf16.mxu0 0
    %2174 = vmatpush1.bf16.msra.mxu0 0
    %2175 = vmatprep.subr.bf16.mxu0 0
    %2176 = vmatpush1.bf16.msra.mxu0 0
    %2177 = vmatprep.mubr.bf16.mxu0 0
    %2178 = vmatmul.mubr.bf16.gmra.mrb[0].mxu0 %v2102
    %v2179 = vpop.f32.mrb[0].mxu0
    %v2180 = vadd.f32 0.0, %v2179
    %v2181 = vpop.f32.mrb[0].mxu0
    %v2182 = vadd.f32 0.0, %v2181
    %v2183 = vpop.f32.mrb[0].mxu0
    %v2184 = vpop.f32.mrb[0].mxu0
    %2185 = vdwg.mxu0
    %v2186 = vadd.f32 %v1555, %v2139
    %v2187 = vadd.f32 %v1557, %v2141
    %v2188 = vadd.f32 %v1598, %v2180
    %v2189 = vadd.f32 %v1600, %v2182
    %v2190 = vxor.u32 %v2186, 2147483648
    %v2191 = vxor.u32 %v2187, 2147483648
    %v2192 = vxor.u32 %v2188, 2147483648
    %v2193 = vmul.f32 %v2190, 1.442695
    %v2194 = vpow.pop %v2193
    %v2195 = vmul.f32 %v2191, 1.442695
    %v2196 = vpow.pop %v2195
    %v2197 = vmul.f32 %v2192, 1.442695
    %v2198 = vpow.pop %v2197
    %v2199 = vadd.f32 %v2194, 1.0
    %v2200 = vadd.f32 %v2196, 1.0
    %v2201 = vadd.f32 %v2198, 1.0
    %v2202 = vrcp.pop %v2199
    %v2203 = vmul.f32 1.0, %v2202
    %v2204 = vrcp.pop %v2200
    %v2205 = vmul.f32 1.0, %v2204
    %v2206 = vrcp.pop %v2201
    %v2207 = vmul.f32 1.0, %v2206
    %v2208 = vtanh.pop %v2189
    %v2210 = vrot.slane %v2096, 6
    %v2212 = vmul.f32 %v2205, %v2210
    %v2213 = vmul.f32 %v2203, %v2208
    %v2214 = vadd.f32 %v2212, %v2213
    %v2215 = vtanh.pop %v2214
    %v2216 = vmul.f32 %v2207, %v2215
    %2217 = vst [vmem:[#allocation4 + $0x8] sm:$0x3] %v2216
    %v2218 = vpack.c.bf16 %v2216, %v2216
    %2219 = vmatprep.subr.bf16.mxu0 %v1459
    %2220 = vmatpush1.bf16.msra.mxu0 %v1458
    %2221 = vmatprep.subr.bf16.mxu0 %v1463
    %2222 = vmatpush1.bf16.msra.mxu0 %v1462
    %2223 = vmatprep.subr.bf16.mxu0 %v1467
    %2224 = vmatpush1.bf16.msra.mxu0 %v1466
    %2225 = vmatprep.subr.bf16.mxu0 %v1471
    %2226 = vmatpush1.bf16.msra.mxu0 %v1470
    %2227 = vmatprep.subr.bf16.mxu0 %v1475
    %2228 = vmatpush1.bf16.msra.mxu0 %v1474
    %2229 = vmatprep.subr.bf16.mxu0 %v1479
    %2230 = vmatpush1.bf16.msra.mxu0 %v1478
    %2231 = vmatprep.subr.bf16.mxu0 %v1483
    %2232 = vmatpush1.bf16.msra.mxu0 %v1482
    %2233 = vmatprep.subr.bf16.mxu0 %v1487
    %2234 = vmatpush1.bf16.msra.mxu0 %v1486
    %2235 = vmatprep.subr.bf16.mxu0 0
    %2236 = vmatpush1.bf16.msra.mxu0 0
    %2237 = vmatprep.subr.bf16.mxu0 0
    %2238 = vmatpush1.bf16.msra.mxu0 0
    %2239 = vmatprep.subr.bf16.mxu0 0
    %2240 = vmatpush1.bf16.msra.mxu0 0
    %2241 = vmatprep.subr.bf16.mxu0 0
    %2242 = vmatpush1.bf16.msra.mxu0 0
    %2243 = vmatprep.subr.bf16.mxu0 0
    %2244 = vmatpush1.bf16.msra.mxu0 0
    %2245 = vmatprep.subr.bf16.mxu0 0
    %2246 = vmatpush1.bf16.msra.mxu0 0
    %2247 = vmatprep.subr.bf16.mxu0 0
    %2248 = vmatpush1.bf16.msra.mxu0 0
    %2249 = vmatprep.subr.bf16.mxu0 0
    %2250 = vmatpush1.bf16.msra.mxu0 0
    %2251 = vmatprep.mubr.bf16.mxu0 0
    %2252 = vmatmul.mubr.bf16.gmra.mrb[0].mxu0 %v2218
    %v2253 = vpop.f32.mrb[0].mxu0
    %v2254 = vadd.f32 0.0, %v2253
    %v2255 = vpop.f32.mrb[0].mxu0
    %v2256 = vadd.f32 0.0, %v2255
    %v2257 = vpop.f32.mrb[0].mxu0
    %v2258 = vpop.f32.mrb[0].mxu0
    %2259 = vdwg.mxu0
    %2260 = vmatprep.subr.bf16.mxu0 %v1461
    %2261 = vmatpush1.bf16.msra.mxu0 %v1460
    %2262 = vmatprep.subr.bf16.mxu0 %v1465
    %2263 = vmatpush1.bf16.msra.mxu0 %v1464
    %2264 = vmatprep.subr.bf16.mxu0 %v1469
    %2265 = vmatpush1.bf16.msra.mxu0 %v1468
    %2266 = vmatprep.subr.bf16.mxu0 %v1473
    %2267 = vmatpush1.bf16.msra.mxu0 %v1472
    %2268 = vmatprep.subr.bf16.mxu0 %v1477
    %2269 = vmatpush1.bf16.msra.mxu0 %v1476
    %2270 = vmatprep.subr.bf16.mxu0 %v1481
    %2271 = vmatpush1.bf16.msra.mxu0 %v1480
    %2272 = vmatprep.subr.bf16.mxu0 %v1485
    %2273 = vmatpush1.bf16.msra.mxu0 %v1484
    %2274 = vmatprep.subr.bf16.mxu0 %v1489
    %2275 = vmatpush1.bf16.msra.mxu0 %v1488
    %2276 = vmatprep.subr.bf16.mxu0 0
    %2277 = vmatpush1.bf16.msra.mxu0 0
    %2278 = vmatprep.subr.bf16.mxu0 0
    %2279 = vmatpush1.bf16.msra.mxu0 0
    %2280 = vmatprep.subr.bf16.mxu0 0
    %2281 = vmatpush1.bf16.msra.mxu0 0
    %2282 = vmatprep.subr.bf16.mxu0 0
    %2283 = vmatpush1.bf16.msra.mxu0 0
    %2284 = vmatprep.subr.bf16.mxu0 0
    %2285 = vmatpush1.bf16.msra.mxu0 0
    %2286 = vmatprep.subr.bf16.mxu0 0
    %2287 = vmatpush1.bf16.msra.mxu0 0
    %2288 = vmatprep.subr.bf16.mxu0 0
    %2289 = vmatpush1.bf16.msra.mxu0 0
    %2290 = vmatprep.subr.bf16.mxu0 0
    %2291 = vmatpush1.bf16.msra.mxu0 0
    %2292 = vmatprep.mubr.bf16.mxu0 0
    %2293 = vmatmul.mubr.bf16.gmra.mrb[0].mxu0 %v2218
    %v2294 = vpop.f32.mrb[0].mxu0
    %v2295 = vadd.f32 0.0, %v2294
    %v2296 = vpop.f32.mrb[0].mxu0
    %v2297 = vadd.f32 0.0, %v2296
    %v2298 = vpop.f32.mrb[0].mxu0
    %v2299 = vpop.f32.mrb[0].mxu0
    %2300 = vdwg.mxu0
    %v2305 = vrot.slane %v2254, 6
    %v2306 = vrot.slane %v2256, 6
    %v2307 = vrot.slane %v2295, 6
    %v2308 = vrot.slane %v2297, 6
    %v2313 = vadd.f32 %v1555, %v2305
    %v2314 = vadd.f32 %v1557, %v2306
    %v2315 = vadd.f32 %v1598, %v2307
    %v2316 = vadd.f32 %v1600, %v2308
    %v2317 = vxor.u32 %v2313, 2147483648
    %v2318 = vxor.u32 %v2314, 2147483648
    %v2319 = vxor.u32 %v2315, 2147483648
    %v2320 = vmul.f32 %v2317, 1.442695
    %v2321 = vpow.pop %v2320
    %v2322 = vmul.f32 %v2318, 1.442695
    %v2323 = vpow.pop %v2322
    %v2324 = vmul.f32 %v2319, 1.442695
    %v2325 = vpow.pop %v2324
    %v2326 = vadd.f32 %v2321, 1.0
    %v2327 = vadd.f32 %v2323, 1.0
    %v2328 = vadd.f32 %v2325, 1.0
    %v2329 = vrcp.pop %v2326
    %v2330 = vmul.f32 1.0, %v2329
    %v2331 = vrcp.pop %v2327
    %v2332 = vmul.f32 1.0, %v2331
    %v2333 = vrcp.pop %v2328
    %v2334 = vmul.f32 1.0, %v2333
    %v2335 = vtanh.pop %v2316
    %v2337 = vrot.slane %v2214, 6
    %v2339 = vmul.f32 %v2332, %v2337
    %v2340 = vmul.f32 %v2330, %v2335
    %v2341 = vadd.f32 %v2339, %v2340
    %v2342 = vtanh.pop %v2341
    %v2343 = vmul.f32 %v2334, %v2342
    %2344 = vst [vmem:[#allocation4 + $0x8] sm:$0xc] %v2343
    %v2345 = vpack.c.bf16 %v2343, %v2343
    %v2347 = vrot.slane %v2345, 1
    %2349 = vmatprep.subr.bf16.mxu0 %v1459
    %2350 = vmatpush1.bf16.msra.mxu0 %v1458
    %2351 = vmatprep.subr.bf16.mxu0 %v1463
    %2352 = vmatpush1.bf16.msra.mxu0 %v1462
    %2353 = vmatprep.subr.bf16.mxu0 %v1467
    %2354 = vmatpush1.bf16.msra.mxu0 %v1466
    %2355 = vmatprep.subr.bf16.mxu0 %v1471
    %2356 = vmatpush1.bf16.msra.mxu0 %v1470
    %2357 = vmatprep.subr.bf16.mxu0 %v1475
    %2358 = vmatpush1.bf16.msra.mxu0 %v1474
    %2359 = vmatprep.subr.bf16.mxu0 %v1479
    %2360 = vmatpush1.bf16.msra.mxu0 %v1478
    %2361 = vmatprep.subr.bf16.mxu0 %v1483
    %2362 = vmatpush1.bf16.msra.mxu0 %v1482
    %2363 = vmatprep.subr.bf16.mxu0 %v1487
    %2364 = vmatpush1.bf16.msra.mxu0 %v1486
    %2365 = vmatprep.subr.bf16.mxu0 0
    %2366 = vmatpush1.bf16.msra.mxu0 0
    %2367 = vmatprep.subr.bf16.mxu0 0
    %2368 = vmatpush1.bf16.msra.mxu0 0
    %2369 = vmatprep.subr.bf16.mxu0 0
    %2370 = vmatpush1.bf16.msra.mxu0 0
    %2371 = vmatprep.subr.bf16.mxu0 0
    %2372 = vmatpush1.bf16.msra.mxu0 0
    %2373 = vmatprep.subr.bf16.mxu0 0
    %2374 = vmatpush1.bf16.msra.mxu0 0
    %2375 = vmatprep.subr.bf16.mxu0 0
    %2376 = vmatpush1.bf16.msra.mxu0 0
    %2377 = vmatprep.subr.bf16.mxu0 0
    %2378 = vmatpush1.bf16.msra.mxu0 0
    %2379 = vmatprep.subr.bf16.mxu0 0
    %2380 = vmatpush1.bf16.msra.mxu0 0
    %2381 = vmatprep.mubr.bf16.mxu0 0
    %2382 = vmatmul.mubr.bf16.gmra.mrb[0].mxu0 %v2347
    %v2383 = vpop.f32.mrb[0].mxu0
    %v2384 = vadd.f32 0.0, %v2383
    %v2385 = vpop.f32.mrb[0].mxu0
    %v2386 = vadd.f32 0.0, %v2385
    %v2387 = vpop.f32.mrb[0].mxu0
    %v2388 = vpop.f32.mrb[0].mxu0
    %2389 = vdwg.mxu0
    %2390 = vmatprep.subr.bf16.mxu0 %v1461
    %2391 = vmatpush1.bf16.msra.mxu0 %v1460
    %2392 = vmatprep.subr.bf16.mxu0 %v1465
    %2393 = vmatpush1.bf16.msra.mxu0 %v1464
    %2394 = vmatprep.subr.bf16.mxu0 %v1469
    %2395 = vmatpush1.bf16.msra.mxu0 %v1468
    %2396 = vmatprep.subr.bf16.mxu0 %v1473
    %2397 = vmatpush1.bf16.msra.mxu0 %v1472
    %2398 = vmatprep.subr.bf16.mxu0 %v1477
    %2399 = vmatpush1.bf16.msra.mxu0 %v1476
    %2400 = vmatprep.subr.bf16.mxu0 %v1481
    %2401 = vmatpush1.bf16.msra.mxu0 %v1480
    %2402 = vmatprep.subr.bf16.mxu0 %v1485
    %2403 = vmatpush1.bf16.msra.mxu0 %v1484
    %2404 = vmatprep.subr.bf16.mxu0 %v1489
    %2405 = vmatpush1.bf16.msra.mxu0 %v1488
    %2406 = vmatprep.subr.bf16.mxu0 0
    %2407 = vmatpush1.bf16.msra.mxu0 0
    %2408 = vmatprep.subr.bf16.mxu0 0
    %2409 = vmatpush1.bf16.msra.mxu0 0
    %2410 = vmatprep.subr.bf16.mxu0 0
    %2411 = vmatpush1.bf16.msra.mxu0 0
    %2412 = vmatprep.subr.bf16.mxu0 0
    %2413 = vmatpush1.bf16.msra.mxu0 0
    %2414 = vmatprep.subr.bf16.mxu0 0
    %2415 = vmatpush1.bf16.msra.mxu0 0
    %2416 = vmatprep.subr.bf16.mxu0 0
    %2417 = vmatpush1.bf16.msra.mxu0 0
    %2418 = vmatprep.subr.bf16.mxu0 0
    %2419 = vmatpush1.bf16.msra.mxu0 0
    %2420 = vmatprep.subr.bf16.mxu0 0
    %2421 = vmatpush1.bf16.msra.mxu0 0
    %2422 = vmatprep.mubr.bf16.mxu0 0
    %2423 = vmatmul.mubr.bf16.gmra.mrb[0].mxu0 %v2347
    %v2424 = vpop.f32.mrb[0].mxu0
    %v2425 = vadd.f32 0.0, %v2424
    %v2426 = vpop.f32.mrb[0].mxu0
    %v2427 = vadd.f32 0.0, %v2426
    %v2428 = vpop.f32.mrb[0].mxu0
    %v2429 = vpop.f32.mrb[0].mxu0
    %2430 = vdwg.mxu0
    %v2435 = vrot.slane %v2384, 4
    %v2436 = vrot.slane %v2386, 4
    %v2437 = vrot.slane %v2425, 4
    %v2438 = vrot.slane %v2427, 4
    %v2443 = vadd.f32 %v1555, %v2435
    %v2444 = vadd.f32 %v1557, %v2436
    %v2445 = vadd.f32 %v1598, %v2437
    %v2446 = vadd.f32 %v1600, %v2438
    %v2447 = vxor.u32 %v2443, 2147483648
    %v2448 = vxor.u32 %v2444, 2147483648
    %v2449 = vxor.u32 %v2445, 2147483648
    %v2450 = vmul.f32 %v2447, 1.442695
    %v2451 = vpow.pop %v2450
    %v2452 = vmul.f32 %v2448, 1.442695
    %v2453 = vpow.pop %v2452
    %v2454 = vmul.f32 %v2449, 1.442695
    %v2455 = vpow.pop %v2454
    %v2456 = vadd.f32 %v2451, 1.0
    %v2457 = vadd.f32 %v2453, 1.0
    %v2458 = vadd.f32 %v2455, 1.0
    %v2459 = vrcp.pop %v2456
    %v2460 = vmul.f32 1.0, %v2459
    %v2461 = vrcp.pop %v2457
    %v2462 = vmul.f32 1.0, %v2461
    %v2463 = vrcp.pop %v2458
    %v2464 = vmul.f32 1.0, %v2463
    %v2465 = vtanh.pop %v2446
    %v2467 = vrot.slane %v2341, 6
    %v2469 = vmul.f32 %v2462, %v2467
    %v2470 = vmul.f32 %v2460, %v2465
    %v2471 = vadd.f32 %v2469, %v2470
    %v2472 = vtanh.pop %v2471
    %v2473 = vmul.f32 %v2464, %v2472
    %2474 = vst [vmem:[#allocation4 + $0x8] sm:$0x30] %v2473
    %v2475 = vpack.c.bf16 %v2473, %v2473
    %v2477 = vrot.slane %v2475, 2
    %2479 = vmatprep.subr.bf16.mxu0 %v1459
    %2480 = vmatpush1.bf16.msra.mxu0 %v1458
    %2481 = vmatprep.subr.bf16.mxu0 %v1463
    %2482 = vmatpush1.bf16.msra.mxu0 %v1462
    %2483 = vmatprep.subr.bf16.mxu0 %v1467
    %2484 = vmatpush1.bf16.msra.mxu0 %v1466
    %2485 = vmatprep.subr.bf16.mxu0 %v1471
    %2486 = vmatpush1.bf16.msra.mxu0 %v1470
    %2487 = vmatprep.subr.bf16.mxu0 %v1475
    %2488 = vmatpush1.bf16.msra.mxu0 %v1474
    %2489 = vmatprep.subr.bf16.mxu0 %v1479
    %2490 = vmatpush1.bf16.msra.mxu0 %v1478
    %2491 = vmatprep.subr.bf16.mxu0 %v1483
    %2492 = vmatpush1.bf16.msra.mxu0 %v1482
    %2493 = vmatprep.subr.bf16.mxu0 %v1487
    %2494 = vmatpush1.bf16.msra.mxu0 %v1486
    %2495 = vmatprep.subr.bf16.mxu0 0
    %2496 = vmatpush1.bf16.msra.mxu0 0
    %2497 = vmatprep.subr.bf16.mxu0 0
    %2498 = vmatpush1.bf16.msra.mxu0 0
    %2499 = vmatprep.subr.bf16.mxu0 0
    %2500 = vmatpush1.bf16.msra.mxu0 0
    %2501 = vmatprep.subr.bf16.mxu0 0
    %2502 = vmatpush1.bf16.msra.mxu0 0
    %2503 = vmatprep.subr.bf16.mxu0 0
    %2504 = vmatpush1.bf16.msra.mxu0 0
    %2505 = vmatprep.subr.bf16.mxu0 0
    %2506 = vmatpush1.bf16.msra.mxu0 0
    %2507 = vmatprep.subr.bf16.mxu0 0
    %2508 = vmatpush1.bf16.msra.mxu0 0
    %2509 = vmatprep.subr.bf16.mxu0 0
    %2510 = vmatpush1.bf16.msra.mxu0 0
    %2511 = vmatprep.mubr.bf16.mxu0 0
    %2512 = vmatmul.mubr.bf16.gmra.mrb[0].mxu0 %v2477
    %v2513 = vpop.f32.mrb[0].mxu0
    %v2514 = vadd.f32 0.0, %v2513
    %v2515 = vpop.f32.mrb[0].mxu0
    %v2516 = vadd.f32 0.0, %v2515
    %v2517 = vpop.f32.mrb[0].mxu0
    %v2518 = vpop.f32.mrb[0].mxu0
    %2519 = vdwg.mxu0
    %2520 = vmatprep.subr.bf16.mxu0 %v1461
    %2521 = vmatpush1.bf16.msra.mxu0 %v1460
    %2522 = vmatprep.subr.bf16.mxu0 %v1465
    %2523 = vmatpush1.bf16.msra.mxu0 %v1464
    %2524 = vmatprep.subr.bf16.mxu0 %v1469
    %2525 = vmatpush1.bf16.msra.mxu0 %v1468
    %2526 = vmatprep.subr.bf16.mxu0 %v1473
    %2527 = vmatpush1.bf16.msra.mxu0 %v1472
    %2528 = vmatprep.subr.bf16.mxu0 %v1477
    %2529 = vmatpush1.bf16.msra.mxu0 %v1476
    %2530 = vmatprep.subr.bf16.mxu0 %v1481
    %2531 = vmatpush1.bf16.msra.mxu0 %v1480
    %2532 = vmatprep.subr.bf16.mxu0 %v1485
    %2533 = vmatpush1.bf16.msra.mxu0 %v1484
    %2534 = vmatprep.subr.bf16.mxu0 %v1489
    %2535 = vmatpush1.bf16.msra.mxu0 %v1488
    %2536 = vmatprep.subr.bf16.mxu0 0
    %2537 = vmatpush1.bf16.msra.mxu0 0
    %2538 = vmatprep.subr.bf16.mxu0 0
    %2539 = vmatpush1.bf16.msra.mxu0 0
    %2540 = vmatprep.subr.bf16.mxu0 0
    %2541 = vmatpush1.bf16.msra.mxu0 0
    %2542 = vmatprep.subr.bf16.mxu0 0
    %2543 = vmatpush1.bf16.msra.mxu0 0
    %2544 = vmatprep.subr.bf16.mxu0 0
    %2545 = vmatpush1.bf16.msra.mxu0 0
    %2546 = vmatprep.subr.bf16.mxu0 0
    %2547 = vmatpush1.bf16.msra.mxu0 0
    %2548 = vmatprep.subr.bf16.mxu0 0
    %2549 = vmatpush1.bf16.msra.mxu0 0
    %2550 = vmatprep.subr.bf16.mxu0 0
    %2551 = vmatpush1.bf16.msra.mxu0 0
    %2552 = vmatprep.mubr.bf16.mxu0 0
    %2553 = vmatmul.mubr.bf16.gmra.mrb[0].mxu0 %v2477
    %v2554 = vpop.f32.mrb[0].mxu0
    %v2555 = vadd.f32 0.0, %v2554
    %v2556 = vpop.f32.mrb[0].mxu0
    %v2557 = vadd.f32 0.0, %v2556
    %v2558 = vpop.f32.mrb[0].mxu0
    %v2559 = vpop.f32.mrb[0].mxu0
    %2560 = vdwg.mxu0
    %v2565 = vrot.slane %v2514, 2
    %v2566 = vrot.slane %v2516, 2
    %v2567 = vrot.slane %v2555, 2
    %v2568 = vrot.slane %v2557, 2
    %v2573 = vadd.f32 %v1555, %v2565
    %v2574 = vadd.f32 %v1557, %v2566
    %v2575 = vadd.f32 %v1598, %v2567
    %v2576 = vadd.f32 %v1600, %v2568
    %v2577 = vxor.u32 %v2573, 2147483648
    %v2578 = vxor.u32 %v2574, 2147483648
    %v2579 = vxor.u32 %v2575, 2147483648
    %v2580 = vmul.f32 %v2577, 1.442695
    %v2581 = vpow.pop %v2580
    %v2582 = vmul.f32 %v2578, 1.442695
    %v2583 = vpow.pop %v2582
    %v2584 = vmul.f32 %v2579, 1.442695
    %v2585 = vpow.pop %v2584
    %v2586 = vadd.f32 %v2581, 1.0
    %v2587 = vadd.f32 %v2583, 1.0
    %v2588 = vadd.f32 %v2585, 1.0
    %v2589 = vrcp.pop %v2586
    %v2590 = vmul.f32 1.0, %v2589
    %v2591 = vrcp.pop %v2587
    %v2592 = vmul.f32 1.0, %v2591
    %v2593 = vrcp.pop %v2588
    %v2594 = vmul.f32 1.0, %v2593
    %v2595 = vtanh.pop %v2576
    %v2597 = vrot.slane %v2471, 6
    %v2599 = vmul.f32 %v2592, %v2597
    %v2600 = vmul.f32 %v2590, %v2595
    %v2601 = vadd.f32 %v2599, %v2600
    %v2602 = vtanh.pop %v2601
    %v2603 = vmul.f32 %v2594, %v2602
    %2604 = vst [vmem:[#allocation4 + $0x8] sm:$0xc0] %v2603
    %s2605 = sshll.u32 %s171, 4
    %2606 = dma.done [#allocation3], %s2605
    %s2607 = scalar_lea.hbm %s1, 24576
    %s2609 = sshll.u32 1, 14
    %s2610 = sxor.u32 4294967295, %s2609
    %s2612 = sadd.s32 2, %s139
    %s2614 = sshll.u32 7, 26
    %s2615 = sxor.u32 4294967295, %s2614
    %s2616 = sand.u32 0, %s2615
    %s2617 = sshll.u32 %s2612, 26
    %s2618 = sor.u32 %s2616, %s2617
    %s2619 = sshll.u32 %s175, 4
    %s2620 = int_to_ptr.vmem [resolvable:$true] %s2619
    %2623 = sst [smem:[#allocation28]] 512
    %s2624 = scalar_lea.smem [#allocation28], 1
    %2625 = sst [smem:[%s2624]] 512
    %s2626 = scalar_lea.smem [#allocation28], 2
    %2627 = sst [smem:[%s2626]] 4
    %s2628 = scalar_lea.smem [#allocation28], 3
    %2629 = sst [smem:[%s2628]] 64
    %s2630 = scalar_lea.smem [#allocation28], 4
    %2631 = sst [smem:[%s2630]] 128
    %s2632 = scalar_lea.smem [#allocation28], 5
    %2633 = sst [smem:[%s2632]] 2
    %s2634 = scalar_lea.smem [#allocation28], 6
    %2635 = sst [smem:[%s2634]] 256
    %s2636 = scalar_lea.smem [#allocation28], 7
    %2637 = sst [smem:[%s2636]] 64
    %s2638 = scalar_lea.smem [#allocation28], 8
    %2639 = sst [smem:[%s2638]] 4
    %2641 = dma.general %s2607, 8192, %s2620, %s176, [#allocation27], [#allocation28], %s2618, 0
    %v2642 = vld [vmem:[#allocation2] sm:$0xff]
    %v2643 = vld [vmem:[#allocation2 + $0x8] sm:$0xff]
    %v2644 = vld [vmem:[#allocation2 + $0x10] sm:$0xff]
    %v2645 = vld [vmem:[#allocation2 + $0x18] sm:$0xff]
    %v2646 = vld [vmem:[#allocation2 + $0x20] sm:$0xff]
    %v2647 = vld [vmem:[#allocation2 + $0x28] sm:$0xff]
    %v2648 = vld [vmem:[#allocation2 + $0x30] sm:$0xff]
    %v2649 = vld [vmem:[#allocation2 + $0x38] sm:$0xff]
    %v2650 = vld [vmem:[#allocation2 + $0x40] sm:$0xff]
    %v2651 = vld [vmem:[#allocation2 + $0x48] sm:$0xff]
    %v2652 = vld [vmem:[#allocation2 + $0x50] sm:$0xff]
    %v2653 = vld [vmem:[#allocation2 + $0x58] sm:$0xff]
    %v2654 = vld [vmem:[#allocation2 + $0x60] sm:$0xff]
    %v2655 = vld [vmem:[#allocation2 + $0x68] sm:$0xff]
    %v2656 = vld [vmem:[#allocation2 + $0x70] sm:$0xff]
    %v2657 = vld [vmem:[#allocation2 + $0x78] sm:$0xff]
    %v2658 = vld [vmem:[#allocation2 + $0x80] sm:$0xff]
    %v2659 = vld [vmem:[#allocation2 + $0x88] sm:$0xff]
    %v2660 = vld [vmem:[#allocation2 + $0x90] sm:$0xff]
    %v2661 = vld [vmem:[#allocation2 + $0x98] sm:$0xff]
    %v2662 = vld [vmem:[#allocation2 + $0xa0] sm:$0xff]
    %v2663 = vld [vmem:[#allocation2 + $0xa8] sm:$0xff]
    %v2664 = vld [vmem:[#allocation2 + $0xb0] sm:$0xff]
    %v2665 = vld [vmem:[#allocation2 + $0xb8] sm:$0xff]
    %v2666 = vld [vmem:[#allocation2 + $0xc0] sm:$0xff]
    %v2667 = vld [vmem:[#allocation2 + $0xc8] sm:$0xff]
    %v2668 = vld [vmem:[#allocation2 + $0xd0] sm:$0xff]
    %v2669 = vld [vmem:[#allocation2 + $0xd8] sm:$0xff]
    %v2670 = vld [vmem:[#allocation2 + $0xe0] sm:$0xff]
    %v2671 = vld [vmem:[#allocation2 + $0xe8] sm:$0xff]
    %v2672 = vld [vmem:[#allocation2 + $0xf0] sm:$0xff]
    %v2673 = vld [vmem:[#allocation2 + $0xf8] sm:$0xff]
    %v2674 = vld [vmem:[#allocation2 + $0x100] sm:$0xff]
    %v2675 = vld [vmem:[#allocation2 + $0x108] sm:$0xff]
    %v2676 = vld [vmem:[#allocation2 + $0x110] sm:$0xff]
    %v2677 = vld [vmem:[#allocation2 + $0x118] sm:$0xff]
    %v2678 = vld [vmem:[#allocation2 + $0x120] sm:$0xff]
    %v2679 = vld [vmem:[#allocation2 + $0x128] sm:$0xff]
    %v2680 = vld [vmem:[#allocation2 + $0x130] sm:$0xff]
    %v2681 = vld [vmem:[#allocation2 + $0x138] sm:$0xff]
    %v2682 = vld [vmem:[#allocation2 + $0x140] sm:$0xff]
    %v2683 = vld [vmem:[#allocation2 + $0x148] sm:$0xff]
    %v2684 = vld [vmem:[#allocation2 + $0x150] sm:$0xff]
    %v2685 = vld [vmem:[#allocation2 + $0x158] sm:$0xff]
    %v2686 = vld [vmem:[#allocation2 + $0x160] sm:$0xff]
    %v2687 = vld [vmem:[#allocation2 + $0x168] sm:$0xff]
    %v2688 = vld [vmem:[#allocation2 + $0x170] sm:$0xff]
    %v2689 = vld [vmem:[#allocation2 + $0x178] sm:$0xff]
    %v2690 = vld [vmem:[#allocation2 + $0x180] sm:$0xff]
    %v2691 = vld [vmem:[#allocation2 + $0x188] sm:$0xff]
    %v2692 = vld [vmem:[#allocation2 + $0x190] sm:$0xff]
    %v2693 = vld [vmem:[#allocation2 + $0x198] sm:$0xff]
    %v2694 = vld [vmem:[#allocation2 + $0x1a0] sm:$0xff]
    %v2695 = vld [vmem:[#allocation2 + $0x1a8] sm:$0xff]
    %v2696 = vld [vmem:[#allocation2 + $0x1b0] sm:$0xff]
    %v2697 = vld [vmem:[#allocation2 + $0x1b8] sm:$0xff]
    %v2698 = vld [vmem:[#allocation2 + $0x1c0] sm:$0xff]
    %v2699 = vld [vmem:[#allocation2 + $0x1c8] sm:$0xff]
    %v2700 = vld [vmem:[#allocation2 + $0x1d0] sm:$0xff]
    %v2701 = vld [vmem:[#allocation2 + $0x1d8] sm:$0xff]
    %v2702 = vld [vmem:[#allocation2 + $0x1e0] sm:$0xff]
    %v2703 = vld [vmem:[#allocation2 + $0x1e8] sm:$0xff]
    %v2704 = vld [vmem:[#allocation2 + $0x1f0] sm:$0xff]
    %v2705 = vld [vmem:[#allocation2 + $0x1f8] sm:$0xff]
    %v2706 = vld [vmem:[#allocation4] sm:$0xff]
    %v2707 = vld [vmem:[#allocation4 + $0x8] sm:$0xff]
    %v2708 = vpack.c.bf16 %v2707, %v2706
    %s2709 = scalar_lea.vmem [#allocation9], 8
    %v2710 = vld [vmem:[%s2709] sm:$0xf]
    %v2712 = vlaneseq
    %v2713 = vshrl.u32 %v2712, 7
    %v2714 = vsub.s32 0, %v2713
    %v2715 = vrot.slane %v2710, %v2714
    %v2716 = vlaneseq
    %v2717 = vshrl.u32 %v2716, 7
    %v2718 = vsub.s32 1, %v2717
    %v2719 = vrot.slane %v2710, %v2718
    %v2720 = vlaneseq
    %v2721 = vshrl.u32 %v2720, 7
    %v2722 = vsub.s32 2, %v2721
    %v2723 = vrot.slane %v2710, %v2722
    %v2724 = vlaneseq
    %v2725 = vshrl.u32 %v2724, 7
    %v2726 = vsub.s32 3, %v2725
    %v2727 = vrot.slane %v2710, %v2726
    %2732 = vmatprep.subr.bf16.mxu0 %v2643
    %2733 = vmatpush1.bf16.msra.mxu0 %v2642
    %2734 = vmatprep.subr.bf16.mxu0 %v2647
    %2735 = vmatpush1.bf16.msra.mxu0 %v2646
    %2736 = vmatprep.subr.bf16.mxu0 %v2651
    %2737 = vmatpush1.bf16.msra.mxu0 %v2650
    %2738 = vmatprep.subr.bf16.mxu0 %v2655
    %2739 = vmatpush1.bf16.msra.mxu0 %v2654
    %2740 = vmatprep.subr.bf16.mxu0 %v2659
    %2741 = vmatpush1.bf16.msra.mxu0 %v2658
    %2742 = vmatprep.subr.bf16.mxu0 %v2663
    %2743 = vmatpush1.bf16.msra.mxu0 %v2662
    %2744 = vmatprep.subr.bf16.mxu0 %v2667
    %2745 = vmatpush1.bf16.msra.mxu0 %v2666
    %2746 = vmatprep.subr.bf16.mxu0 %v2671
    %2747 = vmatpush1.bf16.msra.mxu0 %v2670
    %2748 = vmatprep.subr.bf16.mxu0 0
    %2749 = vmatpush1.bf16.msra.mxu0 0
    %2750 = vmatprep.subr.bf16.mxu0 0
    %2751 = vmatpush1.bf16.msra.mxu0 0
    %2752 = vmatprep.subr.bf16.mxu0 0
    %2753 = vmatpush1.bf16.msra.mxu0 0
    %2754 = vmatprep.subr.bf16.mxu0 0
    %2755 = vmatpush1.bf16.msra.mxu0 0
    %2756 = vmatprep.subr.bf16.mxu0 0
    %2757 = vmatpush1.bf16.msra.mxu0 0
    %2758 = vmatprep.subr.bf16.mxu0 0
    %2759 = vmatpush1.bf16.msra.mxu0 0
    %2760 = vmatprep.subr.bf16.mxu0 0
    %2761 = vmatpush1.bf16.msra.mxu0 0
    %2762 = vmatprep.subr.bf16.mxu0 0
    %2763 = vmatpush1.bf16.msra.mxu0 0
    %2764 = vmatprep.mubr.bf16.mxu0 0
    %2765 = vmatmul.mubr.bf16.gmra.mrb[0].mxu0 %v2708
    %v2766 = vpop.f32.mrb[0].mxu0
    %v2767 = vadd.f32 %v2715, %v2766
    %v2768 = vpop.f32.mrb[0].mxu0
    %v2769 = vadd.f32 %v2719, %v2768
    %v2770 = vpop.f32.mrb[0].mxu0
    %v2771 = vadd.f32 %v2715, %v2770
    %v2772 = vpop.f32.mrb[0].mxu0
    %v2773 = vadd.f32 %v2719, %v2772
    %2774 = vdwg.mxu0
    %2775 = vmatprep.subr.bf16.mxu0 %v2645
    %2776 = vmatpush1.bf16.msra.mxu0 %v2644
    %2777 = vmatprep.subr.bf16.mxu0 %v2649
    %2778 = vmatpush1.bf16.msra.mxu0 %v2648
    %2779 = vmatprep.subr.bf16.mxu0 %v2653
    %2780 = vmatpush1.bf16.msra.mxu0 %v2652
    %2781 = vmatprep.subr.bf16.mxu0 %v2657
    %2782 = vmatpush1.bf16.msra.mxu0 %v2656
    %2783 = vmatprep.subr.bf16.mxu0 %v2661
    %2784 = vmatpush1.bf16.msra.mxu0 %v2660
    %2785 = vmatprep.subr.bf16.mxu0 %v2665
    %2786 = vmatpush1.bf16.msra.mxu0 %v2664
    %2787 = vmatprep.subr.bf16.mxu0 %v2669
    %2788 = vmatpush1.bf16.msra.mxu0 %v2668
    %2789 = vmatprep.subr.bf16.mxu0 %v2673
    %2790 = vmatpush1.bf16.msra.mxu0 %v2672
    %2791 = vmatprep.subr.bf16.mxu0 0
    %2792 = vmatpush1.bf16.msra.mxu0 0
    %2793 = vmatprep.subr.bf16.mxu0 0
    %2794 = vmatpush1.bf16.msra.mxu0 0
    %2795 = vmatprep.subr.bf16.mxu0 0
    %2796 = vmatpush1.bf16.msra.mxu0 0
    %2797 = vmatprep.subr.bf16.mxu0 0
    %2798 = vmatpush1.bf16.msra.mxu0 0
    %2799 = vmatprep.subr.bf16.mxu0 0
    %2800 = vmatpush1.bf16.msra.mxu0 0
    %2801 = vmatprep.subr.bf16.mxu0 0
    %2802 = vmatpush1.bf16.msra.mxu0 0
    %2803 = vmatprep.subr.bf16.mxu0 0
    %2804 = vmatpush1.bf16.msra.mxu0 0
    %2805 = vmatprep.subr.bf16.mxu0 0
    %2806 = vmatpush1.bf16.msra.mxu0 0
    %2807 = vmatprep.mubr.bf16.mxu0 0
    %2808 = vmatmul.mubr.bf16.gmra.mrb[0].mxu0 %v2708
    %v2809 = vpop.f32.mrb[0].mxu0
    %v2810 = vadd.f32 %v2723, %v2809
    %v2811 = vpop.f32.mrb[0].mxu0
    %v2812 = vadd.f32 %v2727, %v2811
    %v2813 = vpop.f32.mrb[0].mxu0
    %v2814 = vadd.f32 %v2723, %v2813
    %v2815 = vpop.f32.mrb[0].mxu0
    %v2816 = vadd.f32 %v2727, %v2815
    %2817 = vdwg.mxu0
    %2818 = vmatprep.subr.bf16.mxu0 %v2675
    %2819 = vmatpush1.bf16.msra.mxu0 %v2674
    %2820 = vmatprep.subr.bf16.mxu0 %v2679
    %2821 = vmatpush1.bf16.msra.mxu0 %v2678
    %2822 = vmatprep.subr.bf16.mxu0 %v2683
    %2823 = vmatpush1.bf16.msra.mxu0 %v2682
    %2824 = vmatprep.subr.bf16.mxu0 %v2687
    %2825 = vmatpush1.bf16.msra.mxu0 %v2686
    %2826 = vmatprep.subr.bf16.mxu0 %v2691
    %2827 = vmatpush1.bf16.msra.mxu0 %v2690
    %2828 = vmatprep.subr.bf16.mxu0 %v2695
    %2829 = vmatpush1.bf16.msra.mxu0 %v2694
    %2830 = vmatprep.subr.bf16.mxu0 %v2699
    %2831 = vmatpush1.bf16.msra.mxu0 %v2698
    %2832 = vmatprep.subr.bf16.mxu0 %v2703
    %2833 = vmatpush1.bf16.msra.mxu0 %v2702
    %2834 = vmatprep.subr.bf16.mxu0 0
    %2835 = vmatpush1.bf16.msra.mxu0 0
    %2836 = vmatprep.subr.bf16.mxu0 0
    %2837 = vmatpush1.bf16.msra.mxu0 0
    %2838 = vmatprep.subr.bf16.mxu0 0
    %2839 = vmatpush1.bf16.msra.mxu0 0
    %2840 = vmatprep.subr.bf16.mxu0 0
    %2841 = vmatpush1.bf16.msra.mxu0 0
    %2842 = vmatprep.subr.bf16.mxu0 0
    %2843 = vmatpush1.bf16.msra.mxu0 0
    %2844 = vmatprep.subr.bf16.mxu0 0
    %2845 = vmatpush1.bf16.msra.mxu0 0
    %2846 = vmatprep.subr.bf16.mxu0 0
    %2847 = vmatpush1.bf16.msra.mxu0 0
    %2848 = vmatprep.subr.bf16.mxu0 0
    %2849 = vmatpush1.bf16.msra.mxu0 0
    %2850 = vmatprep.mubr.bf16.mxu0 0
    %2851 = vmatmul.mubr.bf16.gmra.mrb[0].mxu0 0
    %v2852 = vpop.f32.mrb[0].mxu0
    %v2853 = vadd.f32 0.0, %v2852
    %v2854 = vpop.f32.mrb[0].mxu0
    %v2855 = vadd.f32 0.0, %v2854
    %v2856 = vpop.f32.mrb[0].mxu0
    %v2857 = vpop.f32.mrb[0].mxu0
    %2858 = vdwg.mxu0
    %2859 = vmatprep.subr.bf16.mxu0 %v2677
    %2860 = vmatpush1.bf16.msra.mxu0 %v2676
    %2861 = vmatprep.subr.bf16.mxu0 %v2681
    %2862 = vmatpush1.bf16.msra.mxu0 %v2680
    %2863 = vmatprep.subr.bf16.mxu0 %v2685
    %2864 = vmatpush1.bf16.msra.mxu0 %v2684
    %2865 = vmatprep.subr.bf16.mxu0 %v2689
    %2866 = vmatpush1.bf16.msra.mxu0 %v2688
    %2867 = vmatprep.subr.bf16.mxu0 %v2693
    %2868 = vmatpush1.bf16.msra.mxu0 %v2692
    %2869 = vmatprep.subr.bf16.mxu0 %v2697
    %2870 = vmatpush1.bf16.msra.mxu0 %v2696
    %2871 = vmatprep.subr.bf16.mxu0 %v2701
    %2872 = vmatpush1.bf16.msra.mxu0 %v2700
    %2873 = vmatprep.subr.bf16.mxu0 %v2705
    %2874 = vmatpush1.bf16.msra.mxu0 %v2704
    %2875 = vmatprep.subr.bf16.mxu0 0
    %2876 = vmatpush1.bf16.msra.mxu0 0
    %2877 = vmatprep.subr.bf16.mxu0 0
    %2878 = vmatpush1.bf16.msra.mxu0 0
    %2879 = vmatprep.subr.bf16.mxu0 0
    %2880 = vmatpush1.bf16.msra.mxu0 0
    %2881 = vmatprep.subr.bf16.mxu0 0
    %2882 = vmatpush1.bf16.msra.mxu0 0
    %2883 = vmatprep.subr.bf16.mxu0 0
    %2884 = vmatpush1.bf16.msra.mxu0 0
    %2885 = vmatprep.subr.bf16.mxu0 0
    %2886 = vmatpush1.bf16.msra.mxu0 0
    %2887 = vmatprep.subr.bf16.mxu0 0
    %2888 = vmatpush1.bf16.msra.mxu0 0
    %2889 = vmatprep.subr.bf16.mxu0 0
    %2890 = vmatpush1.bf16.msra.mxu0 0
    %2891 = vmatprep.mubr.bf16.mxu0 0
    %2892 = vmatmul.mubr.bf16.gmra.mrb[0].mxu0 0
    %v2893 = vpop.f32.mrb[0].mxu0
    %v2894 = vadd.f32 0.0, %v2893
    %v2895 = vpop.f32.mrb[0].mxu0
    %v2896 = vadd.f32 0.0, %v2895
    %v2897 = vpop.f32.mrb[0].mxu0
    %v2898 = vpop.f32.mrb[0].mxu0
    %2899 = vdwg.mxu0
    %v2900 = vadd.f32 %v2767, %v2853
    %v2901 = vadd.f32 %v2769, %v2855
    %v2902 = vadd.f32 %v2810, %v2894
    %v2903 = vadd.f32 %v2812, %v2896
    %v2904 = vxor.u32 %v2900, 2147483648
    %v2905 = vxor.u32 %v2901, 2147483648
    %v2906 = vxor.u32 %v2902, 2147483648
    %v2907 = vmul.f32 %v2904, 1.442695
    %v2908 = vpow.pop %v2907
    %v2909 = vmul.f32 %v2905, 1.442695
    %v2910 = vpow.pop %v2909
    %v2911 = vmul.f32 %v2906, 1.442695
    %v2912 = vpow.pop %v2911
    %v2913 = vadd.f32 %v2908, 1.0
    %v2914 = vadd.f32 %v2910, 1.0
    %v2915 = vadd.f32 %v2912, 1.0
    %v2916 = vrcp.pop %v2913
    %v2917 = vmul.f32 1.0, %v2916
    %v2918 = vrcp.pop %v2914
    %v2919 = vmul.f32 1.0, %v2918
    %v2920 = vrcp.pop %v2915
    %v2921 = vmul.f32 1.0, %v2920
    %v2922 = vtanh.pop %v2903
    %v2923 = vmul.f32 %v2919, 0.0
    %v2924 = vmul.f32 %v2917, %v2922
    %v2925 = vadd.f32 %v2923, %v2924
    %v2926 = vtanh.pop %v2925
    %v2927 = vmul.f32 %v2921, %v2926
    %2928 = vst [vmem:[#allocation4] sm:$0x3] %v2927
    %v2929 = vpack.c.bf16 %v2927, %v2927
    %2930 = vmatprep.subr.bf16.mxu0 %v2675
    %2931 = vmatpush1.bf16.msra.mxu0 %v2674
    %2932 = vmatprep.subr.bf16.mxu0 %v2679
    %2933 = vmatpush1.bf16.msra.mxu0 %v2678
    %2934 = vmatprep.subr.bf16.mxu0 %v2683
    %2935 = vmatpush1.bf16.msra.mxu0 %v2682
    %2936 = vmatprep.subr.bf16.mxu0 %v2687
    %2937 = vmatpush1.bf16.msra.mxu0 %v2686
    %2938 = vmatprep.subr.bf16.mxu0 %v2691
    %2939 = vmatpush1.bf16.msra.mxu0 %v2690
    %2940 = vmatprep.subr.bf16.mxu0 %v2695
    %2941 = vmatpush1.bf16.msra.mxu0 %v2694
    %2942 = vmatprep.subr.bf16.mxu0 %v2699
    %2943 = vmatpush1.bf16.msra.mxu0 %v2698
    %2944 = vmatprep.subr.bf16.mxu0 %v2703
    %2945 = vmatpush1.bf16.msra.mxu0 %v2702
    %2946 = vmatprep.subr.bf16.mxu0 0
    %2947 = vmatpush1.bf16.msra.mxu0 0
    %2948 = vmatprep.subr.bf16.mxu0 0
    %2949 = vmatpush1.bf16.msra.mxu0 0
    %2950 = vmatprep.subr.bf16.mxu0 0
    %2951 = vmatpush1.bf16.msra.mxu0 0
    %2952 = vmatprep.subr.bf16.mxu0 0
    %2953 = vmatpush1.bf16.msra.mxu0 0
    %2954 = vmatprep.subr.bf16.mxu0 0
    %2955 = vmatpush1.bf16.msra.mxu0 0
    %2956 = vmatprep.subr.bf16.mxu0 0
    %2957 = vmatpush1.bf16.msra.mxu0 0
    %2958 = vmatprep.subr.bf16.mxu0 0
    %2959 = vmatpush1.bf16.msra.mxu0 0
    %2960 = vmatprep.subr.bf16.mxu0 0
    %2961 = vmatpush1.bf16.msra.mxu0 0
    %2962 = vmatprep.mubr.bf16.mxu0 0
    %2963 = vmatmul.mubr.bf16.gmra.mrb[0].mxu0 %v2929
    %v2964 = vpop.f32.mrb[0].mxu0
    %v2965 = vadd.f32 0.0, %v2964
    %v2966 = vpop.f32.mrb[0].mxu0
    %v2967 = vadd.f32 0.0, %v2966
    %v2968 = vpop.f32.mrb[0].mxu0
    %v2969 = vpop.f32.mrb[0].mxu0
    %2970 = vdwg.mxu0
    %2971 = vmatprep.subr.bf16.mxu0 %v2677
    %2972 = vmatpush1.bf16.msra.mxu0 %v2676
    %2973 = vmatprep.subr.bf16.mxu0 %v2681
    %2974 = vmatpush1.bf16.msra.mxu0 %v2680
    %2975 = vmatprep.subr.bf16.mxu0 %v2685
    %2976 = vmatpush1.bf16.msra.mxu0 %v2684
    %2977 = vmatprep.subr.bf16.mxu0 %v2689
    %2978 = vmatpush1.bf16.msra.mxu0 %v2688
    %2979 = vmatprep.subr.bf16.mxu0 %v2693
    %2980 = vmatpush1.bf16.msra.mxu0 %v2692
    %2981 = vmatprep.subr.bf16.mxu0 %v2697
    %2982 = vmatpush1.bf16.msra.mxu0 %v2696
    %2983 = vmatprep.subr.bf16.mxu0 %v2701
    %2984 = vmatpush1.bf16.msra.mxu0 %v2700
    %2985 = vmatprep.subr.bf16.mxu0 %v2705
    %2986 = vmatpush1.bf16.msra.mxu0 %v2704
    %2987 = vmatprep.subr.bf16.mxu0 0
    %2988 = vmatpush1.bf16.msra.mxu0 0
    %2989 = vmatprep.subr.bf16.mxu0 0
    %2990 = vmatpush1.bf16.msra.mxu0 0
    %2991 = vmatprep.subr.bf16.mxu0 0
    %2992 = vmatpush1.bf16.msra.mxu0 0
    %2993 = vmatprep.subr.bf16.mxu0 0
    %2994 = vmatpush1.bf16.msra.mxu0 0
    %2995 = vmatprep.subr.bf16.mxu0 0
    %2996 = vmatpush1.bf16.msra.mxu0 0
    %2997 = vmatprep.subr.bf16.mxu0 0
    %2998 = vmatpush1.bf16.msra.mxu0 0
    %2999 = vmatprep.subr.bf16.mxu0 0
    %3000 = vmatpush1.bf16.msra.mxu0 0
    %3001 = vmatprep.subr.bf16.mxu0 0
    %3002 = vmatpush1.bf16.msra.mxu0 0
    %3003 = vmatprep.mubr.bf16.mxu0 0
    %3004 = vmatmul.mubr.bf16.gmra.mrb[0].mxu0 %v2929
    %v3005 = vpop.f32.mrb[0].mxu0
    %v3006 = vadd.f32 0.0, %v3005
    %v3007 = vpop.f32.mrb[0].mxu0
    %v3008 = vadd.f32 0.0, %v3007
    %v3009 = vpop.f32.mrb[0].mxu0
    %v3010 = vpop.f32.mrb[0].mxu0
    %3011 = vdwg.mxu0
    %v3016 = vrot.slane %v2965, 6
    %v3017 = vrot.slane %v2967, 6
    %v3018 = vrot.slane %v3006, 6
    %v3019 = vrot.slane %v3008, 6
    %v3024 = vadd.f32 %v2767, %v3016
    %v3025 = vadd.f32 %v2769, %v3017
    %v3026 = vadd.f32 %v2810, %v3018
    %v3027 = vadd.f32 %v2812, %v3019
    %v3028 = vxor.u32 %v3024, 2147483648
    %v3029 = vxor.u32 %v3025, 2147483648
    %v3030 = vxor.u32 %v3026, 2147483648
    %v3031 = vmul.f32 %v3028, 1.442695
    %v3032 = vpow.pop %v3031
    %v3033 = vmul.f32 %v3029, 1.442695
    %v3034 = vpow.pop %v3033
    %v3035 = vmul.f32 %v3030, 1.442695
    %v3036 = vpow.pop %v3035
    %v3037 = vadd.f32 %v3032, 1.0
    %v3038 = vadd.f32 %v3034, 1.0
    %v3039 = vadd.f32 %v3036, 1.0
    %v3040 = vrcp.pop %v3037
    %v3041 = vmul.f32 1.0, %v3040
    %v3042 = vrcp.pop %v3038
    %v3043 = vmul.f32 1.0, %v3042
    %v3044 = vrcp.pop %v3039
    %v3045 = vmul.f32 1.0, %v3044
    %v3046 = vtanh.pop %v3027
    %v3048 = vrot.slane %v2925, 6
    %v3050 = vmul.f32 %v3043, %v3048
    %v3051 = vmul.f32 %v3041, %v3046
    %v3052 = vadd.f32 %v3050, %v3051
    %v3053 = vtanh.pop %v3052
    %v3054 = vmul.f32 %v3045, %v3053
    %3055 = vst [vmem:[#allocation4] sm:$0xc] %v3054
    %v3056 = vpack.c.bf16 %v3054, %v3054
    %v3058 = vrot.slane %v3056, 1
    %3060 = vmatprep.subr.bf16.mxu0 %v2675
    %3061 = vmatpush1.bf16.msra.mxu0 %v2674
    %3062 = vmatprep.subr.bf16.mxu0 %v2679
    %3063 = vmatpush1.bf16.msra.mxu0 %v2678
    %3064 = vmatprep.subr.bf16.mxu0 %v2683
    %3065 = vmatpush1.bf16.msra.mxu0 %v2682
    %3066 = vmatprep.subr.bf16.mxu0 %v2687
    %3067 = vmatpush1.bf16.msra.mxu0 %v2686
    %3068 = vmatprep.subr.bf16.mxu0 %v2691
    %3069 = vmatpush1.bf16.msra.mxu0 %v2690
    %3070 = vmatprep.subr.bf16.mxu0 %v2695
    %3071 = vmatpush1.bf16.msra.mxu0 %v2694
    %3072 = vmatprep.subr.bf16.mxu0 %v2699
    %3073 = vmatpush1.bf16.msra.mxu0 %v2698
    %3074 = vmatprep.subr.bf16.mxu0 %v2703
    %3075 = vmatpush1.bf16.msra.mxu0 %v2702
    %3076 = vmatprep.subr.bf16.mxu0 0
    %3077 = vmatpush1.bf16.msra.mxu0 0
    %3078 = vmatprep.subr.bf16.mxu0 0
    %3079 = vmatpush1.bf16.msra.mxu0 0
    %3080 = vmatprep.subr.bf16.mxu0 0
    %3081 = vmatpush1.bf16.msra.mxu0 0
    %3082 = vmatprep.subr.bf16.mxu0 0
    %3083 = vmatpush1.bf16.msra.mxu0 0
    %3084 = vmatprep.subr.bf16.mxu0 0
    %3085 = vmatpush1.bf16.msra.mxu0 0
    %3086 = vmatprep.subr.bf16.mxu0 0
    %3087 = vmatpush1.bf16.msra.mxu0 0
    %3088 = vmatprep.subr.bf16.mxu0 0
    %3089 = vmatpush1.bf16.msra.mxu0 0
    %3090 = vmatprep.subr.bf16.mxu0 0
    %3091 = vmatpush1.bf16.msra.mxu0 0
    %3092 = vmatprep.mubr.bf16.mxu0 0
    %3093 = vmatmul.mubr.bf16.gmra.mrb[0].mxu0 %v3058
    %v3094 = vpop.f32.mrb[0].mxu0
    %v3095 = vadd.f32 0.0, %v3094
    %v3096 = vpop.f32.mrb[0].mxu0
    %v3097 = vadd.f32 0.0, %v3096
    %v3098 = vpop.f32.mrb[0].mxu0
    %v3099 = vpop.f32.mrb[0].mxu0
    %3100 = vdwg.mxu0
    %3101 = vmatprep.subr.bf16.mxu0 %v2677
    %3102 = vmatpush1.bf16.msra.mxu0 %v2676
    %3103 = vmatprep.subr.bf16.mxu0 %v2681
    %3104 = vmatpush1.bf16.msra.mxu0 %v2680
    %3105 = vmatprep.subr.bf16.mxu0 %v2685
    %3106 = vmatpush1.bf16.msra.mxu0 %v2684
    %3107 = vmatprep.subr.bf16.mxu0 %v2689
    %3108 = vmatpush1.bf16.msra.mxu0 %v2688
    %3109 = vmatprep.subr.bf16.mxu0 %v2693
    %3110 = vmatpush1.bf16.msra.mxu0 %v2692
    %3111 = vmatprep.subr.bf16.mxu0 %v2697
    %3112 = vmatpush1.bf16.msra.mxu0 %v2696
    %3113 = vmatprep.subr.bf16.mxu0 %v2701
    %3114 = vmatpush1.bf16.msra.mxu0 %v2700
    %3115 = vmatprep.subr.bf16.mxu0 %v2705
    %3116 = vmatpush1.bf16.msra.mxu0 %v2704
    %3117 = vmatprep.subr.bf16.mxu0 0
    %3118 = vmatpush1.bf16.msra.mxu0 0
    %3119 = vmatprep.subr.bf16.mxu0 0
    %3120 = vmatpush1.bf16.msra.mxu0 0
    %3121 = vmatprep.subr.bf16.mxu0 0
    %3122 = vmatpush1.bf16.msra.mxu0 0
    %3123 = vmatprep.subr.bf16.mxu0 0
    %3124 = vmatpush1.bf16.msra.mxu0 0
    %3125 = vmatprep.subr.bf16.mxu0 0
    %3126 = vmatpush1.bf16.msra.mxu0 0
    %3127 = vmatprep.subr.bf16.mxu0 0
    %3128 = vmatpush1.bf16.msra.mxu0 0
    %3129 = vmatprep.subr.bf16.mxu0 0
    %3130 = vmatpush1.bf16.msra.mxu0 0
    %3131 = vmatprep.subr.bf16.mxu0 0
    %3132 = vmatpush1.bf16.msra.mxu0 0
    %3133 = vmatprep.mubr.bf16.mxu0 0
    %3134 = vmatmul.mubr.bf16.gmra.mrb[0].mxu0 %v3058
    %v3135 = vpop.f32.mrb[0].mxu0
    %v3136 = vadd.f32 0.0, %v3135
    %v3137 = vpop.f32.mrb[0].mxu0
    %v3138 = vadd.f32 0.0, %v3137
    %v3139 = vpop.f32.mrb[0].mxu0
    %v3140 = vpop.f32.mrb[0].mxu0
    %3141 = vdwg.mxu0
    %v3146 = vrot.slane %v3095, 4
    %v3147 = vrot.slane %v3097, 4
    %v3148 = vrot.slane %v3136, 4
    %v3149 = vrot.slane %v3138, 4
    %v3154 = vadd.f32 %v2767, %v3146
    %v3155 = vadd.f32 %v2769, %v3147
    %v3156 = vadd.f32 %v2810, %v3148
    %v3157 = vadd.f32 %v2812, %v3149
    %v3158 = vxor.u32 %v3154, 2147483648
    %v3159 = vxor.u32 %v3155, 2147483648
    %v3160 = vxor.u32 %v3156, 2147483648
    %v3161 = vmul.f32 %v3158, 1.442695
    %v3162 = vpow.pop %v3161
    %v3163 = vmul.f32 %v3159, 1.442695
    %v3164 = vpow.pop %v3163
    %v3165 = vmul.f32 %v3160, 1.442695
    %v3166 = vpow.pop %v3165
    %v3167 = vadd.f32 %v3162, 1.0
    %v3168 = vadd.f32 %v3164, 1.0
    %v3169 = vadd.f32 %v3166, 1.0
    %v3170 = vrcp.pop %v3167
    %v3171 = vmul.f32 1.0, %v3170
    %v3172 = vrcp.pop %v3168
    %v3173 = vmul.f32 1.0, %v3172
    %v3174 = vrcp.pop %v3169
    %v3175 = vmul.f32 1.0, %v3174
    %v3176 = vtanh.pop %v3157
    %v3178 = vrot.slane %v3052, 6
    %v3180 = vmul.f32 %v3173, %v3178
    %v3181 = vmul.f32 %v3171, %v3176
    %v3182 = vadd.f32 %v3180, %v3181
    %v3183 = vtanh.pop %v3182
    %v3184 = vmul.f32 %v3175, %v3183
    %3185 = vst [vmem:[#allocation4] sm:$0x30] %v3184
    %v3186 = vpack.c.bf16 %v3184, %v3184
    %v3188 = vrot.slane %v3186, 2
    %3190 = vmatprep.subr.bf16.mxu0 %v2675
    %3191 = vmatpush1.bf16.msra.mxu0 %v2674
    %3192 = vmatprep.subr.bf16.mxu0 %v2679
    %3193 = vmatpush1.bf16.msra.mxu0 %v2678
    %3194 = vmatprep.subr.bf16.mxu0 %v2683
    %3195 = vmatpush1.bf16.msra.mxu0 %v2682
    %3196 = vmatprep.subr.bf16.mxu0 %v2687
    %3197 = vmatpush1.bf16.msra.mxu0 %v2686
    %3198 = vmatprep.subr.bf16.mxu0 %v2691
    %3199 = vmatpush1.bf16.msra.mxu0 %v2690
    %3200 = vmatprep.subr.bf16.mxu0 %v2695
    %3201 = vmatpush1.bf16.msra.mxu0 %v2694
    %3202 = vmatprep.subr.bf16.mxu0 %v2699
    %3203 = vmatpush1.bf16.msra.mxu0 %v2698
    %3204 = vmatprep.subr.bf16.mxu0 %v2703
    %3205 = vmatpush1.bf16.msra.mxu0 %v2702
    %3206 = vmatprep.subr.bf16.mxu0 0
    %3207 = vmatpush1.bf16.msra.mxu0 0
    %3208 = vmatprep.subr.bf16.mxu0 0
    %3209 = vmatpush1.bf16.msra.mxu0 0
    %3210 = vmatprep.subr.bf16.mxu0 0
    %3211 = vmatpush1.bf16.msra.mxu0 0
    %3212 = vmatprep.subr.bf16.mxu0 0
    %3213 = vmatpush1.bf16.msra.mxu0 0
    %3214 = vmatprep.subr.bf16.mxu0 0
    %3215 = vmatpush1.bf16.msra.mxu0 0
    %3216 = vmatprep.subr.bf16.mxu0 0
    %3217 = vmatpush1.bf16.msra.mxu0 0
    %3218 = vmatprep.subr.bf16.mxu0 0
    %3219 = vmatpush1.bf16.msra.mxu0 0
    %3220 = vmatprep.subr.bf16.mxu0 0
    %3221 = vmatpush1.bf16.msra.mxu0 0
    %3222 = vmatprep.mubr.bf16.mxu0 0
    %3223 = vmatmul.mubr.bf16.gmra.mrb[0].mxu0 %v3188
    %v3224 = vpop.f32.mrb[0].mxu0
    %v3225 = vadd.f32 0.0, %v3224
    %v3226 = vpop.f32.mrb[0].mxu0
    %v3227 = vadd.f32 0.0, %v3226
    %v3228 = vpop.f32.mrb[0].mxu0
    %v3229 = vpop.f32.mrb[0].mxu0
    %3230 = vdwg.mxu0
    %3231 = vmatprep.subr.bf16.mxu0 %v2677
    %3232 = vmatpush1.bf16.msra.mxu0 %v2676
    %3233 = vmatprep.subr.bf16.mxu0 %v2681
    %3234 = vmatpush1.bf16.msra.mxu0 %v2680
    %3235 = vmatprep.subr.bf16.mxu0 %v2685
    %3236 = vmatpush1.bf16.msra.mxu0 %v2684
    %3237 = vmatprep.subr.bf16.mxu0 %v2689
    %3238 = vmatpush1.bf16.msra.mxu0 %v2688
    %3239 = vmatprep.subr.bf16.mxu0 %v2693
    %3240 = vmatpush1.bf16.msra.mxu0 %v2692
    %3241 = vmatprep.subr.bf16.mxu0 %v2697
    %3242 = vmatpush1.bf16.msra.mxu0 %v2696
    %3243 = vmatprep.subr.bf16.mxu0 %v2701
    %3244 = vmatpush1.bf16.msra.mxu0 %v2700
    %3245 = vmatprep.subr.bf16.mxu0 %v2705
    %3246 = vmatpush1.bf16.msra.mxu0 %v2704
    %3247 = vmatprep.subr.bf16.mxu0 0
    %3248 = vmatpush1.bf16.msra.mxu0 0
    %3249 = vmatprep.subr.bf16.mxu0 0
    %3250 = vmatpush1.bf16.msra.mxu0 0
    %3251 = vmatprep.subr.bf16.mxu0 0
    %3252 = vmatpush1.bf16.msra.mxu0 0
    %3253 = vmatprep.subr.bf16.mxu0 0
    %3254 = vmatpush1.bf16.msra.mxu0 0
    %3255 = vmatprep.subr.bf16.mxu0 0
    %3256 = vmatpush1.bf16.msra.mxu0 0
    %3257 = vmatprep.subr.bf16.mxu0 0
    %3258 = vmatpush1.bf16.msra.mxu0 0
    %3259 = vmatprep.subr.bf16.mxu0 0
    %3260 = vmatpush1.bf16.msra.mxu0 0
    %3261 = vmatprep.subr.bf16.mxu0 0
    %3262 = vmatpush1.bf16.msra.mxu0 0
    %3263 = vmatprep.mubr.bf16.mxu0 0
    %3264 = vmatmul.mubr.bf16.gmra.mrb[0].mxu0 %v3188
    %v3265 = vpop.f32.mrb[0].mxu0
    %v3266 = vadd.f32 0.0, %v3265
    %v3267 = vpop.f32.mrb[0].mxu0
    %v3268 = vadd.f32 0.0, %v3267
    %v3269 = vpop.f32.mrb[0].mxu0
    %v3270 = vpop.f32.mrb[0].mxu0
    %3271 = vdwg.mxu0
    %v3276 = vrot.slane %v3225, 2
    %v3277 = vrot.slane %v3227, 2
    %v3278 = vrot.slane %v3266, 2
    %v3279 = vrot.slane %v3268, 2
    %v3284 = vadd.f32 %v2767, %v3276
    %v3285 = vadd.f32 %v2769, %v3277
    %v3286 = vadd.f32 %v2810, %v3278
    %v3287 = vadd.f32 %v2812, %v3279
    %v3288 = vxor.u32 %v3284, 2147483648
    %v3289 = vxor.u32 %v3285, 2147483648
    %v3290 = vxor.u32 %v3286, 2147483648
    %v3291 = vmul.f32 %v3288, 1.442695
    %v3292 = vpow.pop %v3291
    %v3293 = vmul.f32 %v3289, 1.442695
    %v3294 = vpow.pop %v3293
    %v3295 = vmul.f32 %v3290, 1.442695
    %v3296 = vpow.pop %v3295
    %v3297 = vadd.f32 %v3292, 1.0
    %v3298 = vadd.f32 %v3294, 1.0
    %v3299 = vadd.f32 %v3296, 1.0
    %v3300 = vrcp.pop %v3297
    %v3301 = vmul.f32 1.0, %v3300
    %v3302 = vrcp.pop %v3298
    %v3303 = vmul.f32 1.0, %v3302
    %v3304 = vrcp.pop %v3299
    %v3305 = vmul.f32 1.0, %v3304
    %v3306 = vtanh.pop %v3287
    %v3308 = vrot.slane %v3182, 6
    %v3310 = vmul.f32 %v3303, %v3308
    %v3311 = vmul.f32 %v3301, %v3306
    %v3312 = vadd.f32 %v3310, %v3311
    %v3313 = vtanh.pop %v3312
    %v3314 = vmul.f32 %v3305, %v3313
    %3315 = vst [vmem:[#allocation4] sm:$0xc0] %v3314
    %v3316 = vpack.c.bf16 %v3314, %v3314
    %v3318 = vrot.slane %v3316, 3
    %3320 = vmatprep.subr.bf16.mxu0 %v2675
    %3321 = vmatpush1.bf16.msra.mxu0 %v2674
    %3322 = vmatprep.subr.bf16.mxu0 %v2679
    %3323 = vmatpush1.bf16.msra.mxu0 %v2678
    %3324 = vmatprep.subr.bf16.mxu0 %v2683
    %3325 = vmatpush1.bf16.msra.mxu0 %v2682
    %3326 = vmatprep.subr.bf16.mxu0 %v2687
    %3327 = vmatpush1.bf16.msra.mxu0 %v2686
    %3328 = vmatprep.subr.bf16.mxu0 %v2691
    %3329 = vmatpush1.bf16.msra.mxu0 %v2690
    %3330 = vmatprep.subr.bf16.mxu0 %v2695
    %3331 = vmatpush1.bf16.msra.mxu0 %v2694
    %3332 = vmatprep.subr.bf16.mxu0 %v2699
    %3333 = vmatpush1.bf16.msra.mxu0 %v2698
    %3334 = vmatprep.subr.bf16.mxu0 %v2703
    %3335 = vmatpush1.bf16.msra.mxu0 %v2702
    %3336 = vmatprep.subr.bf16.mxu0 0
    %3337 = vmatpush1.bf16.msra.mxu0 0
    %3338 = vmatprep.subr.bf16.mxu0 0
    %3339 = vmatpush1.bf16.msra.mxu0 0
    %3340 = vmatprep.subr.bf16.mxu0 0
    %3341 = vmatpush1.bf16.msra.mxu0 0
    %3342 = vmatprep.subr.bf16.mxu0 0
    %3343 = vmatpush1.bf16.msra.mxu0 0
    %3344 = vmatprep.subr.bf16.mxu0 0
    %3345 = vmatpush1.bf16.msra.mxu0 0
    %3346 = vmatprep.subr.bf16.mxu0 0
    %3347 = vmatpush1.bf16.msra.mxu0 0
    %3348 = vmatprep.subr.bf16.mxu0 0
    %3349 = vmatpush1.bf16.msra.mxu0 0
    %3350 = vmatprep.subr.bf16.mxu0 0
    %3351 = vmatpush1.bf16.msra.mxu0 0
    %3352 = vmatprep.mubr.bf16.mxu0 0
    %3353 = vmatmul.mubr.bf16.gmra.mrb[0].mxu0 %v3318
    %v3354 = vpop.f32.mrb[0].mxu0
    %v3355 = vadd.f32 0.0, %v3354
    %v3356 = vpop.f32.mrb[0].mxu0
    %v3357 = vadd.f32 0.0, %v3356
    %v3358 = vpop.f32.mrb[0].mxu0
    %v3359 = vpop.f32.mrb[0].mxu0
    %3360 = vdwg.mxu0
    %3361 = vmatprep.subr.bf16.mxu0 %v2677
    %3362 = vmatpush1.bf16.msra.mxu0 %v2676
    %3363 = vmatprep.subr.bf16.mxu0 %v2681
    %3364 = vmatpush1.bf16.msra.mxu0 %v2680
    %3365 = vmatprep.subr.bf16.mxu0 %v2685
    %3366 = vmatpush1.bf16.msra.mxu0 %v2684
    %3367 = vmatprep.subr.bf16.mxu0 %v2689
    %3368 = vmatpush1.bf16.msra.mxu0 %v2688
    %3369 = vmatprep.subr.bf16.mxu0 %v2693
    %3370 = vmatpush1.bf16.msra.mxu0 %v2692
    %3371 = vmatprep.subr.bf16.mxu0 %v2697
    %3372 = vmatpush1.bf16.msra.mxu0 %v2696
    %3373 = vmatprep.subr.bf16.mxu0 %v2701
    %3374 = vmatpush1.bf16.msra.mxu0 %v2700
    %3375 = vmatprep.subr.bf16.mxu0 %v2705
    %3376 = vmatpush1.bf16.msra.mxu0 %v2704
    %3377 = vmatprep.subr.bf16.mxu0 0
    %3378 = vmatpush1.bf16.msra.mxu0 0
    %3379 = vmatprep.subr.bf16.mxu0 0
    %3380 = vmatpush1.bf16.msra.mxu0 0
    %3381 = vmatprep.subr.bf16.mxu0 0
    %3382 = vmatpush1.bf16.msra.mxu0 0
    %3383 = vmatprep.subr.bf16.mxu0 0
    %3384 = vmatpush1.bf16.msra.mxu0 0
    %3385 = vmatprep.subr.bf16.mxu0 0
    %3386 = vmatpush1.bf16.msra.mxu0 0
    %3387 = vmatprep.subr.bf16.mxu0 0
    %3388 = vmatpush1.bf16.msra.mxu0 0
    %3389 = vmatprep.subr.bf16.mxu0 0
    %3390 = vmatpush1.bf16.msra.mxu0 0
    %3391 = vmatprep.subr.bf16.mxu0 0
    %3392 = vmatpush1.bf16.msra.mxu0 0
    %3393 = vmatprep.mubr.bf16.mxu0 0
    %3394 = vmatmul.mubr.bf16.gmra.mrb[0].mxu0 %v3318
    %v3395 = vpop.f32.mrb[0].mxu0
    %v3396 = vadd.f32 0.0, %v3395
    %v3397 = vpop.f32.mrb[0].mxu0
    %v3398 = vadd.f32 0.0, %v3397
    %v3399 = vpop.f32.mrb[0].mxu0
    %v3400 = vpop.f32.mrb[0].mxu0
    %3401 = vdwg.mxu0
    %v3402 = vadd.f32 %v2771, %v3355
    %v3403 = vadd.f32 %v2773, %v3357
    %v3404 = vadd.f32 %v2814, %v3396
    %v3405 = vadd.f32 %v2816, %v3398
    %v3406 = vxor.u32 %v3402, 2147483648
    %v3407 = vxor.u32 %v3403, 2147483648
    %v3408 = vxor.u32 %v3404, 2147483648
    %v3409 = vmul.f32 %v3406, 1.442695
    %v3410 = vpow.pop %v3409
    %v3411 = vmul.f32 %v3407, 1.442695
    %v3412 = vpow.pop %v3411
    %v3413 = vmul.f32 %v3408, 1.442695
    %v3414 = vpow.pop %v3413
    %v3415 = vadd.f32 %v3410, 1.0
    %v3416 = vadd.f32 %v3412, 1.0
    %v3417 = vadd.f32 %v3414, 1.0
    %v3418 = vrcp.pop %v3415
    %v3419 = vmul.f32 1.0, %v3418
    %v3420 = vrcp.pop %v3416
    %v3421 = vmul.f32 1.0, %v3420
    %v3422 = vrcp.pop %v3417
    %v3423 = vmul.f32 1.0, %v3422
    %v3424 = vtanh.pop %v3405
    %v3426 = vrot.slane %v3312, 6
    %v3428 = vmul.f32 %v3421, %v3426
    %v3429 = vmul.f32 %v3419, %v3424
    %v3430 = vadd.f32 %v3428, %v3429
    %v3431 = vtanh.pop %v3430
    %v3432 = vmul.f32 %v3423, %v3431
    %3433 = vst [vmem:[#allocation4 + $0x8] sm:$0x3] %v3432
    %v3434 = vpack.c.bf16 %v3432, %v3432
    %3435 = vmatprep.subr.bf16.mxu0 %v2675
    %3436 = vmatpush1.bf16.msra.mxu0 %v2674
    %3437 = vmatprep.subr.bf16.mxu0 %v2679
    %3438 = vmatpush1.bf16.msra.mxu0 %v2678
    %3439 = vmatprep.subr.bf16.mxu0 %v2683
    %3440 = vmatpush1.bf16.msra.mxu0 %v2682
    %3441 = vmatprep.subr.bf16.mxu0 %v2687
    %3442 = vmatpush1.bf16.msra.mxu0 %v2686
    %3443 = vmatprep.subr.bf16.mxu0 %v2691
    %3444 = vmatpush1.bf16.msra.mxu0 %v2690
    %3445 = vmatprep.subr.bf16.mxu0 %v2695
    %3446 = vmatpush1.bf16.msra.mxu0 %v2694
    %3447 = vmatprep.subr.bf16.mxu0 %v2699
    %3448 = vmatpush1.bf16.msra.mxu0 %v2698
    %3449 = vmatprep.subr.bf16.mxu0 %v2703
    %3450 = vmatpush1.bf16.msra.mxu0 %v2702
    %3451 = vmatprep.subr.bf16.mxu0 0
    %3452 = vmatpush1.bf16.msra.mxu0 0
    %3453 = vmatprep.subr.bf16.mxu0 0
    %3454 = vmatpush1.bf16.msra.mxu0 0
    %3455 = vmatprep.subr.bf16.mxu0 0
    %3456 = vmatpush1.bf16.msra.mxu0 0
    %3457 = vmatprep.subr.bf16.mxu0 0
    %3458 = vmatpush1.bf16.msra.mxu0 0
    %3459 = vmatprep.subr.bf16.mxu0 0
    %3460 = vmatpush1.bf16.msra.mxu0 0
    %3461 = vmatprep.subr.bf16.mxu0 0
    %3462 = vmatpush1.bf16.msra.mxu0 0
    %3463 = vmatprep.subr.bf16.mxu0 0
    %3464 = vmatpush1.bf16.msra.mxu0 0
    %3465 = vmatprep.subr.bf16.mxu0 0
    %3466 = vmatpush1.bf16.msra.mxu0 0
    %3467 = vmatprep.mubr.bf16.mxu0 0
    %3468 = vmatmul.mubr.bf16.gmra.mrb[0].mxu0 %v3434
    %v3469 = vpop.f32.mrb[0].mxu0
    %v3470 = vadd.f32 0.0, %v3469
    %v3471 = vpop.f32.mrb[0].mxu0
    %v3472 = vadd.f32 0.0, %v3471
    %v3473 = vpop.f32.mrb[0].mxu0
    %v3474 = vpop.f32.mrb[0].mxu0
    %3475 = vdwg.mxu0
    %3476 = vmatprep.subr.bf16.mxu0 %v2677
    %3477 = vmatpush1.bf16.msra.mxu0 %v2676
    %3478 = vmatprep.subr.bf16.mxu0 %v2681
    %3479 = vmatpush1.bf16.msra.mxu0 %v2680
    %3480 = vmatprep.subr.bf16.mxu0 %v2685
    %3481 = vmatpush1.bf16.msra.mxu0 %v2684
    %3482 = vmatprep.subr.bf16.mxu0 %v2689
    %3483 = vmatpush1.bf16.msra.mxu0 %v2688
    %3484 = vmatprep.subr.bf16.mxu0 %v2693
    %3485 = vmatpush1.bf16.msra.mxu0 %v2692
    %3486 = vmatprep.subr.bf16.mxu0 %v2697
    %3487 = vmatpush1.bf16.msra.mxu0 %v2696
    %3488 = vmatprep.subr.bf16.mxu0 %v2701
    %3489 = vmatpush1.bf16.msra.mxu0 %v2700
    %3490 = vmatprep.subr.bf16.mxu0 %v2705
    %3491 = vmatpush1.bf16.msra.mxu0 %v2704
    %3492 = vmatprep.subr.bf16.mxu0 0
    %3493 = vmatpush1.bf16.msra.mxu0 0
    %3494 = vmatprep.subr.bf16.mxu0 0
    %3495 = vmatpush1.bf16.msra.mxu0 0
    %3496 = vmatprep.subr.bf16.mxu0 0
    %3497 = vmatpush1.bf16.msra.mxu0 0
    %3498 = vmatprep.subr.bf16.mxu0 0
    %3499 = vmatpush1.bf16.msra.mxu0 0
    %3500 = vmatprep.subr.bf16.mxu0 0
    %3501 = vmatpush1.bf16.msra.mxu0 0
    %3502 = vmatprep.subr.bf16.mxu0 0
    %3503 = vmatpush1.bf16.msra.mxu0 0
    %3504 = vmatprep.subr.bf16.mxu0 0
    %3505 = vmatpush1.bf16.msra.mxu0 0
    %3506 = vmatprep.subr.bf16.mxu0 0
    %3507 = vmatpush1.bf16.msra.mxu0 0
    %3508 = vmatprep.mubr.bf16.mxu0 0
    %3509 = vmatmul.mubr.bf16.gmra.mrb[0].mxu0 %v3434
    %v3510 = vpop.f32.mrb[0].mxu0
    %v3511 = vadd.f32 0.0, %v3510
    %v3512 = vpop.f32.mrb[0].mxu0
    %v3513 = vadd.f32 0.0, %v3512
    %v3514 = vpop.f32.mrb[0].mxu0
    %v3515 = vpop.f32.mrb[0].mxu0
    %3516 = vdwg.mxu0
    %v3521 = vrot.slane %v3470, 6
    %v3522 = vrot.slane %v3472, 6
    %v3523 = vrot.slane %v3511, 6
    %v3524 = vrot.slane %v3513, 6
    %v3529 = vadd.f32 %v2771, %v3521
    %v3530 = vadd.f32 %v2773, %v3522
    %v3531 = vadd.f32 %v2814, %v3523
    %v3532 = vadd.f32 %v2816, %v3524
    %v3533 = vxor.u32 %v3529, 2147483648
    %v3534 = vxor.u32 %v3530, 2147483648
    %v3535 = vxor.u32 %v3531, 2147483648
    %v3536 = vmul.f32 %v3533, 1.442695
    %v3537 = vpow.pop %v3536
    %v3538 = vmul.f32 %v3534, 1.442695
    %v3539 = vpow.pop %v3538
    %v3540 = vmul.f32 %v3535, 1.442695
    %v3541 = vpow.pop %v3540
    %v3542 = vadd.f32 %v3537, 1.0
    %v3543 = vadd.f32 %v3539, 1.0
    %v3544 = vadd.f32 %v3541, 1.0
    %v3545 = vrcp.pop %v3542
    %v3546 = vmul.f32 1.0, %v3545
    %v3547 = vrcp.pop %v3543
    %v3548 = vmul.f32 1.0, %v3547
    %v3549 = vrcp.pop %v3544
    %v3550 = vmul.f32 1.0, %v3549
    %v3551 = vtanh.pop %v3532
    %v3553 = vrot.slane %v3430, 6
    %v3555 = vmul.f32 %v3548, %v3553
    %v3556 = vmul.f32 %v3546, %v3551
    %v3557 = vadd.f32 %v3555, %v3556
    %v3558 = vtanh.pop %v3557
    %v3559 = vmul.f32 %v3550, %v3558
    %3560 = vst [vmem:[#allocation4 + $0x8] sm:$0xc] %v3559
    %v3561 = vpack.c.bf16 %v3559, %v3559
    %v3563 = vrot.slane %v3561, 1
    %3565 = vmatprep.subr.bf16.mxu0 %v2675
    %3566 = vmatpush1.bf16.msra.mxu0 %v2674
    %3567 = vmatprep.subr.bf16.mxu0 %v2679
    %3568 = vmatpush1.bf16.msra.mxu0 %v2678
    %3569 = vmatprep.subr.bf16.mxu0 %v2683
    %3570 = vmatpush1.bf16.msra.mxu0 %v2682
    %3571 = vmatprep.subr.bf16.mxu0 %v2687
    %3572 = vmatpush1.bf16.msra.mxu0 %v2686
    %3573 = vmatprep.subr.bf16.mxu0 %v2691
    %3574 = vmatpush1.bf16.msra.mxu0 %v2690
    %3575 = vmatprep.subr.bf16.mxu0 %v2695
    %3576 = vmatpush1.bf16.msra.mxu0 %v2694
    %3577 = vmatprep.subr.bf16.mxu0 %v2699
    %3578 = vmatpush1.bf16.msra.mxu0 %v2698
    %3579 = vmatprep.subr.bf16.mxu0 %v2703
    %3580 = vmatpush1.bf16.msra.mxu0 %v2702
    %3581 = vmatprep.subr.bf16.mxu0 0
    %3582 = vmatpush1.bf16.msra.mxu0 0
    %3583 = vmatprep.subr.bf16.mxu0 0
    %3584 = vmatpush1.bf16.msra.mxu0 0
    %3585 = vmatprep.subr.bf16.mxu0 0
    %3586 = vmatpush1.bf16.msra.mxu0 0
    %3587 = vmatprep.subr.bf16.mxu0 0
    %3588 = vmatpush1.bf16.msra.mxu0 0
    %3589 = vmatprep.subr.bf16.mxu0 0
    %3590 = vmatpush1.bf16.msra.mxu0 0
    %3591 = vmatprep.subr.bf16.mxu0 0
    %3592 = vmatpush1.bf16.msra.mxu0 0
    %3593 = vmatprep.subr.bf16.mxu0 0
    %3594 = vmatpush1.bf16.msra.mxu0 0
    %3595 = vmatprep.subr.bf16.mxu0 0
    %3596 = vmatpush1.bf16.msra.mxu0 0
    %3597 = vmatprep.mubr.bf16.mxu0 0
    %3598 = vmatmul.mubr.bf16.gmra.mrb[0].mxu0 %v3563
    %v3599 = vpop.f32.mrb[0].mxu0
    %v3600 = vadd.f32 0.0, %v3599
    %v3601 = vpop.f32.mrb[0].mxu0
    %v3602 = vadd.f32 0.0, %v3601
    %v3603 = vpop.f32.mrb[0].mxu0
    %v3604 = vpop.f32.mrb[0].mxu0
    %3605 = vdwg.mxu0
    %3606 = vmatprep.subr.bf16.mxu0 %v2677
    %3607 = vmatpush1.bf16.msra.mxu0 %v2676
    %3608 = vmatprep.subr.bf16.mxu0 %v2681
    %3609 = vmatpush1.bf16.msra.mxu0 %v2680
    %3610 = vmatprep.subr.bf16.mxu0 %v2685
    %3611 = vmatpush1.bf16.msra.mxu0 %v2684
    %3612 = vmatprep.subr.bf16.mxu0 %v2689
    %3613 = vmatpush1.bf16.msra.mxu0 %v2688
    %3614 = vmatprep.subr.bf16.mxu0 %v2693
    %3615 = vmatpush1.bf16.msra.mxu0 %v2692
    %3616 = vmatprep.subr.bf16.mxu0 %v2697
    %3617 = vmatpush1.bf16.msra.mxu0 %v2696
    %3618 = vmatprep.subr.bf16.mxu0 %v2701
    %3619 = vmatpush1.bf16.msra.mxu0 %v2700
    %3620 = vmatprep.subr.bf16.mxu0 %v2705
    %3621 = vmatpush1.bf16.msra.mxu0 %v2704
    %3622 = vmatprep.subr.bf16.mxu0 0
    %3623 = vmatpush1.bf16.msra.mxu0 0
    %3624 = vmatprep.subr.bf16.mxu0 0
    %3625 = vmatpush1.bf16.msra.mxu0 0
    %3626 = vmatprep.subr.bf16.mxu0 0
    %3627 = vmatpush1.bf16.msra.mxu0 0
    %3628 = vmatprep.subr.bf16.mxu0 0
    %3629 = vmatpush1.bf16.msra.mxu0 0
    %3630 = vmatprep.subr.bf16.mxu0 0
    %3631 = vmatpush1.bf16.msra.mxu0 0
    %3632 = vmatprep.subr.bf16.mxu0 0
    %3633 = vmatpush1.bf16.msra.mxu0 0
    %3634 = vmatprep.subr.bf16.mxu0 0
    %3635 = vmatpush1.bf16.msra.mxu0 0
    %3636 = vmatprep.subr.bf16.mxu0 0
    %3637 = vmatpush1.bf16.msra.mxu0 0
    %3638 = vmatprep.mubr.bf16.mxu0 0
    %3639 = vmatmul.mubr.bf16.gmra.mrb[0].mxu0 %v3563
    %v3640 = vpop.f32.mrb[0].mxu0
    %v3641 = vadd.f32 0.0, %v3640
    %v3642 = vpop.f32.mrb[0].mxu0
    %v3643 = vadd.f32 0.0, %v3642
    %v3644 = vpop.f32.mrb[0].mxu0
    %v3645 = vpop.f32.mrb[0].mxu0
    %3646 = vdwg.mxu0
    %v3651 = vrot.slane %v3600, 4
    %v3652 = vrot.slane %v3602, 4
    %v3653 = vrot.slane %v3641, 4
    %v3654 = vrot.slane %v3643, 4
    %v3659 = vadd.f32 %v2771, %v3651
    %v3660 = vadd.f32 %v2773, %v3652
    %v3661 = vadd.f32 %v2814, %v3653
    %v3662 = vadd.f32 %v2816, %v3654
    %v3663 = vxor.u32 %v3659, 2147483648
    %v3664 = vxor.u32 %v3660, 2147483648
    %v3665 = vxor.u32 %v3661, 2147483648
    %v3666 = vmul.f32 %v3663, 1.442695
    %v3667 = vpow.pop %v3666
    %v3668 = vmul.f32 %v3664, 1.442695
    %v3669 = vpow.pop %v3668
    %v3670 = vmul.f32 %v3665, 1.442695
    %v3671 = vpow.pop %v3670
    %v3672 = vadd.f32 %v3667, 1.0
    %v3673 = vadd.f32 %v3669, 1.0
    %v3674 = vadd.f32 %v3671, 1.0
    %v3675 = vrcp.pop %v3672
    %v3676 = vmul.f32 1.0, %v3675
    %v3677 = vrcp.pop %v3673
    %v3678 = vmul.f32 1.0, %v3677
    %v3679 = vrcp.pop %v3674
    %v3680 = vmul.f32 1.0, %v3679
    %v3681 = vtanh.pop %v3662
    %v3683 = vrot.slane %v3557, 6
    %v3685 = vmul.f32 %v3678, %v3683
    %v3686 = vmul.f32 %v3676, %v3681
    %v3687 = vadd.f32 %v3685, %v3686
    %v3688 = vtanh.pop %v3687
    %v3689 = vmul.f32 %v3680, %v3688
    %3690 = vst [vmem:[#allocation4 + $0x8] sm:$0x30] %v3689
    %v3691 = vpack.c.bf16 %v3689, %v3689
    %v3693 = vrot.slane %v3691, 2
    %3695 = vmatprep.subr.bf16.mxu0 %v2675
    %3696 = vmatpush1.bf16.msra.mxu0 %v2674
    %3697 = vmatprep.subr.bf16.mxu0 %v2679
    %3698 = vmatpush1.bf16.msra.mxu0 %v2678
    %3699 = vmatprep.subr.bf16.mxu0 %v2683
    %3700 = vmatpush1.bf16.msra.mxu0 %v2682
    %3701 = vmatprep.subr.bf16.mxu0 %v2687
    %3702 = vmatpush1.bf16.msra.mxu0 %v2686
    %3703 = vmatprep.subr.bf16.mxu0 %v2691
    %3704 = vmatpush1.bf16.msra.mxu0 %v2690
    %3705 = vmatprep.subr.bf16.mxu0 %v2695
    %3706 = vmatpush1.bf16.msra.mxu0 %v2694
    %3707 = vmatprep.subr.bf16.mxu0 %v2699
    %3708 = vmatpush1.bf16.msra.mxu0 %v2698
    %3709 = vmatprep.subr.bf16.mxu0 %v2703
    %3710 = vmatpush1.bf16.msra.mxu0 %v2702
    %3711 = vmatprep.subr.bf16.mxu0 0
    %3712 = vmatpush1.bf16.msra.mxu0 0
    %3713 = vmatprep.subr.bf16.mxu0 0
    %3714 = vmatpush1.bf16.msra.mxu0 0
    %3715 = vmatprep.subr.bf16.mxu0 0
    %3716 = vmatpush1.bf16.msra.mxu0 0
    %3717 = vmatprep.subr.bf16.mxu0 0
    %3718 = vmatpush1.bf16.msra.mxu0 0
    %3719 = vmatprep.subr.bf16.mxu0 0
    %3720 = vmatpush1.bf16.msra.mxu0 0
    %3721 = vmatprep.subr.bf16.mxu0 0
    %3722 = vmatpush1.bf16.msra.mxu0 0
    %3723 = vmatprep.subr.bf16.mxu0 0
    %3724 = vmatpush1.bf16.msra.mxu0 0
    %3725 = vmatprep.subr.bf16.mxu0 0
    %3726 = vmatpush1.bf16.msra.mxu0 0
    %3727 = vmatprep.mubr.bf16.mxu0 0
    %3728 = vmatmul.mubr.bf16.gmra.mrb[0].mxu0 %v3693
    %v3729 = vpop.f32.mrb[0].mxu0
    %v3730 = vadd.f32 0.0, %v3729
    %v3731 = vpop.f32.mrb[0].mxu0
    %v3732 = vadd.f32 0.0, %v3731
    %v3733 = vpop.f32.mrb[0].mxu0
    %v3734 = vpop.f32.mrb[0].mxu0
    %3735 = vdwg.mxu0
    %3736 = vmatprep.subr.bf16.mxu0 %v2677
    %3737 = vmatpush1.bf16.msra.mxu0 %v2676
    %3738 = vmatprep.subr.bf16.mxu0 %v2681
    %3739 = vmatpush1.bf16.msra.mxu0 %v2680
    %3740 = vmatprep.subr.bf16.mxu0 %v2685
    %3741 = vmatpush1.bf16.msra.mxu0 %v2684
    %3742 = vmatprep.subr.bf16.mxu0 %v2689
    %3743 = vmatpush1.bf16.msra.mxu0 %v2688
    %3744 = vmatprep.subr.bf16.mxu0 %v2693
    %3745 = vmatpush1.bf16.msra.mxu0 %v2692
    %3746 = vmatprep.subr.bf16.mxu0 %v2697
    %3747 = vmatpush1.bf16.msra.mxu0 %v2696
    %3748 = vmatprep.subr.bf16.mxu0 %v2701
    %3749 = vmatpush1.bf16.msra.mxu0 %v2700
    %3750 = vmatprep.subr.bf16.mxu0 %v2705
    %3751 = vmatpush1.bf16.msra.mxu0 %v2704
    %3752 = vmatprep.subr.bf16.mxu0 0
    %3753 = vmatpush1.bf16.msra.mxu0 0
    %3754 = vmatprep.subr.bf16.mxu0 0
    %3755 = vmatpush1.bf16.msra.mxu0 0
    %3756 = vmatprep.subr.bf16.mxu0 0
    %3757 = vmatpush1.bf16.msra.mxu0 0
    %3758 = vmatprep.subr.bf16.mxu0 0
    %3759 = vmatpush1.bf16.msra.mxu0 0
    %3760 = vmatprep.subr.bf16.mxu0 0
    %3761 = vmatpush1.bf16.msra.mxu0 0
    %3762 = vmatprep.subr.bf16.mxu0 0
    %3763 = vmatpush1.bf16.msra.mxu0 0
    %3764 = vmatprep.subr.bf16.mxu0 0
    %3765 = vmatpush1.bf16.msra.mxu0 0
    %3766 = vmatprep.subr.bf16.mxu0 0
    %3767 = vmatpush1.bf16.msra.mxu0 0
    %3768 = vmatprep.mubr.bf16.mxu0 0
    %3769 = vmatmul.mubr.bf16.gmra.mrb[0].mxu0 %v3693
    %v3770 = vpop.f32.mrb[0].mxu0
    %v3771 = vadd.f32 0.0, %v3770
    %v3772 = vpop.f32.mrb[0].mxu0
    %v3773 = vadd.f32 0.0, %v3772
    %v3774 = vpop.f32.mrb[0].mxu0
    %v3775 = vpop.f32.mrb[0].mxu0
    %3776 = vdwg.mxu0
    %v3781 = vrot.slane %v3730, 2
    %v3782 = vrot.slane %v3732, 2
    %v3783 = vrot.slane %v3771, 2
    %v3784 = vrot.slane %v3773, 2
    %v3789 = vadd.f32 %v2771, %v3781
    %v3790 = vadd.f32 %v2773, %v3782
    %v3791 = vadd.f32 %v2814, %v3783
    %v3792 = vadd.f32 %v2816, %v3784
    %v3793 = vxor.u32 %v3789, 2147483648
    %v3794 = vxor.u32 %v3790, 2147483648
    %v3795 = vxor.u32 %v3791, 2147483648
    %v3796 = vmul.f32 %v3793, 1.442695
    %v3797 = vpow.pop %v3796
    %v3798 = vmul.f32 %v3794, 1.442695
    %v3799 = vpow.pop %v3798
    %v3800 = vmul.f32 %v3795, 1.442695
    %v3801 = vpow.pop %v3800
    %v3802 = vadd.f32 %v3797, 1.0
    %v3803 = vadd.f32 %v3799, 1.0
    %v3804 = vadd.f32 %v3801, 1.0
    %v3805 = vrcp.pop %v3802
    %v3806 = vmul.f32 1.0, %v3805
    %v3807 = vrcp.pop %v3803
    %v3808 = vmul.f32 1.0, %v3807
    %v3809 = vrcp.pop %v3804
    %v3810 = vmul.f32 1.0, %v3809
    %v3811 = vtanh.pop %v3792
    %v3813 = vrot.slane %v3687, 6
    %v3815 = vmul.f32 %v3808, %v3813
    %v3816 = vmul.f32 %v3806, %v3811
    %v3817 = vadd.f32 %v3815, %v3816
    %v3818 = vtanh.pop %v3817
    %v3819 = vmul.f32 %v3810, %v3818
    %3820 = vst [vmem:[#allocation4 + $0x8] sm:$0xc0] %v3819
    %s3821 = sshll.u32 %s171, 4
    %3822 = dma.done %s176, %s3821
    %s3823 = scalar_lea.hbm %s1, 32768
    %s3825 = sshll.u32 1, 14
    %s3826 = sxor.u32 4294967295, %s3825
    %s3828 = sadd.s32 2, %s139
    %s3830 = sshll.u32 7, 26
    %s3831 = sxor.u32 4294967295, %s3830
    %s3832 = sand.u32 0, %s3831
    %s3833 = sshll.u32 %s3828, 26
    %s3834 = sor.u32 %s3832, %s3833
    %s3835 = sshll.u32 [#allocation2], 4
    %s3836 = int_to_ptr.vmem [resolvable:$true] %s3835
    %3839 = sst [smem:[#allocation30]] 512
    %s3840 = scalar_lea.smem [#allocation30], 1
    %3841 = sst [smem:[%s3840]] 512
    %s3842 = scalar_lea.smem [#allocation30], 2
    %3843 = sst [smem:[%s3842]] 4
    %s3844 = scalar_lea.smem [#allocation30], 3
    %3845 = sst [smem:[%s3844]] 64
    %s3846 = scalar_lea.smem [#allocation30], 4
    %3847 = sst [smem:[%s3846]] 128
    %s3848 = scalar_lea.smem [#allocation30], 5
    %3849 = sst [smem:[%s3848]] 2
    %s3850 = scalar_lea.smem [#allocation30], 6
    %3851 = sst [smem:[%s3850]] 256
    %s3852 = scalar_lea.smem [#allocation30], 7
    %3853 = sst [smem:[%s3852]] 64
    %s3854 = scalar_lea.smem [#allocation30], 8
    %3855 = sst [smem:[%s3854]] 4
    %3857 = dma.general %s3823, 8192, %s3836, [#allocation3], [#allocation29], [#allocation30], %s3834, 0
    %v3858 = vld [vmem:[%s175] sm:$0xff]
    %v3859 = vld [vmem:[%s175 + $0x8] sm:$0xff]
    %v3860 = vld [vmem:[%s175 + $0x10] sm:$0xff]
    %v3861 = vld [vmem:[%s175 + $0x18] sm:$0xff]
    %v3862 = vld [vmem:[%s175 + $0x20] sm:$0xff]
    %v3863 = vld [vmem:[%s175 + $0x28] sm:$0xff]
    %v3864 = vld [vmem:[%s175 + $0x30] sm:$0xff]
    %v3865 = vld [vmem:[%s175 + $0x38] sm:$0xff]
    %v3866 = vld [vmem:[%s175 + $0x40] sm:$0xff]
    %v3867 = vld [vmem:[%s175 + $0x48] sm:$0xff]
    %v3868 = vld [vmem:[%s175 + $0x50] sm:$0xff]
    %v3869 = vld [vmem:[%s175 + $0x58] sm:$0xff]
    %v3870 = vld [vmem:[%s175 + $0x60] sm:$0xff]
    %v3871 = vld [vmem:[%s175 + $0x68] sm:$0xff]
    %v3872 = vld [vmem:[%s175 + $0x70] sm:$0xff]
    %v3873 = vld [vmem:[%s175 + $0x78] sm:$0xff]
    %v3874 = vld [vmem:[%s175 + $0x80] sm:$0xff]
    %v3875 = vld [vmem:[%s175 + $0x88] sm:$0xff]
    %v3876 = vld [vmem:[%s175 + $0x90] sm:$0xff]
    %v3877 = vld [vmem:[%s175 + $0x98] sm:$0xff]
    %v3878 = vld [vmem:[%s175 + $0xa0] sm:$0xff]
    %v3879 = vld [vmem:[%s175 + $0xa8] sm:$0xff]
    %v3880 = vld [vmem:[%s175 + $0xb0] sm:$0xff]
    %v3881 = vld [vmem:[%s175 + $0xb8] sm:$0xff]
    %v3882 = vld [vmem:[%s175 + $0xc0] sm:$0xff]
    %v3883 = vld [vmem:[%s175 + $0xc8] sm:$0xff]
    %v3884 = vld [vmem:[%s175 + $0xd0] sm:$0xff]
    %v3885 = vld [vmem:[%s175 + $0xd8] sm:$0xff]
    %v3886 = vld [vmem:[%s175 + $0xe0] sm:$0xff]
    %v3887 = vld [vmem:[%s175 + $0xe8] sm:$0xff]
    %v3888 = vld [vmem:[%s175 + $0xf0] sm:$0xff]
    %v3889 = vld [vmem:[%s175 + $0xf8] sm:$0xff]
    %v3890 = vld [vmem:[%s175 + $0x100] sm:$0xff]
    %v3891 = vld [vmem:[%s175 + $0x108] sm:$0xff]
    %v3892 = vld [vmem:[%s175 + $0x110] sm:$0xff]
    %v3893 = vld [vmem:[%s175 + $0x118] sm:$0xff]
    %v3894 = vld [vmem:[%s175 + $0x120] sm:$0xff]
    %v3895 = vld [vmem:[%s175 + $0x128] sm:$0xff]
    %v3896 = vld [vmem:[%s175 + $0x130] sm:$0xff]
    %v3897 = vld [vmem:[%s175 + $0x138] sm:$0xff]
    %v3898 = vld [vmem:[%s175 + $0x140] sm:$0xff]
    %v3899 = vld [vmem:[%s175 + $0x148] sm:$0xff]
    %v3900 = vld [vmem:[%s175 + $0x150] sm:$0xff]
    %v3901 = vld [vmem:[%s175 + $0x158] sm:$0xff]
    %v3902 = vld [vmem:[%s175 + $0x160] sm:$0xff]
    %v3903 = vld [vmem:[%s175 + $0x168] sm:$0xff]
    %v3904 = vld [vmem:[%s175 + $0x170] sm:$0xff]
    %v3905 = vld [vmem:[%s175 + $0x178] sm:$0xff]
    %v3906 = vld [vmem:[%s175 + $0x180] sm:$0xff]
    %v3907 = vld [vmem:[%s175 + $0x188] sm:$0xff]
    %v3908 = vld [vmem:[%s175 + $0x190] sm:$0xff]
    %v3909 = vld [vmem:[%s175 + $0x198] sm:$0xff]
    %v3910 = vld [vmem:[%s175 + $0x1a0] sm:$0xff]
    %v3911 = vld [vmem:[%s175 + $0x1a8] sm:$0xff]
    %v3912 = vld [vmem:[%s175 + $0x1b0] sm:$0xff]
    %v3913 = vld [vmem:[%s175 + $0x1b8] sm:$0xff]
    %v3914 = vld [vmem:[%s175 + $0x1c0] sm:$0xff]
    %v3915 = vld [vmem:[%s175 + $0x1c8] sm:$0xff]
    %v3916 = vld [vmem:[%s175 + $0x1d0] sm:$0xff]
    %v3917 = vld [vmem:[%s175 + $0x1d8] sm:$0xff]
    %v3918 = vld [vmem:[%s175 + $0x1e0] sm:$0xff]
    %v3919 = vld [vmem:[%s175 + $0x1e8] sm:$0xff]
    %v3920 = vld [vmem:[%s175 + $0x1f0] sm:$0xff]
    %v3921 = vld [vmem:[%s175 + $0x1f8] sm:$0xff]
    %v3922 = vld [vmem:[#allocation4] sm:$0xff]
    %v3923 = vld [vmem:[#allocation4 + $0x8] sm:$0xff]
    %v3924 = vpack.c.bf16 %v3923, %v3922
    %s3925 = scalar_lea.vmem [#allocation9], 12
    %v3926 = vld [vmem:[%s3925] sm:$0xf]
    %v3928 = vlaneseq
    %v3929 = vshrl.u32 %v3928, 7
    %v3930 = vsub.s32 0, %v3929
    %v3931 = vrot.slane %v3926, %v3930
    %v3932 = vlaneseq
    %v3933 = vshrl.u32 %v3932, 7
    %v3934 = vsub.s32 1, %v3933
    %v3935 = vrot.slane %v3926, %v3934
    %v3936 = vlaneseq
    %v3937 = vshrl.u32 %v3936, 7
    %v3938 = vsub.s32 2, %v3937
    %v3939 = vrot.slane %v3926, %v3938
    %v3940 = vlaneseq
    %v3941 = vshrl.u32 %v3940, 7
    %v3942 = vsub.s32 3, %v3941
    %v3943 = vrot.slane %v3926, %v3942
    %3948 = vmatprep.subr.bf16.mxu0 %v3859
    %3949 = vmatpush1.bf16.msra.mxu0 %v3858
    %3950 = vmatprep.subr.bf16.mxu0 %v3863
    %3951 = vmatpush1.bf16.msra.mxu0 %v3862
    %3952 = vmatprep.subr.bf16.mxu0 %v3867
    %3953 = vmatpush1.bf16.msra.mxu0 %v3866
    %3954 = vmatprep.subr.bf16.mxu0 %v3871
    %3955 = vmatpush1.bf16.msra.mxu0 %v3870
    %3956 = vmatprep.subr.bf16.mxu0 %v3875
    %3957 = vmatpush1.bf16.msra.mxu0 %v3874
    %3958 = vmatprep.subr.bf16.mxu0 %v3879
    %3959 = vmatpush1.bf16.msra.mxu0 %v3878
    %3960 = vmatprep.subr.bf16.mxu0 %v3883
    %3961 = vmatpush1.bf16.msra.mxu0 %v3882
    %3962 = vmatprep.subr.bf16.mxu0 %v3887
    %3963 = vmatpush1.bf16.msra.mxu0 %v3886
    %3964 = vmatprep.subr.bf16.mxu0 0
    %3965 = vmatpush1.bf16.msra.mxu0 0
    %3966 = vmatprep.subr.bf16.mxu0 0
    %3967 = vmatpush1.bf16.msra.mxu0 0
    %3968 = vmatprep.subr.bf16.mxu0 0
    %3969 = vmatpush1.bf16.msra.mxu0 0
    %3970 = vmatprep.subr.bf16.mxu0 0
    %3971 = vmatpush1.bf16.msra.mxu0 0
    %3972 = vmatprep.subr.bf16.mxu0 0
    %3973 = vmatpush1.bf16.msra.mxu0 0
    %3974 = vmatprep.subr.bf16.mxu0 0
    %3975 = vmatpush1.bf16.msra.mxu0 0
    %3976 = vmatprep.subr.bf16.mxu0 0
    %3977 = vmatpush1.bf16.msra.mxu0 0
    %3978 = vmatprep.subr.bf16.mxu0 0
    %3979 = vmatpush1.bf16.msra.mxu0 0
    %3980 = vmatprep.mubr.bf16.mxu0 0
    %3981 = vmatmul.mubr.bf16.gmra.mrb[0].mxu0 %v3924
    %v3982 = vpop.f32.mrb[0].mxu0
    %v3983 = vadd.f32 %v3931, %v3982
    %v3984 = vpop.f32.mrb[0].mxu0
    %v3985 = vadd.f32 %v3935, %v3984
    %v3986 = vpop.f32.mrb[0].mxu0
    %v3987 = vadd.f32 %v3931, %v3986
    %v3988 = vpop.f32.mrb[0].mxu0
    %v3989 = vadd.f32 %v3935, %v3988
    %3990 = vdwg.mxu0
    %3991 = vmatprep.subr.bf16.mxu0 %v3861
    %3992 = vmatpush1.bf16.msra.mxu0 %v3860
    %3993 = vmatprep.subr.bf16.mxu0 %v3865
    %3994 = vmatpush1.bf16.msra.mxu0 %v3864
    %3995 = vmatprep.subr.bf16.mxu0 %v3869
    %3996 = vmatpush1.bf16.msra.mxu0 %v3868
    %3997 = vmatprep.subr.bf16.mxu0 %v3873
    %3998 = vmatpush1.bf16.msra.mxu0 %v3872
    %3999 = vmatprep.subr.bf16.mxu0 %v3877
    %4000 = vmatpush1.bf16.msra.mxu0 %v3876
    %4001 = vmatprep.subr.bf16.mxu0 %v3881
    %4002 = vmatpush1.bf16.msra.mxu0 %v3880
    %4003 = vmatprep.subr.bf16.mxu0 %v3885
    %4004 = vmatpush1.bf16.msra.mxu0 %v3884
    %4005 = vmatprep.subr.bf16.mxu0 %v3889
    %4006 = vmatpush1.bf16.msra.mxu0 %v3888
    %4007 = vmatprep.subr.bf16.mxu0 0
    %4008 = vmatpush1.bf16.msra.mxu0 0
    %4009 = vmatprep.subr.bf16.mxu0 0
    %4010 = vmatpush1.bf16.msra.mxu0 0
    %4011 = vmatprep.subr.bf16.mxu0 0
    %4012 = vmatpush1.bf16.msra.mxu0 0
    %4013 = vmatprep.subr.bf16.mxu0 0
    %4014 = vmatpush1.bf16.msra.mxu0 0
    %4015 = vmatprep.subr.bf16.mxu0 0
    %4016 = vmatpush1.bf16.msra.mxu0 0
    %4017 = vmatprep.subr.bf16.mxu0 0
    %4018 = vmatpush1.bf16.msra.mxu0 0
    %4019 = vmatprep.subr.bf16.mxu0 0
    %4020 = vmatpush1.bf16.msra.mxu0 0
    %4021 = vmatprep.subr.bf16.mxu0 0
    %4022 = vmatpush1.bf16.msra.mxu0 0
    %4023 = vmatprep.mubr.bf16.mxu0 0
    %4024 = vmatmul.mubr.bf16.gmra.mrb[0].mxu0 %v3924
    %v4025 = vpop.f32.mrb[0].mxu0
    %v4026 = vadd.f32 %v3939, %v4025
    %v4027 = vpop.f32.mrb[0].mxu0
    %v4028 = vadd.f32 %v3943, %v4027
    %v4029 = vpop.f32.mrb[0].mxu0
    %v4030 = vadd.f32 %v3939, %v4029
    %v4031 = vpop.f32.mrb[0].mxu0
    %v4032 = vadd.f32 %v3943, %v4031
    %4033 = vdwg.mxu0
    %4034 = vmatprep.subr.bf16.mxu0 %v3891
    %4035 = vmatpush1.bf16.msra.mxu0 %v3890
    %4036 = vmatprep.subr.bf16.mxu0 %v3895
    %4037 = vmatpush1.bf16.msra.mxu0 %v3894
    %4038 = vmatprep.subr.bf16.mxu0 %v3899
    %4039 = vmatpush1.bf16.msra.mxu0 %v3898
    %4040 = vmatprep.subr.bf16.mxu0 %v3903
    %4041 = vmatpush1.bf16.msra.mxu0 %v3902
    %4042 = vmatprep.subr.bf16.mxu0 %v3907
    %4043 = vmatpush1.bf16.msra.mxu0 %v3906
    %4044 = vmatprep.subr.bf16.mxu0 %v3911
    %4045 = vmatpush1.bf16.msra.mxu0 %v3910
    %4046 = vmatprep.subr.bf16.mxu0 %v3915
    %4047 = vmatpush1.bf16.msra.mxu0 %v3914
    %4048 = vmatprep.subr.bf16.mxu0 %v3919
    %4049 = vmatpush1.bf16.msra.mxu0 %v3918
    %4050 = vmatprep.subr.bf16.mxu0 0
    %4051 = vmatpush1.bf16.msra.mxu0 0
    %4052 = vmatprep.subr.bf16.mxu0 0
    %4053 = vmatpush1.bf16.msra.mxu0 0
    %4054 = vmatprep.subr.bf16.mxu0 0
    %4055 = vmatpush1.bf16.msra.mxu0 0
    %4056 = vmatprep.subr.bf16.mxu0 0
    %4057 = vmatpush1.bf16.msra.mxu0 0
    %4058 = vmatprep.subr.bf16.mxu0 0
    %4059 = vmatpush1.bf16.msra.mxu0 0
    %4060 = vmatprep.subr.bf16.mxu0 0
    %4061 = vmatpush1.bf16.msra.mxu0 0
    %4062 = vmatprep.subr.bf16.mxu0 0
    %4063 = vmatpush1.bf16.msra.mxu0 0
    %4064 = vmatprep.subr.bf16.mxu0 0
    %4065 = vmatpush1.bf16.msra.mxu0 0
    %4066 = vmatprep.mubr.bf16.mxu0 0
    %4067 = vmatmul.mubr.bf16.gmra.mrb[0].mxu0 0
    %v4068 = vpop.f32.mrb[0].mxu0
    %v4069 = vadd.f32 0.0, %v4068
    %v4070 = vpop.f32.mrb[0].mxu0
    %v4071 = vadd.f32 0.0, %v4070
    %v4072 = vpop.f32.mrb[0].mxu0
    %v4073 = vpop.f32.mrb[0].mxu0
    %4074 = vdwg.mxu0
    %4075 = vmatprep.subr.bf16.mxu0 %v3893
    %4076 = vmatpush1.bf16.msra.mxu0 %v3892
    %4077 = vmatprep.subr.bf16.mxu0 %v3897
    %4078 = vmatpush1.bf16.msra.mxu0 %v3896
    %4079 = vmatprep.subr.bf16.mxu0 %v3901
    %4080 = vmatpush1.bf16.msra.mxu0 %v3900
    %4081 = vmatprep.subr.bf16.mxu0 %v3905
    %4082 = vmatpush1.bf16.msra.mxu0 %v3904
    %4083 = vmatprep.subr.bf16.mxu0 %v3909
    %4084 = vmatpush1.bf16.msra.mxu0 %v3908
    %4085 = vmatprep.subr.bf16.mxu0 %v3913
    %4086 = vmatpush1.bf16.msra.mxu0 %v3912
    %4087 = vmatprep.subr.bf16.mxu0 %v3917
    %4088 = vmatpush1.bf16.msra.mxu0 %v3916
    %4089 = vmatprep.subr.bf16.mxu0 %v3921
    %4090 = vmatpush1.bf16.msra.mxu0 %v3920
    %4091 = vmatprep.subr.bf16.mxu0 0
    %4092 = vmatpush1.bf16.msra.mxu0 0
    %4093 = vmatprep.subr.bf16.mxu0 0
    %4094 = vmatpush1.bf16.msra.mxu0 0
    %4095 = vmatprep.subr.bf16.mxu0 0
    %4096 = vmatpush1.bf16.msra.mxu0 0
    %4097 = vmatprep.subr.bf16.mxu0 0
    %4098 = vmatpush1.bf16.msra.mxu0 0
    %4099 = vmatprep.subr.bf16.mxu0 0
    %4100 = vmatpush1.bf16.msra.mxu0 0
    %4101 = vmatprep.subr.bf16.mxu0 0
    %4102 = vmatpush1.bf16.msra.mxu0 0
    %4103 = vmatprep.subr.bf16.mxu0 0
    %4104 = vmatpush1.bf16.msra.mxu0 0
    %4105 = vmatprep.subr.bf16.mxu0 0
    %4106 = vmatpush1.bf16.msra.mxu0 0
    %4107 = vmatprep.mubr.bf16.mxu0 0
    %4108 = vmatmul.mubr.bf16.gmra.mrb[0].mxu0 0
    %v4109 = vpop.f32.mrb[0].mxu0
    %v4110 = vadd.f32 0.0, %v4109
    %v4111 = vpop.f32.mrb[0].mxu0
    %v4112 = vadd.f32 0.0, %v4111
    %v4113 = vpop.f32.mrb[0].mxu0
    %v4114 = vpop.f32.mrb[0].mxu0
    %4115 = vdwg.mxu0
    %v4116 = vadd.f32 %v3983, %v4069
    %v4117 = vadd.f32 %v3985, %v4071
    %v4118 = vadd.f32 %v4026, %v4110
    %v4119 = vadd.f32 %v4028, %v4112
    %v4120 = vxor.u32 %v4116, 2147483648
    %v4121 = vxor.u32 %v4117, 2147483648
    %v4122 = vxor.u32 %v4118, 2147483648
    %v4123 = vmul.f32 %v4120, 1.442695
    %v4124 = vpow.pop %v4123
    %v4125 = vmul.f32 %v4121, 1.442695
    %v4126 = vpow.pop %v4125
    %v4127 = vmul.f32 %v4122, 1.442695
    %v4128 = vpow.pop %v4127
    %v4129 = vadd.f32 %v4124, 1.0
    %v4130 = vadd.f32 %v4126, 1.0
    %v4131 = vadd.f32 %v4128, 1.0
    %v4132 = vrcp.pop %v4129
    %v4133 = vmul.f32 1.0, %v4132
    %v4134 = vrcp.pop %v4130
    %v4135 = vmul.f32 1.0, %v4134
    %v4136 = vrcp.pop %v4131
    %v4137 = vmul.f32 1.0, %v4136
    %v4138 = vtanh.pop %v4119
    %v4139 = vmul.f32 %v4135, 0.0
    %v4140 = vmul.f32 %v4133, %v4138
    %v4141 = vadd.f32 %v4139, %v4140
    %v4142 = vtanh.pop %v4141
    %v4143 = vmul.f32 %v4137, %v4142
    %4144 = vst [vmem:[#allocation4] sm:$0x3] %v4143
    %v4145 = vpack.c.bf16 %v4143, %v4143
    %4146 = vmatprep.subr.bf16.mxu0 %v3891
    %4147 = vmatpush1.bf16.msra.mxu0 %v3890
    %4148 = vmatprep.subr.bf16.mxu0 %v3895
    %4149 = vmatpush1.bf16.msra.mxu0 %v3894
    %4150 = vmatprep.subr.bf16.mxu0 %v3899
    %4151 = vmatpush1.bf16.msra.mxu0 %v3898
    %4152 = vmatprep.subr.bf16.mxu0 %v3903
    %4153 = vmatpush1.bf16.msra.mxu0 %v3902
    %4154 = vmatprep.subr.bf16.mxu0 %v3907
    %4155 = vmatpush1.bf16.msra.mxu0 %v3906
    %4156 = vmatprep.subr.bf16.mxu0 %v3911
    %4157 = vmatpush1.bf16.msra.mxu0 %v3910
    %4158 = vmatprep.subr.bf16.mxu0 %v3915
    %4159 = vmatpush1.bf16.msra.mxu0 %v3914
    %4160 = vmatprep.subr.bf16.mxu0 %v3919
    %4161 = vmatpush1.bf16.msra.mxu0 %v3918
    %4162 = vmatprep.subr.bf16.mxu0 0
    %4163 = vmatpush1.bf16.msra.mxu0 0
    %4164 = vmatprep.subr.bf16.mxu0 0
    %4165 = vmatpush1.bf16.msra.mxu0 0
    %4166 = vmatprep.subr.bf16.mxu0 0
    %4167 = vmatpush1.bf16.msra.mxu0 0
    %4168 = vmatprep.subr.bf16.mxu0 0
    %4169 = vmatpush1.bf16.msra.mxu0 0
    %4170 = vmatprep.subr.bf16.mxu0 0
    %4171 = vmatpush1.bf16.msra.mxu0 0
    %4172 = vmatprep.subr.bf16.mxu0 0
    %4173 = vmatpush1.bf16.msra.mxu0 0
    %4174 = vmatprep.subr.bf16.mxu0 0
    %4175 = vmatpush1.bf16.msra.mxu0 0
    %4176 = vmatprep.subr.bf16.mxu0 0
    %4177 = vmatpush1.bf16.msra.mxu0 0
    %4178 = vmatprep.mubr.bf16.mxu0 0
    %4179 = vmatmul.mubr.bf16.gmra.mrb[0].mxu0 %v4145
    %v4180 = vpop.f32.mrb[0].mxu0
    %v4181 = vadd.f32 0.0, %v4180
    %v4182 = vpop.f32.mrb[0].mxu0
    %v4183 = vadd.f32 0.0, %v4182
    %v4184 = vpop.f32.mrb[0].mxu0
    %v4185 = vpop.f32.mrb[0].mxu0
    %4186 = vdwg.mxu0
    %4187 = vmatprep.subr.bf16.mxu0 %v3893
    %4188 = vmatpush1.bf16.msra.mxu0 %v3892
    %4189 = vmatprep.subr.bf16.mxu0 %v3897
    %4190 = vmatpush1.bf16.msra.mxu0 %v3896
    %4191 = vmatprep.subr.bf16.mxu0 %v3901
    %4192 = vmatpush1.bf16.msra.mxu0 %v3900
    %4193 = vmatprep.subr.bf16.mxu0 %v3905
    %4194 = vmatpush1.bf16.msra.mxu0 %v3904
    %4195 = vmatprep.subr.bf16.mxu0 %v3909
    %4196 = vmatpush1.bf16.msra.mxu0 %v3908
    %4197 = vmatprep.subr.bf16.mxu0 %v3913
    %4198 = vmatpush1.bf16.msra.mxu0 %v3912
    %4199 = vmatprep.subr.bf16.mxu0 %v3917
    %4200 = vmatpush1.bf16.msra.mxu0 %v3916
    %4201 = vmatprep.subr.bf16.mxu0 %v3921
    %4202 = vmatpush1.bf16.msra.mxu0 %v3920
    %4203 = vmatprep.subr.bf16.mxu0 0
    %4204 = vmatpush1.bf16.msra.mxu0 0
    %4205 = vmatprep.subr.bf16.mxu0 0
    %4206 = vmatpush1.bf16.msra.mxu0 0
    %4207 = vmatprep.subr.bf16.mxu0 0
    %4208 = vmatpush1.bf16.msra.mxu0 0
    %4209 = vmatprep.subr.bf16.mxu0 0
    %4210 = vmatpush1.bf16.msra.mxu0 0
    %4211 = vmatprep.subr.bf16.mxu0 0
    %4212 = vmatpush1.bf16.msra.mxu0 0
    %4213 = vmatprep.subr.bf16.mxu0 0
    %4214 = vmatpush1.bf16.msra.mxu0 0
    %4215 = vmatprep.subr.bf16.mxu0 0
    %4216 = vmatpush1.bf16.msra.mxu0 0
    %4217 = vmatprep.subr.bf16.mxu0 0
    %4218 = vmatpush1.bf16.msra.mxu0 0
    %4219 = vmatprep.mubr.bf16.mxu0 0
    %4220 = vmatmul.mubr.bf16.gmra.mrb[0].mxu0 %v4145
    %v4221 = vpop.f32.mrb[0].mxu0
    %v4222 = vadd.f32 0.0, %v4221
    %v4223 = vpop.f32.mrb[0].mxu0
    %v4224 = vadd.f32 0.0, %v4223
    %v4225 = vpop.f32.mrb[0].mxu0
    %v4226 = vpop.f32.mrb[0].mxu0
    %4227 = vdwg.mxu0
    %v4232 = vrot.slane %v4181, 6
    %v4233 = vrot.slane %v4183, 6
    %v4234 = vrot.slane %v4222, 6
    %v4235 = vrot.slane %v4224, 6
    %v4240 = vadd.f32 %v3983, %v4232
    %v4241 = vadd.f32 %v3985, %v4233
    %v4242 = vadd.f32 %v4026, %v4234
    %v4243 = vadd.f32 %v4028, %v4235
    %v4244 = vxor.u32 %v4240, 2147483648
    %v4245 = vxor.u32 %v4241, 2147483648
    %v4246 = vxor.u32 %v4242, 2147483648
    %v4247 = vmul.f32 %v4244, 1.442695
    %v4248 = vpow.pop %v4247
    %v4249 = vmul.f32 %v4245, 1.442695
    %v4250 = vpow.pop %v4249
    %v4251 = vmul.f32 %v4246, 1.442695
    %v4252 = vpow.pop %v4251
    %v4253 = vadd.f32 %v4248, 1.0
    %v4254 = vadd.f32 %v4250, 1.0
    %v4255 = vadd.f32 %v4252, 1.0
    %v4256 = vrcp.pop %v4253
    %v4257 = vmul.f32 1.0, %v4256
    %v4258 = vrcp.pop %v4254
    %v4259 = vmul.f32 1.0, %v4258
    %v4260 = vrcp.pop %v4255
    %v4261 = vmul.f32 1.0, %v4260
    %v4262 = vtanh.pop %v4243
    %v4264 = vrot.slane %v4141, 6
    %v4266 = vmul.f32 %v4259, %v4264
    %v4267 = vmul.f32 %v4257, %v4262
    %v4268 = vadd.f32 %v4266, %v4267
    %v4269 = vtanh.pop %v4268
    %v4270 = vmul.f32 %v4261, %v4269
    %4271 = vst [vmem:[#allocation4] sm:$0xc] %v4270
    %v4272 = vpack.c.bf16 %v4270, %v4270
    %v4274 = vrot.slane %v4272, 1
    %4276 = vmatprep.subr.bf16.mxu0 %v3891
    %4277 = vmatpush1.bf16.msra.mxu0 %v3890
    %4278 = vmatprep.subr.bf16.mxu0 %v3895
    %4279 = vmatpush1.bf16.msra.mxu0 %v3894
    %4280 = vmatprep.subr.bf16.mxu0 %v3899
    %4281 = vmatpush1.bf16.msra.mxu0 %v3898
    %4282 = vmatprep.subr.bf16.mxu0 %v3903
    %4283 = vmatpush1.bf16.msra.mxu0 %v3902
    %4284 = vmatprep.subr.bf16.mxu0 %v3907
    %4285 = vmatpush1.bf16.msra.mxu0 %v3906
    %4286 = vmatprep.subr.bf16.mxu0 %v3911
    %4287 = vmatpush1.bf16.msra.mxu0 %v3910
    %4288 = vmatprep.subr.bf16.mxu0 %v3915
    %4289 = vmatpush1.bf16.msra.mxu0 %v3914
    %4290 = vmatprep.subr.bf16.mxu0 %v3919
    %4291 = vmatpush1.bf16.msra.mxu0 %v3918
    %4292 = vmatprep.subr.bf16.mxu0 0
    %4293 = vmatpush1.bf16.msra.mxu0 0
    %4294 = vmatprep.subr.bf16.mxu0 0
    %4295 = vmatpush1.bf16.msra.mxu0 0
    %4296 = vmatprep.subr.bf16.mxu0 0
    %4297 = vmatpush1.bf16.msra.mxu0 0
    %4298 = vmatprep.subr.bf16.mxu0 0
    %4299 = vmatpush1.bf16.msra.mxu0 0
    %4300 = vmatprep.subr.bf16.mxu0 0
    %4301 = vmatpush1.bf16.msra.mxu0 0
    %4302 = vmatprep.subr.bf16.mxu0 0
    %4303 = vmatpush1.bf16.msra.mxu0 0
    %4304 = vmatprep.subr.bf16.mxu0 0
    %4305 = vmatpush1.bf16.msra.mxu0 0
    %4306 = vmatprep.subr.bf16.mxu0 0
    %4307 = vmatpush1.bf16.msra.mxu0 0
    %4308 = vmatprep.mubr.bf16.mxu0 0
    %4309 = vmatmul.mubr.bf16.gmra.mrb[0].mxu0 %v4274
    %v4310 = vpop.f32.mrb[0].mxu0
    %v4311 = vadd.f32 0.0, %v4310
    %v4312 = vpop.f32.mrb[0].mxu0
    %v4313 = vadd.f32 0.0, %v4312
    %v4314 = vpop.f32.mrb[0].mxu0
    %v4315 = vpop.f32.mrb[0].mxu0
    %4316 = vdwg.mxu0
    %4317 = vmatprep.subr.bf16.mxu0 %v3893
    %4318 = vmatpush1.bf16.msra.mxu0 %v3892
    %4319 = vmatprep.subr.bf16.mxu0 %v3897
    %4320 = vmatpush1.bf16.msra.mxu0 %v3896
    %4321 = vmatprep.subr.bf16.mxu0 %v3901
    %4322 = vmatpush1.bf16.msra.mxu0 %v3900
    %4323 = vmatprep.subr.bf16.mxu0 %v3905
    %4324 = vmatpush1.bf16.msra.mxu0 %v3904
    %4325 = vmatprep.subr.bf16.mxu0 %v3909
    %4326 = vmatpush1.bf16.msra.mxu0 %v3908
    %4327 = vmatprep.subr.bf16.mxu0 %v3913
    %4328 = vmatpush1.bf16.msra.mxu0 %v3912
    %4329 = vmatprep.subr.bf16.mxu0 %v3917
    %4330 = vmatpush1.bf16.msra.mxu0 %v3916
    %4331 = vmatprep.subr.bf16.mxu0 %v3921
    %4332 = vmatpush1.bf16.msra.mxu0 %v3920
    %4333 = vmatprep.subr.bf16.mxu0 0
    %4334 = vmatpush1.bf16.msra.mxu0 0
    %4335 = vmatprep.subr.bf16.mxu0 0
    %4336 = vmatpush1.bf16.msra.mxu0 0
    %4337 = vmatprep.subr.bf16.mxu0 0
    %4338 = vmatpush1.bf16.msra.mxu0 0
    %4339 = vmatprep.subr.bf16.mxu0 0
    %4340 = vmatpush1.bf16.msra.mxu0 0
    %4341 = vmatprep.subr.bf16.mxu0 0
    %4342 = vmatpush1.bf16.msra.mxu0 0
    %4343 = vmatprep.subr.bf16.mxu0 0
    %4344 = vmatpush1.bf16.msra.mxu0 0
    %4345 = vmatprep.subr.bf16.mxu0 0
    %4346 = vmatpush1.bf16.msra.mxu0 0
    %4347 = vmatprep.subr.bf16.mxu0 0
    %4348 = vmatpush1.bf16.msra.mxu0 0
    %4349 = vmatprep.mubr.bf16.mxu0 0
    %4350 = vmatmul.mubr.bf16.gmra.mrb[0].mxu0 %v4274
    %v4351 = vpop.f32.mrb[0].mxu0
    %v4352 = vadd.f32 0.0, %v4351
    %v4353 = vpop.f32.mrb[0].mxu0
    %v4354 = vadd.f32 0.0, %v4353
    %v4355 = vpop.f32.mrb[0].mxu0
    %v4356 = vpop.f32.mrb[0].mxu0
    %4357 = vdwg.mxu0
    %v4362 = vrot.slane %v4311, 4
    %v4363 = vrot.slane %v4313, 4
    %v4364 = vrot.slane %v4352, 4
    %v4365 = vrot.slane %v4354, 4
    %v4370 = vadd.f32 %v3983, %v4362
    %v4371 = vadd.f32 %v3985, %v4363
    %v4372 = vadd.f32 %v4026, %v4364
    %v4373 = vadd.f32 %v4028, %v4365
    %v4374 = vxor.u32 %v4370, 2147483648
    %v4375 = vxor.u32 %v4371, 2147483648
    %v4376 = vxor.u32 %v4372, 2147483648
    %v4377 = vmul.f32 %v4374, 1.442695
    %v4378 = vpow.pop %v4377
    %v4379 = vmul.f32 %v4375, 1.442695
    %v4380 = vpow.pop %v4379
    %v4381 = vmul.f32 %v4376, 1.442695
    %v4382 = vpow.pop %v4381
    %v4383 = vadd.f32 %v4378, 1.0
    %v4384 = vadd.f32 %v4380, 1.0
    %v4385 = vadd.f32 %v4382, 1.0
    %v4386 = vrcp.pop %v4383
    %v4387 = vmul.f32 1.0, %v4386
    %v4388 = vrcp.pop %v4384
    %v4389 = vmul.f32 1.0, %v4388
    %v4390 = vrcp.pop %v4385
    %v4391 = vmul.f32 1.0, %v4390
    %v4392 = vtanh.pop %v4373
    %v4394 = vrot.slane %v4268, 6
    %v4396 = vmul.f32 %v4389, %v4394
    %v4397 = vmul.f32 %v4387, %v4392
    %v4398 = vadd.f32 %v4396, %v4397
    %v4399 = vtanh.pop %v4398
    %v4400 = vmul.f32 %v4391, %v4399
    %4401 = vst [vmem:[#allocation4] sm:$0x30] %v4400
    %v4402 = vpack.c.bf16 %v4400, %v4400
    %v4404 = vrot.slane %v4402, 2
    %4406 = vmatprep.subr.bf16.mxu0 %v3891
    %4407 = vmatpush1.bf16.msra.mxu0 %v3890
    %4408 = vmatprep.subr.bf16.mxu0 %v3895
    %4409 = vmatpush1.bf16.msra.mxu0 %v3894
    %4410 = vmatprep.subr.bf16.mxu0 %v3899
    %4411 = vmatpush1.bf16.msra.mxu0 %v3898
    %4412 = vmatprep.subr.bf16.mxu0 %v3903
    %4413 = vmatpush1.bf16.msra.mxu0 %v3902
    %4414 = vmatprep.subr.bf16.mxu0 %v3907
    %4415 = vmatpush1.bf16.msra.mxu0 %v3906
    %4416 = vmatprep.subr.bf16.mxu0 %v3911
    %4417 = vmatpush1.bf16.msra.mxu0 %v3910
    %4418 = vmatprep.subr.bf16.mxu0 %v3915
    %4419 = vmatpush1.bf16.msra.mxu0 %v3914
    %4420 = vmatprep.subr.bf16.mxu0 %v3919
    %4421 = vmatpush1.bf16.msra.mxu0 %v3918
    %4422 = vmatprep.subr.bf16.mxu0 0
    %4423 = vmatpush1.bf16.msra.mxu0 0
    %4424 = vmatprep.subr.bf16.mxu0 0
    %4425 = vmatpush1.bf16.msra.mxu0 0
    %4426 = vmatprep.subr.bf16.mxu0 0
    %4427 = vmatpush1.bf16.msra.mxu0 0
    %4428 = vmatprep.subr.bf16.mxu0 0
    %4429 = vmatpush1.bf16.msra.mxu0 0
    %4430 = vmatprep.subr.bf16.mxu0 0
    %4431 = vmatpush1.bf16.msra.mxu0 0
    %4432 = vmatprep.subr.bf16.mxu0 0
    %4433 = vmatpush1.bf16.msra.mxu0 0
    %4434 = vmatprep.subr.bf16.mxu0 0
    %4435 = vmatpush1.bf16.msra.mxu0 0
    %4436 = vmatprep.subr.bf16.mxu0 0
    %4437 = vmatpush1.bf16.msra.mxu0 0
    %4438 = vmatprep.mubr.bf16.mxu0 0
    %4439 = vmatmul.mubr.bf16.gmra.mrb[0].mxu0 %v4404
    %v4440 = vpop.f32.mrb[0].mxu0
    %v4441 = vadd.f32 0.0, %v4440
    %v4442 = vpop.f32.mrb[0].mxu0
    %v4443 = vadd.f32 0.0, %v4442
    %v4444 = vpop.f32.mrb[0].mxu0
    %v4445 = vpop.f32.mrb[0].mxu0
    %4446 = vdwg.mxu0
    %4447 = vmatprep.subr.bf16.mxu0 %v3893
    %4448 = vmatpush1.bf16.msra.mxu0 %v3892
    %4449 = vmatprep.subr.bf16.mxu0 %v3897
    %4450 = vmatpush1.bf16.msra.mxu0 %v3896
    %4451 = vmatprep.subr.bf16.mxu0 %v3901
    %4452 = vmatpush1.bf16.msra.mxu0 %v3900
    %4453 = vmatprep.subr.bf16.mxu0 %v3905
    %4454 = vmatpush1.bf16.msra.mxu0 %v3904
    %4455 = vmatprep.subr.bf16.mxu0 %v3909
    %4456 = vmatpush1.bf16.msra.mxu0 %v3908
    %4457 = vmatprep.subr.bf16.mxu0 %v3913
    %4458 = vmatpush1.bf16.msra.mxu0 %v3912
    %4459 = vmatprep.subr.bf16.mxu0 %v3917
    %4460 = vmatpush1.bf16.msra.mxu0 %v3916
    %4461 = vmatprep.subr.bf16.mxu0 %v3921
    %4462 = vmatpush1.bf16.msra.mxu0 %v3920
    %4463 = vmatprep.subr.bf16.mxu0 0
    %4464 = vmatpush1.bf16.msra.mxu0 0
    %4465 = vmatprep.subr.bf16.mxu0 0
    %4466 = vmatpush1.bf16.msra.mxu0 0
    %4467 = vmatprep.subr.bf16.mxu0 0
    %4468 = vmatpush1.bf16.msra.mxu0 0
    %4469 = vmatprep.subr.bf16.mxu0 0
    %4470 = vmatpush1.bf16.msra.mxu0 0
    %4471 = vmatprep.subr.bf16.mxu0 0
    %4472 = vmatpush1.bf16.msra.mxu0 0
    %4473 = vmatprep.subr.bf16.mxu0 0
    %4474 = vmatpush1.bf16.msra.mxu0 0
    %4475 = vmatprep.subr.bf16.mxu0 0
    %4476 = vmatpush1.bf16.msra.mxu0 0
    %4477 = vmatprep.subr.bf16.mxu0 0
    %4478 = vmatpush1.bf16.msra.mxu0 0
    %4479 = vmatprep.mubr.bf16.mxu0 0
    %4480 = vmatmul.mubr.bf16.gmra.mrb[0].mxu0 %v4404
    %v4481 = vpop.f32.mrb[0].mxu0
    %v4482 = vadd.f32 0.0, %v4481
    %v4483 = vpop.f32.mrb[0].mxu0
    %v4484 = vadd.f32 0.0, %v4483
    %v4485 = vpop.f32.mrb[0].mxu0
    %v4486 = vpop.f32.mrb[0].mxu0
    %4487 = vdwg.mxu0
    %v4492 = vrot.slane %v4441, 2
    %v4493 = vrot.slane %v4443, 2
    %v4494 = vrot.slane %v4482, 2
    %v4495 = vrot.slane %v4484, 2
    %v4500 = vadd.f32 %v3983, %v4492
    %v4501 = vadd.f32 %v3985, %v4493
    %v4502 = vadd.f32 %v4026, %v4494
    %v4503 = vadd.f32 %v4028, %v4495
    %v4504 = vxor.u32 %v4500, 2147483648
    %v4505 = vxor.u32 %v4501, 2147483648
    %v4506 = vxor.u32 %v4502, 2147483648
    %v4507 = vmul.f32 %v4504, 1.442695
    %v4508 = vpow.pop %v4507
    %v4509 = vmul.f32 %v4505, 1.442695
    %v4510 = vpow.pop %v4509
    %v4511 = vmul.f32 %v4506, 1.442695
    %v4512 = vpow.pop %v4511
    %v4513 = vadd.f32 %v4508, 1.0
    %v4514 = vadd.f32 %v4510, 1.0
    %v4515 = vadd.f32 %v4512, 1.0
    %v4516 = vrcp.pop %v4513
    %v4517 = vmul.f32 1.0, %v4516
    %v4518 = vrcp.pop %v4514
    %v4519 = vmul.f32 1.0, %v4518
    %v4520 = vrcp.pop %v4515
    %v4521 = vmul.f32 1.0, %v4520
    %v4522 = vtanh.pop %v4503
    %v4524 = vrot.slane %v4398, 6
    %v4526 = vmul.f32 %v4519, %v4524
    %v4527 = vmul.f32 %v4517, %v4522
    %v4528 = vadd.f32 %v4526, %v4527
    %v4529 = vtanh.pop %v4528
    %v4530 = vmul.f32 %v4521, %v4529
    %4531 = vst [vmem:[#allocation4] sm:$0xc0] %v4530
    %v4532 = vpack.c.bf16 %v4530, %v4530
    %v4534 = vrot.slane %v4532, 3
    %4536 = vmatprep.subr.bf16.mxu0 %v3891
    %4537 = vmatpush1.bf16.msra.mxu0 %v3890
    %4538 = vmatprep.subr.bf16.mxu0 %v3895
    %4539 = vmatpush1.bf16.msra.mxu0 %v3894
    %4540 = vmatprep.subr.bf16.mxu0 %v3899
    %4541 = vmatpush1.bf16.msra.mxu0 %v3898
    %4542 = vmatprep.subr.bf16.mxu0 %v3903
    %4543 = vmatpush1.bf16.msra.mxu0 %v3902
    %4544 = vmatprep.subr.bf16.mxu0 %v3907
    %4545 = vmatpush1.bf16.msra.mxu0 %v3906
    %4546 = vmatprep.subr.bf16.mxu0 %v3911
    %4547 = vmatpush1.bf16.msra.mxu0 %v3910
    %4548 = vmatprep.subr.bf16.mxu0 %v3915
    %4549 = vmatpush1.bf16.msra.mxu0 %v3914
    %4550 = vmatprep.subr.bf16.mxu0 %v3919
    %4551 = vmatpush1.bf16.msra.mxu0 %v3918
    %4552 = vmatprep.subr.bf16.mxu0 0
    %4553 = vmatpush1.bf16.msra.mxu0 0
    %4554 = vmatprep.subr.bf16.mxu0 0
    %4555 = vmatpush1.bf16.msra.mxu0 0
    %4556 = vmatprep.subr.bf16.mxu0 0
    %4557 = vmatpush1.bf16.msra.mxu0 0
    %4558 = vmatprep.subr.bf16.mxu0 0
    %4559 = vmatpush1.bf16.msra.mxu0 0
    %4560 = vmatprep.subr.bf16.mxu0 0
    %4561 = vmatpush1.bf16.msra.mxu0 0
    %4562 = vmatprep.subr.bf16.mxu0 0
    %4563 = vmatpush1.bf16.msra.mxu0 0
    %4564 = vmatprep.subr.bf16.mxu0 0
    %4565 = vmatpush1.bf16.msra.mxu0 0
    %4566 = vmatprep.subr.bf16.mxu0 0
    %4567 = vmatpush1.bf16.msra.mxu0 0
    %4568 = vmatprep.mubr.bf16.mxu0 0
    %4569 = vmatmul.mubr.bf16.gmra.mrb[0].mxu0 %v4534
    %v4570 = vpop.f32.mrb[0].mxu0
    %v4571 = vadd.f32 0.0, %v4570
    %v4572 = vpop.f32.mrb[0].mxu0
    %v4573 = vadd.f32 0.0, %v4572
    %v4574 = vpop.f32.mrb[0].mxu0
    %v4575 = vpop.f32.mrb[0].mxu0
    %4576 = vdwg.mxu0
    %4577 = vmatprep.subr.bf16.mxu0 %v3893
    %4578 = vmatpush1.bf16.msra.mxu0 %v3892
    %4579 = vmatprep.subr.bf16.mxu0 %v3897
    %4580 = vmatpush1.bf16.msra.mxu0 %v3896
    %4581 = vmatprep.subr.bf16.mxu0 %v3901
    %4582 = vmatpush1.bf16.msra.mxu0 %v3900
    %4583 = vmatprep.subr.bf16.mxu0 %v3905
    %4584 = vmatpush1.bf16.msra.mxu0 %v3904
    %4585 = vmatprep.subr.bf16.mxu0 %v3909
    %4586 = vmatpush1.bf16.msra.mxu0 %v3908
    %4587 = vmatprep.subr.bf16.mxu0 %v3913
    %4588 = vmatpush1.bf16.msra.mxu0 %v3912
    %4589 = vmatprep.subr.bf16.mxu0 %v3917
    %4590 = vmatpush1.bf16.msra.mxu0 %v3916
    %4591 = vmatprep.subr.bf16.mxu0 %v3921
    %4592 = vmatpush1.bf16.msra.mxu0 %v3920
    %4593 = vmatprep.subr.bf16.mxu0 0
    %4594 = vmatpush1.bf16.msra.mxu0 0
    %4595 = vmatprep.subr.bf16.mxu0 0
    %4596 = vmatpush1.bf16.msra.mxu0 0
    %4597 = vmatprep.subr.bf16.mxu0 0
    %4598 = vmatpush1.bf16.msra.mxu0 0
    %4599 = vmatprep.subr.bf16.mxu0 0
    %4600 = vmatpush1.bf16.msra.mxu0 0
    %4601 = vmatprep.subr.bf16.mxu0 0
    %4602 = vmatpush1.bf16.msra.mxu0 0
    %4603 = vmatprep.subr.bf16.mxu0 0
    %4604 = vmatpush1.bf16.msra.mxu0 0
    %4605 = vmatprep.subr.bf16.mxu0 0
    %4606 = vmatpush1.bf16.msra.mxu0 0
    %4607 = vmatprep.subr.bf16.mxu0 0
    %4608 = vmatpush1.bf16.msra.mxu0 0
    %4609 = vmatprep.mubr.bf16.mxu0 0
    %4610 = vmatmul.mubr.bf16.gmra.mrb[0].mxu0 %v4534
    %v4611 = vpop.f32.mrb[0].mxu0
    %v4612 = vadd.f32 0.0, %v4611
    %v4613 = vpop.f32.mrb[0].mxu0
    %v4614 = vadd.f32 0.0, %v4613
    %v4615 = vpop.f32.mrb[0].mxu0
    %v4616 = vpop.f32.mrb[0].mxu0
    %4617 = vdwg.mxu0
    %v4618 = vadd.f32 %v3987, %v4571
    %v4619 = vadd.f32 %v3989, %v4573
    %v4620 = vadd.f32 %v4030, %v4612
    %v4621 = vadd.f32 %v4032, %v4614
    %v4622 = vxor.u32 %v4618, 2147483648
    %v4623 = vxor.u32 %v4619, 2147483648
    %v4624 = vxor.u32 %v4620, 2147483648
    %v4625 = vmul.f32 %v4622, 1.442695
    %v4626 = vpow.pop %v4625
    %v4627 = vmul.f32 %v4623, 1.442695
    %v4628 = vpow.pop %v4627
    %v4629 = vmul.f32 %v4624, 1.442695
    %v4630 = vpow.pop %v4629
    %v4631 = vadd.f32 %v4626, 1.0
    %v4632 = vadd.f32 %v4628, 1.0
    %v4633 = vadd.f32 %v4630, 1.0
    %v4634 = vrcp.pop %v4631
    %v4635 = vmul.f32 1.0, %v4634
    %v4636 = vrcp.pop %v4632
    %v4637 = vmul.f32 1.0, %v4636
    %v4638 = vrcp.pop %v4633
    %v4639 = vmul.f32 1.0, %v4638
    %v4640 = vtanh.pop %v4621
    %v4642 = vrot.slane %v4528, 6
    %v4644 = vmul.f32 %v4637, %v4642
    %v4645 = vmul.f32 %v4635, %v4640
    %v4646 = vadd.f32 %v4644, %v4645
    %v4647 = vtanh.pop %v4646
    %v4648 = vmul.f32 %v4639, %v4647
    %4649 = vst [vmem:[#allocation4 + $0x8] sm:$0x3] %v4648
    %v4650 = vpack.c.bf16 %v4648, %v4648
    %4651 = vmatprep.subr.bf16.mxu0 %v3891
    %4652 = vmatpush1.bf16.msra.mxu0 %v3890
    %4653 = vmatprep.subr.bf16.mxu0 %v3895
    %4654 = vmatpush1.bf16.msra.mxu0 %v3894
    %4655 = vmatprep.subr.bf16.mxu0 %v3899
    %4656 = vmatpush1.bf16.msra.mxu0 %v3898
    %4657 = vmatprep.subr.bf16.mxu0 %v3903
    %4658 = vmatpush1.bf16.msra.mxu0 %v3902
    %4659 = vmatprep.subr.bf16.mxu0 %v3907
    %4660 = vmatpush1.bf16.msra.mxu0 %v3906
    %4661 = vmatprep.subr.bf16.mxu0 %v3911
    %4662 = vmatpush1.bf16.msra.mxu0 %v3910
    %4663 = vmatprep.subr.bf16.mxu0 %v3915
    %4664 = vmatpush1.bf16.msra.mxu0 %v3914
    %4665 = vmatprep.subr.bf16.mxu0 %v3919
    %4666 = vmatpush1.bf16.msra.mxu0 %v3918
    %4667 = vmatprep.subr.bf16.mxu0 0
    %4668 = vmatpush1.bf16.msra.mxu0 0
    %4669 = vmatprep.subr.bf16.mxu0 0
    %4670 = vmatpush1.bf16.msra.mxu0 0
    %4671 = vmatprep.subr.bf16.mxu0 0
    %4672 = vmatpush1.bf16.msra.mxu0 0
    %4673 = vmatprep.subr.bf16.mxu0 0
    %4674 = vmatpush1.bf16.msra.mxu0 0
    %4675 = vmatprep.subr.bf16.mxu0 0
    %4676 = vmatpush1.bf16.msra.mxu0 0
    %4677 = vmatprep.subr.bf16.mxu0 0
    %4678 = vmatpush1.bf16.msra.mxu0 0
    %4679 = vmatprep.subr.bf16.mxu0 0
    %4680 = vmatpush1.bf16.msra.mxu0 0
    %4681 = vmatprep.subr.bf16.mxu0 0
    %4682 = vmatpush1.bf16.msra.mxu0 0
    %4683 = vmatprep.mubr.bf16.mxu0 0
    %4684 = vmatmul.mubr.bf16.gmra.mrb[0].mxu0 %v4650
    %v4685 = vpop.f32.mrb[0].mxu0
    %v4686 = vadd.f32 0.0, %v4685
    %v4687 = vpop.f32.mrb[0].mxu0
    %v4688 = vadd.f32 0.0, %v4687
    %v4689 = vpop.f32.mrb[0].mxu0
    %v4690 = vpop.f32.mrb[0].mxu0
    %4691 = vdwg.mxu0
    %4692 = vmatprep.subr.bf16.mxu0 %v3893
    %4693 = vmatpush1.bf16.msra.mxu0 %v3892
    %4694 = vmatprep.subr.bf16.mxu0 %v3897
    %4695 = vmatpush1.bf16.msra.mxu0 %v3896
    %4696 = vmatprep.subr.bf16.mxu0 %v3901
    %4697 = vmatpush1.bf16.msra.mxu0 %v3900
    %4698 = vmatprep.subr.bf16.mxu0 %v3905
    %4699 = vmatpush1.bf16.msra.mxu0 %v3904
    %4700 = vmatprep.subr.bf16.mxu0 %v3909
    %4701 = vmatpush1.bf16.msra.mxu0 %v3908
    %4702 = vmatprep.subr.bf16.mxu0 %v3913
    %4703 = vmatpush1.bf16.msra.mxu0 %v3912
    %4704 = vmatprep.subr.bf16.mxu0 %v3917
    %4705 = vmatpush1.bf16.msra.mxu0 %v3916
    %4706 = vmatprep.subr.bf16.mxu0 %v3921
    %4707 = vmatpush1.bf16.msra.mxu0 %v3920
    %4708 = vmatprep.subr.bf16.mxu0 0
    %4709 = vmatpush1.bf16.msra.mxu0 0
    %4710 = vmatprep.subr.bf16.mxu0 0
    %4711 = vmatpush1.bf16.msra.mxu0 0
    %4712 = vmatprep.subr.bf16.mxu0 0
    %4713 = vmatpush1.bf16.msra.mxu0 0
    %4714 = vmatprep.subr.bf16.mxu0 0
    %4715 = vmatpush1.bf16.msra.mxu0 0
    %4716 = vmatprep.subr.bf16.mxu0 0
    %4717 = vmatpush1.bf16.msra.mxu0 0
    %4718 = vmatprep.subr.bf16.mxu0 0
    %4719 = vmatpush1.bf16.msra.mxu0 0
    %4720 = vmatprep.subr.bf16.mxu0 0
    %4721 = vmatpush1.bf16.msra.mxu0 0
    %4722 = vmatprep.subr.bf16.mxu0 0
    %4723 = vmatpush1.bf16.msra.mxu0 0
    %4724 = vmatprep.mubr.bf16.mxu0 0
    %4725 = vmatmul.mubr.bf16.gmra.mrb[0].mxu0 %v4650
    %v4726 = vpop.f32.mrb[0].mxu0
    %v4727 = vadd.f32 0.0, %v4726
    %v4728 = vpop.f32.mrb[0].mxu0
    %v4729 = vadd.f32 0.0, %v4728
    %v4730 = vpop.f32.mrb[0].mxu0
    %v4731 = vpop.f32.mrb[0].mxu0
    %4732 = vdwg.mxu0
    %v4737 = vrot.slane %v4686, 6
    %v4738 = vrot.slane %v4688, 6
    %v4739 = vrot.slane %v4727, 6
    %v4740 = vrot.slane %v4729, 6
    %v4745 = vadd.f32 %v3987, %v4737
    %v4746 = vadd.f32 %v3989, %v4738
    %v4747 = vadd.f32 %v4030, %v4739
    %v4748 = vadd.f32 %v4032, %v4740
    %v4749 = vxor.u32 %v4745, 2147483648
    %v4750 = vxor.u32 %v4746, 2147483648
    %v4751 = vxor.u32 %v4747, 2147483648
    %v4752 = vmul.f32 %v4749, 1.442695
    %v4753 = vpow.pop %v4752
    %v4754 = vmul.f32 %v4750, 1.442695
    %v4755 = vpow.pop %v4754
    %v4756 = vmul.f32 %v4751, 1.442695
    %v4757 = vpow.pop %v4756
    %v4758 = vadd.f32 %v4753, 1.0
    %v4759 = vadd.f32 %v4755, 1.0
    %v4760 = vadd.f32 %v4757, 1.0
    %v4761 = vrcp.pop %v4758
    %v4762 = vmul.f32 1.0, %v4761
    %v4763 = vrcp.pop %v4759
    %v4764 = vmul.f32 1.0, %v4763
    %v4765 = vrcp.pop %v4760
    %v4766 = vmul.f32 1.0, %v4765
    %v4767 = vtanh.pop %v4748
    %v4769 = vrot.slane %v4646, 6
    %v4771 = vmul.f32 %v4764, %v4769
    %v4772 = vmul.f32 %v4762, %v4767
    %v4773 = vadd.f32 %v4771, %v4772
    %v4774 = vtanh.pop %v4773
    %v4775 = vmul.f32 %v4766, %v4774
    %4776 = vst [vmem:[#allocation4 + $0x8] sm:$0xc] %v4775
    %v4777 = vpack.c.bf16 %v4775, %v4775
    %v4779 = vrot.slane %v4777, 1
    %4781 = vmatprep.subr.bf16.mxu0 %v3891
    %4782 = vmatpush1.bf16.msra.mxu0 %v3890
    %4783 = vmatprep.subr.bf16.mxu0 %v3895
    %4784 = vmatpush1.bf16.msra.mxu0 %v3894
    %4785 = vmatprep.subr.bf16.mxu0 %v3899
    %4786 = vmatpush1.bf16.msra.mxu0 %v3898
    %4787 = vmatprep.subr.bf16.mxu0 %v3903
    %4788 = vmatpush1.bf16.msra.mxu0 %v3902
    %4789 = vmatprep.subr.bf16.mxu0 %v3907
    %4790 = vmatpush1.bf16.msra.mxu0 %v3906
    %4791 = vmatprep.subr.bf16.mxu0 %v3911
    %4792 = vmatpush1.bf16.msra.mxu0 %v3910
    %4793 = vmatprep.subr.bf16.mxu0 %v3915
    %4794 = vmatpush1.bf16.msra.mxu0 %v3914
    %4795 = vmatprep.subr.bf16.mxu0 %v3919
    %4796 = vmatpush1.bf16.msra.mxu0 %v3918
    %4797 = vmatprep.subr.bf16.mxu0 0
    %4798 = vmatpush1.bf16.msra.mxu0 0
    %4799 = vmatprep.subr.bf16.mxu0 0
    %4800 = vmatpush1.bf16.msra.mxu0 0
    %4801 = vmatprep.subr.bf16.mxu0 0
    %4802 = vmatpush1.bf16.msra.mxu0 0
    %4803 = vmatprep.subr.bf16.mxu0 0
    %4804 = vmatpush1.bf16.msra.mxu0 0
    %4805 = vmatprep.subr.bf16.mxu0 0
    %4806 = vmatpush1.bf16.msra.mxu0 0
    %4807 = vmatprep.subr.bf16.mxu0 0
    %4808 = vmatpush1.bf16.msra.mxu0 0
    %4809 = vmatprep.subr.bf16.mxu0 0
    %4810 = vmatpush1.bf16.msra.mxu0 0
    %4811 = vmatprep.subr.bf16.mxu0 0
    %4812 = vmatpush1.bf16.msra.mxu0 0
    %4813 = vmatprep.mubr.bf16.mxu0 0
    %4814 = vmatmul.mubr.bf16.gmra.mrb[0].mxu0 %v4779
    %v4815 = vpop.f32.mrb[0].mxu0
    %v4816 = vadd.f32 0.0, %v4815
    %v4817 = vpop.f32.mrb[0].mxu0
    %v4818 = vadd.f32 0.0, %v4817
    %v4819 = vpop.f32.mrb[0].mxu0
    %v4820 = vpop.f32.mrb[0].mxu0
    %4821 = vdwg.mxu0
    %4822 = vmatprep.subr.bf16.mxu0 %v3893
    %4823 = vmatpush1.bf16.msra.mxu0 %v3892
    %4824 = vmatprep.subr.bf16.mxu0 %v3897
    %4825 = vmatpush1.bf16.msra.mxu0 %v3896
    %4826 = vmatprep.subr.bf16.mxu0 %v3901
    %4827 = vmatpush1.bf16.msra.mxu0 %v3900
    %4828 = vmatprep.subr.bf16.mxu0 %v3905
    %4829 = vmatpush1.bf16.msra.mxu0 %v3904
    %4830 = vmatprep.subr.bf16.mxu0 %v3909
    %4831 = vmatpush1.bf16.msra.mxu0 %v3908
    %4832 = vmatprep.subr.bf16.mxu0 %v3913
    %4833 = vmatpush1.bf16.msra.mxu0 %v3912
    %4834 = vmatprep.subr.bf16.mxu0 %v3917
    %4835 = vmatpush1.bf16.msra.mxu0 %v3916
    %4836 = vmatprep.subr.bf16.mxu0 %v3921
    %4837 = vmatpush1.bf16.msra.mxu0 %v3920
    %4838 = vmatprep.subr.bf16.mxu0 0
    %4839 = vmatpush1.bf16.msra.mxu0 0
    %4840 = vmatprep.subr.bf16.mxu0 0
    %4841 = vmatpush1.bf16.msra.mxu0 0
    %4842 = vmatprep.subr.bf16.mxu0 0
    %4843 = vmatpush1.bf16.msra.mxu0 0
    %4844 = vmatprep.subr.bf16.mxu0 0
    %4845 = vmatpush1.bf16.msra.mxu0 0
    %4846 = vmatprep.subr.bf16.mxu0 0
    %4847 = vmatpush1.bf16.msra.mxu0 0
    %4848 = vmatprep.subr.bf16.mxu0 0
    %4849 = vmatpush1.bf16.msra.mxu0 0
    %4850 = vmatprep.subr.bf16.mxu0 0
    %4851 = vmatpush1.bf16.msra.mxu0 0
    %4852 = vmatprep.subr.bf16.mxu0 0
    %4853 = vmatpush1.bf16.msra.mxu0 0
    %4854 = vmatprep.mubr.bf16.mxu0 0
    %4855 = vmatmul.mubr.bf16.gmra.mrb[0].mxu0 %v4779
    %v4856 = vpop.f32.mrb[0].mxu0
    %v4857 = vadd.f32 0.0, %v4856
    %v4858 = vpop.f32.mrb[0].mxu0
    %v4859 = vadd.f32 0.0, %v4858
    %v4860 = vpop.f32.mrb[0].mxu0
    %v4861 = vpop.f32.mrb[0].mxu0
    %4862 = vdwg.mxu0
    %v4867 = vrot.slane %v4816, 4
    %v4868 = vrot.slane %v4818, 4
    %v4869 = vrot.slane %v4857, 4
    %v4870 = vrot.slane %v4859, 4
    %v4875 = vadd.f32 %v3987, %v4867
    %v4876 = vadd.f32 %v3989, %v4868
    %v4877 = vadd.f32 %v4030, %v4869
    %v4878 = vadd.f32 %v4032, %v4870
    %v4879 = vxor.u32 %v4875, 2147483648
    %v4880 = vxor.u32 %v4876, 2147483648
    %v4881 = vxor.u32 %v4877, 2147483648
    %v4882 = vmul.f32 %v4879, 1.442695
    %v4883 = vpow.pop %v4882
    %v4884 = vmul.f32 %v4880, 1.442695
    %v4885 = vpow.pop %v4884
    %v4886 = vmul.f32 %v4881, 1.442695
    %v4887 = vpow.pop %v4886
    %v4888 = vadd.f32 %v4883, 1.0
    %v4889 = vadd.f32 %v4885, 1.0
    %v4890 = vadd.f32 %v4887, 1.0
    %v4891 = vrcp.pop %v4888
    %v4892 = vmul.f32 1.0, %v4891
    %v4893 = vrcp.pop %v4889
    %v4894 = vmul.f32 1.0, %v4893
    %v4895 = vrcp.pop %v4890
    %v4896 = vmul.f32 1.0, %v4895
    %v4897 = vtanh.pop %v4878
    %v4899 = vrot.slane %v4773, 6
    %v4901 = vmul.f32 %v4894, %v4899
    %v4902 = vmul.f32 %v4892, %v4897
    %v4903 = vadd.f32 %v4901, %v4902
    %v4904 = vtanh.pop %v4903
    %v4905 = vmul.f32 %v4896, %v4904
    %4906 = vst [vmem:[#allocation4 + $0x8] sm:$0x30] %v4905
    %v4907 = vpack.c.bf16 %v4905, %v4905
    %v4909 = vrot.slane %v4907, 2
    %4911 = vmatprep.subr.bf16.mxu0 %v3891
    %4912 = vmatpush1.bf16.msra.mxu0 %v3890
    %4913 = vmatprep.subr.bf16.mxu0 %v3895
    %4914 = vmatpush1.bf16.msra.mxu0 %v3894
    %4915 = vmatprep.subr.bf16.mxu0 %v3899
    %4916 = vmatpush1.bf16.msra.mxu0 %v3898
    %4917 = vmatprep.subr.bf16.mxu0 %v3903
    %4918 = vmatpush1.bf16.msra.mxu0 %v3902
    %4919 = vmatprep.subr.bf16.mxu0 %v3907
    %4920 = vmatpush1.bf16.msra.mxu0 %v3906
    %4921 = vmatprep.subr.bf16.mxu0 %v3911
    %4922 = vmatpush1.bf16.msra.mxu0 %v3910
    %4923 = vmatprep.subr.bf16.mxu0 %v3915
    %4924 = vmatpush1.bf16.msra.mxu0 %v3914
    %4925 = vmatprep.subr.bf16.mxu0 %v3919
    %4926 = vmatpush1.bf16.msra.mxu0 %v3918
    %4927 = vmatprep.subr.bf16.mxu0 0
    %4928 = vmatpush1.bf16.msra.mxu0 0
    %4929 = vmatprep.subr.bf16.mxu0 0
    %4930 = vmatpush1.bf16.msra.mxu0 0
    %4931 = vmatprep.subr.bf16.mxu0 0
    %4932 = vmatpush1.bf16.msra.mxu0 0
    %4933 = vmatprep.subr.bf16.mxu0 0
    %4934 = vmatpush1.bf16.msra.mxu0 0
    %4935 = vmatprep.subr.bf16.mxu0 0
    %4936 = vmatpush1.bf16.msra.mxu0 0
    %4937 = vmatprep.subr.bf16.mxu0 0
    %4938 = vmatpush1.bf16.msra.mxu0 0
    %4939 = vmatprep.subr.bf16.mxu0 0
    %4940 = vmatpush1.bf16.msra.mxu0 0
    %4941 = vmatprep.subr.bf16.mxu0 0
    %4942 = vmatpush1.bf16.msra.mxu0 0
    %4943 = vmatprep.mubr.bf16.mxu0 0
    %4944 = vmatmul.mubr.bf16.gmra.mrb[0].mxu0 %v4909
    %v4945 = vpop.f32.mrb[0].mxu0
    %v4946 = vadd.f32 0.0, %v4945
    %v4947 = vpop.f32.mrb[0].mxu0
    %v4948 = vadd.f32 0.0, %v4947
    %v4949 = vpop.f32.mrb[0].mxu0
    %v4950 = vpop.f32.mrb[0].mxu0
    %4951 = vdwg.mxu0
    %4952 = vmatprep.subr.bf16.mxu0 %v3893
    %4953 = vmatpush1.bf16.msra.mxu0 %v3892
    %4954 = vmatprep.subr.bf16.mxu0 %v3897
    %4955 = vmatpush1.bf16.msra.mxu0 %v3896
    %4956 = vmatprep.subr.bf16.mxu0 %v3901
    %4957 = vmatpush1.bf16.msra.mxu0 %v3900
    %4958 = vmatprep.subr.bf16.mxu0 %v3905
    %4959 = vmatpush1.bf16.msra.mxu0 %v3904
    %4960 = vmatprep.subr.bf16.mxu0 %v3909
    %4961 = vmatpush1.bf16.msra.mxu0 %v3908
    %4962 = vmatprep.subr.bf16.mxu0 %v3913
    %4963 = vmatpush1.bf16.msra.mxu0 %v3912
    %4964 = vmatprep.subr.bf16.mxu0 %v3917
    %4965 = vmatpush1.bf16.msra.mxu0 %v3916
    %4966 = vmatprep.subr.bf16.mxu0 %v3921
    %4967 = vmatpush1.bf16.msra.mxu0 %v3920
    %4968 = vmatprep.subr.bf16.mxu0 0
    %4969 = vmatpush1.bf16.msra.mxu0 0
    %4970 = vmatprep.subr.bf16.mxu0 0
    %4971 = vmatpush1.bf16.msra.mxu0 0
    %4972 = vmatprep.subr.bf16.mxu0 0
    %4973 = vmatpush1.bf16.msra.mxu0 0
    %4974 = vmatprep.subr.bf16.mxu0 0
    %4975 = vmatpush1.bf16.msra.mxu0 0
    %4976 = vmatprep.subr.bf16.mxu0 0
    %4977 = vmatpush1.bf16.msra.mxu0 0
    %4978 = vmatprep.subr.bf16.mxu0 0
    %4979 = vmatpush1.bf16.msra.mxu0 0
    %4980 = vmatprep.subr.bf16.mxu0 0
    %4981 = vmatpush1.bf16.msra.mxu0 0
    %4982 = vmatprep.subr.bf16.mxu0 0
    %4983 = vmatpush1.bf16.msra.mxu0 0
    %4984 = vmatprep.mubr.bf16.mxu0 0
    %4985 = vmatmul.mubr.bf16.gmra.mrb[0].mxu0 %v4909
    %v4986 = vpop.f32.mrb[0].mxu0
    %v4987 = vadd.f32 0.0, %v4986
    %v4988 = vpop.f32.mrb[0].mxu0
    %v4989 = vadd.f32 0.0, %v4988
    %v4990 = vpop.f32.mrb[0].mxu0
    %v4991 = vpop.f32.mrb[0].mxu0
    %4992 = vdwg.mxu0
    %v4997 = vrot.slane %v4946, 2
    %v4998 = vrot.slane %v4948, 2
    %v4999 = vrot.slane %v4987, 2
    %v5000 = vrot.slane %v4989, 2
    %v5005 = vadd.f32 %v3987, %v4997
    %v5006 = vadd.f32 %v3989, %v4998
    %v5007 = vadd.f32 %v4030, %v4999
    %v5008 = vadd.f32 %v4032, %v5000
    %v5009 = vxor.u32 %v5005, 2147483648
    %v5010 = vxor.u32 %v5006, 2147483648
    %v5011 = vxor.u32 %v5007, 2147483648
    %v5012 = vmul.f32 %v5009, 1.442695
    %v5013 = vpow.pop %v5012
    %v5014 = vmul.f32 %v5010, 1.442695
    %v5015 = vpow.pop %v5014
    %v5016 = vmul.f32 %v5011, 1.442695
    %v5017 = vpow.pop %v5016
    %v5018 = vadd.f32 %v5013, 1.0
    %v5019 = vadd.f32 %v5015, 1.0
    %v5020 = vadd.f32 %v5017, 1.0
    %v5021 = vrcp.pop %v5018
    %v5022 = vmul.f32 1.0, %v5021
    %v5023 = vrcp.pop %v5019
    %v5024 = vmul.f32 1.0, %v5023
    %v5025 = vrcp.pop %v5020
    %v5026 = vmul.f32 1.0, %v5025
    %v5027 = vtanh.pop %v5008
    %v5029 = vrot.slane %v4903, 6
    %v5031 = vmul.f32 %v5024, %v5029
    %v5032 = vmul.f32 %v5022, %v5027
    %v5033 = vadd.f32 %v5031, %v5032
    %v5034 = vtanh.pop %v5033
    %v5035 = vmul.f32 %v5026, %v5034
    %5036 = vst [vmem:[#allocation4 + $0x8] sm:$0xc0] %v5035
    %s5037 = sshll.u32 %s171, 4
    %5038 = dma.done [#allocation3], %s5037
    %s5039 = scalar_lea.hbm %s1, 40960
    %s5041 = sshll.u32 1, 14
    %s5042 = sxor.u32 4294967295, %s5041
    %s5044 = sadd.s32 2, %s139
    %s5046 = sshll.u32 7, 26
    %s5047 = sxor.u32 4294967295, %s5046
    %s5048 = sand.u32 0, %s5047
    %s5049 = sshll.u32 %s5044, 26
    %s5050 = sor.u32 %s5048, %s5049
    %s5051 = sshll.u32 %s175, 4
    %s5052 = int_to_ptr.vmem [resolvable:$true] %s5051
    %5055 = sst [smem:[#allocation32]] 512
    %s5056 = scalar_lea.smem [#allocation32], 1
    %5057 = sst [smem:[%s5056]] 512
    %s5058 = scalar_lea.smem [#allocation32], 2
    %5059 = sst [smem:[%s5058]] 4
    %s5060 = scalar_lea.smem [#allocation32], 3
    %5061 = sst [smem:[%s5060]] 64
    %s5062 = scalar_lea.smem [#allocation32], 4
    %5063 = sst [smem:[%s5062]] 128
    %s5064 = scalar_lea.smem [#allocation32], 5
    %5065 = sst [smem:[%s5064]] 2
    %s5066 = scalar_lea.smem [#allocation32], 6
    %5067 = sst [smem:[%s5066]] 256
    %s5068 = scalar_lea.smem [#allocation32], 7
    %5069 = sst [smem:[%s5068]] 64
    %s5070 = scalar_lea.smem [#allocation32], 8
    %5071 = sst [smem:[%s5070]] 4
    %5073 = dma.general %s5039, 8192, %s5052, %s176, [#allocation31], [#allocation32], %s5050, 0
    %v5074 = vld [vmem:[#allocation2] sm:$0xff]
    %v5075 = vld [vmem:[#allocation2 + $0x8] sm:$0xff]
    %v5076 = vld [vmem:[#allocation2 + $0x10] sm:$0xff]
    %v5077 = vld [vmem:[#allocation2 + $0x18] sm:$0xff]
    %v5078 = vld [vmem:[#allocation2 + $0x20] sm:$0xff]
    %v5079 = vld [vmem:[#allocation2 + $0x28] sm:$0xff]
    %v5080 = vld [vmem:[#allocation2 + $0x30] sm:$0xff]
    %v5081 = vld [vmem:[#allocation2 + $0x38] sm:$0xff]
    %v5082 = vld [vmem:[#allocation2 + $0x40] sm:$0xff]
    %v5083 = vld [vmem:[#allocation2 + $0x48] sm:$0xff]
    %v5084 = vld [vmem:[#allocation2 + $0x50] sm:$0xff]
    %v5085 = vld [vmem:[#allocation2 + $0x58] sm:$0xff]
    %v5086 = vld [vmem:[#allocation2 + $0x60] sm:$0xff]
    %v5087 = vld [vmem:[#allocation2 + $0x68] sm:$0xff]
    %v5088 = vld [vmem:[#allocation2 + $0x70] sm:$0xff]
    %v5089 = vld [vmem:[#allocation2 + $0x78] sm:$0xff]
    %v5090 = vld [vmem:[#allocation2 + $0x80] sm:$0xff]
    %v5091 = vld [vmem:[#allocation2 + $0x88] sm:$0xff]
    %v5092 = vld [vmem:[#allocation2 + $0x90] sm:$0xff]
    %v5093 = vld [vmem:[#allocation2 + $0x98] sm:$0xff]
    %v5094 = vld [vmem:[#allocation2 + $0xa0] sm:$0xff]
    %v5095 = vld [vmem:[#allocation2 + $0xa8] sm:$0xff]
    %v5096 = vld [vmem:[#allocation2 + $0xb0] sm:$0xff]
    %v5097 = vld [vmem:[#allocation2 + $0xb8] sm:$0xff]
    %v5098 = vld [vmem:[#allocation2 + $0xc0] sm:$0xff]
    %v5099 = vld [vmem:[#allocation2 + $0xc8] sm:$0xff]
    %v5100 = vld [vmem:[#allocation2 + $0xd0] sm:$0xff]
    %v5101 = vld [vmem:[#allocation2 + $0xd8] sm:$0xff]
    %v5102 = vld [vmem:[#allocation2 + $0xe0] sm:$0xff]
    %v5103 = vld [vmem:[#allocation2 + $0xe8] sm:$0xff]
    %v5104 = vld [vmem:[#allocation2 + $0xf0] sm:$0xff]
    %v5105 = vld [vmem:[#allocation2 + $0xf8] sm:$0xff]
    %v5106 = vld [vmem:[#allocation2 + $0x100] sm:$0xff]
    %v5107 = vld [vmem:[#allocation2 + $0x108] sm:$0xff]
    %v5108 = vld [vmem:[#allocation2 + $0x110] sm:$0xff]
    %v5109 = vld [vmem:[#allocation2 + $0x118] sm:$0xff]
    %v5110 = vld [vmem:[#allocation2 + $0x120] sm:$0xff]
    %v5111 = vld [vmem:[#allocation2 + $0x128] sm:$0xff]
    %v5112 = vld [vmem:[#allocation2 + $0x130] sm:$0xff]
    %v5113 = vld [vmem:[#allocation2 + $0x138] sm:$0xff]
    %v5114 = vld [vmem:[#allocation2 + $0x140] sm:$0xff]
    %v5115 = vld [vmem:[#allocation2 + $0x148] sm:$0xff]
    %v5116 = vld [vmem:[#allocation2 + $0x150] sm:$0xff]
    %v5117 = vld [vmem:[#allocation2 + $0x158] sm:$0xff]
    %v5118 = vld [vmem:[#allocation2 + $0x160] sm:$0xff]
    %v5119 = vld [vmem:[#allocation2 + $0x168] sm:$0xff]
    %v5120 = vld [vmem:[#allocation2 + $0x170] sm:$0xff]
    %v5121 = vld [vmem:[#allocation2 + $0x178] sm:$0xff]
    %v5122 = vld [vmem:[#allocation2 + $0x180] sm:$0xff]
    %v5123 = vld [vmem:[#allocation2 + $0x188] sm:$0xff]
    %v5124 = vld [vmem:[#allocation2 + $0x190] sm:$0xff]
    %v5125 = vld [vmem:[#allocation2 + $0x198] sm:$0xff]
    %v5126 = vld [vmem:[#allocation2 + $0x1a0] sm:$0xff]
    %v5127 = vld [vmem:[#allocation2 + $0x1a8] sm:$0xff]
    %v5128 = vld [vmem:[#allocation2 + $0x1b0] sm:$0xff]
    %v5129 = vld [vmem:[#allocation2 + $0x1b8] sm:$0xff]
    %v5130 = vld [vmem:[#allocation2 + $0x1c0] sm:$0xff]
    %v5131 = vld [vmem:[#allocation2 + $0x1c8] sm:$0xff]
    %v5132 = vld [vmem:[#allocation2 + $0x1d0] sm:$0xff]
    %v5133 = vld [vmem:[#allocation2 + $0x1d8] sm:$0xff]
    %v5134 = vld [vmem:[#allocation2 + $0x1e0] sm:$0xff]
    %v5135 = vld [vmem:[#allocation2 + $0x1e8] sm:$0xff]
    %v5136 = vld [vmem:[#allocation2 + $0x1f0] sm:$0xff]
    %v5137 = vld [vmem:[#allocation2 + $0x1f8] sm:$0xff]
    %v5138 = vld [vmem:[#allocation4] sm:$0xff]
    %v5139 = vld [vmem:[#allocation4 + $0x8] sm:$0xff]
    %v5140 = vpack.c.bf16 %v5139, %v5138
    %s5141 = scalar_lea.vmem [#allocation9], 16
    %v5142 = vld [vmem:[%s5141] sm:$0xf]
    %v5144 = vlaneseq
    %v5145 = vshrl.u32 %v5144, 7
    %v5146 = vsub.s32 0, %v5145
    %v5147 = vrot.slane %v5142, %v5146
    %v5148 = vlaneseq
    %v5149 = vshrl.u32 %v5148, 7
    %v5150 = vsub.s32 1, %v5149
    %v5151 = vrot.slane %v5142, %v5150
    %v5152 = vlaneseq
    %v5153 = vshrl.u32 %v5152, 7
    %v5154 = vsub.s32 2, %v5153
    %v5155 = vrot.slane %v5142, %v5154
    %v5156 = vlaneseq
    %v5157 = vshrl.u32 %v5156, 7
    %v5158 = vsub.s32 3, %v5157
    %v5159 = vrot.slane %v5142, %v5158
    %5164 = vmatprep.subr.bf16.mxu0 %v5075
    %5165 = vmatpush1.bf16.msra.mxu0 %v5074
    %5166 = vmatprep.subr.bf16.mxu0 %v5079
    %5167 = vmatpush1.bf16.msra.mxu0 %v5078
    %5168 = vmatprep.subr.bf16.mxu0 %v5083
    %5169 = vmatpush1.bf16.msra.mxu0 %v5082
    %5170 = vmatprep.subr.bf16.mxu0 %v5087
    %5171 = vmatpush1.bf16.msra.mxu0 %v5086
    %5172 = vmatprep.subr.bf16.mxu0 %v5091
    %5173 = vmatpush1.bf16.msra.mxu0 %v5090
    %5174 = vmatprep.subr.bf16.mxu0 %v5095
    %5175 = vmatpush1.bf16.msra.mxu0 %v5094
    %5176 = vmatprep.subr.bf16.mxu0 %v5099
    %5177 = vmatpush1.bf16.msra.mxu0 %v5098
    %5178 = vmatprep.subr.bf16.mxu0 %v5103
    %5179 = vmatpush1.bf16.msra.mxu0 %v5102
    %5180 = vmatprep.subr.bf16.mxu0 0
    %5181 = vmatpush1.bf16.msra.mxu0 0
    %5182 = vmatprep.subr.bf16.mxu0 0
    %5183 = vmatpush1.bf16.msra.mxu0 0
    %5184 = vmatprep.subr.bf16.mxu0 0
    %5185 = vmatpush1.bf16.msra.mxu0 0
    %5186 = vmatprep.subr.bf16.mxu0 0
    %5187 = vmatpush1.bf16.msra.mxu0 0
    %5188 = vmatprep.subr.bf16.mxu0 0
    %5189 = vmatpush1.bf16.msra.mxu0 0
    %5190 = vmatprep.subr.bf16.mxu0 0
    %5191 = vmatpush1.bf16.msra.mxu0 0
    %5192 = vmatprep.subr.bf16.mxu0 0
    %5193 = vmatpush1.bf16.msra.mxu0 0
    %5194 = vmatprep.subr.bf16.mxu0 0
    %5195 = vmatpush1.bf16.msra.mxu0 0
    %5196 = vmatprep.mubr.bf16.mxu0 0
    %5197 = vmatmul.mubr.bf16.gmra.mrb[0].mxu0 %v5140
    %v5198 = vpop.f32.mrb[0].mxu0
    %v5199 = vadd.f32 %v5147, %v5198
    %v5200 = vpop.f32.mrb[0].mxu0
    %v5201 = vadd.f32 %v5151, %v5200
    %v5202 = vpop.f32.mrb[0].mxu0
    %v5203 = vadd.f32 %v5147, %v5202
    %v5204 = vpop.f32.mrb[0].mxu0
    %v5205 = vadd.f32 %v5151, %v5204
    %5206 = vdwg.mxu0
    %5207 = vmatprep.subr.bf16.mxu0 %v5077
    %5208 = vmatpush1.bf16.msra.mxu0 %v5076
    %5209 = vmatprep.subr.bf16.mxu0 %v5081
    %5210 = vmatpush1.bf16.msra.mxu0 %v5080
    %5211 = vmatprep.subr.bf16.mxu0 %v5085
    %5212 = vmatpush1.bf16.msra.mxu0 %v5084
    %5213 = vmatprep.subr.bf16.mxu0 %v5089
    %5214 = vmatpush1.bf16.msra.mxu0 %v5088
    %5215 = vmatprep.subr.bf16.mxu0 %v5093
    %5216 = vmatpush1.bf16.msra.mxu0 %v5092
    %5217 = vmatprep.subr.bf16.mxu0 %v5097
    %5218 = vmatpush1.bf16.msra.mxu0 %v5096
    %5219 = vmatprep.subr.bf16.mxu0 %v5101
    %5220 = vmatpush1.bf16.msra.mxu0 %v5100
    %5221 = vmatprep.subr.bf16.mxu0 %v5105
    %5222 = vmatpush1.bf16.msra.mxu0 %v5104
    %5223 = vmatprep.subr.bf16.mxu0 0
    %5224 = vmatpush1.bf16.msra.mxu0 0
    %5225 = vmatprep.subr.bf16.mxu0 0
    %5226 = vmatpush1.bf16.msra.mxu0 0
    %5227 = vmatprep.subr.bf16.mxu0 0
    %5228 = vmatpush1.bf16.msra.mxu0 0
    %5229 = vmatprep.subr.bf16.mxu0 0
    %5230 = vmatpush1.bf16.msra.mxu0 0
    %5231 = vmatprep.subr.bf16.mxu0 0
    %5232 = vmatpush1.bf16.msra.mxu0 0
    %5233 = vmatprep.subr.bf16.mxu0 0
    %5234 = vmatpush1.bf16.msra.mxu0 0
    %5235 = vmatprep.subr.bf16.mxu0 0
    %5236 = vmatpush1.bf16.msra.mxu0 0
    %5237 = vmatprep.subr.bf16.mxu0 0
    %5238 = vmatpush1.bf16.msra.mxu0 0
    %5239 = vmatprep.mubr.bf16.mxu0 0
    %5240 = vmatmul.mubr.bf16.gmra.mrb[0].mxu0 %v5140
    %v5241 = vpop.f32.mrb[0].mxu0
    %v5242 = vadd.f32 %v5155, %v5241
    %v5243 = vpop.f32.mrb[0].mxu0
    %v5244 = vadd.f32 %v5159, %v5243
    %v5245 = vpop.f32.mrb[0].mxu0
    %v5246 = vadd.f32 %v5155, %v5245
    %v5247 = vpop.f32.mrb[0].mxu0
    %v5248 = vadd.f32 %v5159, %v5247
    %5249 = vdwg.mxu0
    %5250 = vmatprep.subr.bf16.mxu0 %v5107
    %5251 = vmatpush1.bf16.msra.mxu0 %v5106
    %5252 = vmatprep.subr.bf16.mxu0 %v5111
    %5253 = vmatpush1.bf16.msra.mxu0 %v5110
    %5254 = vmatprep.subr.bf16.mxu0 %v5115
    %5255 = vmatpush1.bf16.msra.mxu0 %v5114
    %5256 = vmatprep.subr.bf16.mxu0 %v5119
    %5257 = vmatpush1.bf16.msra.mxu0 %v5118
    %5258 = vmatprep.subr.bf16.mxu0 %v5123
    %5259 = vmatpush1.bf16.msra.mxu0 %v5122
    %5260 = vmatprep.subr.bf16.mxu0 %v5127
    %5261 = vmatpush1.bf16.msra.mxu0 %v5126
    %5262 = vmatprep.subr.bf16.mxu0 %v5131
    %5263 = vmatpush1.bf16.msra.mxu0 %v5130
    %5264 = vmatprep.subr.bf16.mxu0 %v5135
    %5265 = vmatpush1.bf16.msra.mxu0 %v5134
    %5266 = vmatprep.subr.bf16.mxu0 0
    %5267 = vmatpush1.bf16.msra.mxu0 0
    %5268 = vmatprep.subr.bf16.mxu0 0
    %5269 = vmatpush1.bf16.msra.mxu0 0
    %5270 = vmatprep.subr.bf16.mxu0 0
    %5271 = vmatpush1.bf16.msra.mxu0 0
    %5272 = vmatprep.subr.bf16.mxu0 0
    %5273 = vmatpush1.bf16.msra.mxu0 0
    %5274 = vmatprep.subr.bf16.mxu0 0
    %5275 = vmatpush1.bf16.msra.mxu0 0
    %5276 = vmatprep.subr.bf16.mxu0 0
    %5277 = vmatpush1.bf16.msra.mxu0 0
    %5278 = vmatprep.subr.bf16.mxu0 0
    %5279 = vmatpush1.bf16.msra.mxu0 0
    %5280 = vmatprep.subr.bf16.mxu0 0
    %5281 = vmatpush1.bf16.msra.mxu0 0
    %5282 = vmatprep.mubr.bf16.mxu0 0
    %5283 = vmatmul.mubr.bf16.gmra.mrb[0].mxu0 0
    %v5284 = vpop.f32.mrb[0].mxu0
    %v5285 = vadd.f32 0.0, %v5284
    %v5286 = vpop.f32.mrb[0].mxu0
    %v5287 = vadd.f32 0.0, %v5286
    %v5288 = vpop.f32.mrb[0].mxu0
    %v5289 = vpop.f32.mrb[0].mxu0
    %5290 = vdwg.mxu0
    %5291 = vmatprep.subr.bf16.mxu0 %v5109
    %5292 = vmatpush1.bf16.msra.mxu0 %v5108
    %5293 = vmatprep.subr.bf16.mxu0 %v5113
    %5294 = vmatpush1.bf16.msra.mxu0 %v5112
    %5295 = vmatprep.subr.bf16.mxu0 %v5117
    %5296 = vmatpush1.bf16.msra.mxu0 %v5116
    %5297 = vmatprep.subr.bf16.mxu0 %v5121
    %5298 = vmatpush1.bf16.msra.mxu0 %v5120
    %5299 = vmatprep.subr.bf16.mxu0 %v5125
    %5300 = vmatpush1.bf16.msra.mxu0 %v5124
    %5301 = vmatprep.subr.bf16.mxu0 %v5129
    %5302 = vmatpush1.bf16.msra.mxu0 %v5128
    %5303 = vmatprep.subr.bf16.mxu0 %v5133
    %5304 = vmatpush1.bf16.msra.mxu0 %v5132
    %5305 = vmatprep.subr.bf16.mxu0 %v5137
    %5306 = vmatpush1.bf16.msra.mxu0 %v5136
    %5307 = vmatprep.subr.bf16.mxu0 0
    %5308 = vmatpush1.bf16.msra.mxu0 0
    %5309 = vmatprep.subr.bf16.mxu0 0
    %5310 = vmatpush1.bf16.msra.mxu0 0
    %5311 = vmatprep.subr.bf16.mxu0 0
    %5312 = vmatpush1.bf16.msra.mxu0 0
    %5313 = vmatprep.subr.bf16.mxu0 0
    %5314 = vmatpush1.bf16.msra.mxu0 0
    %5315 = vmatprep.subr.bf16.mxu0 0
    %5316 = vmatpush1.bf16.msra.mxu0 0
    %5317 = vmatprep.subr.bf16.mxu0 0
    %5318 = vmatpush1.bf16.msra.mxu0 0
    %5319 = vmatprep.subr.bf16.mxu0 0
    %5320 = vmatpush1.bf16.msra.mxu0 0
    %5321 = vmatprep.subr.bf16.mxu0 0
    %5322 = vmatpush1.bf16.msra.mxu0 0
    %5323 = vmatprep.mubr.bf16.mxu0 0
    %5324 = vmatmul.mubr.bf16.gmra.mrb[0].mxu0 0
    %v5325 = vpop.f32.mrb[0].mxu0
    %v5326 = vadd.f32 0.0, %v5325
    %v5327 = vpop.f32.mrb[0].mxu0
    %v5328 = vadd.f32 0.0, %v5327
    %v5329 = vpop.f32.mrb[0].mxu0
    %v5330 = vpop.f32.mrb[0].mxu0
    %5331 = vdwg.mxu0
    %v5332 = vadd.f32 %v5199, %v5285
    %v5333 = vadd.f32 %v5201, %v5287
    %v5334 = vadd.f32 %v5242, %v5326
    %v5335 = vadd.f32 %v5244, %v5328
    %v5336 = vxor.u32 %v5332, 2147483648
    %v5337 = vxor.u32 %v5333, 2147483648
    %v5338 = vxor.u32 %v5334, 2147483648
    %v5339 = vmul.f32 %v5336, 1.442695
    %v5340 = vpow.pop %v5339
    %v5341 = vmul.f32 %v5337, 1.442695
    %v5342 = vpow.pop %v5341
    %v5343 = vmul.f32 %v5338, 1.442695
    %v5344 = vpow.pop %v5343
    %v5345 = vadd.f32 %v5340, 1.0
    %v5346 = vadd.f32 %v5342, 1.0
    %v5347 = vadd.f32 %v5344, 1.0
    %v5348 = vrcp.pop %v5345
    %v5349 = vmul.f32 1.0, %v5348
    %v5350 = vrcp.pop %v5346
    %v5351 = vmul.f32 1.0, %v5350
    %v5352 = vrcp.pop %v5347
    %v5353 = vmul.f32 1.0, %v5352
    %v5354 = vtanh.pop %v5335
    %v5355 = vmul.f32 %v5351, 0.0
    %v5356 = vmul.f32 %v5349, %v5354
    %v5357 = vadd.f32 %v5355, %v5356
    %v5358 = vtanh.pop %v5357
    %v5359 = vmul.f32 %v5353, %v5358
    %5360 = vst [vmem:[#allocation4] sm:$0x3] %v5359
    %v5361 = vpack.c.bf16 %v5359, %v5359
    %5362 = vmatprep.subr.bf16.mxu0 %v5107
    %5363 = vmatpush1.bf16.msra.mxu0 %v5106
    %5364 = vmatprep.subr.bf16.mxu0 %v5111
    %5365 = vmatpush1.bf16.msra.mxu0 %v5110
    %5366 = vmatprep.subr.bf16.mxu0 %v5115
    %5367 = vmatpush1.bf16.msra.mxu0 %v5114
    %5368 = vmatprep.subr.bf16.mxu0 %v5119
    %5369 = vmatpush1.bf16.msra.mxu0 %v5118
    %5370 = vmatprep.subr.bf16.mxu0 %v5123
    %5371 = vmatpush1.bf16.msra.mxu0 %v5122
    %5372 = vmatprep.subr.bf16.mxu0 %v5127
    %5373 = vmatpush1.bf16.msra.mxu0 %v5126
    %5374 = vmatprep.subr.bf16.mxu0 %v5131
    %5375 = vmatpush1.bf16.msra.mxu0 %v5130
    %5376 = vmatprep.subr.bf16.mxu0 %v5135
    %5377 = vmatpush1.bf16.msra.mxu0 %v5134
    %5378 = vmatprep.subr.bf16.mxu0 0
    %5379 = vmatpush1.bf16.msra.mxu0 0
    %5380 = vmatprep.subr.bf16.mxu0 0
    %5381 = vmatpush1.bf16.msra.mxu0 0
    %5382 = vmatprep.subr.bf16.mxu0 0
    %5383 = vmatpush1.bf16.msra.mxu0 0
    %5384 = vmatprep.subr.bf16.mxu0 0
    %5385 = vmatpush1.bf16.msra.mxu0 0
    %5386 = vmatprep.subr.bf16.mxu0 0
    %5387 = vmatpush1.bf16.msra.mxu0 0
    %5388 = vmatprep.subr.bf16.mxu0 0
    %5389 = vmatpush1.bf16.msra.mxu0 0
    %5390 = vmatprep.subr.bf16.mxu0 0
    %5391 = vmatpush1.bf16.msra.mxu0 0
    %5392 = vmatprep.subr.bf16.mxu0 0
    %5393 = vmatpush1.bf16.msra.mxu0 0
    %5394 = vmatprep.mubr.bf16.mxu0 0
    %5395 = vmatmul.mubr.bf16.gmra.mrb[0].mxu0 %v5361
    %v5396 = vpop.f32.mrb[0].mxu0
    %v5397 = vadd.f32 0.0, %v5396
    %v5398 = vpop.f32.mrb[0].mxu0
    %v5399 = vadd.f32 0.0, %v5398
    %v5400 = vpop.f32.mrb[0].mxu0
    %v5401 = vpop.f32.mrb[0].mxu0
    %5402 = vdwg.mxu0
    %5403 = vmatprep.subr.bf16.mxu0 %v5109
    %5404 = vmatpush1.bf16.msra.mxu0 %v5108
    %5405 = vmatprep.subr.bf16.mxu0 %v5113
    %5406 = vmatpush1.bf16.msra.mxu0 %v5112
    %5407 = vmatprep.subr.bf16.mxu0 %v5117
    %5408 = vmatpush1.bf16.msra.mxu0 %v5116
    %5409 = vmatprep.subr.bf16.mxu0 %v5121
    %5410 = vmatpush1.bf16.msra.mxu0 %v5120
    %5411 = vmatprep.subr.bf16.mxu0 %v5125
    %5412 = vmatpush1.bf16.msra.mxu0 %v5124
    %5413 = vmatprep.subr.bf16.mxu0 %v5129
    %5414 = vmatpush1.bf16.msra.mxu0 %v5128
    %5415 = vmatprep.subr.bf16.mxu0 %v5133
    %5416 = vmatpush1.bf16.msra.mxu0 %v5132
    %5417 = vmatprep.subr.bf16.mxu0 %v5137
    %5418 = vmatpush1.bf16.msra.mxu0 %v5136
    %5419 = vmatprep.subr.bf16.mxu0 0
    %5420 = vmatpush1.bf16.msra.mxu0 0
    %5421 = vmatprep.subr.bf16.mxu0 0
    %5422 = vmatpush1.bf16.msra.mxu0 0
    %5423 = vmatprep.subr.bf16.mxu0 0
    %5424 = vmatpush1.bf16.msra.mxu0 0
    %5425 = vmatprep.subr.bf16.mxu0 0
    %5426 = vmatpush1.bf16.msra.mxu0 0
    %5427 = vmatprep.subr.bf16.mxu0 0
    %5428 = vmatpush1.bf16.msra.mxu0 0
    %5429 = vmatprep.subr.bf16.mxu0 0
    %5430 = vmatpush1.bf16.msra.mxu0 0
    %5431 = vmatprep.subr.bf16.mxu0 0
    %5432 = vmatpush1.bf16.msra.mxu0 0
    %5433 = vmatprep.subr.bf16.mxu0 0
    %5434 = vmatpush1.bf16.msra.mxu0 0
    %5435 = vmatprep.mubr.bf16.mxu0 0
    %5436 = vmatmul.mubr.bf16.gmra.mrb[0].mxu0 %v5361
    %v5437 = vpop.f32.mrb[0].mxu0
    %v5438 = vadd.f32 0.0, %v5437
    %v5439 = vpop.f32.mrb[0].mxu0
    %v5440 = vadd.f32 0.0, %v5439
    %v5441 = vpop.f32.mrb[0].mxu0
    %v5442 = vpop.f32.mrb[0].mxu0
    %5443 = vdwg.mxu0
    %v5448 = vrot.slane %v5397, 6
    %v5449 = vrot.slane %v5399, 6
    %v5450 = vrot.slane %v5438, 6
    %v5451 = vrot.slane %v5440, 6
    %v5456 = vadd.f32 %v5199, %v5448
    %v5457 = vadd.f32 %v5201, %v5449
    %v5458 = vadd.f32 %v5242, %v5450
    %v5459 = vadd.f32 %v5244, %v5451
    %v5460 = vxor.u32 %v5456, 2147483648
    %v5461 = vxor.u32 %v5457, 2147483648
    %v5462 = vxor.u32 %v5458, 2147483648
    %v5463 = vmul.f32 %v5460, 1.442695
    %v5464 = vpow.pop %v5463
    %v5465 = vmul.f32 %v5461, 1.442695
    %v5466 = vpow.pop %v5465
    %v5467 = vmul.f32 %v5462, 1.442695
    %v5468 = vpow.pop %v5467
    %v5469 = vadd.f32 %v5464, 1.0
    %v5470 = vadd.f32 %v5466, 1.0
    %v5471 = vadd.f32 %v5468, 1.0
    %v5472 = vrcp.pop %v5469
    %v5473 = vmul.f32 1.0, %v5472
    %v5474 = vrcp.pop %v5470
    %v5475 = vmul.f32 1.0, %v5474
    %v5476 = vrcp.pop %v5471
    %v5477 = vmul.f32 1.0, %v5476
    %v5478 = vtanh.pop %v5459
    %v5480 = vrot.slane %v5357, 6
    %v5482 = vmul.f32 %v5475, %v5480
    %v5483 = vmul.f32 %v5473, %v5478
    %v5484 = vadd.f32 %v5482, %v5483
    %v5485 = vtanh.pop %v5484
    %v5486 = vmul.f32 %v5477, %v5485
    %5487 = vst [vmem:[#allocation4] sm:$0xc] %v5486
    %v5488 = vpack.c.bf16 %v5486, %v5486
    %v5490 = vrot.slane %v5488, 1
    %5492 = vmatprep.subr.bf16.mxu0 %v5107
    %5493 = vmatpush1.bf16.msra.mxu0 %v5106
    %5494 = vmatprep.subr.bf16.mxu0 %v5111
    %5495 = vmatpush1.bf16.msra.mxu0 %v5110
    %5496 = vmatprep.subr.bf16.mxu0 %v5115
    %5497 = vmatpush1.bf16.msra.mxu0 %v5114
    %5498 = vmatprep.subr.bf16.mxu0 %v5119
    %5499 = vmatpush1.bf16.msra.mxu0 %v5118
    %5500 = vmatprep.subr.bf16.mxu0 %v5123
    %5501 = vmatpush1.bf16.msra.mxu0 %v5122
    %5502 = vmatprep.subr.bf16.mxu0 %v5127
    %5503 = vmatpush1.bf16.msra.mxu0 %v5126
    %5504 = vmatprep.subr.bf16.mxu0 %v5131
    %5505 = vmatpush1.bf16.msra.mxu0 %v5130
    %5506 = vmatprep.subr.bf16.mxu0 %v5135
    %5507 = vmatpush1.bf16.msra.mxu0 %v5134
    %5508 = vmatprep.subr.bf16.mxu0 0
    %5509 = vmatpush1.bf16.msra.mxu0 0
    %5510 = vmatprep.subr.bf16.mxu0 0
    %5511 = vmatpush1.bf16.msra.mxu0 0
    %5512 = vmatprep.subr.bf16.mxu0 0
    %5513 = vmatpush1.bf16.msra.mxu0 0
    %5514 = vmatprep.subr.bf16.mxu0 0
    %5515 = vmatpush1.bf16.msra.mxu0 0
    %5516 = vmatprep.subr.bf16.mxu0 0
    %5517 = vmatpush1.bf16.msra.mxu0 0
    %5518 = vmatprep.subr.bf16.mxu0 0
    %5519 = vmatpush1.bf16.msra.mxu0 0
    %5520 = vmatprep.subr.bf16.mxu0 0
    %5521 = vmatpush1.bf16.msra.mxu0 0
    %5522 = vmatprep.subr.bf16.mxu0 0
    %5523 = vmatpush1.bf16.msra.mxu0 0
    %5524 = vmatprep.mubr.bf16.mxu0 0
    %5525 = vmatmul.mubr.bf16.gmra.mrb[0].mxu0 %v5490
    %v5526 = vpop.f32.mrb[0].mxu0
    %v5527 = vadd.f32 0.0, %v5526
    %v5528 = vpop.f32.mrb[0].mxu0
    %v5529 = vadd.f32 0.0, %v5528
    %v5530 = vpop.f32.mrb[0].mxu0
    %v5531 = vpop.f32.mrb[0].mxu0
    %5532 = vdwg.mxu0
    %5533 = vmatprep.subr.bf16.mxu0 %v5109
    %5534 = vmatpush1.bf16.msra.mxu0 %v5108
    %5535 = vmatprep.subr.bf16.mxu0 %v5113
    %5536 = vmatpush1.bf16.msra.mxu0 %v5112
    %5537 = vmatprep.subr.bf16.mxu0 %v5117
    %5538 = vmatpush1.bf16.msra.mxu0 %v5116
    %5539 = vmatprep.subr.bf16.mxu0 %v5121
    %5540 = vmatpush1.bf16.msra.mxu0 %v5120
    %5541 = vmatprep.subr.bf16.mxu0 %v5125
    %5542 = vmatpush1.bf16.msra.mxu0 %v5124
    %5543 = vmatprep.subr.bf16.mxu0 %v5129
    %5544 = vmatpush1.bf16.msra.mxu0 %v5128
    %5545 = vmatprep.subr.bf16.mxu0 %v5133
    %5546 = vmatpush1.bf16.msra.mxu0 %v5132
    %5547 = vmatprep.subr.bf16.mxu0 %v5137
    %5548 = vmatpush1.bf16.msra.mxu0 %v5136
    %5549 = vmatprep.subr.bf16.mxu0 0
    %5550 = vmatpush1.bf16.msra.mxu0 0
    %5551 = vmatprep.subr.bf16.mxu0 0
    %5552 = vmatpush1.bf16.msra.mxu0 0
    %5553 = vmatprep.subr.bf16.mxu0 0
    %5554 = vmatpush1.bf16.msra.mxu0 0
    %5555 = vmatprep.subr.bf16.mxu0 0
    %5556 = vmatpush1.bf16.msra.mxu0 0
    %5557 = vmatprep.subr.bf16.mxu0 0
    %5558 = vmatpush1.bf16.msra.mxu0 0
    %5559 = vmatprep.subr.bf16.mxu0 0
    %5560 = vmatpush1.bf16.msra.mxu0 0
    %5561 = vmatprep.subr.bf16.mxu0 0
    %5562 = vmatpush1.bf16.msra.mxu0 0
    %5563 = vmatprep.subr.bf16.mxu0 0
    %5564 = vmatpush1.bf16.msra.mxu0 0
    %5565 = vmatprep.mubr.bf16.mxu0 0
    %5566 = vmatmul.mubr.bf16.gmra.mrb[0].mxu0 %v5490
    %v5567 = vpop.f32.mrb[0].mxu0
    %v5568 = vadd.f32 0.0, %v5567
    %v5569 = vpop.f32.mrb[0].mxu0
    %v5570 = vadd.f32 0.0, %v5569
    %v5571 = vpop.f32.mrb[0].mxu0
    %v5572 = vpop.f32.mrb[0].mxu0
    %5573 = vdwg.mxu0
    %v5578 = vrot.slane %v5527, 4
    %v5579 = vrot.slane %v5529, 4
    %v5580 = vrot.slane %v5568, 4
    %v5581 = vrot.slane %v5570, 4
    %v5586 = vadd.f32 %v5199, %v5578
    %v5587 = vadd.f32 %v5201, %v5579
    %v5588 = vadd.f32 %v5242, %v5580
    %v5589 = vadd.f32 %v5244, %v5581
    %v5590 = vxor.u32 %v5586, 2147483648
    %v5591 = vxor.u32 %v5587, 2147483648
    %v5592 = vxor.u32 %v5588, 2147483648
    %v5593 = vmul.f32 %v5590, 1.442695
    %v5594 = vpow.pop %v5593
    %v5595 = vmul.f32 %v5591, 1.442695
    %v5596 = vpow.pop %v5595
    %v5597 = vmul.f32 %v5592, 1.442695
    %v5598 = vpow.pop %v5597
    %v5599 = vadd.f32 %v5594, 1.0
    %v5600 = vadd.f32 %v5596, 1.0
    %v5601 = vadd.f32 %v5598, 1.0
    %v5602 = vrcp.pop %v5599
    %v5603 = vmul.f32 1.0, %v5602
    %v5604 = vrcp.pop %v5600
    %v5605 = vmul.f32 1.0, %v5604
    %v5606 = vrcp.pop %v5601
    %v5607 = vmul.f32 1.0, %v5606
    %v5608 = vtanh.pop %v5589
    %v5610 = vrot.slane %v5484, 6
    %v5612 = vmul.f32 %v5605, %v5610
    %v5613 = vmul.f32 %v5603, %v5608
    %v5614 = vadd.f32 %v5612, %v5613
    %v5615 = vtanh.pop %v5614
    %v5616 = vmul.f32 %v5607, %v5615
    %5617 = vst [vmem:[#allocation4] sm:$0x30] %v5616
    %v5618 = vpack.c.bf16 %v5616, %v5616
    %v5620 = vrot.slane %v5618, 2
    %5622 = vmatprep.subr.bf16.mxu0 %v5107
    %5623 = vmatpush1.bf16.msra.mxu0 %v5106
    %5624 = vmatprep.subr.bf16.mxu0 %v5111
    %5625 = vmatpush1.bf16.msra.mxu0 %v5110
    %5626 = vmatprep.subr.bf16.mxu0 %v5115
    %5627 = vmatpush1.bf16.msra.mxu0 %v5114
    %5628 = vmatprep.subr.bf16.mxu0 %v5119
    %5629 = vmatpush1.bf16.msra.mxu0 %v5118
    %5630 = vmatprep.subr.bf16.mxu0 %v5123
    %5631 = vmatpush1.bf16.msra.mxu0 %v5122
    %5632 = vmatprep.subr.bf16.mxu0 %v5127
    %5633 = vmatpush1.bf16.msra.mxu0 %v5126
    %5634 = vmatprep.subr.bf16.mxu0 %v5131
    %5635 = vmatpush1.bf16.msra.mxu0 %v5130
    %5636 = vmatprep.subr.bf16.mxu0 %v5135
    %5637 = vmatpush1.bf16.msra.mxu0 %v5134
    %5638 = vmatprep.subr.bf16.mxu0 0
    %5639 = vmatpush1.bf16.msra.mxu0 0
    %5640 = vmatprep.subr.bf16.mxu0 0
    %5641 = vmatpush1.bf16.msra.mxu0 0
    %5642 = vmatprep.subr.bf16.mxu0 0
    %5643 = vmatpush1.bf16.msra.mxu0 0
    %5644 = vmatprep.subr.bf16.mxu0 0
    %5645 = vmatpush1.bf16.msra.mxu0 0
    %5646 = vmatprep.subr.bf16.mxu0 0
    %5647 = vmatpush1.bf16.msra.mxu0 0
    %5648 = vmatprep.subr.bf16.mxu0 0
    %5649 = vmatpush1.bf16.msra.mxu0 0
    %5650 = vmatprep.subr.bf16.mxu0 0
    %5651 = vmatpush1.bf16.msra.mxu0 0
    %5652 = vmatprep.subr.bf16.mxu0 0
    %5653 = vmatpush1.bf16.msra.mxu0 0
    %5654 = vmatprep.mubr.bf16.mxu0 0
    %5655 = vmatmul.mubr.bf16.gmra.mrb[0].mxu0 %v5620
    %v5656 = vpop.f32.mrb[0].mxu0
    %v5657 = vadd.f32 0.0, %v5656
    %v5658 = vpop.f32.mrb[0].mxu0
    %v5659 = vadd.f32 0.0, %v5658
    %v5660 = vpop.f32.mrb[0].mxu0
    %v5661 = vpop.f32.mrb[0].mxu0
    %5662 = vdwg.mxu0
    %5663 = vmatprep.subr.bf16.mxu0 %v5109
    %5664 = vmatpush1.bf16.msra.mxu0 %v5108
    %5665 = vmatprep.subr.bf16.mxu0 %v5113
    %5666 = vmatpush1.bf16.msra.mxu0 %v5112
    %5667 = vmatprep.subr.bf16.mxu0 %v5117
    %5668 = vmatpush1.bf16.msra.mxu0 %v5116
    %5669 = vmatprep.subr.bf16.mxu0 %v5121
    %5670 = vmatpush1.bf16.msra.mxu0 %v5120
    %5671 = vmatprep.subr.bf16.mxu0 %v5125
    %5672 = vmatpush1.bf16.msra.mxu0 %v5124
    %5673 = vmatprep.subr.bf16.mxu0 %v5129
    %5674 = vmatpush1.bf16.msra.mxu0 %v5128
    %5675 = vmatprep.subr.bf16.mxu0 %v5133
    %5676 = vmatpush1.bf16.msra.mxu0 %v5132
    %5677 = vmatprep.subr.bf16.mxu0 %v5137
    %5678 = vmatpush1.bf16.msra.mxu0 %v5136
    %5679 = vmatprep.subr.bf16.mxu0 0
    %5680 = vmatpush1.bf16.msra.mxu0 0
    %5681 = vmatprep.subr.bf16.mxu0 0
    %5682 = vmatpush1.bf16.msra.mxu0 0
    %5683 = vmatprep.subr.bf16.mxu0 0
    %5684 = vmatpush1.bf16.msra.mxu0 0
    %5685 = vmatprep.subr.bf16.mxu0 0
    %5686 = vmatpush1.bf16.msra.mxu0 0
    %5687 = vmatprep.subr.bf16.mxu0 0
    %5688 = vmatpush1.bf16.msra.mxu0 0
    %5689 = vmatprep.subr.bf16.mxu0 0
    %5690 = vmatpush1.bf16.msra.mxu0 0
    %5691 = vmatprep.subr.bf16.mxu0 0
    %5692 = vmatpush1.bf16.msra.mxu0 0
    %5693 = vmatprep.subr.bf16.mxu0 0
    %5694 = vmatpush1.bf16.msra.mxu0 0
    %5695 = vmatprep.mubr.bf16.mxu0 0
    %5696 = vmatmul.mubr.bf16.gmra.mrb[0].mxu0 %v5620
    %v5697 = vpop.f32.mrb[0].mxu0
    %v5698 = vadd.f32 0.0, %v5697
    %v5699 = vpop.f32.mrb[0].mxu0
    %v5700 = vadd.f32 0.0, %v5699
    %v5701 = vpop.f32.mrb[0].mxu0
    %v5702 = vpop.f32.mrb[0].mxu0
    %5703 = vdwg.mxu0
    %v5708 = vrot.slane %v5657, 2
    %v5709 = vrot.slane %v5659, 2
    %v5710 = vrot.slane %v5698, 2
    %v5711 = vrot.slane %v5700, 2
    %v5716 = vadd.f32 %v5199, %v5708
    %v5717 = vadd.f32 %v5201, %v5709
    %v5718 = vadd.f32 %v5242, %v5710
    %v5719 = vadd.f32 %v5244, %v5711
    %v5720 = vxor.u32 %v5716, 2147483648
    %v5721 = vxor.u32 %v5717, 2147483648
    %v5722 = vxor.u32 %v5718, 2147483648
    %v5723 = vmul.f32 %v5720, 1.442695
    %v5724 = vpow.pop %v5723
    %v5725 = vmul.f32 %v5721, 1.442695
    %v5726 = vpow.pop %v5725
    %v5727 = vmul.f32 %v5722, 1.442695
    %v5728 = vpow.pop %v5727
    %v5729 = vadd.f32 %v5724, 1.0
    %v5730 = vadd.f32 %v5726, 1.0
    %v5731 = vadd.f32 %v5728, 1.0
    %v5732 = vrcp.pop %v5729
    %v5733 = vmul.f32 1.0, %v5732
    %v5734 = vrcp.pop %v5730
    %v5735 = vmul.f32 1.0, %v5734
    %v5736 = vrcp.pop %v5731
    %v5737 = vmul.f32 1.0, %v5736
    %v5738 = vtanh.pop %v5719
    %v5740 = vrot.slane %v5614, 6
    %v5742 = vmul.f32 %v5735, %v5740
    %v5743 = vmul.f32 %v5733, %v5738
    %v5744 = vadd.f32 %v5742, %v5743
    %v5745 = vtanh.pop %v5744
    %v5746 = vmul.f32 %v5737, %v5745
    %5747 = vst [vmem:[#allocation4] sm:$0xc0] %v5746
    %v5748 = vpack.c.bf16 %v5746, %v5746
    %v5750 = vrot.slane %v5748, 3
    %5752 = vmatprep.subr.bf16.mxu0 %v5107
    %5753 = vmatpush1.bf16.msra.mxu0 %v5106
    %5754 = vmatprep.subr.bf16.mxu0 %v5111
    %5755 = vmatpush1.bf16.msra.mxu0 %v5110
    %5756 = vmatprep.subr.bf16.mxu0 %v5115
    %5757 = vmatpush1.bf16.msra.mxu0 %v5114
    %5758 = vmatprep.subr.bf16.mxu0 %v5119
    %5759 = vmatpush1.bf16.msra.mxu0 %v5118
    %5760 = vmatprep.subr.bf16.mxu0 %v5123
    %5761 = vmatpush1.bf16.msra.mxu0 %v5122
    %5762 = vmatprep.subr.bf16.mxu0 %v5127
    %5763 = vmatpush1.bf16.msra.mxu0 %v5126
    %5764 = vmatprep.subr.bf16.mxu0 %v5131
    %5765 = vmatpush1.bf16.msra.mxu0 %v5130
    %5766 = vmatprep.subr.bf16.mxu0 %v5135
    %5767 = vmatpush1.bf16.msra.mxu0 %v5134
    %5768 = vmatprep.subr.bf16.mxu0 0
    %5769 = vmatpush1.bf16.msra.mxu0 0
    %5770 = vmatprep.subr.bf16.mxu0 0
    %5771 = vmatpush1.bf16.msra.mxu0 0
    %5772 = vmatprep.subr.bf16.mxu0 0
    %5773 = vmatpush1.bf16.msra.mxu0 0
    %5774 = vmatprep.subr.bf16.mxu0 0
    %5775 = vmatpush1.bf16.msra.mxu0 0
    %5776 = vmatprep.subr.bf16.mxu0 0
    %5777 = vmatpush1.bf16.msra.mxu0 0
    %5778 = vmatprep.subr.bf16.mxu0 0
    %5779 = vmatpush1.bf16.msra.mxu0 0
    %5780 = vmatprep.subr.bf16.mxu0 0
    %5781 = vmatpush1.bf16.msra.mxu0 0
    %5782 = vmatprep.subr.bf16.mxu0 0
    %5783 = vmatpush1.bf16.msra.mxu0 0
    %5784 = vmatprep.mubr.bf16.mxu0 0
    %5785 = vmatmul.mubr.bf16.gmra.mrb[0].mxu0 %v5750
    %v5786 = vpop.f32.mrb[0].mxu0
    %v5787 = vadd.f32 0.0, %v5786
    %v5788 = vpop.f32.mrb[0].mxu0
    %v5789 = vadd.f32 0.0, %v5788
    %v5790 = vpop.f32.mrb[0].mxu0
    %v5791 = vpop.f32.mrb[0].mxu0
    %5792 = vdwg.mxu0
    %5793 = vmatprep.subr.bf16.mxu0 %v5109
    %5794 = vmatpush1.bf16.msra.mxu0 %v5108
    %5795 = vmatprep.subr.bf16.mxu0 %v5113
    %5796 = vmatpush1.bf16.msra.mxu0 %v5112
    %5797 = vmatprep.subr.bf16.mxu0 %v5117
    %5798 = vmatpush1.bf16.msra.mxu0 %v5116
    %5799 = vmatprep.subr.bf16.mxu0 %v5121
    %5800 = vmatpush1.bf16.msra.mxu0 %v5120
    %5801 = vmatprep.subr.bf16.mxu0 %v5125
    %5802 = vmatpush1.bf16.msra.mxu0 %v5124
    %5803 = vmatprep.subr.bf16.mxu0 %v5129
    %5804 = vmatpush1.bf16.msra.mxu0 %v5128
    %5805 = vmatprep.subr.bf16.mxu0 %v5133
    %5806 = vmatpush1.bf16.msra.mxu0 %v5132
    %5807 = vmatprep.subr.bf16.mxu0 %v5137
    %5808 = vmatpush1.bf16.msra.mxu0 %v5136
    %5809 = vmatprep.subr.bf16.mxu0 0
    %5810 = vmatpush1.bf16.msra.mxu0 0
    %5811 = vmatprep.subr.bf16.mxu0 0
    %5812 = vmatpush1.bf16.msra.mxu0 0
    %5813 = vmatprep.subr.bf16.mxu0 0
    %5814 = vmatpush1.bf16.msra.mxu0 0
    %5815 = vmatprep.subr.bf16.mxu0 0
    %5816 = vmatpush1.bf16.msra.mxu0 0
    %5817 = vmatprep.subr.bf16.mxu0 0
    %5818 = vmatpush1.bf16.msra.mxu0 0
    %5819 = vmatprep.subr.bf16.mxu0 0
    %5820 = vmatpush1.bf16.msra.mxu0 0
    %5821 = vmatprep.subr.bf16.mxu0 0
    %5822 = vmatpush1.bf16.msra.mxu0 0
    %5823 = vmatprep.subr.bf16.mxu0 0
    %5824 = vmatpush1.bf16.msra.mxu0 0
    %5825 = vmatprep.mubr.bf16.mxu0 0
    %5826 = vmatmul.mubr.bf16.gmra.mrb[0].mxu0 %v5750
    %v5827 = vpop.f32.mrb[0].mxu0
    %v5828 = vadd.f32 0.0, %v5827
    %v5829 = vpop.f32.mrb[0].mxu0
    %v5830 = vadd.f32 0.0, %v5829
    %v5831 = vpop.f32.mrb[0].mxu0
    %v5832 = vpop.f32.mrb[0].mxu0
    %5833 = vdwg.mxu0
    %v5834 = vadd.f32 %v5203, %v5787
    %v5835 = vadd.f32 %v5205, %v5789
    %v5836 = vadd.f32 %v5246, %v5828
    %v5837 = vadd.f32 %v5248, %v5830
    %v5838 = vxor.u32 %v5834, 2147483648
    %v5839 = vxor.u32 %v5835, 2147483648
    %v5840 = vxor.u32 %v5836, 2147483648
    %v5841 = vmul.f32 %v5838, 1.442695
    %v5842 = vpow.pop %v5841
    %v5843 = vmul.f32 %v5839, 1.442695
    %v5844 = vpow.pop %v5843
    %v5845 = vmul.f32 %v5840, 1.442695
    %v5846 = vpow.pop %v5845
    %v5847 = vadd.f32 %v5842, 1.0
    %v5848 = vadd.f32 %v5844, 1.0
    %v5849 = vadd.f32 %v5846, 1.0
    %v5850 = vrcp.pop %v5847
    %v5851 = vmul.f32 1.0, %v5850
    %v5852 = vrcp.pop %v5848
    %v5853 = vmul.f32 1.0, %v5852
    %v5854 = vrcp.pop %v5849
    %v5855 = vmul.f32 1.0, %v5854
    %v5856 = vtanh.pop %v5837
    %v5858 = vrot.slane %v5744, 6
    %v5860 = vmul.f32 %v5853, %v5858
    %v5861 = vmul.f32 %v5851, %v5856
    %v5862 = vadd.f32 %v5860, %v5861
    %v5863 = vtanh.pop %v5862
    %v5864 = vmul.f32 %v5855, %v5863
    %5865 = vst [vmem:[#allocation4 + $0x8] sm:$0x3] %v5864
    %v5866 = vpack.c.bf16 %v5864, %v5864
    %5867 = vmatprep.subr.bf16.mxu0 %v5107
    %5868 = vmatpush1.bf16.msra.mxu0 %v5106
    %5869 = vmatprep.subr.bf16.mxu0 %v5111
    %5870 = vmatpush1.bf16.msra.mxu0 %v5110
    %5871 = vmatprep.subr.bf16.mxu0 %v5115
    %5872 = vmatpush1.bf16.msra.mxu0 %v5114
    %5873 = vmatprep.subr.bf16.mxu0 %v5119
    %5874 = vmatpush1.bf16.msra.mxu0 %v5118
    %5875 = vmatprep.subr.bf16.mxu0 %v5123
    %5876 = vmatpush1.bf16.msra.mxu0 %v5122
    %5877 = vmatprep.subr.bf16.mxu0 %v5127
    %5878 = vmatpush1.bf16.msra.mxu0 %v5126
    %5879 = vmatprep.subr.bf16.mxu0 %v5131
    %5880 = vmatpush1.bf16.msra.mxu0 %v5130
    %5881 = vmatprep.subr.bf16.mxu0 %v5135
    %5882 = vmatpush1.bf16.msra.mxu0 %v5134
    %5883 = vmatprep.subr.bf16.mxu0 0
    %5884 = vmatpush1.bf16.msra.mxu0 0
    %5885 = vmatprep.subr.bf16.mxu0 0
    %5886 = vmatpush1.bf16.msra.mxu0 0
    %5887 = vmatprep.subr.bf16.mxu0 0
    %5888 = vmatpush1.bf16.msra.mxu0 0
    %5889 = vmatprep.subr.bf16.mxu0 0
    %5890 = vmatpush1.bf16.msra.mxu0 0
    %5891 = vmatprep.subr.bf16.mxu0 0
    %5892 = vmatpush1.bf16.msra.mxu0 0
    %5893 = vmatprep.subr.bf16.mxu0 0
    %5894 = vmatpush1.bf16.msra.mxu0 0
    %5895 = vmatprep.subr.bf16.mxu0 0
    %5896 = vmatpush1.bf16.msra.mxu0 0
    %5897 = vmatprep.subr.bf16.mxu0 0
    %5898 = vmatpush1.bf16.msra.mxu0 0
    %5899 = vmatprep.mubr.bf16.mxu0 0
    %5900 = vmatmul.mubr.bf16.gmra.mrb[0].mxu0 %v5866
    %v5901 = vpop.f32.mrb[0].mxu0
    %v5902 = vadd.f32 0.0, %v5901
    %v5903 = vpop.f32.mrb[0].mxu0
    %v5904 = vadd.f32 0.0, %v5903
    %v5905 = vpop.f32.mrb[0].mxu0
    %v5906 = vpop.f32.mrb[0].mxu0
    %5907 = vdwg.mxu0
    %5908 = vmatprep.subr.bf16.mxu0 %v5109
    %5909 = vmatpush1.bf16.msra.mxu0 %v5108
    %5910 = vmatprep.subr.bf16.mxu0 %v5113
    %5911 = vmatpush1.bf16.msra.mxu0 %v5112
    %5912 = vmatprep.subr.bf16.mxu0 %v5117
    %5913 = vmatpush1.bf16.msra.mxu0 %v5116
    %5914 = vmatprep.subr.bf16.mxu0 %v5121
    %5915 = vmatpush1.bf16.msra.mxu0 %v5120
    %5916 = vmatprep.subr.bf16.mxu0 %v5125
    %5917 = vmatpush1.bf16.msra.mxu0 %v5124
    %5918 = vmatprep.subr.bf16.mxu0 %v5129
    %5919 = vmatpush1.bf16.msra.mxu0 %v5128
    %5920 = vmatprep.subr.bf16.mxu0 %v5133
    %5921 = vmatpush1.bf16.msra.mxu0 %v5132
    %5922 = vmatprep.subr.bf16.mxu0 %v5137
    %5923 = vmatpush1.bf16.msra.mxu0 %v5136
    %5924 = vmatprep.subr.bf16.mxu0 0
    %5925 = vmatpush1.bf16.msra.mxu0 0
    %5926 = vmatprep.subr.bf16.mxu0 0
    %5927 = vmatpush1.bf16.msra.mxu0 0
    %5928 = vmatprep.subr.bf16.mxu0 0
    %5929 = vmatpush1.bf16.msra.mxu0 0
    %5930 = vmatprep.subr.bf16.mxu0 0
    %5931 = vmatpush1.bf16.msra.mxu0 0
    %5932 = vmatprep.subr.bf16.mxu0 0
    %5933 = vmatpush1.bf16.msra.mxu0 0
    %5934 = vmatprep.subr.bf16.mxu0 0
    %5935 = vmatpush1.bf16.msra.mxu0 0
    %5936 = vmatprep.subr.bf16.mxu0 0
    %5937 = vmatpush1.bf16.msra.mxu0 0
    %5938 = vmatprep.subr.bf16.mxu0 0
    %5939 = vmatpush1.bf16.msra.mxu0 0
    %5940 = vmatprep.mubr.bf16.mxu0 0
    %5941 = vmatmul.mubr.bf16.gmra.mrb[0].mxu0 %v5866
    %v5942 = vpop.f32.mrb[0].mxu0
    %v5943 = vadd.f32 0.0, %v5942
    %v5944 = vpop.f32.mrb[0].mxu0
    %v5945 = vadd.f32 0.0, %v5944
    %v5946 = vpop.f32.mrb[0].mxu0
    %v5947 = vpop.f32.mrb[0].mxu0
    %5948 = vdwg.mxu0
    %v5953 = vrot.slane %v5902, 6
    %v5954 = vrot.slane %v5904, 6
    %v5955 = vrot.slane %v5943, 6
    %v5956 = vrot.slane %v5945, 6
    %v5961 = vadd.f32 %v5203, %v5953
    %v5962 = vadd.f32 %v5205, %v5954
    %v5963 = vadd.f32 %v5246, %v5955
    %v5964 = vadd.f32 %v5248, %v5956
    %v5965 = vxor.u32 %v5961, 2147483648
    %v5966 = vxor.u32 %v5962, 2147483648
    %v5967 = vxor.u32 %v5963, 2147483648
    %v5968 = vmul.f32 %v5965, 1.442695
    %v5969 = vpow.pop %v5968
    %v5970 = vmul.f32 %v5966, 1.442695
    %v5971 = vpow.pop %v5970
    %v5972 = vmul.f32 %v5967, 1.442695
    %v5973 = vpow.pop %v5972
    %v5974 = vadd.f32 %v5969, 1.0
    %v5975 = vadd.f32 %v5971, 1.0
    %v5976 = vadd.f32 %v5973, 1.0
    %v5977 = vrcp.pop %v5974
    %v5978 = vmul.f32 1.0, %v5977
    %v5979 = vrcp.pop %v5975
    %v5980 = vmul.f32 1.0, %v5979
    %v5981 = vrcp.pop %v5976
    %v5982 = vmul.f32 1.0, %v5981
    %v5983 = vtanh.pop %v5964
    %v5985 = vrot.slane %v5862, 6
    %v5987 = vmul.f32 %v5980, %v5985
    %v5988 = vmul.f32 %v5978, %v5983
    %v5989 = vadd.f32 %v5987, %v5988
    %v5990 = vtanh.pop %v5989
    %v5991 = vmul.f32 %v5982, %v5990
    %5992 = vst [vmem:[#allocation4 + $0x8] sm:$0xc] %v5991
    %v5993 = vpack.c.bf16 %v5991, %v5991
    %v5995 = vrot.slane %v5993, 1
    %5997 = vmatprep.subr.bf16.mxu0 %v5107
    %5998 = vmatpush1.bf16.msra.mxu0 %v5106
    %5999 = vmatprep.subr.bf16.mxu0 %v5111
    %6000 = vmatpush1.bf16.msra.mxu0 %v5110
    %6001 = vmatprep.subr.bf16.mxu0 %v5115
    %6002 = vmatpush1.bf16.msra.mxu0 %v5114
    %6003 = vmatprep.subr.bf16.mxu0 %v5119
    %6004 = vmatpush1.bf16.msra.mxu0 %v5118
    %6005 = vmatprep.subr.bf16.mxu0 %v5123
    %6006 = vmatpush1.bf16.msra.mxu0 %v5122
    %6007 = vmatprep.subr.bf16.mxu0 %v5127
    %6008 = vmatpush1.bf16.msra.mxu0 %v5126
    %6009 = vmatprep.subr.bf16.mxu0 %v5131
    %6010 = vmatpush1.bf16.msra.mxu0 %v5130
    %6011 = vmatprep.subr.bf16.mxu0 %v5135
    %6012 = vmatpush1.bf16.msra.mxu0 %v5134
    %6013 = vmatprep.subr.bf16.mxu0 0
    %6014 = vmatpush1.bf16.msra.mxu0 0
    %6015 = vmatprep.subr.bf16.mxu0 0
    %6016 = vmatpush1.bf16.msra.mxu0 0
    %6017 = vmatprep.subr.bf16.mxu0 0
    %6018 = vmatpush1.bf16.msra.mxu0 0
    %6019 = vmatprep.subr.bf16.mxu0 0
    %6020 = vmatpush1.bf16.msra.mxu0 0
    %6021 = vmatprep.subr.bf16.mxu0 0
    %6022 = vmatpush1.bf16.msra.mxu0 0
    %6023 = vmatprep.subr.bf16.mxu0 0
    %6024 = vmatpush1.bf16.msra.mxu0 0
    %6025 = vmatprep.subr.bf16.mxu0 0
    %6026 = vmatpush1.bf16.msra.mxu0 0
    %6027 = vmatprep.subr.bf16.mxu0 0
    %6028 = vmatpush1.bf16.msra.mxu0 0
    %6029 = vmatprep.mubr.bf16.mxu0 0
    %6030 = vmatmul.mubr.bf16.gmra.mrb[0].mxu0 %v5995
    %v6031 = vpop.f32.mrb[0].mxu0
    %v6032 = vadd.f32 0.0, %v6031
    %v6033 = vpop.f32.mrb[0].mxu0
    %v6034 = vadd.f32 0.0, %v6033
    %v6035 = vpop.f32.mrb[0].mxu0
    %v6036 = vpop.f32.mrb[0].mxu0
    %6037 = vdwg.mxu0
    %6038 = vmatprep.subr.bf16.mxu0 %v5109
    %6039 = vmatpush1.bf16.msra.mxu0 %v5108
    %6040 = vmatprep.subr.bf16.mxu0 %v5113
    %6041 = vmatpush1.bf16.msra.mxu0 %v5112
    %6042 = vmatprep.subr.bf16.mxu0 %v5117
    %6043 = vmatpush1.bf16.msra.mxu0 %v5116
    %6044 = vmatprep.subr.bf16.mxu0 %v5121
    %6045 = vmatpush1.bf16.msra.mxu0 %v5120
    %6046 = vmatprep.subr.bf16.mxu0 %v5125
    %6047 = vmatpush1.bf16.msra.mxu0 %v5124
    %6048 = vmatprep.subr.bf16.mxu0 %v5129
    %6049 = vmatpush1.bf16.msra.mxu0 %v5128
    %6050 = vmatprep.subr.bf16.mxu0 %v5133
    %6051 = vmatpush1.bf16.msra.mxu0 %v5132
    %6052 = vmatprep.subr.bf16.mxu0 %v5137
    %6053 = vmatpush1.bf16.msra.mxu0 %v5136
    %6054 = vmatprep.subr.bf16.mxu0 0
    %6055 = vmatpush1.bf16.msra.mxu0 0
    %6056 = vmatprep.subr.bf16.mxu0 0
    %6057 = vmatpush1.bf16.msra.mxu0 0
    %6058 = vmatprep.subr.bf16.mxu0 0
    %6059 = vmatpush1.bf16.msra.mxu0 0
    %6060 = vmatprep.subr.bf16.mxu0 0
    %6061 = vmatpush1.bf16.msra.mxu0 0
    %6062 = vmatprep.subr.bf16.mxu0 0
    %6063 = vmatpush1.bf16.msra.mxu0 0
    %6064 = vmatprep.subr.bf16.mxu0 0
    %6065 = vmatpush1.bf16.msra.mxu0 0
    %6066 = vmatprep.subr.bf16.mxu0 0
    %6067 = vmatpush1.bf16.msra.mxu0 0
    %6068 = vmatprep.subr.bf16.mxu0 0
    %6069 = vmatpush1.bf16.msra.mxu0 0
    %6070 = vmatprep.mubr.bf16.mxu0 0
    %6071 = vmatmul.mubr.bf16.gmra.mrb[0].mxu0 %v5995
    %v6072 = vpop.f32.mrb[0].mxu0
    %v6073 = vadd.f32 0.0, %v6072
    %v6074 = vpop.f32.mrb[0].mxu0
    %v6075 = vadd.f32 0.0, %v6074
    %v6076 = vpop.f32.mrb[0].mxu0
    %v6077 = vpop.f32.mrb[0].mxu0
    %6078 = vdwg.mxu0
    %v6083 = vrot.slane %v6032, 4
    %v6084 = vrot.slane %v6034, 4
    %v6085 = vrot.slane %v6073, 4
    %v6086 = vrot.slane %v6075, 4
    %v6091 = vadd.f32 %v5203, %v6083
    %v6092 = vadd.f32 %v5205, %v6084
    %v6093 = vadd.f32 %v5246, %v6085
    %v6094 = vadd.f32 %v5248, %v6086
    %v6095 = vxor.u32 %v6091, 2147483648
    %v6096 = vxor.u32 %v6092, 2147483648
    %v6097 = vxor.u32 %v6093, 2147483648
    %v6098 = vmul.f32 %v6095, 1.442695
    %v6099 = vpow.pop %v6098
    %v6100 = vmul.f32 %v6096, 1.442695
    %v6101 = vpow.pop %v6100
    %v6102 = vmul.f32 %v6097, 1.442695
    %v6103 = vpow.pop %v6102
    %v6104 = vadd.f32 %v6099, 1.0
    %v6105 = vadd.f32 %v6101, 1.0
    %v6106 = vadd.f32 %v6103, 1.0
    %v6107 = vrcp.pop %v6104
    %v6108 = vmul.f32 1.0, %v6107
    %v6109 = vrcp.pop %v6105
    %v6110 = vmul.f32 1.0, %v6109
    %v6111 = vrcp.pop %v6106
    %v6112 = vmul.f32 1.0, %v6111
    %v6113 = vtanh.pop %v6094
    %v6115 = vrot.slane %v5989, 6
    %v6117 = vmul.f32 %v6110, %v6115
    %v6118 = vmul.f32 %v6108, %v6113
    %v6119 = vadd.f32 %v6117, %v6118
    %v6120 = vtanh.pop %v6119
    %v6121 = vmul.f32 %v6112, %v6120
    %6122 = vst [vmem:[#allocation4 + $0x8] sm:$0x30] %v6121
    %v6123 = vpack.c.bf16 %v6121, %v6121
    %v6125 = vrot.slane %v6123, 2
    %6127 = vmatprep.subr.bf16.mxu0 %v5107
    %6128 = vmatpush1.bf16.msra.mxu0 %v5106
    %6129 = vmatprep.subr.bf16.mxu0 %v5111
    %6130 = vmatpush1.bf16.msra.mxu0 %v5110
    %6131 = vmatprep.subr.bf16.mxu0 %v5115
    %6132 = vmatpush1.bf16.msra.mxu0 %v5114
    %6133 = vmatprep.subr.bf16.mxu0 %v5119
    %6134 = vmatpush1.bf16.msra.mxu0 %v5118
    %6135 = vmatprep.subr.bf16.mxu0 %v5123
    %6136 = vmatpush1.bf16.msra.mxu0 %v5122
    %6137 = vmatprep.subr.bf16.mxu0 %v5127
    %6138 = vmatpush1.bf16.msra.mxu0 %v5126
    %6139 = vmatprep.subr.bf16.mxu0 %v5131
    %6140 = vmatpush1.bf16.msra.mxu0 %v5130
    %6141 = vmatprep.subr.bf16.mxu0 %v5135
    %6142 = vmatpush1.bf16.msra.mxu0 %v5134
    %6143 = vmatprep.subr.bf16.mxu0 0
    %6144 = vmatpush1.bf16.msra.mxu0 0
    %6145 = vmatprep.subr.bf16.mxu0 0
    %6146 = vmatpush1.bf16.msra.mxu0 0
    %6147 = vmatprep.subr.bf16.mxu0 0
    %6148 = vmatpush1.bf16.msra.mxu0 0
    %6149 = vmatprep.subr.bf16.mxu0 0
    %6150 = vmatpush1.bf16.msra.mxu0 0
    %6151 = vmatprep.subr.bf16.mxu0 0
    %6152 = vmatpush1.bf16.msra.mxu0 0
    %6153 = vmatprep.subr.bf16.mxu0 0
    %6154 = vmatpush1.bf16.msra.mxu0 0
    %6155 = vmatprep.subr.bf16.mxu0 0
    %6156 = vmatpush1.bf16.msra.mxu0 0
    %6157 = vmatprep.subr.bf16.mxu0 0
    %6158 = vmatpush1.bf16.msra.mxu0 0
    %6159 = vmatprep.mubr.bf16.mxu0 0
    %6160 = vmatmul.mubr.bf16.gmra.mrb[0].mxu0 %v6125
    %v6161 = vpop.f32.mrb[0].mxu0
    %v6162 = vadd.f32 0.0, %v6161
    %v6163 = vpop.f32.mrb[0].mxu0
    %v6164 = vadd.f32 0.0, %v6163
    %v6165 = vpop.f32.mrb[0].mxu0
    %v6166 = vpop.f32.mrb[0].mxu0
    %6167 = vdwg.mxu0
    %6168 = vmatprep.subr.bf16.mxu0 %v5109
    %6169 = vmatpush1.bf16.msra.mxu0 %v5108
    %6170 = vmatprep.subr.bf16.mxu0 %v5113
    %6171 = vmatpush1.bf16.msra.mxu0 %v5112
    %6172 = vmatprep.subr.bf16.mxu0 %v5117
    %6173 = vmatpush1.bf16.msra.mxu0 %v5116
    %6174 = vmatprep.subr.bf16.mxu0 %v5121
    %6175 = vmatpush1.bf16.msra.mxu0 %v5120
    %6176 = vmatprep.subr.bf16.mxu0 %v5125
    %6177 = vmatpush1.bf16.msra.mxu0 %v5124
    %6178 = vmatprep.subr.bf16.mxu0 %v5129
    %6179 = vmatpush1.bf16.msra.mxu0 %v5128
    %6180 = vmatprep.subr.bf16.mxu0 %v5133
    %6181 = vmatpush1.bf16.msra.mxu0 %v5132
    %6182 = vmatprep.subr.bf16.mxu0 %v5137
    %6183 = vmatpush1.bf16.msra.mxu0 %v5136
    %6184 = vmatprep.subr.bf16.mxu0 0
    %6185 = vmatpush1.bf16.msra.mxu0 0
    %6186 = vmatprep.subr.bf16.mxu0 0
    %6187 = vmatpush1.bf16.msra.mxu0 0
    %6188 = vmatprep.subr.bf16.mxu0 0
    %6189 = vmatpush1.bf16.msra.mxu0 0
    %6190 = vmatprep.subr.bf16.mxu0 0
    %6191 = vmatpush1.bf16.msra.mxu0 0
    %6192 = vmatprep.subr.bf16.mxu0 0
    %6193 = vmatpush1.bf16.msra.mxu0 0
    %6194 = vmatprep.subr.bf16.mxu0 0
    %6195 = vmatpush1.bf16.msra.mxu0 0
    %6196 = vmatprep.subr.bf16.mxu0 0
    %6197 = vmatpush1.bf16.msra.mxu0 0
    %6198 = vmatprep.subr.bf16.mxu0 0
    %6199 = vmatpush1.bf16.msra.mxu0 0
    %6200 = vmatprep.mubr.bf16.mxu0 0
    %6201 = vmatmul.mubr.bf16.gmra.mrb[0].mxu0 %v6125
    %v6202 = vpop.f32.mrb[0].mxu0
    %v6203 = vadd.f32 0.0, %v6202
    %v6204 = vpop.f32.mrb[0].mxu0
    %v6205 = vadd.f32 0.0, %v6204
    %v6206 = vpop.f32.mrb[0].mxu0
    %v6207 = vpop.f32.mrb[0].mxu0
    %6208 = vdwg.mxu0
    %v6213 = vrot.slane %v6162, 2
    %v6214 = vrot.slane %v6164, 2
    %v6215 = vrot.slane %v6203, 2
    %v6216 = vrot.slane %v6205, 2
    %v6221 = vadd.f32 %v5203, %v6213
    %v6222 = vadd.f32 %v5205, %v6214
    %v6223 = vadd.f32 %v5246, %v6215
    %v6224 = vadd.f32 %v5248, %v6216
    %v6225 = vxor.u32 %v6221, 2147483648
    %v6226 = vxor.u32 %v6222, 2147483648
    %v6227 = vxor.u32 %v6223, 2147483648
    %v6228 = vmul.f32 %v6225, 1.442695
    %v6229 = vpow.pop %v6228
    %v6230 = vmul.f32 %v6226, 1.442695
    %v6231 = vpow.pop %v6230
    %v6232 = vmul.f32 %v6227, 1.442695
    %v6233 = vpow.pop %v6232
    %v6234 = vadd.f32 %v6229, 1.0
    %v6235 = vadd.f32 %v6231, 1.0
    %v6236 = vadd.f32 %v6233, 1.0
    %v6237 = vrcp.pop %v6234
    %v6238 = vmul.f32 1.0, %v6237
    %v6239 = vrcp.pop %v6235
    %v6240 = vmul.f32 1.0, %v6239
    %v6241 = vrcp.pop %v6236
    %v6242 = vmul.f32 1.0, %v6241
    %v6243 = vtanh.pop %v6224
    %v6245 = vrot.slane %v6119, 6
    %v6247 = vmul.f32 %v6240, %v6245
    %v6248 = vmul.f32 %v6238, %v6243
    %v6249 = vadd.f32 %v6247, %v6248
    %v6250 = vtanh.pop %v6249
    %v6251 = vmul.f32 %v6242, %v6250
    %6252 = vst [vmem:[#allocation4 + $0x8] sm:$0xc0] %v6251
    %s6253 = sshll.u32 %s171, 4
    %6254 = dma.done %s176, %s6253
    %v6255 = vld [vmem:[%s175] sm:$0xff]
    %v6256 = vld [vmem:[%s175 + $0x8] sm:$0xff]
    %v6257 = vld [vmem:[%s175 + $0x10] sm:$0xff]
    %v6258 = vld [vmem:[%s175 + $0x18] sm:$0xff]
    %v6259 = vld [vmem:[%s175 + $0x20] sm:$0xff]
    %v6260 = vld [vmem:[%s175 + $0x28] sm:$0xff]
    %v6261 = vld [vmem:[%s175 + $0x30] sm:$0xff]
    %v6262 = vld [vmem:[%s175 + $0x38] sm:$0xff]
    %v6263 = vld [vmem:[%s175 + $0x40] sm:$0xff]
    %v6264 = vld [vmem:[%s175 + $0x48] sm:$0xff]
    %v6265 = vld [vmem:[%s175 + $0x50] sm:$0xff]
    %v6266 = vld [vmem:[%s175 + $0x58] sm:$0xff]
    %v6267 = vld [vmem:[%s175 + $0x60] sm:$0xff]
    %v6268 = vld [vmem:[%s175 + $0x68] sm:$0xff]
    %v6269 = vld [vmem:[%s175 + $0x70] sm:$0xff]
    %v6270 = vld [vmem:[%s175 + $0x78] sm:$0xff]
    %v6271 = vld [vmem:[%s175 + $0x80] sm:$0xff]
    %v6272 = vld [vmem:[%s175 + $0x88] sm:$0xff]
    %v6273 = vld [vmem:[%s175 + $0x90] sm:$0xff]
    %v6274 = vld [vmem:[%s175 + $0x98] sm:$0xff]
    %v6275 = vld [vmem:[%s175 + $0xa0] sm:$0xff]
    %v6276 = vld [vmem:[%s175 + $0xa8] sm:$0xff]
    %v6277 = vld [vmem:[%s175 + $0xb0] sm:$0xff]
    %v6278 = vld [vmem:[%s175 + $0xb8] sm:$0xff]
    %v6279 = vld [vmem:[%s175 + $0xc0] sm:$0xff]
    %v6280 = vld [vmem:[%s175 + $0xc8] sm:$0xff]
    %v6281 = vld [vmem:[%s175 + $0xd0] sm:$0xff]
    %v6282 = vld [vmem:[%s175 + $0xd8] sm:$0xff]
    %v6283 = vld [vmem:[%s175 + $0xe0] sm:$0xff]
    %v6284 = vld [vmem:[%s175 + $0xe8] sm:$0xff]
    %v6285 = vld [vmem:[%s175 + $0xf0] sm:$0xff]
    %v6286 = vld [vmem:[%s175 + $0xf8] sm:$0xff]
    %v6287 = vld [vmem:[%s175 + $0x100] sm:$0xff]
    %v6288 = vld [vmem:[%s175 + $0x108] sm:$0xff]
    %v6289 = vld [vmem:[%s175 + $0x110] sm:$0xff]
    %v6290 = vld [vmem:[%s175 + $0x118] sm:$0xff]
    %v6291 = vld [vmem:[%s175 + $0x120] sm:$0xff]
    %v6292 = vld [vmem:[%s175 + $0x128] sm:$0xff]
    %v6293 = vld [vmem:[%s175 + $0x130] sm:$0xff]
    %v6294 = vld [vmem:[%s175 + $0x138] sm:$0xff]
    %v6295 = vld [vmem:[%s175 + $0x140] sm:$0xff]
    %v6296 = vld [vmem:[%s175 + $0x148] sm:$0xff]
    %v6297 = vld [vmem:[%s175 + $0x150] sm:$0xff]
    %v6298 = vld [vmem:[%s175 + $0x158] sm:$0xff]
    %v6299 = vld [vmem:[%s175 + $0x160] sm:$0xff]
    %v6300 = vld [vmem:[%s175 + $0x168] sm:$0xff]
    %v6301 = vld [vmem:[%s175 + $0x170] sm:$0xff]
    %v6302 = vld [vmem:[%s175 + $0x178] sm:$0xff]
    %v6303 = vld [vmem:[%s175 + $0x180] sm:$0xff]
    %v6304 = vld [vmem:[%s175 + $0x188] sm:$0xff]
    %v6305 = vld [vmem:[%s175 + $0x190] sm:$0xff]
    %v6306 = vld [vmem:[%s175 + $0x198] sm:$0xff]
    %v6307 = vld [vmem:[%s175 + $0x1a0] sm:$0xff]
    %v6308 = vld [vmem:[%s175 + $0x1a8] sm:$0xff]
    %v6309 = vld [vmem:[%s175 + $0x1b0] sm:$0xff]
    %v6310 = vld [vmem:[%s175 + $0x1b8] sm:$0xff]
    %v6311 = vld [vmem:[%s175 + $0x1c0] sm:$0xff]
    %v6312 = vld [vmem:[%s175 + $0x1c8] sm:$0xff]
    %v6313 = vld [vmem:[%s175 + $0x1d0] sm:$0xff]
    %v6314 = vld [vmem:[%s175 + $0x1d8] sm:$0xff]
    %v6315 = vld [vmem:[%s175 + $0x1e0] sm:$0xff]
    %v6316 = vld [vmem:[%s175 + $0x1e8] sm:$0xff]
    %v6317 = vld [vmem:[%s175 + $0x1f0] sm:$0xff]
    %v6318 = vld [vmem:[%s175 + $0x1f8] sm:$0xff]
    %v6319 = vld [vmem:[#allocation4] sm:$0xff]
    %v6320 = vld [vmem:[#allocation4 + $0x8] sm:$0xff]
    %v6321 = vpack.c.bf16 %v6320, %v6319
    %s6322 = scalar_lea.vmem [#allocation9], 20
    %v6323 = vld [vmem:[%s6322] sm:$0xf]
    %v6325 = vlaneseq
    %v6326 = vshrl.u32 %v6325, 7
    %v6327 = vsub.s32 0, %v6326
    %v6328 = vrot.slane %v6323, %v6327
    %v6329 = vlaneseq
    %v6330 = vshrl.u32 %v6329, 7
    %v6331 = vsub.s32 1, %v6330
    %v6332 = vrot.slane %v6323, %v6331
    %v6333 = vlaneseq
    %v6334 = vshrl.u32 %v6333, 7
    %v6335 = vsub.s32 2, %v6334
    %v6336 = vrot.slane %v6323, %v6335
    %v6337 = vlaneseq
    %v6338 = vshrl.u32 %v6337, 7
    %v6339 = vsub.s32 3, %v6338
    %v6340 = vrot.slane %v6323, %v6339
    %6345 = vmatprep.subr.bf16.mxu0 %v6256
    %6346 = vmatpush1.bf16.msra.mxu0 %v6255
    %6347 = vmatprep.subr.bf16.mxu0 %v6260
    %6348 = vmatpush1.bf16.msra.mxu0 %v6259
    %6349 = vmatprep.subr.bf16.mxu0 %v6264
    %6350 = vmatpush1.bf16.msra.mxu0 %v6263
    %6351 = vmatprep.subr.bf16.mxu0 %v6268
    %6352 = vmatpush1.bf16.msra.mxu0 %v6267
    %6353 = vmatprep.subr.bf16.mxu0 %v6272
    %6354 = vmatpush1.bf16.msra.mxu0 %v6271
    %6355 = vmatprep.subr.bf16.mxu0 %v6276
    %6356 = vmatpush1.bf16.msra.mxu0 %v6275
    %6357 = vmatprep.subr.bf16.mxu0 %v6280
    %6358 = vmatpush1.bf16.msra.mxu0 %v6279
    %6359 = vmatprep.subr.bf16.mxu0 %v6284
    %6360 = vmatpush1.bf16.msra.mxu0 %v6283
    %6361 = vmatprep.subr.bf16.mxu0 0
    %6362 = vmatpush1.bf16.msra.mxu0 0
    %6363 = vmatprep.subr.bf16.mxu0 0
    %6364 = vmatpush1.bf16.msra.mxu0 0
    %6365 = vmatprep.subr.bf16.mxu0 0
    %6366 = vmatpush1.bf16.msra.mxu0 0
    %6367 = vmatprep.subr.bf16.mxu0 0
    %6368 = vmatpush1.bf16.msra.mxu0 0
    %6369 = vmatprep.subr.bf16.mxu0 0
    %6370 = vmatpush1.bf16.msra.mxu0 0
    %6371 = vmatprep.subr.bf16.mxu0 0
    %6372 = vmatpush1.bf16.msra.mxu0 0
    %6373 = vmatprep.subr.bf16.mxu0 0
    %6374 = vmatpush1.bf16.msra.mxu0 0
    %6375 = vmatprep.subr.bf16.mxu0 0
    %6376 = vmatpush1.bf16.msra.mxu0 0
    %6377 = vmatprep.mubr.bf16.mxu0 0
    %6378 = vmatmul.mubr.bf16.gmra.mrb[0].mxu0 %v6321
    %v6379 = vpop.f32.mrb[0].mxu0
    %v6380 = vadd.f32 %v6328, %v6379
    %v6381 = vpop.f32.mrb[0].mxu0
    %v6382 = vadd.f32 %v6332, %v6381
    %v6383 = vpop.f32.mrb[0].mxu0
    %v6384 = vadd.f32 %v6328, %v6383
    %v6385 = vpop.f32.mrb[0].mxu0
    %v6386 = vadd.f32 %v6332, %v6385
    %6387 = vdwg.mxu0
    %6388 = vmatprep.subr.bf16.mxu0 %v6258
    %6389 = vmatpush1.bf16.msra.mxu0 %v6257
    %6390 = vmatprep.subr.bf16.mxu0 %v6262
    %6391 = vmatpush1.bf16.msra.mxu0 %v6261
    %6392 = vmatprep.subr.bf16.mxu0 %v6266
    %6393 = vmatpush1.bf16.msra.mxu0 %v6265
    %6394 = vmatprep.subr.bf16.mxu0 %v6270
    %6395 = vmatpush1.bf16.msra.mxu0 %v6269
    %6396 = vmatprep.subr.bf16.mxu0 %v6274
    %6397 = vmatpush1.bf16.msra.mxu0 %v6273
    %6398 = vmatprep.subr.bf16.mxu0 %v6278
    %6399 = vmatpush1.bf16.msra.mxu0 %v6277
    %6400 = vmatprep.subr.bf16.mxu0 %v6282
    %6401 = vmatpush1.bf16.msra.mxu0 %v6281
    %6402 = vmatprep.subr.bf16.mxu0 %v6286
    %6403 = vmatpush1.bf16.msra.mxu0 %v6285
    %6404 = vmatprep.subr.bf16.mxu0 0
    %6405 = vmatpush1.bf16.msra.mxu0 0
    %6406 = vmatprep.subr.bf16.mxu0 0
    %6407 = vmatpush1.bf16.msra.mxu0 0
    %6408 = vmatprep.subr.bf16.mxu0 0
    %6409 = vmatpush1.bf16.msra.mxu0 0
    %6410 = vmatprep.subr.bf16.mxu0 0
    %6411 = vmatpush1.bf16.msra.mxu0 0
    %6412 = vmatprep.subr.bf16.mxu0 0
    %6413 = vmatpush1.bf16.msra.mxu0 0
    %6414 = vmatprep.subr.bf16.mxu0 0
    %6415 = vmatpush1.bf16.msra.mxu0 0
    %6416 = vmatprep.subr.bf16.mxu0 0
    %6417 = vmatpush1.bf16.msra.mxu0 0
    %6418 = vmatprep.subr.bf16.mxu0 0
    %6419 = vmatpush1.bf16.msra.mxu0 0
    %6420 = vmatprep.mubr.bf16.mxu0 0
    %6421 = vmatmul.mubr.bf16.gmra.mrb[0].mxu0 %v6321
    %v6422 = vpop.f32.mrb[0].mxu0
    %v6423 = vadd.f32 %v6336, %v6422
    %v6424 = vpop.f32.mrb[0].mxu0
    %v6425 = vadd.f32 %v6340, %v6424
    %v6426 = vpop.f32.mrb[0].mxu0
    %v6427 = vadd.f32 %v6336, %v6426
    %v6428 = vpop.f32.mrb[0].mxu0
    %v6429 = vadd.f32 %v6340, %v6428
    %6430 = vdwg.mxu0
    %6431 = vmatprep.subr.bf16.mxu0 %v6288
    %6432 = vmatpush1.bf16.msra.mxu0 %v6287
    %6433 = vmatprep.subr.bf16.mxu0 %v6292
    %6434 = vmatpush1.bf16.msra.mxu0 %v6291
    %6435 = vmatprep.subr.bf16.mxu0 %v6296
    %6436 = vmatpush1.bf16.msra.mxu0 %v6295
    %6437 = vmatprep.subr.bf16.mxu0 %v6300
    %6438 = vmatpush1.bf16.msra.mxu0 %v6299
    %6439 = vmatprep.subr.bf16.mxu0 %v6304
    %6440 = vmatpush1.bf16.msra.mxu0 %v6303
    %6441 = vmatprep.subr.bf16.mxu0 %v6308
    %6442 = vmatpush1.bf16.msra.mxu0 %v6307
    %6443 = vmatprep.subr.bf16.mxu0 %v6312
    %6444 = vmatpush1.bf16.msra.mxu0 %v6311
    %6445 = vmatprep.subr.bf16.mxu0 %v6316
    %6446 = vmatpush1.bf16.msra.mxu0 %v6315
    %6447 = vmatprep.subr.bf16.mxu0 0
    %6448 = vmatpush1.bf16.msra.mxu0 0
    %6449 = vmatprep.subr.bf16.mxu0 0
    %6450 = vmatpush1.bf16.msra.mxu0 0
    %6451 = vmatprep.subr.bf16.mxu0 0
    %6452 = vmatpush1.bf16.msra.mxu0 0
    %6453 = vmatprep.subr.bf16.mxu0 0
    %6454 = vmatpush1.bf16.msra.mxu0 0
    %6455 = vmatprep.subr.bf16.mxu0 0
    %6456 = vmatpush1.bf16.msra.mxu0 0
    %6457 = vmatprep.subr.bf16.mxu0 0
    %6458 = vmatpush1.bf16.msra.mxu0 0
    %6459 = vmatprep.subr.bf16.mxu0 0
    %6460 = vmatpush1.bf16.msra.mxu0 0
    %6461 = vmatprep.subr.bf16.mxu0 0
    %6462 = vmatpush1.bf16.msra.mxu0 0
    %6463 = vmatprep.mubr.bf16.mxu0 0
    %6464 = vmatmul.mubr.bf16.gmra.mrb[0].mxu0 0
    %v6465 = vpop.f32.mrb[0].mxu0
    %v6466 = vadd.f32 0.0, %v6465
    %v6467 = vpop.f32.mrb[0].mxu0
    %v6468 = vadd.f32 0.0, %v6467
    %v6469 = vpop.f32.mrb[0].mxu0
    %v6470 = vpop.f32.mrb[0].mxu0
    %6471 = vdwg.mxu0
    %6472 = vmatprep.subr.bf16.mxu0 %v6290
    %6473 = vmatpush1.bf16.msra.mxu0 %v6289
    %6474 = vmatprep.subr.bf16.mxu0 %v6294
    %6475 = vmatpush1.bf16.msra.mxu0 %v6293
    %6476 = vmatprep.subr.bf16.mxu0 %v6298
    %6477 = vmatpush1.bf16.msra.mxu0 %v6297
    %6478 = vmatprep.subr.bf16.mxu0 %v6302
    %6479 = vmatpush1.bf16.msra.mxu0 %v6301
    %6480 = vmatprep.subr.bf16.mxu0 %v6306
    %6481 = vmatpush1.bf16.msra.mxu0 %v6305
    %6482 = vmatprep.subr.bf16.mxu0 %v6310
    %6483 = vmatpush1.bf16.msra.mxu0 %v6309
    %6484 = vmatprep.subr.bf16.mxu0 %v6314
    %6485 = vmatpush1.bf16.msra.mxu0 %v6313
    %6486 = vmatprep.subr.bf16.mxu0 %v6318
    %6487 = vmatpush1.bf16.msra.mxu0 %v6317
    %6488 = vmatprep.subr.bf16.mxu0 0
    %6489 = vmatpush1.bf16.msra.mxu0 0
    %6490 = vmatprep.subr.bf16.mxu0 0
    %6491 = vmatpush1.bf16.msra.mxu0 0
    %6492 = vmatprep.subr.bf16.mxu0 0
    %6493 = vmatpush1.bf16.msra.mxu0 0
    %6494 = vmatprep.subr.bf16.mxu0 0
    %6495 = vmatpush1.bf16.msra.mxu0 0
    %6496 = vmatprep.subr.bf16.mxu0 0
    %6497 = vmatpush1.bf16.msra.mxu0 0
    %6498 = vmatprep.subr.bf16.mxu0 0
    %6499 = vmatpush1.bf16.msra.mxu0 0
    %6500 = vmatprep.subr.bf16.mxu0 0
    %6501 = vmatpush1.bf16.msra.mxu0 0
    %6502 = vmatprep.subr.bf16.mxu0 0
    %6503 = vmatpush1.bf16.msra.mxu0 0
    %6504 = vmatprep.mubr.bf16.mxu0 0
    %6505 = vmatmul.mubr.bf16.gmra.mrb[0].mxu0 0
    %v6506 = vpop.f32.mrb[0].mxu0
    %v6507 = vadd.f32 0.0, %v6506
    %v6508 = vpop.f32.mrb[0].mxu0
    %v6509 = vadd.f32 0.0, %v6508
    %v6510 = vpop.f32.mrb[0].mxu0
    %v6511 = vpop.f32.mrb[0].mxu0
    %6512 = vdwg.mxu0
    %v6513 = vadd.f32 %v6380, %v6466
    %v6514 = vadd.f32 %v6382, %v6468
    %v6515 = vadd.f32 %v6423, %v6507
    %v6516 = vadd.f32 %v6425, %v6509
    %v6517 = vxor.u32 %v6513, 2147483648
    %v6518 = vxor.u32 %v6514, 2147483648
    %v6519 = vxor.u32 %v6515, 2147483648
    %v6520 = vmul.f32 %v6517, 1.442695
    %v6521 = vpow.pop %v6520
    %v6522 = vmul.f32 %v6518, 1.442695
    %v6523 = vpow.pop %v6522
    %v6524 = vmul.f32 %v6519, 1.442695
    %v6525 = vpow.pop %v6524
    %v6526 = vadd.f32 %v6521, 1.0
    %v6527 = vadd.f32 %v6523, 1.0
    %v6528 = vadd.f32 %v6525, 1.0
    %v6529 = vrcp.pop %v6526
    %v6530 = vmul.f32 1.0, %v6529
    %v6531 = vrcp.pop %v6527
    %v6532 = vmul.f32 1.0, %v6531
    %v6533 = vrcp.pop %v6528
    %v6534 = vmul.f32 1.0, %v6533
    %v6535 = vtanh.pop %v6516
    %v6536 = vmul.f32 %v6532, 0.0
    %v6537 = vmul.f32 %v6530, %v6535
    %v6538 = vadd.f32 %v6536, %v6537
    %v6539 = vtanh.pop %v6538
    %v6540 = vmul.f32 %v6534, %v6539
    %6541 = vst [vmem:[#allocation5] sm:$0x3] %v6540
    %v6542 = vpack.c.bf16 %v6540, %v6540
    %6543 = vmatprep.subr.bf16.mxu0 %v6288
    %6544 = vmatpush1.bf16.msra.mxu0 %v6287
    %6545 = vmatprep.subr.bf16.mxu0 %v6292
    %6546 = vmatpush1.bf16.msra.mxu0 %v6291
    %6547 = vmatprep.subr.bf16.mxu0 %v6296
    %6548 = vmatpush1.bf16.msra.mxu0 %v6295
    %6549 = vmatprep.subr.bf16.mxu0 %v6300
    %6550 = vmatpush1.bf16.msra.mxu0 %v6299
    %6551 = vmatprep.subr.bf16.mxu0 %v6304
    %6552 = vmatpush1.bf16.msra.mxu0 %v6303
    %6553 = vmatprep.subr.bf16.mxu0 %v6308
    %6554 = vmatpush1.bf16.msra.mxu0 %v6307
    %6555 = vmatprep.subr.bf16.mxu0 %v6312
    %6556 = vmatpush1.bf16.msra.mxu0 %v6311
    %6557 = vmatprep.subr.bf16.mxu0 %v6316
    %6558 = vmatpush1.bf16.msra.mxu0 %v6315
    %6559 = vmatprep.subr.bf16.mxu0 0
    %6560 = vmatpush1.bf16.msra.mxu0 0
    %6561 = vmatprep.subr.bf16.mxu0 0
    %6562 = vmatpush1.bf16.msra.mxu0 0
    %6563 = vmatprep.subr.bf16.mxu0 0
    %6564 = vmatpush1.bf16.msra.mxu0 0
    %6565 = vmatprep.subr.bf16.mxu0 0
    %6566 = vmatpush1.bf16.msra.mxu0 0
    %6567 = vmatprep.subr.bf16.mxu0 0
    %6568 = vmatpush1.bf16.msra.mxu0 0
    %6569 = vmatprep.subr.bf16.mxu0 0
    %6570 = vmatpush1.bf16.msra.mxu0 0
    %6571 = vmatprep.subr.bf16.mxu0 0
    %6572 = vmatpush1.bf16.msra.mxu0 0
    %6573 = vmatprep.subr.bf16.mxu0 0
    %6574 = vmatpush1.bf16.msra.mxu0 0
    %6575 = vmatprep.mubr.bf16.mxu0 0
    %6576 = vmatmul.mubr.bf16.gmra.mrb[0].mxu0 %v6542
    %v6577 = vpop.f32.mrb[0].mxu0
    %v6578 = vadd.f32 0.0, %v6577
    %v6579 = vpop.f32.mrb[0].mxu0
    %v6580 = vadd.f32 0.0, %v6579
    %v6581 = vpop.f32.mrb[0].mxu0
    %v6582 = vpop.f32.mrb[0].mxu0
    %6583 = vdwg.mxu0
    %6584 = vmatprep.subr.bf16.mxu0 %v6290
    %6585 = vmatpush1.bf16.msra.mxu0 %v6289
    %6586 = vmatprep.subr.bf16.mxu0 %v6294
    %6587 = vmatpush1.bf16.msra.mxu0 %v6293
    %6588 = vmatprep.subr.bf16.mxu0 %v6298
    %6589 = vmatpush1.bf16.msra.mxu0 %v6297
    %6590 = vmatprep.subr.bf16.mxu0 %v6302
    %6591 = vmatpush1.bf16.msra.mxu0 %v6301
    %6592 = vmatprep.subr.bf16.mxu0 %v6306
    %6593 = vmatpush1.bf16.msra.mxu0 %v6305
    %6594 = vmatprep.subr.bf16.mxu0 %v6310
    %6595 = vmatpush1.bf16.msra.mxu0 %v6309
    %6596 = vmatprep.subr.bf16.mxu0 %v6314
    %6597 = vmatpush1.bf16.msra.mxu0 %v6313
    %6598 = vmatprep.subr.bf16.mxu0 %v6318
    %6599 = vmatpush1.bf16.msra.mxu0 %v6317
    %6600 = vmatprep.subr.bf16.mxu0 0
    %6601 = vmatpush1.bf16.msra.mxu0 0
    %6602 = vmatprep.subr.bf16.mxu0 0
    %6603 = vmatpush1.bf16.msra.mxu0 0
    %6604 = vmatprep.subr.bf16.mxu0 0
    %6605 = vmatpush1.bf16.msra.mxu0 0
    %6606 = vmatprep.subr.bf16.mxu0 0
    %6607 = vmatpush1.bf16.msra.mxu0 0
    %6608 = vmatprep.subr.bf16.mxu0 0
    %6609 = vmatpush1.bf16.msra.mxu0 0
    %6610 = vmatprep.subr.bf16.mxu0 0
    %6611 = vmatpush1.bf16.msra.mxu0 0
    %6612 = vmatprep.subr.bf16.mxu0 0
    %6613 = vmatpush1.bf16.msra.mxu0 0
    %6614 = vmatprep.subr.bf16.mxu0 0
    %6615 = vmatpush1.bf16.msra.mxu0 0
    %6616 = vmatprep.mubr.bf16.mxu0 0
    %6617 = vmatmul.mubr.bf16.gmra.mrb[0].mxu0 %v6542
    %v6618 = vpop.f32.mrb[0].mxu0
    %v6619 = vadd.f32 0.0, %v6618
    %v6620 = vpop.f32.mrb[0].mxu0
    %v6621 = vadd.f32 0.0, %v6620
    %v6622 = vpop.f32.mrb[0].mxu0
    %v6623 = vpop.f32.mrb[0].mxu0
    %6624 = vdwg.mxu0
    %v6629 = vrot.slane %v6578, 6
    %v6630 = vrot.slane %v6580, 6
    %v6631 = vrot.slane %v6619, 6
    %v6632 = vrot.slane %v6621, 6
    %v6637 = vadd.f32 %v6380, %v6629
    %v6638 = vadd.f32 %v6382, %v6630
    %v6639 = vadd.f32 %v6423, %v6631
    %v6640 = vadd.f32 %v6425, %v6632
    %v6641 = vxor.u32 %v6637, 2147483648
    %v6642 = vxor.u32 %v6638, 2147483648
    %v6643 = vxor.u32 %v6639, 2147483648
    %v6644 = vmul.f32 %v6641, 1.442695
    %v6645 = vpow.pop %v6644
    %v6646 = vmul.f32 %v6642, 1.442695
    %v6647 = vpow.pop %v6646
    %v6648 = vmul.f32 %v6643, 1.442695
    %v6649 = vpow.pop %v6648
    %v6650 = vadd.f32 %v6645, 1.0
    %v6651 = vadd.f32 %v6647, 1.0
    %v6652 = vadd.f32 %v6649, 1.0
    %v6653 = vrcp.pop %v6650
    %v6654 = vmul.f32 1.0, %v6653
    %v6655 = vrcp.pop %v6651
    %v6656 = vmul.f32 1.0, %v6655
    %v6657 = vrcp.pop %v6652
    %v6658 = vmul.f32 1.0, %v6657
    %v6659 = vtanh.pop %v6640
    %v6661 = vrot.slane %v6538, 6
    %v6663 = vmul.f32 %v6656, %v6661
    %v6664 = vmul.f32 %v6654, %v6659
    %v6665 = vadd.f32 %v6663, %v6664
    %v6666 = vtanh.pop %v6665
    %v6667 = vmul.f32 %v6658, %v6666
    %v6670 = vunpack.c.l.s4 1983009808
    %v6671 = vunpack.c.0.s8 %v6670
    %v6672 = vlaneseq
    %v6673 = vshrl.u32 %v6672, 7
    %v6674 = vsub.s32 %v6671, %v6673
    %v6675 = vrot.slane %v6667, %v6674
    %v6676 = vcombine.high %v6675, %v6675
    %6678 = vst [vmem:[#allocation5 + $0x2] sm:$0x3] %v6676
    %v6679 = vpack.c.bf16 %v6667, %v6667
    %v6681 = vrot.slane %v6679, 1
    %6683 = vmatprep.subr.bf16.mxu0 %v6288
    %6684 = vmatpush1.bf16.msra.mxu0 %v6287
    %6685 = vmatprep.subr.bf16.mxu0 %v6292
    %6686 = vmatpush1.bf16.msra.mxu0 %v6291
    %6687 = vmatprep.subr.bf16.mxu0 %v6296
    %6688 = vmatpush1.bf16.msra.mxu0 %v6295
    %6689 = vmatprep.subr.bf16.mxu0 %v6300
    %6690 = vmatpush1.bf16.msra.mxu0 %v6299
    %6691 = vmatprep.subr.bf16.mxu0 %v6304
    %6692 = vmatpush1.bf16.msra.mxu0 %v6303
    %6693 = vmatprep.subr.bf16.mxu0 %v6308
    %6694 = vmatpush1.bf16.msra.mxu0 %v6307
    %6695 = vmatprep.subr.bf16.mxu0 %v6312
    %6696 = vmatpush1.bf16.msra.mxu0 %v6311
    %6697 = vmatprep.subr.bf16.mxu0 %v6316
    %6698 = vmatpush1.bf16.msra.mxu0 %v6315
    %6699 = vmatprep.subr.bf16.mxu0 0
    %6700 = vmatpush1.bf16.msra.mxu0 0
    %6701 = vmatprep.subr.bf16.mxu0 0
    %6702 = vmatpush1.bf16.msra.mxu0 0
    %6703 = vmatprep.subr.bf16.mxu0 0
    %6704 = vmatpush1.bf16.msra.mxu0 0
    %6705 = vmatprep.subr.bf16.mxu0 0
    %6706 = vmatpush1.bf16.msra.mxu0 0
    %6707 = vmatprep.subr.bf16.mxu0 0
    %6708 = vmatpush1.bf16.msra.mxu0 0
    %6709 = vmatprep.subr.bf16.mxu0 0
    %6710 = vmatpush1.bf16.msra.mxu0 0
    %6711 = vmatprep.subr.bf16.mxu0 0
    %6712 = vmatpush1.bf16.msra.mxu0 0
    %6713 = vmatprep.subr.bf16.mxu0 0
    %6714 = vmatpush1.bf16.msra.mxu0 0
    %6715 = vmatprep.mubr.bf16.mxu0 0
    %6716 = vmatmul.mubr.bf16.gmra.mrb[0].mxu0 %v6681
    %v6717 = vpop.f32.mrb[0].mxu0
    %v6718 = vadd.f32 0.0, %v6717
    %v6719 = vpop.f32.mrb[0].mxu0
    %v6720 = vadd.f32 0.0, %v6719
    %v6721 = vpop.f32.mrb[0].mxu0
    %v6722 = vpop.f32.mrb[0].mxu0
    %6723 = vdwg.mxu0
    %6724 = vmatprep.subr.bf16.mxu0 %v6290
    %6725 = vmatpush1.bf16.msra.mxu0 %v6289
    %6726 = vmatprep.subr.bf16.mxu0 %v6294
    %6727 = vmatpush1.bf16.msra.mxu0 %v6293
    %6728 = vmatprep.subr.bf16.mxu0 %v6298
    %6729 = vmatpush1.bf16.msra.mxu0 %v6297
    %6730 = vmatprep.subr.bf16.mxu0 %v6302
    %6731 = vmatpush1.bf16.msra.mxu0 %v6301
    %6732 = vmatprep.subr.bf16.mxu0 %v6306
    %6733 = vmatpush1.bf16.msra.mxu0 %v6305
    %6734 = vmatprep.subr.bf16.mxu0 %v6310
    %6735 = vmatpush1.bf16.msra.mxu0 %v6309
    %6736 = vmatprep.subr.bf16.mxu0 %v6314
    %6737 = vmatpush1.bf16.msra.mxu0 %v6313
    %6738 = vmatprep.subr.bf16.mxu0 %v6318
    %6739 = vmatpush1.bf16.msra.mxu0 %v6317
    %6740 = vmatprep.subr.bf16.mxu0 0
    %6741 = vmatpush1.bf16.msra.mxu0 0
    %6742 = vmatprep.subr.bf16.mxu0 0
    %6743 = vmatpush1.bf16.msra.mxu0 0
    %6744 = vmatprep.subr.bf16.mxu0 0
    %6745 = vmatpush1.bf16.msra.mxu0 0
    %6746 = vmatprep.subr.bf16.mxu0 0
    %6747 = vmatpush1.bf16.msra.mxu0 0
    %6748 = vmatprep.subr.bf16.mxu0 0
    %6749 = vmatpush1.bf16.msra.mxu0 0
    %6750 = vmatprep.subr.bf16.mxu0 0
    %6751 = vmatpush1.bf16.msra.mxu0 0
    %6752 = vmatprep.subr.bf16.mxu0 0
    %6753 = vmatpush1.bf16.msra.mxu0 0
    %6754 = vmatprep.subr.bf16.mxu0 0
    %6755 = vmatpush1.bf16.msra.mxu0 0
    %6756 = vmatprep.mubr.bf16.mxu0 0
    %6757 = vmatmul.mubr.bf16.gmra.mrb[0].mxu0 %v6681
    %v6758 = vpop.f32.mrb[0].mxu0
    %v6759 = vadd.f32 0.0, %v6758
    %v6760 = vpop.f32.mrb[0].mxu0
    %v6761 = vadd.f32 0.0, %v6760
    %v6762 = vpop.f32.mrb[0].mxu0
    %v6763 = vpop.f32.mrb[0].mxu0
    %6764 = vdwg.mxu0
    %v6769 = vrot.slane %v6718, 4
    %v6770 = vrot.slane %v6720, 4
    %v6771 = vrot.slane %v6759, 4
    %v6772 = vrot.slane %v6761, 4
    %v6777 = vadd.f32 %v6380, %v6769
    %v6778 = vadd.f32 %v6382, %v6770
    %v6779 = vadd.f32 %v6423, %v6771
    %v6780 = vadd.f32 %v6425, %v6772
    %v6781 = vxor.u32 %v6777, 2147483648
    %v6782 = vxor.u32 %v6778, 2147483648
    %v6783 = vxor.u32 %v6779, 2147483648
    %v6784 = vmul.f32 %v6781, 1.442695
    %v6785 = vpow.pop %v6784
    %v6786 = vmul.f32 %v6782, 1.442695
    %v6787 = vpow.pop %v6786
    %v6788 = vmul.f32 %v6783, 1.442695
    %v6789 = vpow.pop %v6788
    %v6790 = vadd.f32 %v6785, 1.0
    %v6791 = vadd.f32 %v6787, 1.0
    %v6792 = vadd.f32 %v6789, 1.0
    %v6793 = vrcp.pop %v6790
    %v6794 = vmul.f32 1.0, %v6793
    %v6795 = vrcp.pop %v6791
    %v6796 = vmul.f32 1.0, %v6795
    %v6797 = vrcp.pop %v6792
    %v6798 = vmul.f32 1.0, %v6797
    %v6799 = vtanh.pop %v6780
    %v6801 = vrot.slane %v6665, 6
    %v6803 = vmul.f32 %v6796, %v6801
    %v6804 = vmul.f32 %v6794, %v6799
    %v6805 = vadd.f32 %v6803, %v6804
    %v6806 = vtanh.pop %v6805
    %v6807 = vmul.f32 %v6798, %v6806
    %v6809 = vcombine.high %v6807, %v6807
    %v6811 = vunpack.c.l.s4 1983009808
    %v6812 = vunpack.c.0.s8 %v6811
    %v6813 = vlaneseq
    %v6814 = vshrl.u32 %v6813, 7
    %v6815 = vsub.s32 %v6812, %v6814
    %v6816 = vrot.slane %v6809, %v6815
    %6818 = vst [vmem:[#allocation5 + $0x4] sm:$0x3] %v6816
    %v6819 = vpack.c.bf16 %v6807, %v6807
    %v6821 = vrot.slane %v6819, 2
    %6823 = vmatprep.subr.bf16.mxu0 %v6288
    %6824 = vmatpush1.bf16.msra.mxu0 %v6287
    %6825 = vmatprep.subr.bf16.mxu0 %v6292
    %6826 = vmatpush1.bf16.msra.mxu0 %v6291
    %6827 = vmatprep.subr.bf16.mxu0 %v6296
    %6828 = vmatpush1.bf16.msra.mxu0 %v6295
    %6829 = vmatprep.subr.bf16.mxu0 %v6300
    %6830 = vmatpush1.bf16.msra.mxu0 %v6299
    %6831 = vmatprep.subr.bf16.mxu0 %v6304
    %6832 = vmatpush1.bf16.msra.mxu0 %v6303
    %6833 = vmatprep.subr.bf16.mxu0 %v6308
    %6834 = vmatpush1.bf16.msra.mxu0 %v6307
    %6835 = vmatprep.subr.bf16.mxu0 %v6312
    %6836 = vmatpush1.bf16.msra.mxu0 %v6311
    %6837 = vmatprep.subr.bf16.mxu0 %v6316
    %6838 = vmatpush1.bf16.msra.mxu0 %v6315
    %6839 = vmatprep.subr.bf16.mxu0 0
    %6840 = vmatpush1.bf16.msra.mxu0 0
    %6841 = vmatprep.subr.bf16.mxu0 0
    %6842 = vmatpush1.bf16.msra.mxu0 0
    %6843 = vmatprep.subr.bf16.mxu0 0
    %6844 = vmatpush1.bf16.msra.mxu0 0
    %6845 = vmatprep.subr.bf16.mxu0 0
    %6846 = vmatpush1.bf16.msra.mxu0 0
    %6847 = vmatprep.subr.bf16.mxu0 0
    %6848 = vmatpush1.bf16.msra.mxu0 0
    %6849 = vmatprep.subr.bf16.mxu0 0
    %6850 = vmatpush1.bf16.msra.mxu0 0
    %6851 = vmatprep.subr.bf16.mxu0 0
    %6852 = vmatpush1.bf16.msra.mxu0 0
    %6853 = vmatprep.subr.bf16.mxu0 0
    %6854 = vmatpush1.bf16.msra.mxu0 0
    %6855 = vmatprep.mubr.bf16.mxu0 0
    %6856 = vmatmul.mubr.bf16.gmra.mrb[0].mxu0 %v6821
    %v6857 = vpop.f32.mrb[0].mxu0
    %v6858 = vadd.f32 0.0, %v6857
    %v6859 = vpop.f32.mrb[0].mxu0
    %v6860 = vadd.f32 0.0, %v6859
    %v6861 = vpop.f32.mrb[0].mxu0
    %v6862 = vpop.f32.mrb[0].mxu0
    %6863 = vdwg.mxu0
    %6864 = vmatprep.subr.bf16.mxu0 %v6290
    %6865 = vmatpush1.bf16.msra.mxu0 %v6289
    %6866 = vmatprep.subr.bf16.mxu0 %v6294
    %6867 = vmatpush1.bf16.msra.mxu0 %v6293
    %6868 = vmatprep.subr.bf16.mxu0 %v6298
    %6869 = vmatpush1.bf16.msra.mxu0 %v6297
    %6870 = vmatprep.subr.bf16.mxu0 %v6302
    %6871 = vmatpush1.bf16.msra.mxu0 %v6301
    %6872 = vmatprep.subr.bf16.mxu0 %v6306
    %6873 = vmatpush1.bf16.msra.mxu0 %v6305
    %6874 = vmatprep.subr.bf16.mxu0 %v6310
    %6875 = vmatpush1.bf16.msra.mxu0 %v6309
    %6876 = vmatprep.subr.bf16.mxu0 %v6314
    %6877 = vmatpush1.bf16.msra.mxu0 %v6313
    %6878 = vmatprep.subr.bf16.mxu0 %v6318
    %6879 = vmatpush1.bf16.msra.mxu0 %v6317
    %6880 = vmatprep.subr.bf16.mxu0 0
    %6881 = vmatpush1.bf16.msra.mxu0 0
    %6882 = vmatprep.subr.bf16.mxu0 0
    %6883 = vmatpush1.bf16.msra.mxu0 0
    %6884 = vmatprep.subr.bf16.mxu0 0
    %6885 = vmatpush1.bf16.msra.mxu0 0
    %6886 = vmatprep.subr.bf16.mxu0 0
    %6887 = vmatpush1.bf16.msra.mxu0 0
    %6888 = vmatprep.subr.bf16.mxu0 0
    %6889 = vmatpush1.bf16.msra.mxu0 0
    %6890 = vmatprep.subr.bf16.mxu0 0
    %6891 = vmatpush1.bf16.msra.mxu0 0
    %6892 = vmatprep.subr.bf16.mxu0 0
    %6893 = vmatpush1.bf16.msra.mxu0 0
    %6894 = vmatprep.subr.bf16.mxu0 0
    %6895 = vmatpush1.bf16.msra.mxu0 0
    %6896 = vmatprep.mubr.bf16.mxu0 0
    %6897 = vmatmul.mubr.bf16.gmra.mrb[0].mxu0 %v6821
    %v6898 = vpop.f32.mrb[0].mxu0
    %v6899 = vadd.f32 0.0, %v6898
    %v6900 = vpop.f32.mrb[0].mxu0
    %v6901 = vadd.f32 0.0, %v6900
    %v6902 = vpop.f32.mrb[0].mxu0
    %v6903 = vpop.f32.mrb[0].mxu0
    %6904 = vdwg.mxu0
    %v6909 = vrot.slane %v6858, 2
    %v6910 = vrot.slane %v6860, 2
    %v6911 = vrot.slane %v6899, 2
    %v6912 = vrot.slane %v6901, 2
    %v6917 = vadd.f32 %v6380, %v6909
    %v6918 = vadd.f32 %v6382, %v6910
    %v6919 = vadd.f32 %v6423, %v6911
    %v6920 = vadd.f32 %v6425, %v6912
    %v6921 = vxor.u32 %v6917, 2147483648
    %v6922 = vxor.u32 %v6918, 2147483648
    %v6923 = vxor.u32 %v6919, 2147483648
    %v6924 = vmul.f32 %v6921, 1.442695
    %v6925 = vpow.pop %v6924
    %v6926 = vmul.f32 %v6922, 1.442695
    %v6927 = vpow.pop %v6926
    %v6928 = vmul.f32 %v6923, 1.442695
    %v6929 = vpow.pop %v6928
    %v6930 = vadd.f32 %v6925, 1.0
    %v6931 = vadd.f32 %v6927, 1.0
    %v6932 = vadd.f32 %v6929, 1.0
    %v6933 = vrcp.pop %v6930
    %v6934 = vmul.f32 1.0, %v6933
    %v6935 = vrcp.pop %v6931
    %v6936 = vmul.f32 1.0, %v6935
    %v6937 = vrcp.pop %v6932
    %v6938 = vmul.f32 1.0, %v6937
    %v6939 = vtanh.pop %v6920
    %v6941 = vrot.slane %v6805, 6
    %v6943 = vmul.f32 %v6936, %v6941
    %v6944 = vmul.f32 %v6934, %v6939
    %v6945 = vadd.f32 %v6943, %v6944
    %v6946 = vtanh.pop %v6945
    %v6947 = vmul.f32 %v6938, %v6946
    %v6949 = vcombine.high %v6947, %v6947
    %v6951 = vunpack.c.l.s4 1983009808
    %v6952 = vunpack.c.0.s8 %v6951
    %v6953 = vlaneseq
    %v6954 = vshrl.u32 %v6953, 7
    %v6955 = vsub.s32 %v6952, %v6954
    %v6956 = vrot.slane %v6949, %v6955
    %v6957 = vcombine.high %v6956, %v6956
    %6959 = vst [vmem:[#allocation5 + $0x6] sm:$0x3] %v6957
    %v6960 = vpack.c.bf16 %v6947, %v6947
    %v6962 = vrot.slane %v6960, 3
    %6964 = vmatprep.subr.bf16.mxu0 %v6288
    %6965 = vmatpush1.bf16.msra.mxu0 %v6287
    %6966 = vmatprep.subr.bf16.mxu0 %v6292
    %6967 = vmatpush1.bf16.msra.mxu0 %v6291
    %6968 = vmatprep.subr.bf16.mxu0 %v6296
    %6969 = vmatpush1.bf16.msra.mxu0 %v6295
    %6970 = vmatprep.subr.bf16.mxu0 %v6300
    %6971 = vmatpush1.bf16.msra.mxu0 %v6299
    %6972 = vmatprep.subr.bf16.mxu0 %v6304
    %6973 = vmatpush1.bf16.msra.mxu0 %v6303
    %6974 = vmatprep.subr.bf16.mxu0 %v6308
    %6975 = vmatpush1.bf16.msra.mxu0 %v6307
    %6976 = vmatprep.subr.bf16.mxu0 %v6312
    %6977 = vmatpush1.bf16.msra.mxu0 %v6311
    %6978 = vmatprep.subr.bf16.mxu0 %v6316
    %6979 = vmatpush1.bf16.msra.mxu0 %v6315
    %6980 = vmatprep.subr.bf16.mxu0 0
    %6981 = vmatpush1.bf16.msra.mxu0 0
    %6982 = vmatprep.subr.bf16.mxu0 0
    %6983 = vmatpush1.bf16.msra.mxu0 0
    %6984 = vmatprep.subr.bf16.mxu0 0
    %6985 = vmatpush1.bf16.msra.mxu0 0
    %6986 = vmatprep.subr.bf16.mxu0 0
    %6987 = vmatpush1.bf16.msra.mxu0 0
    %6988 = vmatprep.subr.bf16.mxu0 0
    %6989 = vmatpush1.bf16.msra.mxu0 0
    %6990 = vmatprep.subr.bf16.mxu0 0
    %6991 = vmatpush1.bf16.msra.mxu0 0
    %6992 = vmatprep.subr.bf16.mxu0 0
    %6993 = vmatpush1.bf16.msra.mxu0 0
    %6994 = vmatprep.subr.bf16.mxu0 0
    %6995 = vmatpush1.bf16.msra.mxu0 0
    %6996 = vmatprep.mubr.bf16.mxu0 0
    %6997 = vmatmul.mubr.bf16.gmra.mrb[0].mxu0 %v6962
    %v6998 = vpop.f32.mrb[0].mxu0
    %v6999 = vadd.f32 0.0, %v6998
    %v7000 = vpop.f32.mrb[0].mxu0
    %v7001 = vadd.f32 0.0, %v7000
    %v7002 = vpop.f32.mrb[0].mxu0
    %v7003 = vpop.f32.mrb[0].mxu0
    %7004 = vdwg.mxu0
    %7005 = vmatprep.subr.bf16.mxu0 %v6290
    %7006 = vmatpush1.bf16.msra.mxu0 %v6289
    %7007 = vmatprep.subr.bf16.mxu0 %v6294
    %7008 = vmatpush1.bf16.msra.mxu0 %v6293
    %7009 = vmatprep.subr.bf16.mxu0 %v6298
    %7010 = vmatpush1.bf16.msra.mxu0 %v6297
    %7011 = vmatprep.subr.bf16.mxu0 %v6302
    %7012 = vmatpush1.bf16.msra.mxu0 %v6301
    %7013 = vmatprep.subr.bf16.mxu0 %v6306
    %7014 = vmatpush1.bf16.msra.mxu0 %v6305
    %7015 = vmatprep.subr.bf16.mxu0 %v6310
    %7016 = vmatpush1.bf16.msra.mxu0 %v6309
    %7017 = vmatprep.subr.bf16.mxu0 %v6314
    %7018 = vmatpush1.bf16.msra.mxu0 %v6313
    %7019 = vmatprep.subr.bf16.mxu0 %v6318
    %7020 = vmatpush1.bf16.msra.mxu0 %v6317
    %7021 = vmatprep.subr.bf16.mxu0 0
    %7022 = vmatpush1.bf16.msra.mxu0 0
    %7023 = vmatprep.subr.bf16.mxu0 0
    %7024 = vmatpush1.bf16.msra.mxu0 0
    %7025 = vmatprep.subr.bf16.mxu0 0
    %7026 = vmatpush1.bf16.msra.mxu0 0
    %7027 = vmatprep.subr.bf16.mxu0 0
    %7028 = vmatpush1.bf16.msra.mxu0 0
    %7029 = vmatprep.subr.bf16.mxu0 0
    %7030 = vmatpush1.bf16.msra.mxu0 0
    %7031 = vmatprep.subr.bf16.mxu0 0
    %7032 = vmatpush1.bf16.msra.mxu0 0
    %7033 = vmatprep.subr.bf16.mxu0 0
    %7034 = vmatpush1.bf16.msra.mxu0 0
    %7035 = vmatprep.subr.bf16.mxu0 0
    %7036 = vmatpush1.bf16.msra.mxu0 0
    %7037 = vmatprep.mubr.bf16.mxu0 0
    %7038 = vmatmul.mubr.bf16.gmra.mrb[0].mxu0 %v6962
    %v7039 = vpop.f32.mrb[0].mxu0
    %v7040 = vadd.f32 0.0, %v7039
    %v7041 = vpop.f32.mrb[0].mxu0
    %v7042 = vadd.f32 0.0, %v7041
    %v7043 = vpop.f32.mrb[0].mxu0
    %v7044 = vpop.f32.mrb[0].mxu0
    %7045 = vdwg.mxu0
    %v7046 = vadd.f32 %v6384, %v6999
    %v7047 = vadd.f32 %v6386, %v7001
    %v7048 = vadd.f32 %v6427, %v7040
    %v7049 = vadd.f32 %v6429, %v7042
    %v7050 = vxor.u32 %v7046, 2147483648
    %v7051 = vxor.u32 %v7047, 2147483648
    %v7052 = vxor.u32 %v7048, 2147483648
    %v7053 = vmul.f32 %v7050, 1.442695
    %v7054 = vpow.pop %v7053
    %v7055 = vmul.f32 %v7051, 1.442695
    %v7056 = vpow.pop %v7055
    %v7057 = vmul.f32 %v7052, 1.442695
    %v7058 = vpow.pop %v7057
    %v7059 = vadd.f32 %v7054, 1.0
    %v7060 = vadd.f32 %v7056, 1.0
    %v7061 = vadd.f32 %v7058, 1.0
    %v7062 = vrcp.pop %v7059
    %v7063 = vmul.f32 1.0, %v7062
    %v7064 = vrcp.pop %v7060
    %v7065 = vmul.f32 1.0, %v7064
    %v7066 = vrcp.pop %v7061
    %v7067 = vmul.f32 1.0, %v7066
    %v7068 = vtanh.pop %v7049
    %v7070 = vrot.slane %v6945, 6
    %v7072 = vmul.f32 %v7065, %v7070
    %v7073 = vmul.f32 %v7063, %v7068
    %v7074 = vadd.f32 %v7072, %v7073
    %v7075 = vtanh.pop %v7074
    %v7076 = vmul.f32 %v7067, %v7075
    %7077 = vst [vmem:[#allocation5 + $0x8] sm:$0x3] %v7076
    %v7078 = vpack.c.bf16 %v7076, %v7076
    %7079 = vmatprep.subr.bf16.mxu0 %v6288
    %7080 = vmatpush1.bf16.msra.mxu0 %v6287
    %7081 = vmatprep.subr.bf16.mxu0 %v6292
    %7082 = vmatpush1.bf16.msra.mxu0 %v6291
    %7083 = vmatprep.subr.bf16.mxu0 %v6296
    %7084 = vmatpush1.bf16.msra.mxu0 %v6295
    %7085 = vmatprep.subr.bf16.mxu0 %v6300
    %7086 = vmatpush1.bf16.msra.mxu0 %v6299
    %7087 = vmatprep.subr.bf16.mxu0 %v6304
    %7088 = vmatpush1.bf16.msra.mxu0 %v6303
    %7089 = vmatprep.subr.bf16.mxu0 %v6308
    %7090 = vmatpush1.bf16.msra.mxu0 %v6307
    %7091 = vmatprep.subr.bf16.mxu0 %v6312
    %7092 = vmatpush1.bf16.msra.mxu0 %v6311
    %7093 = vmatprep.subr.bf16.mxu0 %v6316
    %7094 = vmatpush1.bf16.msra.mxu0 %v6315
    %7095 = vmatprep.subr.bf16.mxu0 0
    %7096 = vmatpush1.bf16.msra.mxu0 0
    %7097 = vmatprep.subr.bf16.mxu0 0
    %7098 = vmatpush1.bf16.msra.mxu0 0
    %7099 = vmatprep.subr.bf16.mxu0 0
    %7100 = vmatpush1.bf16.msra.mxu0 0
    %7101 = vmatprep.subr.bf16.mxu0 0
    %7102 = vmatpush1.bf16.msra.mxu0 0
    %7103 = vmatprep.subr.bf16.mxu0 0
    %7104 = vmatpush1.bf16.msra.mxu0 0
    %7105 = vmatprep.subr.bf16.mxu0 0
    %7106 = vmatpush1.bf16.msra.mxu0 0
    %7107 = vmatprep.subr.bf16.mxu0 0
    %7108 = vmatpush1.bf16.msra.mxu0 0
    %7109 = vmatprep.subr.bf16.mxu0 0
    %7110 = vmatpush1.bf16.msra.mxu0 0
    %7111 = vmatprep.mubr.bf16.mxu0 0
    %7112 = vmatmul.mubr.bf16.gmra.mrb[0].mxu0 %v7078
    %v7113 = vpop.f32.mrb[0].mxu0
    %v7114 = vadd.f32 0.0, %v7113
    %v7115 = vpop.f32.mrb[0].mxu0
    %v7116 = vadd.f32 0.0, %v7115
    %v7117 = vpop.f32.mrb[0].mxu0
    %v7118 = vpop.f32.mrb[0].mxu0
    %7119 = vdwg.mxu0
    %7120 = vmatprep.subr.bf16.mxu0 %v6290
    %7121 = vmatpush1.bf16.msra.mxu0 %v6289
    %7122 = vmatprep.subr.bf16.mxu0 %v6294
    %7123 = vmatpush1.bf16.msra.mxu0 %v6293
    %7124 = vmatprep.subr.bf16.mxu0 %v6298
    %7125 = vmatpush1.bf16.msra.mxu0 %v6297
    %7126 = vmatprep.subr.bf16.mxu0 %v6302
    %7127 = vmatpush1.bf16.msra.mxu0 %v6301
    %7128 = vmatprep.subr.bf16.mxu0 %v6306
    %7129 = vmatpush1.bf16.msra.mxu0 %v6305
    %7130 = vmatprep.subr.bf16.mxu0 %v6310
    %7131 = vmatpush1.bf16.msra.mxu0 %v6309
    %7132 = vmatprep.subr.bf16.mxu0 %v6314
    %7133 = vmatpush1.bf16.msra.mxu0 %v6313
    %7134 = vmatprep.subr.bf16.mxu0 %v6318
    %7135 = vmatpush1.bf16.msra.mxu0 %v6317
    %7136 = vmatprep.subr.bf16.mxu0 0
    %7137 = vmatpush1.bf16.msra.mxu0 0
    %7138 = vmatprep.subr.bf16.mxu0 0
    %7139 = vmatpush1.bf16.msra.mxu0 0
    %7140 = vmatprep.subr.bf16.mxu0 0
    %7141 = vmatpush1.bf16.msra.mxu0 0
    %7142 = vmatprep.subr.bf16.mxu0 0
    %7143 = vmatpush1.bf16.msra.mxu0 0
    %7144 = vmatprep.subr.bf16.mxu0 0
    %7145 = vmatpush1.bf16.msra.mxu0 0
    %7146 = vmatprep.subr.bf16.mxu0 0
    %7147 = vmatpush1.bf16.msra.mxu0 0
    %7148 = vmatprep.subr.bf16.mxu0 0
    %7149 = vmatpush1.bf16.msra.mxu0 0
    %7150 = vmatprep.subr.bf16.mxu0 0
    %7151 = vmatpush1.bf16.msra.mxu0 0
    %7152 = vmatprep.mubr.bf16.mxu0 0
    %7153 = vmatmul.mubr.bf16.gmra.mrb[0].mxu0 %v7078
    %v7154 = vpop.f32.mrb[0].mxu0
    %v7155 = vadd.f32 0.0, %v7154
    %v7156 = vpop.f32.mrb[0].mxu0
    %v7157 = vadd.f32 0.0, %v7156
    %v7158 = vpop.f32.mrb[0].mxu0
    %v7159 = vpop.f32.mrb[0].mxu0
    %7160 = vdwg.mxu0
    %v7165 = vrot.slane %v7114, 6
    %v7166 = vrot.slane %v7116, 6
    %v7167 = vrot.slane %v7155, 6
    %v7168 = vrot.slane %v7157, 6
    %v7173 = vadd.f32 %v6384, %v7165
    %v7174 = vadd.f32 %v6386, %v7166
    %v7175 = vadd.f32 %v6427, %v7167
    %v7176 = vadd.f32 %v6429, %v7168
    %v7177 = vxor.u32 %v7173, 2147483648
    %v7178 = vxor.u32 %v7174, 2147483648
    %v7179 = vxor.u32 %v7175, 2147483648
    %v7180 = vmul.f32 %v7177, 1.442695
    %v7181 = vpow.pop %v7180
    %v7182 = vmul.f32 %v7178, 1.442695
    %v7183 = vpow.pop %v7182
    %v7184 = vmul.f32 %v7179, 1.442695
    %v7185 = vpow.pop %v7184
    %v7186 = vadd.f32 %v7181, 1.0
    %v7187 = vadd.f32 %v7183, 1.0
    %v7188 = vadd.f32 %v7185, 1.0
    %v7189 = vrcp.pop %v7186
    %v7190 = vmul.f32 1.0, %v7189
    %v7191 = vrcp.pop %v7187
    %v7192 = vmul.f32 1.0, %v7191
    %v7193 = vrcp.pop %v7188
    %v7194 = vmul.f32 1.0, %v7193
    %v7195 = vtanh.pop %v7176
    %v7197 = vrot.slane %v7074, 6
    %v7199 = vmul.f32 %v7192, %v7197
    %v7200 = vmul.f32 %v7190, %v7195
    %v7201 = vadd.f32 %v7199, %v7200
    %v7202 = vtanh.pop %v7201
    %v7203 = vmul.f32 %v7194, %v7202
    %v7206 = vunpack.c.l.s4 1983009808
    %v7207 = vunpack.c.0.s8 %v7206
    %v7208 = vlaneseq
    %v7209 = vshrl.u32 %v7208, 7
    %v7210 = vsub.s32 %v7207, %v7209
    %v7211 = vrot.slane %v7203, %v7210
    %v7212 = vcombine.high %v7211, %v7211
    %7214 = vst [vmem:[#allocation5 + $0xa] sm:$0x3] %v7212
    %v7215 = vpack.c.bf16 %v7203, %v7203
    %v7217 = vrot.slane %v7215, 1
    %7219 = vmatprep.subr.bf16.mxu0 %v6288
    %7220 = vmatpush1.bf16.msra.mxu0 %v6287
    %7221 = vmatprep.subr.bf16.mxu0 %v6292
    %7222 = vmatpush1.bf16.msra.mxu0 %v6291
    %7223 = vmatprep.subr.bf16.mxu0 %v6296
    %7224 = vmatpush1.bf16.msra.mxu0 %v6295
    %7225 = vmatprep.subr.bf16.mxu0 %v6300
    %7226 = vmatpush1.bf16.msra.mxu0 %v6299
    %7227 = vmatprep.subr.bf16.mxu0 %v6304
    %7228 = vmatpush1.bf16.msra.mxu0 %v6303
    %7229 = vmatprep.subr.bf16.mxu0 %v6308
    %7230 = vmatpush1.bf16.msra.mxu0 %v6307
    %7231 = vmatprep.subr.bf16.mxu0 %v6312
    %7232 = vmatpush1.bf16.msra.mxu0 %v6311
    %7233 = vmatprep.subr.bf16.mxu0 %v6316
    %7234 = vmatpush1.bf16.msra.mxu0 %v6315
    %7235 = vmatprep.subr.bf16.mxu0 0
    %7236 = vmatpush1.bf16.msra.mxu0 0
    %7237 = vmatprep.subr.bf16.mxu0 0
    %7238 = vmatpush1.bf16.msra.mxu0 0
    %7239 = vmatprep.subr.bf16.mxu0 0
    %7240 = vmatpush1.bf16.msra.mxu0 0
    %7241 = vmatprep.subr.bf16.mxu0 0
    %7242 = vmatpush1.bf16.msra.mxu0 0
    %7243 = vmatprep.subr.bf16.mxu0 0
    %7244 = vmatpush1.bf16.msra.mxu0 0
    %7245 = vmatprep.subr.bf16.mxu0 0
    %7246 = vmatpush1.bf16.msra.mxu0 0
    %7247 = vmatprep.subr.bf16.mxu0 0
    %7248 = vmatpush1.bf16.msra.mxu0 0
    %7249 = vmatprep.subr.bf16.mxu0 0
    %7250 = vmatpush1.bf16.msra.mxu0 0
    %7251 = vmatprep.mubr.bf16.mxu0 0
    %7252 = vmatmul.mubr.bf16.gmra.mrb[0].mxu0 %v7217
    %v7253 = vpop.f32.mrb[0].mxu0
    %v7254 = vadd.f32 0.0, %v7253
    %v7255 = vpop.f32.mrb[0].mxu0
    %v7256 = vadd.f32 0.0, %v7255
    %v7257 = vpop.f32.mrb[0].mxu0
    %v7258 = vpop.f32.mrb[0].mxu0
    %7259 = vdwg.mxu0
    %7260 = vmatprep.subr.bf16.mxu0 %v6290
    %7261 = vmatpush1.bf16.msra.mxu0 %v6289
    %7262 = vmatprep.subr.bf16.mxu0 %v6294
    %7263 = vmatpush1.bf16.msra.mxu0 %v6293
    %7264 = vmatprep.subr.bf16.mxu0 %v6298
    %7265 = vmatpush1.bf16.msra.mxu0 %v6297
    %7266 = vmatprep.subr.bf16.mxu0 %v6302
    %7267 = vmatpush1.bf16.msra.mxu0 %v6301
    %7268 = vmatprep.subr.bf16.mxu0 %v6306
    %7269 = vmatpush1.bf16.msra.mxu0 %v6305
    %7270 = vmatprep.subr.bf16.mxu0 %v6310
    %7271 = vmatpush1.bf16.msra.mxu0 %v6309
    %7272 = vmatprep.subr.bf16.mxu0 %v6314
    %7273 = vmatpush1.bf16.msra.mxu0 %v6313
    %7274 = vmatprep.subr.bf16.mxu0 %v6318
    %7275 = vmatpush1.bf16.msra.mxu0 %v6317
    %7276 = vmatprep.subr.bf16.mxu0 0
    %7277 = vmatpush1.bf16.msra.mxu0 0
    %7278 = vmatprep.subr.bf16.mxu0 0
    %7279 = vmatpush1.bf16.msra.mxu0 0
    %7280 = vmatprep.subr.bf16.mxu0 0
    %7281 = vmatpush1.bf16.msra.mxu0 0
    %7282 = vmatprep.subr.bf16.mxu0 0
    %7283 = vmatpush1.bf16.msra.mxu0 0
    %7284 = vmatprep.subr.bf16.mxu0 0
    %7285 = vmatpush1.bf16.msra.mxu0 0
    %7286 = vmatprep.subr.bf16.mxu0 0
    %7287 = vmatpush1.bf16.msra.mxu0 0
    %7288 = vmatprep.subr.bf16.mxu0 0
    %7289 = vmatpush1.bf16.msra.mxu0 0
    %7290 = vmatprep.subr.bf16.mxu0 0
    %7291 = vmatpush1.bf16.msra.mxu0 0
    %7292 = vmatprep.mubr.bf16.mxu0 0
    %7293 = vmatmul.mubr.bf16.gmra.mrb[0].mxu0 %v7217
    %v7294 = vpop.f32.mrb[0].mxu0
    %v7295 = vadd.f32 0.0, %v7294
    %v7296 = vpop.f32.mrb[0].mxu0
    %v7297 = vadd.f32 0.0, %v7296
    %v7298 = vpop.f32.mrb[0].mxu0
    %v7299 = vpop.f32.mrb[0].mxu0
    %7300 = vdwg.mxu0
    %v7305 = vrot.slane %v7254, 4
    %v7306 = vrot.slane %v7256, 4
    %v7307 = vrot.slane %v7295, 4
    %v7308 = vrot.slane %v7297, 4
    %v7313 = vadd.f32 %v6384, %v7305
    %v7314 = vadd.f32 %v6386, %v7306
    %v7315 = vadd.f32 %v6427, %v7307
    %v7316 = vadd.f32 %v6429, %v7308
    %v7317 = vxor.u32 %v7313, 2147483648
    %v7318 = vxor.u32 %v7314, 2147483648
    %v7319 = vxor.u32 %v7315, 2147483648
    %v7320 = vmul.f32 %v7317, 1.442695
    %v7321 = vpow.pop %v7320
    %v7322 = vmul.f32 %v7318, 1.442695
    %v7323 = vpow.pop %v7322
    %v7324 = vmul.f32 %v7319, 1.442695
    %v7325 = vpow.pop %v7324
    %v7326 = vadd.f32 %v7321, 1.0
    %v7327 = vadd.f32 %v7323, 1.0
    %v7328 = vadd.f32 %v7325, 1.0
    %v7329 = vrcp.pop %v7326
    %v7330 = vmul.f32 1.0, %v7329
    %v7331 = vrcp.pop %v7327
    %v7332 = vmul.f32 1.0, %v7331
    %v7333 = vrcp.pop %v7328
    %v7334 = vmul.f32 1.0, %v7333
    %v7335 = vtanh.pop %v7316
    %v7337 = vrot.slane %v7201, 6
    %v7339 = vmul.f32 %v7332, %v7337
    %v7340 = vmul.f32 %v7330, %v7335
    %v7341 = vadd.f32 %v7339, %v7340
    %v7342 = vtanh.pop %v7341
    %v7343 = vmul.f32 %v7334, %v7342
    %v7345 = vcombine.high %v7343, %v7343
    %v7347 = vunpack.c.l.s4 1983009808
    %v7348 = vunpack.c.0.s8 %v7347
    %v7349 = vlaneseq
    %v7350 = vshrl.u32 %v7349, 7
    %v7351 = vsub.s32 %v7348, %v7350
    %v7352 = vrot.slane %v7345, %v7351
    %7354 = vst [vmem:[#allocation5 + $0xc] sm:$0x3] %v7352
    %v7355 = vpack.c.bf16 %v7343, %v7343
    %v7357 = vrot.slane %v7355, 2
    %7359 = vmatprep.subr.bf16.mxu0 %v6288
    %7360 = vmatpush1.bf16.msra.mxu0 %v6287
    %7361 = vmatprep.subr.bf16.mxu0 %v6292
    %7362 = vmatpush1.bf16.msra.mxu0 %v6291
    %7363 = vmatprep.subr.bf16.mxu0 %v6296
    %7364 = vmatpush1.bf16.msra.mxu0 %v6295
    %7365 = vmatprep.subr.bf16.mxu0 %v6300
    %7366 = vmatpush1.bf16.msra.mxu0 %v6299
    %7367 = vmatprep.subr.bf16.mxu0 %v6304
    %7368 = vmatpush1.bf16.msra.mxu0 %v6303
    %7369 = vmatprep.subr.bf16.mxu0 %v6308
    %7370 = vmatpush1.bf16.msra.mxu0 %v6307
    %7371 = vmatprep.subr.bf16.mxu0 %v6312
    %7372 = vmatpush1.bf16.msra.mxu0 %v6311
    %7373 = vmatprep.subr.bf16.mxu0 %v6316
    %7374 = vmatpush1.bf16.msra.mxu0 %v6315
    %7375 = vmatprep.subr.bf16.mxu0 0
    %7376 = vmatpush1.bf16.msra.mxu0 0
    %7377 = vmatprep.subr.bf16.mxu0 0
    %7378 = vmatpush1.bf16.msra.mxu0 0
    %7379 = vmatprep.subr.bf16.mxu0 0
    %7380 = vmatpush1.bf16.msra.mxu0 0
    %7381 = vmatprep.subr.bf16.mxu0 0
    %7382 = vmatpush1.bf16.msra.mxu0 0
    %7383 = vmatprep.subr.bf16.mxu0 0
    %7384 = vmatpush1.bf16.msra.mxu0 0
    %7385 = vmatprep.subr.bf16.mxu0 0
    %7386 = vmatpush1.bf16.msra.mxu0 0
    %7387 = vmatprep.subr.bf16.mxu0 0
    %7388 = vmatpush1.bf16.msra.mxu0 0
    %7389 = vmatprep.subr.bf16.mxu0 0
    %7390 = vmatpush1.bf16.msra.mxu0 0
    %7391 = vmatprep.mubr.bf16.mxu0 0
    %7392 = vmatmul.mubr.bf16.gmra.mrb[0].mxu0 %v7357
    %v7393 = vpop.f32.mrb[0].mxu0
    %v7394 = vadd.f32 0.0, %v7393
    %v7395 = vpop.f32.mrb[0].mxu0
    %v7396 = vadd.f32 0.0, %v7395
    %v7397 = vpop.f32.mrb[0].mxu0
    %v7398 = vpop.f32.mrb[0].mxu0
    %7399 = vdwg.mxu0
    %7400 = vmatprep.subr.bf16.mxu0 %v6290
    %7401 = vmatpush1.bf16.msra.mxu0 %v6289
    %7402 = vmatprep.subr.bf16.mxu0 %v6294
    %7403 = vmatpush1.bf16.msra.mxu0 %v6293
    %7404 = vmatprep.subr.bf16.mxu0 %v6298
    %7405 = vmatpush1.bf16.msra.mxu0 %v6297
    %7406 = vmatprep.subr.bf16.mxu0 %v6302
    %7407 = vmatpush1.bf16.msra.mxu0 %v6301
    %7408 = vmatprep.subr.bf16.mxu0 %v6306
    %7409 = vmatpush1.bf16.msra.mxu0 %v6305
    %7410 = vmatprep.subr.bf16.mxu0 %v6310
    %7411 = vmatpush1.bf16.msra.mxu0 %v6309
    %7412 = vmatprep.subr.bf16.mxu0 %v6314
    %7413 = vmatpush1.bf16.msra.mxu0 %v6313
    %7414 = vmatprep.subr.bf16.mxu0 %v6318
    %7415 = vmatpush1.bf16.msra.mxu0 %v6317
    %7416 = vmatprep.subr.bf16.mxu0 0
    %7417 = vmatpush1.bf16.msra.mxu0 0
    %7418 = vmatprep.subr.bf16.mxu0 0
    %7419 = vmatpush1.bf16.msra.mxu0 0
    %7420 = vmatprep.subr.bf16.mxu0 0
    %7421 = vmatpush1.bf16.msra.mxu0 0
    %7422 = vmatprep.subr.bf16.mxu0 0
    %7423 = vmatpush1.bf16.msra.mxu0 0
    %7424 = vmatprep.subr.bf16.mxu0 0
    %7425 = vmatpush1.bf16.msra.mxu0 0
    %7426 = vmatprep.subr.bf16.mxu0 0
    %7427 = vmatpush1.bf16.msra.mxu0 0
    %7428 = vmatprep.subr.bf16.mxu0 0
    %7429 = vmatpush1.bf16.msra.mxu0 0
    %7430 = vmatprep.subr.bf16.mxu0 0
    %7431 = vmatpush1.bf16.msra.mxu0 0
    %7432 = vmatprep.mubr.bf16.mxu0 0
    %7433 = vmatmul.mubr.bf16.gmra.mrb[0].mxu0 %v7357
    %v7434 = vpop.f32.mrb[0].mxu0
    %v7435 = vadd.f32 0.0, %v7434
    %v7436 = vpop.f32.mrb[0].mxu0
    %v7437 = vadd.f32 0.0, %v7436
    %v7438 = vpop.f32.mrb[0].mxu0
    %v7439 = vpop.f32.mrb[0].mxu0
    %7440 = vdwg.mxu0
    %v7445 = vrot.slane %v7394, 2
    %v7446 = vrot.slane %v7396, 2
    %v7447 = vrot.slane %v7435, 2
    %v7448 = vrot.slane %v7437, 2
    %v7453 = vadd.f32 %v6384, %v7445
    %v7454 = vadd.f32 %v6386, %v7446
    %v7455 = vadd.f32 %v6427, %v7447
    %v7456 = vadd.f32 %v6429, %v7448
    %v7457 = vxor.u32 %v7453, 2147483648
    %v7458 = vxor.u32 %v7454, 2147483648
    %v7459 = vxor.u32 %v7455, 2147483648
    %v7460 = vmul.f32 %v7457, 1.442695
    %v7461 = vpow.pop %v7460
    %v7462 = vmul.f32 %v7458, 1.442695
    %v7463 = vpow.pop %v7462
    %v7464 = vmul.f32 %v7459, 1.442695
    %v7465 = vpow.pop %v7464
    %v7466 = vadd.f32 %v7461, 1.0
    %v7467 = vadd.f32 %v7463, 1.0
    %v7468 = vadd.f32 %v7465, 1.0
    %v7469 = vrcp.pop %v7466
    %v7470 = vmul.f32 1.0, %v7469
    %v7471 = vrcp.pop %v7467
    %v7472 = vmul.f32 1.0, %v7471
    %v7473 = vrcp.pop %v7468
    %v7474 = vmul.f32 1.0, %v7473
    %v7475 = vtanh.pop %v7456
    %v7477 = vrot.slane %v7341, 6
    %v7479 = vmul.f32 %v7472, %v7477
    %v7480 = vmul.f32 %v7470, %v7475
    %v7481 = vadd.f32 %v7479, %v7480
    %v7482 = vtanh.pop %v7481
    %v7483 = vmul.f32 %v7474, %v7482
    %v7485 = vcombine.high %v7483, %v7483
    %v7487 = vunpack.c.l.s4 1983009808
    %v7488 = vunpack.c.0.s8 %v7487
    %v7489 = vlaneseq
    %v7490 = vshrl.u32 %v7489, 7
    %v7491 = vsub.s32 %v7488, %v7490
    %v7492 = vrot.slane %v7485, %v7491
    %v7493 = vcombine.high %v7492, %v7492
    %7495 = vst [vmem:[#allocation5 + $0xe] sm:$0x3] %v7493
    %v7496 = vld [vmem:[#allocation5] sm:$0xff]
    %v7497 = vld [vmem:[#allocation5 + $0x8] sm:$0xff]
    %v7500 = vcombine.high %v7496, %v7496
    %v7502 = vunpack.c.l.s4 1983009808
    %v7503 = vunpack.c.0.s8 %v7502
    %v7504 = vlaneseq
    %v7505 = vshrl.u32 %v7504, 7
    %v7506 = vsub.s32 %v7503, %v7505
    %v7507 = vrot.slane %v7496, %v7506
    %v7509 = vunpack.c.l.s4 1983009808
    %v7510 = vunpack.c.0.s8 %v7509
    %v7511 = vlaneseq
    %v7512 = vshrl.u32 %v7511, 7
    %v7513 = vsub.s32 %v7510, %v7512
    %v7514 = vrot.slane %v7500, %v7513
    %v7515 = vcombine.high %v7507, %v7507
    %v7516 = vcombine.high %v7514, %v7514
    %v7517 = vcombine.high %v7497, %v7497
    %v7519 = vunpack.c.l.s4 1983009808
    %v7520 = vunpack.c.0.s8 %v7519
    %v7521 = vlaneseq
    %v7522 = vshrl.u32 %v7521, 7
    %v7523 = vsub.s32 %v7520, %v7522
    %v7524 = vrot.slane %v7497, %v7523
    %v7526 = vunpack.c.l.s4 1983009808
    %v7527 = vunpack.c.0.s8 %v7526
    %v7528 = vlaneseq
    %v7529 = vshrl.u32 %v7528, 7
    %v7530 = vsub.s32 %v7527, %v7529
    %v7531 = vrot.slane %v7517, %v7530
    %v7532 = vcombine.high %v7524, %v7524
    %v7533 = vcombine.high %v7531, %v7531
    %v7542 = vpack.c.bf16 %v7507, %v7507
    %v7543 = vpack.c.bf16 %v7515, %v7515
    %v7544 = vpack.c.bf16 %v7514, %v7514
    %v7545 = vpack.c.bf16 %v7516, %v7516
    %v7546 = vpack.c.bf16 %v7524, %v7524
    %v7547 = vpack.c.bf16 %v7532, %v7532
    %v7548 = vpack.c.bf16 %v7531, %v7531
    %v7549 = vpack.c.bf16 %v7533, %v7533
    %v7550 = vld [vmem:[#allocation11] sm:$0xf]
    %v7551 = vld [vmem:[#allocation11 + $0x4] sm:$0xf]
    %v7552 = vld [vmem:[#allocation11 + $0x8] sm:$0xf]
    %v7553 = vld [vmem:[#allocation11 + $0xc] sm:$0xf]
    %v7554 = vld [vmem:[#allocation11 + $0x10] sm:$0xf]
    %v7555 = vld [vmem:[#allocation11 + $0x14] sm:$0xf]
    %v7556 = vld [vmem:[#allocation11 + $0x18] sm:$0xf]
    %v7557 = vld [vmem:[#allocation11 + $0x1c] sm:$0xf]
    %v7558 = vld [vmem:[#allocation11 + $0x20] sm:$0xf]
    %v7559 = vld [vmem:[#allocation11 + $0x24] sm:$0xf]
    %v7560 = vld [vmem:[#allocation11 + $0x28] sm:$0xf]
    %v7561 = vld [vmem:[#allocation11 + $0x2c] sm:$0xf]
    %v7562 = vld [vmem:[#allocation11 + $0x30] sm:$0xf]
    %v7563 = vld [vmem:[#allocation11 + $0x34] sm:$0xf]
    %v7564 = vld [vmem:[#allocation11 + $0x38] sm:$0xf]
    %v7565 = vld [vmem:[#allocation11 + $0x3c] sm:$0xf]
    %v7566 = vld [vmem:[#allocation11 + $0x40] sm:$0xf]
    %v7567 = vld [vmem:[#allocation11 + $0x44] sm:$0xf]
    %v7568 = vld [vmem:[#allocation11 + $0x48] sm:$0xf]
    %v7569 = vld [vmem:[#allocation11 + $0x4c] sm:$0xf]
    %v7570 = vld [vmem:[#allocation11 + $0x50] sm:$0xf]
    %v7571 = vld [vmem:[#allocation11 + $0x54] sm:$0xf]
    %v7572 = vld [vmem:[#allocation11 + $0x58] sm:$0xf]
    %v7573 = vld [vmem:[#allocation11 + $0x5c] sm:$0xf]
    %v7574 = vld [vmem:[#allocation11 + $0x60] sm:$0xf]
    %v7575 = vld [vmem:[#allocation11 + $0x64] sm:$0xf]
    %v7576 = vld [vmem:[#allocation11 + $0x68] sm:$0xf]
    %v7577 = vld [vmem:[#allocation11 + $0x6c] sm:$0xf]
    %v7578 = vld [vmem:[#allocation11 + $0x70] sm:$0xf]
    %v7579 = vld [vmem:[#allocation11 + $0x74] sm:$0xf]
    %v7580 = vld [vmem:[#allocation11 + $0x78] sm:$0xf]
    %v7581 = vld [vmem:[#allocation11 + $0x7c] sm:$0xf]
    %v7582 = vld [vmem:[#allocation11 + $0x80] sm:$0xf]
    %v7583 = vld [vmem:[#allocation11 + $0x84] sm:$0xf]
    %v7584 = vld [vmem:[#allocation11 + $0x88] sm:$0xf]
    %v7585 = vld [vmem:[#allocation11 + $0x8c] sm:$0xf]
    %v7586 = vld [vmem:[#allocation11 + $0x90] sm:$0xf]
    %v7587 = vld [vmem:[#allocation11 + $0x94] sm:$0xf]
    %v7588 = vld [vmem:[#allocation11 + $0x98] sm:$0xf]
    %v7589 = vld [vmem:[#allocation11 + $0x9c] sm:$0xf]
    %v7590 = vld [vmem:[#allocation11 + $0xa0] sm:$0xf]
    %v7591 = vld [vmem:[#allocation11 + $0xa4] sm:$0xf]
    %v7592 = vld [vmem:[#allocation11 + $0xa8] sm:$0xf]
    %v7593 = vld [vmem:[#allocation11 + $0xac] sm:$0xf]
    %v7594 = vld [vmem:[#allocation11 + $0xb0] sm:$0xf]
    %v7595 = vld [vmem:[#allocation11 + $0xb4] sm:$0xf]
    %v7596 = vld [vmem:[#allocation11 + $0xb8] sm:$0xf]
    %v7597 = vld [vmem:[#allocation11 + $0xbc] sm:$0xf]
    %v7598 = vld [vmem:[#allocation11 + $0xc0] sm:$0xf]
    %v7599 = vld [vmem:[#allocation11 + $0xc4] sm:$0xf]
    %v7600 = vld [vmem:[#allocation11 + $0xc8] sm:$0xf]
    %v7601 = vld [vmem:[#allocation11 + $0xcc] sm:$0xf]
    %v7602 = vld [vmem:[#allocation11 + $0xd0] sm:$0xf]
    %v7603 = vld [vmem:[#allocation11 + $0xd4] sm:$0xf]
    %v7604 = vld [vmem:[#allocation11 + $0xd8] sm:$0xf]
    %v7605 = vld [vmem:[#allocation11 + $0xdc] sm:$0xf]
    %v7606 = vld [vmem:[#allocation11 + $0xe0] sm:$0xf]
    %v7607 = vld [vmem:[#allocation11 + $0xe4] sm:$0xf]
    %v7608 = vld [vmem:[#allocation11 + $0xe8] sm:$0xf]
    %v7609 = vld [vmem:[#allocation11 + $0xec] sm:$0xf]
    %v7610 = vld [vmem:[#allocation11 + $0xf0] sm:$0xf]
    %v7611 = vld [vmem:[#allocation11 + $0xf4] sm:$0xf]
    %v7612 = vld [vmem:[#allocation11 + $0xf8] sm:$0xf]
    %v7613 = vld [vmem:[#allocation11 + $0xfc] sm:$0xf]
    %v7614 = vld [vmem:[#allocation11 + $0x100] sm:$0xf]
    %v7615 = vld [vmem:[#allocation11 + $0x104] sm:$0xf]
    %v7616 = vld [vmem:[#allocation11 + $0x108] sm:$0xf]
    %v7617 = vld [vmem:[#allocation11 + $0x10c] sm:$0xf]
    %v7618 = vld [vmem:[#allocation11 + $0x110] sm:$0xf]
    %v7619 = vld [vmem:[#allocation11 + $0x114] sm:$0xf]
    %v7620 = vld [vmem:[#allocation11 + $0x118] sm:$0xf]
    %v7621 = vld [vmem:[#allocation11 + $0x11c] sm:$0xf]
    %v7622 = vld [vmem:[#allocation11 + $0x120] sm:$0xf]
    %v7623 = vld [vmem:[#allocation11 + $0x124] sm:$0xf]
    %v7624 = vld [vmem:[#allocation11 + $0x128] sm:$0xf]
    %v7625 = vld [vmem:[#allocation11 + $0x12c] sm:$0xf]
    %v7626 = vld [vmem:[#allocation11 + $0x130] sm:$0xf]
    %v7627 = vld [vmem:[#allocation11 + $0x134] sm:$0xf]
    %v7628 = vld [vmem:[#allocation11 + $0x138] sm:$0xf]
    %v7629 = vld [vmem:[#allocation11 + $0x13c] sm:$0xf]
    %v7630 = vld [vmem:[#allocation11 + $0x140] sm:$0xf]
    %v7631 = vld [vmem:[#allocation11 + $0x144] sm:$0xf]
    %v7632 = vld [vmem:[#allocation11 + $0x148] sm:$0xf]
    %v7633 = vld [vmem:[#allocation11 + $0x14c] sm:$0xf]
    %v7634 = vld [vmem:[#allocation11 + $0x150] sm:$0xf]
    %v7635 = vld [vmem:[#allocation11 + $0x154] sm:$0xf]
    %v7636 = vld [vmem:[#allocation11 + $0x158] sm:$0xf]
    %v7637 = vld [vmem:[#allocation11 + $0x15c] sm:$0xf]
    %v7638 = vld [vmem:[#allocation11 + $0x160] sm:$0xf]
    %v7639 = vld [vmem:[#allocation11 + $0x164] sm:$0xf]
    %v7640 = vld [vmem:[#allocation11 + $0x168] sm:$0xf]
    %v7641 = vld [vmem:[#allocation11 + $0x16c] sm:$0xf]
    %v7642 = vld [vmem:[#allocation11 + $0x170] sm:$0xf]
    %v7643 = vld [vmem:[#allocation11 + $0x174] sm:$0xf]
    %v7644 = vld [vmem:[#allocation11 + $0x178] sm:$0xf]
    %v7645 = vld [vmem:[#allocation11 + $0x17c] sm:$0xf]
    %v7646 = vld [vmem:[#allocation11 + $0x180] sm:$0xf]
    %v7647 = vld [vmem:[#allocation11 + $0x184] sm:$0xf]
    %v7648 = vld [vmem:[#allocation11 + $0x188] sm:$0xf]
    %v7649 = vld [vmem:[#allocation11 + $0x18c] sm:$0xf]
    %v7650 = vld [vmem:[#allocation11 + $0x190] sm:$0xf]
    %v7651 = vld [vmem:[#allocation11 + $0x194] sm:$0xf]
    %v7652 = vld [vmem:[#allocation11 + $0x198] sm:$0xf]
    %v7653 = vld [vmem:[#allocation11 + $0x19c] sm:$0xf]
    %v7654 = vld [vmem:[#allocation11 + $0x1a0] sm:$0xf]
    %v7655 = vld [vmem:[#allocation11 + $0x1a4] sm:$0xf]
    %v7656 = vld [vmem:[#allocation11 + $0x1a8] sm:$0xf]
    %v7657 = vld [vmem:[#allocation11 + $0x1ac] sm:$0xf]
    %v7658 = vld [vmem:[#allocation11 + $0x1b0] sm:$0xf]
    %v7659 = vld [vmem:[#allocation11 + $0x1b4] sm:$0xf]
    %v7660 = vld [vmem:[#allocation11 + $0x1b8] sm:$0xf]
    %v7661 = vld [vmem:[#allocation11 + $0x1bc] sm:$0xf]
    %v7662 = vld [vmem:[#allocation11 + $0x1c0] sm:$0xf]
    %v7663 = vld [vmem:[#allocation11 + $0x1c4] sm:$0xf]
    %v7664 = vld [vmem:[#allocation11 + $0x1c8] sm:$0xf]
    %v7665 = vld [vmem:[#allocation11 + $0x1cc] sm:$0xf]
    %v7666 = vld [vmem:[#allocation11 + $0x1d0] sm:$0xf]
    %v7667 = vld [vmem:[#allocation11 + $0x1d4] sm:$0xf]
    %v7668 = vld [vmem:[#allocation11 + $0x1d8] sm:$0xf]
    %v7669 = vld [vmem:[#allocation11 + $0x1dc] sm:$0xf]
    %v7670 = vld [vmem:[#allocation11 + $0x1e0] sm:$0xf]
    %v7671 = vld [vmem:[#allocation11 + $0x1e4] sm:$0xf]
    %v7672 = vld [vmem:[#allocation11 + $0x1e8] sm:$0xf]
    %v7673 = vld [vmem:[#allocation11 + $0x1ec] sm:$0xf]
    %v7674 = vld [vmem:[#allocation11 + $0x1f0] sm:$0xf]
    %v7675 = vld [vmem:[#allocation11 + $0x1f4] sm:$0xf]
    %v7676 = vld [vmem:[#allocation11 + $0x1f8] sm:$0xf]
    %v7677 = vld [vmem:[#allocation11 + $0x1fc] sm:$0xf]
    %v7678 = vld [vmem:[#allocation12] sm:$0x1]
    %v7680 = vlaneseq
    %v7681 = vshrl.u32 %v7680, 7
    %v7682 = vsub.s32 0, %v7681
    %v7683 = vrot.slane %v7678, %v7682
    %v7813 = vunpack.c.l.b16 %v7550
    %v7814 = vunpack.c.l.b16 %v7551
    %v7815 = vunpack.c.l.b16 %v7552
    %v7816 = vunpack.c.l.b16 %v7553
    %v7817 = vunpack.c.l.b16 %v7554
    %v7818 = vunpack.c.l.b16 %v7555
    %v7819 = vunpack.c.l.b16 %v7556
    %v7820 = vunpack.c.l.b16 %v7557
    %v7821 = vunpack.c.l.b16 %v7558
    %v7822 = vunpack.c.l.b16 %v7559
    %v7823 = vunpack.c.l.b16 %v7560
    %v7824 = vunpack.c.l.b16 %v7561
    %v7825 = vunpack.c.l.b16 %v7562
    %v7826 = vunpack.c.l.b16 %v7563
    %v7827 = vunpack.c.l.b16 %v7564
    %v7828 = vunpack.c.l.b16 %v7565
    %v7829 = vunpack.c.l.b16 %v7566
    %v7830 = vunpack.c.l.b16 %v7567
    %v7831 = vunpack.c.l.b16 %v7568
    %v7832 = vunpack.c.l.b16 %v7569
    %v7833 = vunpack.c.l.b16 %v7570
    %v7834 = vunpack.c.l.b16 %v7571
    %v7835 = vunpack.c.l.b16 %v7572
    %v7836 = vunpack.c.l.b16 %v7573
    %v7837 = vunpack.c.l.b16 %v7574
    %v7838 = vunpack.c.l.b16 %v7575
    %v7839 = vunpack.c.l.b16 %v7576
    %v7840 = vunpack.c.l.b16 %v7577
    %v7841 = vunpack.c.l.b16 %v7578
    %v7842 = vunpack.c.l.b16 %v7579
    %v7843 = vunpack.c.l.b16 %v7580
    %v7844 = vunpack.c.l.b16 %v7581
    %v7845 = vunpack.c.l.b16 %v7582
    %v7846 = vunpack.c.l.b16 %v7583
    %v7847 = vunpack.c.l.b16 %v7584
    %v7848 = vunpack.c.l.b16 %v7585
    %v7849 = vunpack.c.l.b16 %v7586
    %v7850 = vunpack.c.l.b16 %v7587
    %v7851 = vunpack.c.l.b16 %v7588
    %v7852 = vunpack.c.l.b16 %v7589
    %v7853 = vunpack.c.l.b16 %v7590
    %v7854 = vunpack.c.l.b16 %v7591
    %v7855 = vunpack.c.l.b16 %v7592
    %v7856 = vunpack.c.l.b16 %v7593
    %v7857 = vunpack.c.l.b16 %v7594
    %v7858 = vunpack.c.l.b16 %v7595
    %v7859 = vunpack.c.l.b16 %v7596
    %v7860 = vunpack.c.l.b16 %v7597
    %v7861 = vunpack.c.l.b16 %v7598
    %v7862 = vunpack.c.l.b16 %v7599
    %v7863 = vunpack.c.l.b16 %v7600
    %v7864 = vunpack.c.l.b16 %v7601
    %v7865 = vunpack.c.l.b16 %v7602
    %v7866 = vunpack.c.l.b16 %v7603
    %v7867 = vunpack.c.l.b16 %v7604
    %v7868 = vunpack.c.l.b16 %v7605
    %v7869 = vunpack.c.l.b16 %v7606
    %v7870 = vunpack.c.l.b16 %v7607
    %v7871 = vunpack.c.l.b16 %v7608
    %v7872 = vunpack.c.l.b16 %v7609
    %v7873 = vunpack.c.l.b16 %v7610
    %v7874 = vunpack.c.l.b16 %v7611
    %v7875 = vunpack.c.l.b16 %v7612
    %v7876 = vunpack.c.l.b16 %v7613
    %v7877 = vunpack.c.l.b16 %v7614
    %v7878 = vunpack.c.l.b16 %v7615
    %v7879 = vunpack.c.l.b16 %v7616
    %v7880 = vunpack.c.l.b16 %v7617
    %v7881 = vunpack.c.l.b16 %v7618
    %v7882 = vunpack.c.l.b16 %v7619
    %v7883 = vunpack.c.l.b16 %v7620
    %v7884 = vunpack.c.l.b16 %v7621
    %v7885 = vunpack.c.l.b16 %v7622
    %v7886 = vunpack.c.l.b16 %v7623
    %v7887 = vunpack.c.l.b16 %v7624
    %v7888 = vunpack.c.l.b16 %v7625
    %v7889 = vunpack.c.l.b16 %v7626
    %v7890 = vunpack.c.l.b16 %v7627
    %v7891 = vunpack.c.l.b16 %v7628
    %v7892 = vunpack.c.l.b16 %v7629
    %v7893 = vunpack.c.l.b16 %v7630
    %v7894 = vunpack.c.l.b16 %v7631
    %v7895 = vunpack.c.l.b16 %v7632
    %v7896 = vunpack.c.l.b16 %v7633
    %v7897 = vunpack.c.l.b16 %v7634
    %v7898 = vunpack.c.l.b16 %v7635
    %v7899 = vunpack.c.l.b16 %v7636
    %v7900 = vunpack.c.l.b16 %v7637
    %v7901 = vunpack.c.l.b16 %v7638
    %v7902 = vunpack.c.l.b16 %v7639
    %v7903 = vunpack.c.l.b16 %v7640
    %v7904 = vunpack.c.l.b16 %v7641
    %v7905 = vunpack.c.l.b16 %v7642
    %v7906 = vunpack.c.l.b16 %v7643
    %v7907 = vunpack.c.l.b16 %v7644
    %v7908 = vunpack.c.l.b16 %v7645
    %v7909 = vunpack.c.l.b16 %v7646
    %v7910 = vunpack.c.l.b16 %v7647
    %v7911 = vunpack.c.l.b16 %v7648
    %v7912 = vunpack.c.l.b16 %v7649
    %v7913 = vunpack.c.l.b16 %v7650
    %v7914 = vunpack.c.l.b16 %v7651
    %v7915 = vunpack.c.l.b16 %v7652
    %v7916 = vunpack.c.l.b16 %v7653
    %v7917 = vunpack.c.l.b16 %v7654
    %v7918 = vunpack.c.l.b16 %v7655
    %v7919 = vunpack.c.l.b16 %v7656
    %v7920 = vunpack.c.l.b16 %v7657
    %v7921 = vunpack.c.l.b16 %v7658
    %v7922 = vunpack.c.l.b16 %v7659
    %v7923 = vunpack.c.l.b16 %v7660
    %v7924 = vunpack.c.l.b16 %v7661
    %v7925 = vunpack.c.l.b16 %v7662
    %v7926 = vunpack.c.l.b16 %v7663
    %v7927 = vunpack.c.l.b16 %v7664
    %v7928 = vunpack.c.l.b16 %v7665
    %v7929 = vunpack.c.l.b16 %v7666
    %v7930 = vunpack.c.l.b16 %v7667
    %v7931 = vunpack.c.l.b16 %v7668
    %v7932 = vunpack.c.l.b16 %v7669
    %v7933 = vunpack.c.l.b16 %v7670
    %v7934 = vunpack.c.l.b16 %v7671
    %v7935 = vunpack.c.l.b16 %v7672
    %v7936 = vunpack.c.l.b16 %v7673
    %v7937 = vunpack.c.l.b16 %v7674
    %v7938 = vunpack.c.l.b16 %v7675
    %v7939 = vunpack.c.l.b16 %v7676
    %v7940 = vunpack.c.l.b16 %v7677
    %v7941 = vpack.c.b16 %v7814, %v7813
    %v7942 = vpack.c.b16 %v7816, %v7815
    %v7943 = vpack.c.b16 %v7818, %v7817
    %v7944 = vpack.c.b16 %v7820, %v7819
    %v7945 = vpack.c.b16 %v7822, %v7821
    %v7946 = vpack.c.b16 %v7824, %v7823
    %v7947 = vpack.c.b16 %v7826, %v7825
    %v7948 = vpack.c.b16 %v7828, %v7827
    %v7949 = vpack.c.b16 %v7830, %v7829
    %v7950 = vpack.c.b16 %v7832, %v7831
    %v7951 = vpack.c.b16 %v7834, %v7833
    %v7952 = vpack.c.b16 %v7836, %v7835
    %v7953 = vpack.c.b16 %v7838, %v7837
    %v7954 = vpack.c.b16 %v7840, %v7839
    %v7955 = vpack.c.b16 %v7842, %v7841
    %v7956 = vpack.c.b16 %v7844, %v7843
    %v7957 = vpack.c.b16 %v7846, %v7845
    %v7958 = vpack.c.b16 %v7848, %v7847
    %v7959 = vpack.c.b16 %v7850, %v7849
    %v7960 = vpack.c.b16 %v7852, %v7851
    %v7961 = vpack.c.b16 %v7854, %v7853
    %v7962 = vpack.c.b16 %v7856, %v7855
    %v7963 = vpack.c.b16 %v7858, %v7857
    %v7964 = vpack.c.b16 %v7860, %v7859
    %v7965 = vpack.c.b16 %v7862, %v7861
    %v7966 = vpack.c.b16 %v7864, %v7863
    %v7967 = vpack.c.b16 %v7866, %v7865
    %v7968 = vpack.c.b16 %v7868, %v7867
    %v7969 = vpack.c.b16 %v7870, %v7869
    %v7970 = vpack.c.b16 %v7872, %v7871
    %v7971 = vpack.c.b16 %v7874, %v7873
    %v7972 = vpack.c.b16 %v7876, %v7875
    %v7973 = vpack.c.b16 %v7878, %v7877
    %v7974 = vpack.c.b16 %v7880, %v7879
    %v7975 = vpack.c.b16 %v7882, %v7881
    %v7976 = vpack.c.b16 %v7884, %v7883
    %v7977 = vpack.c.b16 %v7886, %v7885
    %v7978 = vpack.c.b16 %v7888, %v7887
    %v7979 = vpack.c.b16 %v7890, %v7889
    %v7980 = vpack.c.b16 %v7892, %v7891
    %v7981 = vpack.c.b16 %v7894, %v7893
    %v7982 = vpack.c.b16 %v7896, %v7895
    %v7983 = vpack.c.b16 %v7898, %v7897
    %v7984 = vpack.c.b16 %v7900, %v7899
    %v7985 = vpack.c.b16 %v7902, %v7901
    %v7986 = vpack.c.b16 %v7904, %v7903
    %v7987 = vpack.c.b16 %v7906, %v7905
    %v7988 = vpack.c.b16 %v7908, %v7907
    %v7989 = vpack.c.b16 %v7910, %v7909
    %v7990 = vpack.c.b16 %v7912, %v7911
    %v7991 = vpack.c.b16 %v7914, %v7913
    %v7992 = vpack.c.b16 %v7916, %v7915
    %v7993 = vpack.c.b16 %v7918, %v7917
    %v7994 = vpack.c.b16 %v7920, %v7919
    %v7995 = vpack.c.b16 %v7922, %v7921
    %v7996 = vpack.c.b16 %v7924, %v7923
    %v7997 = vpack.c.b16 %v7926, %v7925
    %v7998 = vpack.c.b16 %v7928, %v7927
    %v7999 = vpack.c.b16 %v7930, %v7929
    %v8000 = vpack.c.b16 %v7932, %v7931
    %v8001 = vpack.c.b16 %v7934, %v7933
    %v8002 = vpack.c.b16 %v7936, %v7935
    %v8003 = vpack.c.b16 %v7938, %v7937
    %v8004 = vpack.c.b16 %v7940, %v7939
    %8069 = vmatprep.subr.bf16.mxu0 0
    %8070 = vmatpush1.bf16.msra.mxu0 %v7941
    %8071 = vmatprep.subr.bf16.mxu0 0
    %8072 = vmatpush1.bf16.msra.mxu0 %v7942
    %8073 = vmatprep.subr.bf16.mxu0 0
    %8074 = vmatpush1.bf16.msra.mxu0 %v7943
    %8075 = vmatprep.subr.bf16.mxu0 0
    %8076 = vmatpush1.bf16.msra.mxu0 %v7944
    %8077 = vmatprep.subr.bf16.mxu0 0
    %8078 = vmatpush1.bf16.msra.mxu0 %v7945
    %8079 = vmatprep.subr.bf16.mxu0 0
    %8080 = vmatpush1.bf16.msra.mxu0 %v7946
    %8081 = vmatprep.subr.bf16.mxu0 0
    %8082 = vmatpush1.bf16.msra.mxu0 %v7947
    %8083 = vmatprep.subr.bf16.mxu0 0
    %8084 = vmatpush1.bf16.msra.mxu0 %v7948
    %8085 = vmatprep.subr.bf16.mxu0 0
    %8086 = vmatpush1.bf16.msra.mxu0 %v7949
    %8087 = vmatprep.subr.bf16.mxu0 0
    %8088 = vmatpush1.bf16.msra.mxu0 %v7950
    %8089 = vmatprep.subr.bf16.mxu0 0
    %8090 = vmatpush1.bf16.msra.mxu0 %v7951
    %8091 = vmatprep.subr.bf16.mxu0 0
    %8092 = vmatpush1.bf16.msra.mxu0 %v7952
    %8093 = vmatprep.subr.bf16.mxu0 0
    %8094 = vmatpush1.bf16.msra.mxu0 %v7953
    %8095 = vmatprep.subr.bf16.mxu0 0
    %8096 = vmatpush1.bf16.msra.mxu0 %v7954
    %8097 = vmatprep.subr.bf16.mxu0 0
    %8098 = vmatpush1.bf16.msra.mxu0 %v7955
    %8099 = vmatprep.subr.bf16.mxu0 0
    %8100 = vmatpush1.bf16.msra.mxu0 %v7956
    %8101 = vmatprep.mubr.bf16.mxu0 %v7543
    %8102 = vmatmul.mubr.bf16.gmra.mrb[0].mxu0 %v7542
    %v8103 = vpop.f32.mrb[0].mxu0
    %v8104 = vadd.f32 %v7683, %v8103
    %v8105 = vpop.f32.mrb[0].mxu0
    %v8106 = vpop.f32.mrb[0].mxu0
    %v8107 = vpop.f32.mrb[0].mxu0
    %8108 = vdwg.mxu0
    %8109 = vmatprep.subr.bf16.mxu0 0
    %8110 = vmatpush1.bf16.msra.mxu0 %v7957
    %8111 = vmatprep.subr.bf16.mxu0 0
    %8112 = vmatpush1.bf16.msra.mxu0 %v7958
    %8113 = vmatprep.subr.bf16.mxu0 0
    %8114 = vmatpush1.bf16.msra.mxu0 %v7959
    %8115 = vmatprep.subr.bf16.mxu0 0
    %8116 = vmatpush1.bf16.msra.mxu0 %v7960
    %8117 = vmatprep.subr.bf16.mxu0 0
    %8118 = vmatpush1.bf16.msra.mxu0 %v7961
    %8119 = vmatprep.subr.bf16.mxu0 0
    %8120 = vmatpush1.bf16.msra.mxu0 %v7962
    %8121 = vmatprep.subr.bf16.mxu0 0
    %8122 = vmatpush1.bf16.msra.mxu0 %v7963
    %8123 = vmatprep.subr.bf16.mxu0 0
    %8124 = vmatpush1.bf16.msra.mxu0 %v7964
    %8125 = vmatprep.subr.bf16.mxu0 0
    %8126 = vmatpush1.bf16.msra.mxu0 %v7965
    %8127 = vmatprep.subr.bf16.mxu0 0
    %8128 = vmatpush1.bf16.msra.mxu0 %v7966
    %8129 = vmatprep.subr.bf16.mxu0 0
    %8130 = vmatpush1.bf16.msra.mxu0 %v7967
    %8131 = vmatprep.subr.bf16.mxu0 0
    %8132 = vmatpush1.bf16.msra.mxu0 %v7968
    %8133 = vmatprep.subr.bf16.mxu0 0
    %8134 = vmatpush1.bf16.msra.mxu0 %v7969
    %8135 = vmatprep.subr.bf16.mxu0 0
    %8136 = vmatpush1.bf16.msra.mxu0 %v7970
    %8137 = vmatprep.subr.bf16.mxu0 0
    %8138 = vmatpush1.bf16.msra.mxu0 %v7971
    %8139 = vmatprep.subr.bf16.mxu0 0
    %8140 = vmatpush1.bf16.msra.mxu0 %v7972
    %8141 = vmatprep.mubr.bf16.mxu0 %v7545
    %8142 = vmatmul.mubr.bf16.gmra.mrb[0].mxu0 %v7544
    %v8143 = vpop.f32.mrb[0].mxu0
    %v8144 = vadd.f32 %v8104, %v8143
    %v8145 = vpop.f32.mrb[0].mxu0
    %v8146 = vpop.f32.mrb[0].mxu0
    %v8147 = vpop.f32.mrb[0].mxu0
    %8148 = vdwg.mxu0
    %8149 = vmatprep.subr.bf16.mxu0 0
    %8150 = vmatpush1.bf16.msra.mxu0 %v7973
    %8151 = vmatprep.subr.bf16.mxu0 0
    %8152 = vmatpush1.bf16.msra.mxu0 %v7974
    %8153 = vmatprep.subr.bf16.mxu0 0
    %8154 = vmatpush1.bf16.msra.mxu0 %v7975
    %8155 = vmatprep.subr.bf16.mxu0 0
    %8156 = vmatpush1.bf16.msra.mxu0 %v7976
    %8157 = vmatprep.subr.bf16.mxu0 0
    %8158 = vmatpush1.bf16.msra.mxu0 %v7977
    %8159 = vmatprep.subr.bf16.mxu0 0
    %8160 = vmatpush1.bf16.msra.mxu0 %v7978
    %8161 = vmatprep.subr.bf16.mxu0 0
    %8162 = vmatpush1.bf16.msra.mxu0 %v7979
    %8163 = vmatprep.subr.bf16.mxu0 0
    %8164 = vmatpush1.bf16.msra.mxu0 %v7980
    %8165 = vmatprep.subr.bf16.mxu0 0
    %8166 = vmatpush1.bf16.msra.mxu0 %v7981
    %8167 = vmatprep.subr.bf16.mxu0 0
    %8168 = vmatpush1.bf16.msra.mxu0 %v7982
    %8169 = vmatprep.subr.bf16.mxu0 0
    %8170 = vmatpush1.bf16.msra.mxu0 %v7983
    %8171 = vmatprep.subr.bf16.mxu0 0
    %8172 = vmatpush1.bf16.msra.mxu0 %v7984
    %8173 = vmatprep.subr.bf16.mxu0 0
    %8174 = vmatpush1.bf16.msra.mxu0 %v7985
    %8175 = vmatprep.subr.bf16.mxu0 0
    %8176 = vmatpush1.bf16.msra.mxu0 %v7986
    %8177 = vmatprep.subr.bf16.mxu0 0
    %8178 = vmatpush1.bf16.msra.mxu0 %v7987
    %8179 = vmatprep.subr.bf16.mxu0 0
    %8180 = vmatpush1.bf16.msra.mxu0 %v7988
    %8181 = vmatprep.mubr.bf16.mxu0 %v7547
    %8182 = vmatmul.mubr.bf16.gmra.mrb[0].mxu0 %v7546
    %v8183 = vpop.f32.mrb[0].mxu0
    %v8184 = vadd.f32 %v8144, %v8183
    %v8185 = vpop.f32.mrb[0].mxu0
    %v8186 = vpop.f32.mrb[0].mxu0
    %v8187 = vpop.f32.mrb[0].mxu0
    %8188 = vdwg.mxu0
    %8189 = vmatprep.subr.bf16.mxu0 0
    %8190 = vmatpush1.bf16.msra.mxu0 %v7989
    %8191 = vmatprep.subr.bf16.mxu0 0
    %8192 = vmatpush1.bf16.msra.mxu0 %v7990
    %8193 = vmatprep.subr.bf16.mxu0 0
    %8194 = vmatpush1.bf16.msra.mxu0 %v7991
    %8195 = vmatprep.subr.bf16.mxu0 0
    %8196 = vmatpush1.bf16.msra.mxu0 %v7992
    %8197 = vmatprep.subr.bf16.mxu0 0
    %8198 = vmatpush1.bf16.msra.mxu0 %v7993
    %8199 = vmatprep.subr.bf16.mxu0 0
    %8200 = vmatpush1.bf16.msra.mxu0 %v7994
    %8201 = vmatprep.subr.bf16.mxu0 0
    %8202 = vmatpush1.bf16.msra.mxu0 %v7995
    %8203 = vmatprep.subr.bf16.mxu0 0
    %8204 = vmatpush1.bf16.msra.mxu0 %v7996
    %8205 = vmatprep.subr.bf16.mxu0 0
    %8206 = vmatpush1.bf16.msra.mxu0 %v7997
    %8207 = vmatprep.subr.bf16.mxu0 0
    %8208 = vmatpush1.bf16.msra.mxu0 %v7998
    %8209 = vmatprep.subr.bf16.mxu0 0
    %8210 = vmatpush1.bf16.msra.mxu0 %v7999
    %8211 = vmatprep.subr.bf16.mxu0 0
    %8212 = vmatpush1.bf16.msra.mxu0 %v8000
    %8213 = vmatprep.subr.bf16.mxu0 0
    %8214 = vmatpush1.bf16.msra.mxu0 %v8001
    %8215 = vmatprep.subr.bf16.mxu0 0
    %8216 = vmatpush1.bf16.msra.mxu0 %v8002
    %8217 = vmatprep.subr.bf16.mxu0 0
    %8218 = vmatpush1.bf16.msra.mxu0 %v8003
    %8219 = vmatprep.subr.bf16.mxu0 0
    %8220 = vmatpush1.bf16.msra.mxu0 %v8004
    %8221 = vmatprep.mubr.bf16.mxu0 %v7549
    %8222 = vmatmul.mubr.bf16.gmra.mrb[0].mxu0 %v7548
    %v8223 = vpop.f32.mrb[0].mxu0
    %v8224 = vadd.f32 %v8184, %v8223
    %v8225 = vpop.f32.mrb[0].mxu0
    %v8226 = vpop.f32.mrb[0].mxu0
    %v8227 = vpop.f32.mrb[0].mxu0
    %8228 = vdwg.mxu0
    %v8229 = vpack.c.bf16 %v8224, %v8224
    %v8230 = vld [vmem:[#allocation14] sm:$0xf]
    %v8231 = vld [vmem:[#allocation14 + $0x4] sm:$0xf]
    %v8232 = vld [vmem:[#allocation14 + $0x8] sm:$0xf]
    %v8233 = vld [vmem:[#allocation14 + $0xc] sm:$0xf]
    %v8234 = vld [vmem:[#allocation14 + $0x10] sm:$0xf]
    %v8235 = vld [vmem:[#allocation14 + $0x14] sm:$0xf]
    %v8236 = vld [vmem:[#allocation14 + $0x18] sm:$0xf]
    %v8237 = vld [vmem:[#allocation14 + $0x1c] sm:$0xf]
    %v8238 = vld [vmem:[#allocation14 + $0x20] sm:$0xf]
    %v8239 = vld [vmem:[#allocation14 + $0x24] sm:$0xf]
    %v8240 = vld [vmem:[#allocation14 + $0x28] sm:$0xf]
    %v8241 = vld [vmem:[#allocation14 + $0x2c] sm:$0xf]
    %v8242 = vld [vmem:[#allocation14 + $0x30] sm:$0xf]
    %v8243 = vld [vmem:[#allocation14 + $0x34] sm:$0xf]
    %v8244 = vld [vmem:[#allocation14 + $0x38] sm:$0xf]
    %v8245 = vld [vmem:[#allocation14 + $0x3c] sm:$0xf]
    %v8246 = vld [vmem:[#allocation15] sm:$0x1]
    %v8248 = vlaneseq
    %v8249 = vshrl.u32 %v8248, 7
    %v8250 = vsub.s32 0, %v8249
    %v8251 = vrot.slane %v8246, %v8250
    %v8269 = vunpack.c.l.b16 %v8230
    %v8270 = vunpack.c.l.b16 %v8231
    %v8271 = vunpack.c.l.b16 %v8232
    %v8272 = vunpack.c.l.b16 %v8233
    %v8273 = vunpack.c.l.b16 %v8234
    %v8274 = vunpack.c.l.b16 %v8235
    %v8275 = vunpack.c.l.b16 %v8236
    %v8276 = vunpack.c.l.b16 %v8237
    %v8277 = vunpack.c.l.b16 %v8238
    %v8278 = vunpack.c.l.b16 %v8239
    %v8279 = vunpack.c.l.b16 %v8240
    %v8280 = vunpack.c.l.b16 %v8241
    %v8281 = vunpack.c.l.b16 %v8242
    %v8282 = vunpack.c.l.b16 %v8243
    %v8283 = vunpack.c.l.b16 %v8244
    %v8284 = vunpack.c.l.b16 %v8245
    %v8285 = vpack.c.b16 %v8270, %v8269
    %v8286 = vpack.c.b16 %v8272, %v8271
    %v8287 = vpack.c.b16 %v8274, %v8273
    %v8288 = vpack.c.b16 %v8276, %v8275
    %v8289 = vpack.c.b16 %v8278, %v8277
    %v8290 = vpack.c.b16 %v8280, %v8279
    %v8291 = vpack.c.b16 %v8282, %v8281
    %v8292 = vpack.c.b16 %v8284, %v8283
    %8301 = vmatprep.subr.bf16.mxu0 0
    %8302 = vmatpush1.bf16.msra.mxu0 %v8285
    %8303 = vmatprep.subr.bf16.mxu0 0
    %8304 = vmatpush1.bf16.msra.mxu0 %v8286
    %8305 = vmatprep.subr.bf16.mxu0 0
    %8306 = vmatpush1.bf16.msra.mxu0 %v8287
    %8307 = vmatprep.subr.bf16.mxu0 0
    %8308 = vmatpush1.bf16.msra.mxu0 %v8288
    %8309 = vmatprep.subr.bf16.mxu0 0
    %8310 = vmatpush1.bf16.msra.mxu0 %v8289
    %8311 = vmatprep.subr.bf16.mxu0 0
    %8312 = vmatpush1.bf16.msra.mxu0 %v8290
    %8313 = vmatprep.subr.bf16.mxu0 0
    %8314 = vmatpush1.bf16.msra.mxu0 %v8291
    %8315 = vmatprep.subr.bf16.mxu0 0
    %8316 = vmatpush1.bf16.msra.mxu0 %v8292
    %8317 = vmatprep.subr.bf16.mxu0 0
    %8318 = vmatpush1.bf16.msra.mxu0 0
    %8319 = vmatprep.subr.bf16.mxu0 0
    %8320 = vmatpush1.bf16.msra.mxu0 0
    %8321 = vmatprep.subr.bf16.mxu0 0
    %8322 = vmatpush1.bf16.msra.mxu0 0
    %8323 = vmatprep.subr.bf16.mxu0 0
    %8324 = vmatpush1.bf16.msra.mxu0 0
    %8325 = vmatprep.subr.bf16.mxu0 0
    %8326 = vmatpush1.bf16.msra.mxu0 0
    %8327 = vmatprep.subr.bf16.mxu0 0
    %8328 = vmatpush1.bf16.msra.mxu0 0
    %8329 = vmatprep.subr.bf16.mxu0 0
    %8330 = vmatpush1.bf16.msra.mxu0 0
    %8331 = vmatprep.subr.bf16.mxu0 0
    %8332 = vmatpush1.bf16.msra.mxu0 0
    %8333 = vmatprep.mubr.bf16.mxu0 0
    %8334 = vmatmul.mubr.bf16.gmra.mrb[0].mxu0 %v8229
    %v8335 = vpop.f32.mrb[0].mxu0
    %v8336 = vadd.f32 %v8251, %v8335
    %v8337 = vpop.f32.mrb[0].mxu0
    %v8338 = vpop.f32.mrb[0].mxu0
    %v8339 = vpop.f32.mrb[0].mxu0
    %8340 = vdwg.mxu0
    %v8341 = vpack.c.bf16 %v8336, %v8336
    %v8342 = vld [vmem:[#allocation17] sm:$0xf]
    %v8343 = vld [vmem:[#allocation17 + $0x4] sm:$0xf]
    %v8344 = vld [vmem:[#allocation17 + $0x8] sm:$0xf]
    %v8345 = vld [vmem:[#allocation17 + $0xc] sm:$0xf]
    %v8346 = vld [vmem:[#allocation17 + $0x10] sm:$0xf]
    %v8347 = vld [vmem:[#allocation17 + $0x14] sm:$0xf]
    %v8348 = vld [vmem:[#allocation17 + $0x18] sm:$0xf]
    %v8349 = vld [vmem:[#allocation17 + $0x1c] sm:$0xf]
    %v8350 = vld [vmem:[#allocation17 + $0x20] sm:$0xf]
    %v8351 = vld [vmem:[#allocation17 + $0x24] sm:$0xf]
    %v8352 = vld [vmem:[#allocation17 + $0x28] sm:$0xf]
    %v8353 = vld [vmem:[#allocation17 + $0x2c] sm:$0xf]
    %v8354 = vld [vmem:[#allocation17 + $0x30] sm:$0xf]
    %v8355 = vld [vmem:[#allocation17 + $0x34] sm:$0xf]
    %v8356 = vld [vmem:[#allocation17 + $0x38] sm:$0xf]
    %v8357 = vld [vmem:[#allocation17 + $0x3c] sm:$0xf]
    %v8358 = vld [vmem:[#allocation18] sm:$0x1]
    %v8360 = vlaneseq
    %v8361 = vshrl.u32 %v8360, 7
    %v8362 = vsub.s32 0, %v8361
    %v8363 = vrot.slane %v8358, %v8362
    %v8381 = vunpack.c.l.b16 %v8342
    %v8382 = vunpack.c.l.b16 %v8343
    %v8383 = vunpack.c.l.b16 %v8344
    %v8384 = vunpack.c.l.b16 %v8345
    %v8385 = vunpack.c.l.b16 %v8346
    %v8386 = vunpack.c.l.b16 %v8347
    %v8387 = vunpack.c.l.b16 %v8348
    %v8388 = vunpack.c.l.b16 %v8349
    %v8389 = vunpack.c.l.b16 %v8350
    %v8390 = vunpack.c.l.b16 %v8351
    %v8391 = vunpack.c.l.b16 %v8352
    %v8392 = vunpack.c.l.b16 %v8353
    %v8393 = vunpack.c.l.b16 %v8354
    %v8394 = vunpack.c.l.b16 %v8355
    %v8395 = vunpack.c.l.b16 %v8356
    %v8396 = vunpack.c.l.b16 %v8357
    %v8397 = vpack.c.b16 %v8382, %v8381
    %v8398 = vpack.c.b16 %v8384, %v8383
    %v8399 = vpack.c.b16 %v8386, %v8385
    %v8400 = vpack.c.b16 %v8388, %v8387
    %v8401 = vpack.c.b16 %v8390, %v8389
    %v8402 = vpack.c.b16 %v8392, %v8391
    %v8403 = vpack.c.b16 %v8394, %v8393
    %v8404 = vpack.c.b16 %v8396, %v8395
    %8413 = vmatprep.subr.bf16.mxu0 0
    %8414 = vmatpush1.bf16.msra.mxu0 %v8397
    %8415 = vmatprep.subr.bf16.mxu0 0
    %8416 = vmatpush1.bf16.msra.mxu0 %v8398
    %8417 = vmatprep.subr.bf16.mxu0 0
    %8418 = vmatpush1.bf16.msra.mxu0 %v8399
    %8419 = vmatprep.subr.bf16.mxu0 0
    %8420 = vmatpush1.bf16.msra.mxu0 %v8400
    %8421 = vmatprep.subr.bf16.mxu0 0
    %8422 = vmatpush1.bf16.msra.mxu0 %v8401
    %8423 = vmatprep.subr.bf16.mxu0 0
    %8424 = vmatpush1.bf16.msra.mxu0 %v8402
    %8425 = vmatprep.subr.bf16.mxu0 0
    %8426 = vmatpush1.bf16.msra.mxu0 %v8403
    %8427 = vmatprep.subr.bf16.mxu0 0
    %8428 = vmatpush1.bf16.msra.mxu0 %v8404
    %8429 = vmatprep.subr.bf16.mxu0 0
    %8430 = vmatpush1.bf16.msra.mxu0 0
    %8431 = vmatprep.subr.bf16.mxu0 0
    %8432 = vmatpush1.bf16.msra.mxu0 0
    %8433 = vmatprep.subr.bf16.mxu0 0
    %8434 = vmatpush1.bf16.msra.mxu0 0
    %8435 = vmatprep.subr.bf16.mxu0 0
    %8436 = vmatpush1.bf16.msra.mxu0 0
    %8437 = vmatprep.subr.bf16.mxu0 0
    %8438 = vmatpush1.bf16.msra.mxu0 0
    %8439 = vmatprep.subr.bf16.mxu0 0
    %8440 = vmatpush1.bf16.msra.mxu0 0
    %8441 = vmatprep.subr.bf16.mxu0 0
    %8442 = vmatpush1.bf16.msra.mxu0 0
    %8443 = vmatprep.subr.bf16.mxu0 0
    %8444 = vmatpush1.bf16.msra.mxu0 0
    %8445 = vmatprep.mubr.bf16.mxu0 0
    %8446 = vmatmul.mubr.bf16.gmra.mrb[0].mxu0 %v8341
    %v8447 = vpop.f32.mrb[0].mxu0
    %v8448 = vadd.f32 %v8363, %v8447
    %v8449 = vpop.f32.mrb[0].mxu0
    %v8450 = vpop.f32.mrb[0].mxu0
    %v8451 = vpop.f32.mrb[0].mxu0
    %8452 = vdwg.mxu0
    %8453 = vst [vmem:[#allocation20] sm:$0x3] %v8448
    // Predicated region
    $region66: #{tpu_custom_call.1} parent=1 // pred_check
      _
    $region67: #{tpu_custom_call.1} parent=1 // pred_check_branch
      %8455 = sbr.rel (0) target = $region69
    $region68: #{tpu_custom_call.1} parent=1 // pred_region
      %s8457 = ssub.s32 32, 32
      %8458 = vsyncadd [#allocation8], %s8457
      %s8460 = sshll.u32 [#allocation20], 4
      %s8461 = int_to_ptr.vmem [resolvable:$true] %s8460
      %8463 = dma.vmem_to_hbm [thread:$0]  %s8461, 32, %s9, [#allocation8]
    $region69: #{tpu_custom_call.1} parent=1 // pred_fallthru
      _
    // Predicated region
    $region70: #{tpu_custom_call.1} parent=1 // pred_check
      _
    $region71: #{tpu_custom_call.1} parent=1 // pred_check_branch
      %8465 = sbr.rel (0) target = $region73
    $region72: #{tpu_custom_call.1} parent=1 // pred_region
      %8466 = dma.done [#allocation8], 32
    $region73: #{tpu_custom_call.1} parent=1 // pred_fallthru
      _
    %8467 = vsyncpa [#allocation7], 1
    %8468 = vsyncpa [#allocation10], 1
    %8469 = vsyncpa [#allocation13], 1
    %8470 = vsyncpa [#allocation16], 1
    %8471 = vsyncpa [#allocation19], 1
    %8472 = vsyncpa [#allocation8], 1
  %8473 = vsyncmov [#allocation3]
  %s8474 = vpop.sfrf %8473
  %p8475 = scmp.eq.s32.totalorder %s8474, 0
  %p8476 = pneg %p8475
  %8478 = shalt.err (%p8476)
  %s8479 = scalar_lea.sflag [#allocation3], 1
  %8480 = vsyncmov %s8479
  %s8481 = vpop.sfrf %8480
  %p8482 = scmp.eq.s32.totalorder %s8481, 0
  %p8483 = pneg %p8482
  %8485 = shalt.err (%p8483)

</llo_original>
